<compile_context>
chip_gen: v7x
topology: tpu7x:2x2x1
jax: 0.10.0
libtpu: 0.0.40
codegen_flags: <defaults>
</compile_context>

<pallas_src>
import jax
import jax.numpy as jnp
from jax.experimental import pallas as pl
from jax.experimental.pallas import tpu as pltpu

CRAFTED_FEATURES = 34

ESM_HIDDEN = 32        # esm2.config.hidden_size (synthetic stand-in)
AE_HIDDEN = 128        # PartitionedEmbeddingModel hidden width (stands in for 1200)
LATENT = 64            # true latent width; first CRAFTED_FEATURES dims are "crafted"
PACKED = 2 * LATENT    # packed output width: lanes [0:64]=z, [64:128]=binary
VOCAB = 33             # ESM2 vocab size
TM = 1024              # token rows per grid step (row tile)


def _ae_encode_binarize_kernel(x_ref, w1_ref, b1_ref, w2_ref, b2_ref, out_ref):
    """Encoder MLP (f32 MXU accum) + in-place partitioned one-hot on the packed copy."""
    # x: (TM, D) f32, w1: (D, H) f32, b1: (1, H) f32
    h = jnp.dot(x_ref[...], w1_ref[...], preferred_element_type=jnp.float32)
    h = jnp.maximum(h + b1_ref[...], 0.0)                              # ReLU, f32

    # w2/b2 are lane-duplicated ([W2 | W2]), so z2 lanes [0:64] and [64:128]
    # both hold z bit-identically -> one 128-lane slab = [z | (to-be-binarized z)].
    z2 = jnp.dot(h, w2_ref[...], preferred_element_type=jnp.float32) + b2_ref[...]

    n, l = z2.shape
    col = jax.lax.broadcasted_iota(jnp.int32, (n, l), 1)
    packed = z2
    # Binarize only the duplicated upper half; same group order as the torch loop.
    for lo, hi in ((23, 31), (20, 23), (0, 20)):
        glo, ghi = LATENT + lo, LATENT + hi
        mask = (col >= glo) & (col < ghi)
        masked = jnp.where(mask, z2, -jnp.inf)
        rowmax = jnp.max(masked, axis=-1, keepdims=True)
        # first column attaining the group max (torch.argmax tie-break); max+eq+min
        # kept instead of jnp.argmax for guaranteed Mosaic lowering.
        idx = jnp.min(jnp.where(mask & (z2 == rowmax), col, l),
                      axis=-1, keepdims=True)
        packed = jnp.where(mask, (col == idx).astype(z2.dtype), packed)

    out_ref[...] = packed                                               # single lane-dense store


def ae_encode_and_binarize(x_pad, w1, b1, w2_packed, b2_packed):
    """x_pad: (Np, D) f32, Np a multiple of TM -> packed (Np, 128) f32 = [z | binary]."""
    n_pad = x_pad.shape[0]
    grid = (pl.cdiv(n_pad, TM),)

    return pl.pallas_call(
        _ae_encode_binarize_kernel,
        grid=grid,
        in_specs=[
            pl.BlockSpec((TM, ESM_HIDDEN), lambda i: (i, 0)),           # x rows tiled
            pl.BlockSpec((ESM_HIDDEN, AE_HIDDEN), lambda i: (0, 0)),    # w1 resident
            pl.BlockSpec((1, AE_HIDDEN), lambda i: (0, 0)),             # b1 resident
            pl.BlockSpec((AE_HIDDEN, PACKED), lambda i: (0, 0)),        # [W2|W2] resident
            pl.BlockSpec((1, PACKED), lambda i: (0, 0)),                # [b2|b2] resident
        ],
        out_specs=pl.BlockSpec((TM, PACKED), lambda i: (i, 0)),         # packed z|binary
        out_shape=jax.ShapeDtypeStruct((n_pad, PACKED), jnp.float32),
        compiler_params=pltpu.CompilerParams(
            dimension_semantics=("parallel",)),                         # megacore-shardable
    )(x_pad, w1, b1, w2_packed, b2_packed)


# Jitted encode path; caches one executable per sequence-length bucket (Np).
_encode_jit = jax.jit(ae_encode_and_binarize)


def esm2_vae_forward(input_ids, attention_mask, params):
    """Reproduces ESM2VAEModel.forward on synthetic weights.

    input_ids, attention_mask: (1, S) int32 concrete arrays (eager, not jitted),
    mirroring the tokenizer output with batch dim 1.  Multiple proteins can be
    processed in one pallas_call by concatenating their valid embeddings before
    the bucketed encode (gives >1 grid step even for short sequences).
    """
    # --- ESM2 stand-in: deterministic token embedding lookup -------------------
    # TODO(synk): real ESM2 is a frozen pretrained HF transformer + HF tokenizer;
    # replaced by a deterministic embedding table (no clean Pallas equivalent for
    # a checkpoint).
    embeddings = jnp.take(params["emb_table"], input_ids[0], axis=0)    # (S, D)
    mask = attention_mask[0]                                            # (S,)

    # squeeze(0) + mask select + strip BOS/EOS (eager boolean indexing, like torch;
    # dynamic output shape -> cannot be jitted)
    valid_embeddings = embeddings[mask == 1][1:-1]                      # (N, D)

    n = valid_embeddings.shape[0]
    # bucket N to multiples of TM -> MXU-friendly M and few recompiles
    n_pad = max(TM, ((n + TM - 1) // TM) * TM)
    x_pad = jnp.pad(valid_embeddings, ((0, n_pad - n), (0, 0)))         # single eager pad

    packed = _encode_jit(x_pad, params["w1"], params["b1"],
                         params["w2_packed"], params["b2_packed"])

    z = packed[:n, :LATENT]
    binary = packed[:n, LATENT:]
    return (
        valid_embeddings,
        z,
        z[:, :CRAFTED_FEATURES],
        binary[:, :CRAFTED_FEATURES],
    )


def init_params(key):
    k0, k1, k2, k3, k4 = jax.random.split(key, 5)
    w2 = jax.random.normal(k3, (AE_HIDDEN, LATENT), jnp.float32) * 0.1
    b2 = jax.random.normal(k4, (1, LATENT), jnp.float32) * 0.01
    # lane-duplicated W2/b2 so the kernel's second matmul directly emits [z | z]
    w2_packed = jnp.concatenate([w2, w2], axis=1)                       # (H, 128)
    b2_packed = jnp.concatenate([b2, b2], axis=1)                       # (1, 128)
    return {
        "emb_table": jax.random.normal(k0, (VOCAB, ESM_HIDDEN), jnp.float32) * 0.5,
        "w1": jax.random.normal(k1, (ESM_HIDDEN, AE_HIDDEN), jnp.float32) * 0.1,
        "b1": jax.random.normal(k2, (1, AE_HIDDEN), jnp.float32) * 0.01,
        "w2_packed": w2_packed,
        "b2_packed": b2_packed,
    }


def _reference_z(valid_emb, params):
    """Pure-JAX encoder MLP reference."""
    w2 = params["w2_packed"][:, :LATENT]
    b2 = params["b2_packed"][:, :LATENT]
    h = jnp.maximum(valid_emb @ params["w1"] + params["b1"], 0.0)
    return h @ w2 + b2


def _reference_binarize(z):
    """Pure-JAX partitioned one-hot (torch.argmax first-occurrence semantics)."""
    cols = jnp.arange(z.shape[1])
    binary = z
    for lo, hi in ((23, 31), (20, 23), (0, 20)):
        idx = jnp.argmax(z[:, lo:hi], axis=-1) + lo
        onehot = jax.nn.one_hot(idx, z.shape[1], dtype=z.dtype)
        group = (cols >= lo) & (cols < hi)
        binary = jnp.where(group[None, :], onehot, binary)
    return binary


def _check_outputs(outs, params, n):
    valid_emb, z, z_crafted, binary_crafted = outs
    assert valid_emb.shape == (n, ESM_HIDDEN)
    assert z.shape == (n, LATENT)
    assert z_crafted.shape == (n, CRAFTED_FEATURES)
    assert binary_crafted.shape == (n, CRAFTED_FEATURES)
    # encoder MLP matches the pure-JAX reference (loose tol: MXU vs XLA f32 passes)
    z_ref = _reference_z(valid_emb, params)
    assert bool(jnp.allclose(z, z_ref, atol=2e-2, rtol=2e-2))
    assert bool(jnp.allclose(z_crafted, z[:, :CRAFTED_FEATURES]))
    # binarization matches argmax of the kernel's own z exactly (ties included)
    bin_ref = _reference_binarize(z)[:, :CRAFTED_FEATURES]
    assert bool(jnp.array_equal(binary_crafted, bin_ref))
    # structural checks: each group is a one-hot, remaining columns copied from z
    assert bool(jnp.all(jnp.sum(binary_crafted[:, :20], axis=-1) == 1.0))
    assert bool(jnp.all(jnp.sum(binary_crafted[:, 20:23], axis=-1) == 1.0))
    assert bool(jnp.all(jnp.sum(binary_crafted[:, 23:31], axis=-1) == 1.0))
    assert bool(jnp.array_equal(binary_crafted[:, 31:], z_crafted[:, 31:]))


if __name__ == "__main__":
    key = jax.random.PRNGKey(0)
    params = init_params(key)

    # Small synthetic tokenized "sequence": [CLS] + 10 residues + [EOS], all attended.
    seq_len = 12
    kid = jax.random.fold_in(key, 123)
    input_ids = jax.random.randint(kid, (1, seq_len), 0, VOCAB, dtype=jnp.int32)
    attention_mask = jnp.ones((1, seq_len), dtype=jnp.int32)

    outs = esm2_vae_forward(input_ids, attention_mask, params)
    jax.block_until_ready(outs)
    _check_outputs(outs, params, seq_len - 2)

    # Longer "protein" exercising a multi-tile grid (n=2048 -> grid=(2,), so the
    # pipeline double-buffers and v7x's second TensorCore gets a step).
    seq_len2 = 2050
    kid2 = jax.random.fold_in(key, 456)
    input_ids2 = jax.random.randint(kid2, (1, seq_len2), 0, VOCAB, dtype=jnp.int32)
    attention_mask2 = jnp.ones((1, seq_len2), dtype=jnp.int32)

    outs2 = esm2_vae_forward(input_ids2, attention_mask2, params)
    jax.block_until_ready(outs2)
    _check_outputs(outs2, params, seq_len2 - 2)

    print("KERNEL_OK")
</pallas_src>

<mosaic_0001>
module attributes {stable_mosaic.version = 11 : i64} {
  func.func @_ae_encode_binarize_kernel(%arg0: i32, %arg1: memref<1024x32xf32, #tpu.memory_space<vmem>>, %arg2: memref<32x128xf32, #tpu.memory_space<vmem>>, %arg3: memref<1x128xf32, #tpu.memory_space<vmem>>, %arg4: memref<128x128xf32, #tpu.memory_space<vmem>>, %arg5: memref<1x128xf32, #tpu.memory_space<vmem>>, %arg6: memref<1024x128xf32, #tpu.memory_space<vmem>>) attributes {dimension_semantics = [#tpu.dimension_semantics<parallel>], iteration_bounds = array<i64: 1>, scalar_prefetch = 0 : i64, scratch_operands = 0 : i64, tpu.core_type = #tpu.core_type<tc>, window_params = [{transform_indices = @transform_0, window_bounds = array<i64: 1024, 32>}, {pipeline_mode = #tpu.pipeline_mode<synchronous>, transform_indices = @transform_1, window_bounds = array<i64: 32, 128>}, {pipeline_mode = #tpu.pipeline_mode<synchronous>, transform_indices = @transform_2, window_bounds = array<i64: 1, 128>}, {pipeline_mode = #tpu.pipeline_mode<synchronous>, transform_indices = @transform_3, window_bounds = array<i64: 128, 128>}, {pipeline_mode = #tpu.pipeline_mode<synchronous>, transform_indices = @transform_4, window_bounds = array<i64: 1, 128>}, {transform_indices = @transform_5, window_bounds = array<i64: 1024, 128>}]} {
    %c0 = arith.constant 0 : index
    %c0_0 = arith.constant 0 : index
    %0 = vector.load %arg1[%c0, %c0_0] : memref<1024x32xf32, #tpu.memory_space<vmem>>, vector<1024x32xf32>
    %c0_1 = arith.constant 0 : index
    %c0_2 = arith.constant 0 : index
    %1 = vector.load %arg2[%c0_1, %c0_2] : memref<32x128xf32, #tpu.memory_space<vmem>>, vector<32x128xf32>
    %cst = arith.constant dense<0.000000e+00> : vector<1024x128xf32>
    %2 = tpu.matmul %0, %1, %cst {dimension_numbers = #tpu.dot_dimension_numbers<[1], [0], [0], [1], [0, 0, 1, 1], [], []>} : vector<1024x32xf32>, vector<32x128xf32>, vector<1024x128xf32> -> vector<1024x128xf32>
    %c0_3 = arith.constant 0 : index
    %c0_4 = arith.constant 0 : index
    %3 = vector.load %arg3[%c0_3, %c0_4] : memref<1x128xf32, #tpu.memory_space<vmem>>, vector<1x128xf32>
    %4 = vector.broadcast %3 : vector<1x128xf32> to vector<1024x128xf32>
    %5 = arith.addf %2, %4 : vector<1024x128xf32>
    %cst_5 = arith.constant 0.000000e+00 : f32
    %6 = vector.broadcast %cst_5 : f32 to vector<1024x128xf32>
    %7 = arith.maximumf %5, %6 : vector<1024x128xf32>
    %c0_6 = arith.constant 0 : index
    %c0_7 = arith.constant 0 : index
    %8 = vector.load %arg4[%c0_6, %c0_7] : memref<128x128xf32, #tpu.memory_space<vmem>>, vector<128x128xf32>
    %cst_8 = arith.constant dense<0.000000e+00> : vector<1024x128xf32>
    %9 = tpu.matmul %7, %8, %cst_8 {dimension_numbers = #tpu.dot_dimension_numbers<[1], [0], [0], [1], [0, 0, 1, 1], [], []>} : vector<1024x128xf32>, vector<128x128xf32>, vector<1024x128xf32> -> vector<1024x128xf32>
    %c0_9 = arith.constant 0 : index
    %c0_10 = arith.constant 0 : index
    %10 = vector.load %arg5[%c0_9, %c0_10] : memref<1x128xf32, #tpu.memory_space<vmem>>, vector<1x128xf32>
    %11 = vector.broadcast %10 : vector<1x128xf32> to vector<1024x128xf32>
    %12 = arith.addf %9, %11 : vector<1024x128xf32>
    %13 = tpu.iota {dimensions = array<i32: 1>} : vector<1024x128xi32>
    %c87_i32 = arith.constant 87 : i32
    %14 = vector.broadcast %c87_i32 : i32 to vector<1024x128xi32>
    %15 = arith.cmpi sge, %13, %14 : vector<1024x128xi32>
    %c95_i32 = arith.constant 95 : i32
    %16 = vector.broadcast %c95_i32 : i32 to vector<1024x128xi32>
    %17 = arith.cmpi slt, %13, %16 : vector<1024x128xi32>
    %18 = arith.andi %15, %17 : vector<1024x128xi1>
    %cst_11 = arith.constant 0xFF800000 : f32
    %19 = vector.broadcast %cst_11 : f32 to vector<1024x128xf32>
    %20 = arith.select %18, %12, %19 : vector<1024x128xi1>, vector<1024x128xf32>
    %cst_12 = arith.constant dense<0xFF800000> : vector<1024xf32>
    %21 = vector.multi_reduction <maximumf>, %20, %cst_12 [1] : vector<1024x128xf32> to vector<1024xf32>
    %22 = vector.shape_cast %21 : vector<1024xf32> to vector<1024x1xf32>
    %23 = vector.broadcast %22 : vector<1024x1xf32> to vector<1024x128xf32>
    %24 = arith.cmpf oeq, %12, %23 : vector<1024x128xf32>
    %25 = arith.andi %18, %24 : vector<1024x128xi1>
    %c128_i32 = arith.constant 128 : i32
    %26 = vector.broadcast %c128_i32 : i32 to vector<1024x128xi32>
    %27 = arith.select %25, %13, %26 : vector<1024x128xi1>, vector<1024x128xi32>
    %cst_13 = arith.constant dense<2147483647> : vector<1024xi32>
    %28 = vector.multi_reduction <minsi>, %27, %cst_13 [1] : vector<1024x128xi32> to vector<1024xi32>
    %29 = vector.shape_cast %28 : vector<1024xi32> to vector<1024x1xi32>
    %30 = vector.broadcast %29 : vector<1024x1xi32> to vector<1024x128xi32>
    %31 = arith.cmpi eq, %13, %30 : vector<1024x128xi32>
    %32 = arith.extui %31 : vector<1024x128xi1> to vector<1024x128xi32>
    %33 = arith.sitofp %32 : vector<1024x128xi32> to vector<1024x128xf32>
    %34 = arith.select %18, %33, %12 : vector<1024x128xi1>, vector<1024x128xf32>
    %c84_i32 = arith.constant 84 : i32
    %35 = vector.broadcast %c84_i32 : i32 to vector<1024x128xi32>
    %36 = arith.cmpi sge, %13, %35 : vector<1024x128xi32>
    %c87_i32_14 = arith.constant 87 : i32
    %37 = vector.broadcast %c87_i32_14 : i32 to vector<1024x128xi32>
    %38 = arith.cmpi slt, %13, %37 : vector<1024x128xi32>
    %39 = arith.andi %36, %38 : vector<1024x128xi1>
    %cst_15 = arith.constant 0xFF800000 : f32
    %40 = vector.broadcast %cst_15 : f32 to vector<1024x128xf32>
    %41 = arith.select %39, %12, %40 : vector<1024x128xi1>, vector<1024x128xf32>
    %cst_16 = arith.constant dense<0xFF800000> : vector<1024xf32>
    %42 = vector.multi_reduction <maximumf>, %41, %cst_16 [1] : vector<1024x128xf32> to vector<1024xf32>
    %43 = vector.shape_cast %42 : vector<1024xf32> to vector<1024x1xf32>
    %44 = vector.broadcast %43 : vector<1024x1xf32> to vector<1024x128xf32>
    %45 = arith.cmpf oeq, %12, %44 : vector<1024x128xf32>
    %46 = arith.andi %39, %45 : vector<1024x128xi1>
    %c128_i32_17 = arith.constant 128 : i32
    %47 = vector.broadcast %c128_i32_17 : i32 to vector<1024x128xi32>
    %48 = arith.select %46, %13, %47 : vector<1024x128xi1>, vector<1024x128xi32>
    %cst_18 = arith.constant dense<2147483647> : vector<1024xi32>
    %49 = vector.multi_reduction <minsi>, %48, %cst_18 [1] : vector<1024x128xi32> to vector<1024xi32>
    %50 = vector.shape_cast %49 : vector<1024xi32> to vector<1024x1xi32>
    %51 = vector.broadcast %50 : vector<1024x1xi32> to vector<1024x128xi32>
    %52 = arith.cmpi eq, %13, %51 : vector<1024x128xi32>
    %53 = arith.extui %52 : vector<1024x128xi1> to vector<1024x128xi32>
    %54 = arith.sitofp %53 : vector<1024x128xi32> to vector<1024x128xf32>
    %55 = arith.select %39, %54, %34 : vector<1024x128xi1>, vector<1024x128xf32>
    %c64_i32 = arith.constant 64 : i32
    %56 = vector.broadcast %c64_i32 : i32 to vector<1024x128xi32>
    %57 = arith.cmpi sge, %13, %56 : vector<1024x128xi32>
    %c84_i32_19 = arith.constant 84 : i32
    %58 = vector.broadcast %c84_i32_19 : i32 to vector<1024x128xi32>
    %59 = arith.cmpi slt, %13, %58 : vector<1024x128xi32>
    %60 = arith.andi %57, %59 : vector<1024x128xi1>
    %cst_20 = arith.constant 0xFF800000 : f32
    %61 = vector.broadcast %cst_20 : f32 to vector<1024x128xf32>
    %62 = arith.select %60, %12, %61 : vector<1024x128xi1>, vector<1024x128xf32>
    %cst_21 = arith.constant dense<0xFF800000> : vector<1024xf32>
    %63 = vector.multi_reduction <maximumf>, %62, %cst_21 [1] : vector<1024x128xf32> to vector<1024xf32>
    %64 = vector.shape_cast %63 : vector<1024xf32> to vector<1024x1xf32>
    %65 = vector.broadcast %64 : vector<1024x1xf32> to vector<1024x128xf32>
    %66 = arith.cmpf oeq, %12, %65 : vector<1024x128xf32>
    %67 = arith.andi %60, %66 : vector<1024x128xi1>
    %c128_i32_22 = arith.constant 128 : i32
    %68 = vector.broadcast %c128_i32_22 : i32 to vector<1024x128xi32>
    %69 = arith.select %67, %13, %68 : vector<1024x128xi1>, vector<1024x128xi32>
    %cst_23 = arith.constant dense<2147483647> : vector<1024xi32>
    %70 = vector.multi_reduction <minsi>, %69, %cst_23 [1] : vector<1024x128xi32> to vector<1024xi32>
    %71 = vector.shape_cast %70 : vector<1024xi32> to vector<1024x1xi32>
    %72 = vector.broadcast %71 : vector<1024x1xi32> to vector<1024x128xi32>
    %73 = arith.cmpi eq, %13, %72 : vector<1024x128xi32>
    %74 = arith.extui %73 : vector<1024x128xi1> to vector<1024x128xi32>
    %75 = arith.sitofp %74 : vector<1024x128xi32> to vector<1024x128xf32>
    %76 = arith.select %60, %75, %55 : vector<1024x128xi1>, vector<1024x128xf32>
    %c0_24 = arith.constant 0 : index
    %c0_25 = arith.constant 0 : index
    %77 = vector.load %arg6[%c0_24, %c0_25] : memref<1024x128xf32, #tpu.memory_space<vmem>>, vector<1024x128xf32>
    tpu.vector_store %arg6[%c0_24, %c0_25], %76 {strides = array<i32>} : memref<1024x128xf32, #tpu.memory_space<vmem>>, vector<1024x128xf32>,
    return
  }
  func.func @transform_0(%arg0: i32) -> (i32, i32) {
    %c0_i32 = arith.constant 0 : i32
    %c0_i32_0 = arith.constant 0 : i32
    return %arg0, %c0_i32 : i32, i32
  }
  func.func @transform_1(%arg0: i32) -> (i32, i32) {
    %c0_i32 = arith.constant 0 : i32
    %c0_i32_0 = arith.constant 0 : i32
    %c0_i32_1 = arith.constant 0 : i32
    return %c0_i32, %c0_i32_0 : i32, i32
  }
  func.func @transform_2(%arg0: i32) -> (i32, i32) {
    %c0_i32 = arith.constant 0 : i32
    %c0_i32_0 = arith.constant 0 : i32
    %c0_i32_1 = arith.constant 0 : i32
    return %c0_i32, %c0_i32_0 : i32, i32
  }
  func.func @transform_3(%arg0: i32) -> (i32, i32) {
    %c0_i32 = arith.constant 0 : i32
    %c0_i32_0 = arith.constant 0 : i32
    %c0_i32_1 = arith.constant 0 : i32
    return %c0_i32, %c0_i32_0 : i32, i32
  }
  func.func @transform_4(%arg0: i32) -> (i32, i32) {
    %c0_i32 = arith.constant 0 : i32
    %c0_i32_0 = arith.constant 0 : i32
    %c0_i32_1 = arith.constant 0 : i32
    return %c0_i32, %c0_i32_0 : i32, i32
  }
  func.func @transform_5(%arg0: i32) -> (i32, i32) {
    %c0_i32 = arith.constant 0 : i32
    %c0_i32_0 = arith.constant 0 : i32
    return %arg0, %c0_i32 : i32, i32
  }
}

</mosaic_0001>

<llo_original>
// kernel: ae_encode_and_binarize.1
$region0: #{ae_encode_and_binarize.1}
  #allocation0 [shape = 'u32[]', space=smem, size = 0x4, offset = 0x4, fixed_abs, tag = 'smem constant byte address 0x4 - core index']
  #allocation1 [shape = 'u32[144,128]{1,0:T(1,128)}', space=vmem, size = 0x12000, scoped, tag = 'internal scratch']
  %s0 = inlined_call_operand.vmem [shape: f32[1024,32], index: 0, kind: input, shape index: {}]
  %s1 = inlined_call_operand.vmem [shape: f32[32,128], index: 1, kind: input, shape index: {}]
  %s2 = inlined_call_operand.vmem [shape: f32[1,128], index: 2, kind: input, shape index: {}]
  %s3 = inlined_call_operand.vmem [shape: f32[128,128], index: 3, kind: input, shape index: {}]
  %s4 = inlined_call_operand.vmem [shape: f32[1,128], index: 4, kind: input, shape index: {}]
  %s5 = inlined_call_operand.hbm [shape: f32[1024,128], index: 5, kind: output, shape index: {}]
  %s6 = sld [smem:[#allocation0]]
  $region30: #{ae_encode_and_binarize.1} parent=0
    _
  %s8 = ssub.s32 1, %s6
  %s9 = scalar_select 0, %s8, %s6
  $region1: #{ae_encode_and_binarize.1} parent=0
    #allocation2 [shape = 'u8[524288]{0}', space=vmem, size = 0x80000, scoped, tag = 'output window, operand 0, single buffered']
    #allocation3 [shape = 's32[1]{0}', space=sflag, size = 0x4, scoped, tag = 'scoped memory for ae_encode_and_binarize.1']
    %10 = vsyncpa [#allocation3], 0
    // Predicated region
    $region2: #{ae_encode_and_binarize.1} parent=1 // pred_check
      _
    $region3: #{ae_encode_and_binarize.1} parent=1 // pred_check_branch
      %12 = sbr.rel (0) target = $region5
    $region4: #{ae_encode_and_binarize.1} parent=1 // pred_region
      _
    $region5: #{ae_encode_and_binarize.1} parent=1 // pred_fallthru
      _
    // Predicated region
    $region6: #{ae_encode_and_binarize.1} parent=1 // pred_check
      _
    $region7: #{ae_encode_and_binarize.1} parent=1 // pred_check_branch
      %14 = sbr.rel (0) target = $region9
    $region8: #{ae_encode_and_binarize.1} parent=1 // pred_region
      _
    $region9: #{ae_encode_and_binarize.1} parent=1 // pred_fallthru
      _
    // Predicated region
    $region10: #{ae_encode_and_binarize.1} parent=1 // pred_check
      _
    $region11: #{ae_encode_and_binarize.1} parent=1 // pred_check_branch
      %16 = sbr.rel (0) target = $region13
    $region12: #{ae_encode_and_binarize.1} parent=1 // pred_region
      _
    $region13: #{ae_encode_and_binarize.1} parent=1 // pred_fallthru
      _
    // Predicated region
    $region14: #{ae_encode_and_binarize.1} parent=1 // pred_check
      _
    $region15: #{ae_encode_and_binarize.1} parent=1 // pred_check_branch
      %18 = sbr.rel (0) target = $region17
    $region16: #{ae_encode_and_binarize.1} parent=1 // pred_region
      _
    $region17: #{ae_encode_and_binarize.1} parent=1 // pred_fallthru
      _
    // Predicated region
    $region18: #{ae_encode_and_binarize.1} parent=1 // pred_check
      _
    $region19: #{ae_encode_and_binarize.1} parent=1 // pred_check_branch
      %20 = sbr.rel (0) target = $region21
    $region20: #{ae_encode_and_binarize.1} parent=1 // pred_region
      _
    $region21: #{ae_encode_and_binarize.1} parent=1 // pred_fallthru
      _
    %v21 = vld [vmem:[%s0] sm:$0xff]
    %v22 = vld [vmem:[%s0 + $0x8] sm:$0xff]
    %v23 = vld [vmem:[%s0 + $0x10] sm:$0xff]
    %v24 = vld [vmem:[%s0 + $0x18] sm:$0xff]
    %v25 = vld [vmem:[%s0 + $0x20] sm:$0xff]
    %v26 = vld [vmem:[%s0 + $0x28] sm:$0xff]
    %v27 = vld [vmem:[%s0 + $0x30] sm:$0xff]
    %v28 = vld [vmem:[%s0 + $0x38] sm:$0xff]
    %v29 = vld [vmem:[%s0 + $0x40] sm:$0xff]
    %v30 = vld [vmem:[%s0 + $0x48] sm:$0xff]
    %v31 = vld [vmem:[%s0 + $0x50] sm:$0xff]
    %v32 = vld [vmem:[%s0 + $0x58] sm:$0xff]
    %v33 = vld [vmem:[%s0 + $0x60] sm:$0xff]
    %v34 = vld [vmem:[%s0 + $0x68] sm:$0xff]
    %v35 = vld [vmem:[%s0 + $0x70] sm:$0xff]
    %v36 = vld [vmem:[%s0 + $0x78] sm:$0xff]
    %v37 = vld [vmem:[%s0 + $0x80] sm:$0xff]
    %v38 = vld [vmem:[%s0 + $0x88] sm:$0xff]
    %v39 = vld [vmem:[%s0 + $0x90] sm:$0xff]
    %v40 = vld [vmem:[%s0 + $0x98] sm:$0xff]
    %v41 = vld [vmem:[%s0 + $0xa0] sm:$0xff]
    %v42 = vld [vmem:[%s0 + $0xa8] sm:$0xff]
    %v43 = vld [vmem:[%s0 + $0xb0] sm:$0xff]
    %v44 = vld [vmem:[%s0 + $0xb8] sm:$0xff]
    %v45 = vld [vmem:[%s0 + $0xc0] sm:$0xff]
    %v46 = vld [vmem:[%s0 + $0xc8] sm:$0xff]
    %v47 = vld [vmem:[%s0 + $0xd0] sm:$0xff]
    %v48 = vld [vmem:[%s0 + $0xd8] sm:$0xff]
    %v49 = vld [vmem:[%s0 + $0xe0] sm:$0xff]
    %v50 = vld [vmem:[%s0 + $0xe8] sm:$0xff]
    %v51 = vld [vmem:[%s0 + $0xf0] sm:$0xff]
    %v52 = vld [vmem:[%s0 + $0xf8] sm:$0xff]
    %v53 = vld [vmem:[%s0 + $0x100] sm:$0xff]
    %v54 = vld [vmem:[%s0 + $0x108] sm:$0xff]
    %v55 = vld [vmem:[%s0 + $0x110] sm:$0xff]
    %v56 = vld [vmem:[%s0 + $0x118] sm:$0xff]
    %v57 = vld [vmem:[%s0 + $0x120] sm:$0xff]
    %v58 = vld [vmem:[%s0 + $0x128] sm:$0xff]
    %v59 = vld [vmem:[%s0 + $0x130] sm:$0xff]
    %v60 = vld [vmem:[%s0 + $0x138] sm:$0xff]
    %v61 = vld [vmem:[%s0 + $0x140] sm:$0xff]
    %v62 = vld [vmem:[%s0 + $0x148] sm:$0xff]
    %v63 = vld [vmem:[%s0 + $0x150] sm:$0xff]
    %v64 = vld [vmem:[%s0 + $0x158] sm:$0xff]
    %v65 = vld [vmem:[%s0 + $0x160] sm:$0xff]
    %v66 = vld [vmem:[%s0 + $0x168] sm:$0xff]
    %v67 = vld [vmem:[%s0 + $0x170] sm:$0xff]
    %v68 = vld [vmem:[%s0 + $0x178] sm:$0xff]
    %v69 = vld [vmem:[%s0 + $0x180] sm:$0xff]
    %v70 = vld [vmem:[%s0 + $0x188] sm:$0xff]
    %v71 = vld [vmem:[%s0 + $0x190] sm:$0xff]
    %v72 = vld [vmem:[%s0 + $0x198] sm:$0xff]
    %v73 = vld [vmem:[%s0 + $0x1a0] sm:$0xff]
    %v74 = vld [vmem:[%s0 + $0x1a8] sm:$0xff]
    %v75 = vld [vmem:[%s0 + $0x1b0] sm:$0xff]
    %v76 = vld [vmem:[%s0 + $0x1b8] sm:$0xff]
    %v77 = vld [vmem:[%s0 + $0x1c0] sm:$0xff]
    %v78 = vld [vmem:[%s0 + $0x1c8] sm:$0xff]
    %v79 = vld [vmem:[%s0 + $0x1d0] sm:$0xff]
    %v80 = vld [vmem:[%s0 + $0x1d8] sm:$0xff]
    %v81 = vld [vmem:[%s0 + $0x1e0] sm:$0xff]
    %v82 = vld [vmem:[%s0 + $0x1e8] sm:$0xff]
    %v83 = vld [vmem:[%s0 + $0x1f0] sm:$0xff]
    %v84 = vld [vmem:[%s0 + $0x1f8] sm:$0xff]
    %v85 = vld [vmem:[%s0 + $0x200] sm:$0xff]
    %v86 = vld [vmem:[%s0 + $0x208] sm:$0xff]
    %v87 = vld [vmem:[%s0 + $0x210] sm:$0xff]
    %v88 = vld [vmem:[%s0 + $0x218] sm:$0xff]
    %v89 = vld [vmem:[%s0 + $0x220] sm:$0xff]
    %v90 = vld [vmem:[%s0 + $0x228] sm:$0xff]
    %v91 = vld [vmem:[%s0 + $0x230] sm:$0xff]
    %v92 = vld [vmem:[%s0 + $0x238] sm:$0xff]
    %v93 = vld [vmem:[%s0 + $0x240] sm:$0xff]
    %v94 = vld [vmem:[%s0 + $0x248] sm:$0xff]
    %v95 = vld [vmem:[%s0 + $0x250] sm:$0xff]
    %v96 = vld [vmem:[%s0 + $0x258] sm:$0xff]
    %v97 = vld [vmem:[%s0 + $0x260] sm:$0xff]
    %v98 = vld [vmem:[%s0 + $0x268] sm:$0xff]
    %v99 = vld [vmem:[%s0 + $0x270] sm:$0xff]
    %v100 = vld [vmem:[%s0 + $0x278] sm:$0xff]
    %v101 = vld [vmem:[%s0 + $0x280] sm:$0xff]
    %v102 = vld [vmem:[%s0 + $0x288] sm:$0xff]
    %v103 = vld [vmem:[%s0 + $0x290] sm:$0xff]
    %v104 = vld [vmem:[%s0 + $0x298] sm:$0xff]
    %v105 = vld [vmem:[%s0 + $0x2a0] sm:$0xff]
    %v106 = vld [vmem:[%s0 + $0x2a8] sm:$0xff]
    %v107 = vld [vmem:[%s0 + $0x2b0] sm:$0xff]
    %v108 = vld [vmem:[%s0 + $0x2b8] sm:$0xff]
    %v109 = vld [vmem:[%s0 + $0x2c0] sm:$0xff]
    %v110 = vld [vmem:[%s0 + $0x2c8] sm:$0xff]
    %v111 = vld [vmem:[%s0 + $0x2d0] sm:$0xff]
    %v112 = vld [vmem:[%s0 + $0x2d8] sm:$0xff]
    %v113 = vld [vmem:[%s0 + $0x2e0] sm:$0xff]
    %v114 = vld [vmem:[%s0 + $0x2e8] sm:$0xff]
    %v115 = vld [vmem:[%s0 + $0x2f0] sm:$0xff]
    %v116 = vld [vmem:[%s0 + $0x2f8] sm:$0xff]
    %v117 = vld [vmem:[%s0 + $0x300] sm:$0xff]
    %v118 = vld [vmem:[%s0 + $0x308] sm:$0xff]
    %v119 = vld [vmem:[%s0 + $0x310] sm:$0xff]
    %v120 = vld [vmem:[%s0 + $0x318] sm:$0xff]
    %v121 = vld [vmem:[%s0 + $0x320] sm:$0xff]
    %v122 = vld [vmem:[%s0 + $0x328] sm:$0xff]
    %v123 = vld [vmem:[%s0 + $0x330] sm:$0xff]
    %v124 = vld [vmem:[%s0 + $0x338] sm:$0xff]
    %v125 = vld [vmem:[%s0 + $0x340] sm:$0xff]
    %v126 = vld [vmem:[%s0 + $0x348] sm:$0xff]
    %v127 = vld [vmem:[%s0 + $0x350] sm:$0xff]
    %v128 = vld [vmem:[%s0 + $0x358] sm:$0xff]
    %v129 = vld [vmem:[%s0 + $0x360] sm:$0xff]
    %v130 = vld [vmem:[%s0 + $0x368] sm:$0xff]
    %v131 = vld [vmem:[%s0 + $0x370] sm:$0xff]
    %v132 = vld [vmem:[%s0 + $0x378] sm:$0xff]
    %v133 = vld [vmem:[%s0 + $0x380] sm:$0xff]
    %v134 = vld [vmem:[%s0 + $0x388] sm:$0xff]
    %v135 = vld [vmem:[%s0 + $0x390] sm:$0xff]
    %v136 = vld [vmem:[%s0 + $0x398] sm:$0xff]
    %v137 = vld [vmem:[%s0 + $0x3a0] sm:$0xff]
    %v138 = vld [vmem:[%s0 + $0x3a8] sm:$0xff]
    %v139 = vld [vmem:[%s0 + $0x3b0] sm:$0xff]
    %v140 = vld [vmem:[%s0 + $0x3b8] sm:$0xff]
    %v141 = vld [vmem:[%s0 + $0x3c0] sm:$0xff]
    %v142 = vld [vmem:[%s0 + $0x3c8] sm:$0xff]
    %v143 = vld [vmem:[%s0 + $0x3d0] sm:$0xff]
    %v144 = vld [vmem:[%s0 + $0x3d8] sm:$0xff]
    %v145 = vld [vmem:[%s0 + $0x3e0] sm:$0xff]
    %v146 = vld [vmem:[%s0 + $0x3e8] sm:$0xff]
    %v147 = vld [vmem:[%s0 + $0x3f0] sm:$0xff]
    %v148 = vld [vmem:[%s0 + $0x3f8] sm:$0xff]
    %v149 = vld [vmem:[%s1] sm:$0xff]
    %v150 = vld [vmem:[%s1 + $0x8] sm:$0xff]
    %v151 = vld [vmem:[%s1 + $0x10] sm:$0xff]
    %v152 = vld [vmem:[%s1 + $0x18] sm:$0xff]
    %v153 = vld [vmem:[%s2] sm:$0x1]
    %v155 = vlaneseq
    %v156 = vshrl.u32 %v155, 7
    %v157 = vsub.s32 0, %v156
    %v158 = vrot.slane %v153, %v157
    %vm160 = vcmask 261120
    %v162 = vsel %vm160, %v21, 0
    %v165 = vsel %vm160, %v22, 0
    %v168 = vsel %vm160, %v23, 0
    %v171 = vsel %vm160, %v24, 0
    %v174 = vsel %vm160, %v25, 0
    %v177 = vsel %vm160, %v26, 0
    %v180 = vsel %vm160, %v27, 0
    %v183 = vsel %vm160, %v28, 0
    %v186 = vsel %vm160, %v29, 0
    %v189 = vsel %vm160, %v30, 0
    %v192 = vsel %vm160, %v31, 0
    %v195 = vsel %vm160, %v32, 0
    %v198 = vsel %vm160, %v33, 0
    %v201 = vsel %vm160, %v34, 0
    %v204 = vsel %vm160, %v35, 0
    %v207 = vsel %vm160, %v36, 0
    %v210 = vsel %vm160, %v37, 0
    %v213 = vsel %vm160, %v38, 0
    %v216 = vsel %vm160, %v39, 0
    %v219 = vsel %vm160, %v40, 0
    %v222 = vsel %vm160, %v41, 0
    %v225 = vsel %vm160, %v42, 0
    %v228 = vsel %vm160, %v43, 0
    %v231 = vsel %vm160, %v44, 0
    %v234 = vsel %vm160, %v45, 0
    %v237 = vsel %vm160, %v46, 0
    %v240 = vsel %vm160, %v47, 0
    %v243 = vsel %vm160, %v48, 0
    %v246 = vsel %vm160, %v49, 0
    %v249 = vsel %vm160, %v50, 0
    %v252 = vsel %vm160, %v51, 0
    %v255 = vsel %vm160, %v52, 0
    %v258 = vsel %vm160, %v53, 0
    %v261 = vsel %vm160, %v54, 0
    %v264 = vsel %vm160, %v55, 0
    %v267 = vsel %vm160, %v56, 0
    %v270 = vsel %vm160, %v57, 0
    %v273 = vsel %vm160, %v58, 0
    %v276 = vsel %vm160, %v59, 0
    %v279 = vsel %vm160, %v60, 0
    %v282 = vsel %vm160, %v61, 0
    %v285 = vsel %vm160, %v62, 0
    %v288 = vsel %vm160, %v63, 0
    %v291 = vsel %vm160, %v64, 0
    %v294 = vsel %vm160, %v65, 0
    %v297 = vsel %vm160, %v66, 0
    %v300 = vsel %vm160, %v67, 0
    %v303 = vsel %vm160, %v68, 0
    %v306 = vsel %vm160, %v69, 0
    %v309 = vsel %vm160, %v70, 0
    %v312 = vsel %vm160, %v71, 0
    %v315 = vsel %vm160, %v72, 0
    %v318 = vsel %vm160, %v73, 0
    %v321 = vsel %vm160, %v74, 0
    %v324 = vsel %vm160, %v75, 0
    %v327 = vsel %vm160, %v76, 0
    %v330 = vsel %vm160, %v77, 0
    %v333 = vsel %vm160, %v78, 0
    %v336 = vsel %vm160, %v79, 0
    %v339 = vsel %vm160, %v80, 0
    %v342 = vsel %vm160, %v81, 0
    %v345 = vsel %vm160, %v82, 0
    %v348 = vsel %vm160, %v83, 0
    %v351 = vsel %vm160, %v84, 0
    %v354 = vsel %vm160, %v85, 0
    %v357 = vsel %vm160, %v86, 0
    %v360 = vsel %vm160, %v87, 0
    %v363 = vsel %vm160, %v88, 0
    %v366 = vsel %vm160, %v89, 0
    %v369 = vsel %vm160, %v90, 0
    %v372 = vsel %vm160, %v91, 0
    %v375 = vsel %vm160, %v92, 0
    %v378 = vsel %vm160, %v93, 0
    %v381 = vsel %vm160, %v94, 0
    %v384 = vsel %vm160, %v95, 0
    %v387 = vsel %vm160, %v96, 0
    %v390 = vsel %vm160, %v97, 0
    %v393 = vsel %vm160, %v98, 0
    %v396 = vsel %vm160, %v99, 0
    %v399 = vsel %vm160, %v100, 0
    %v402 = vsel %vm160, %v101, 0
    %v405 = vsel %vm160, %v102, 0
    %v408 = vsel %vm160, %v103, 0
    %v411 = vsel %vm160, %v104, 0
    %v414 = vsel %vm160, %v105, 0
    %v417 = vsel %vm160, %v106, 0
    %v420 = vsel %vm160, %v107, 0
    %v423 = vsel %vm160, %v108, 0
    %v426 = vsel %vm160, %v109, 0
    %v429 = vsel %vm160, %v110, 0
    %v432 = vsel %vm160, %v111, 0
    %v435 = vsel %vm160, %v112, 0
    %v438 = vsel %vm160, %v113, 0
    %v441 = vsel %vm160, %v114, 0
    %v444 = vsel %vm160, %v115, 0
    %v447 = vsel %vm160, %v116, 0
    %v450 = vsel %vm160, %v117, 0
    %v453 = vsel %vm160, %v118, 0
    %v456 = vsel %vm160, %v119, 0
    %v459 = vsel %vm160, %v120, 0
    %v462 = vsel %vm160, %v121, 0
    %v465 = vsel %vm160, %v122, 0
    %v468 = vsel %vm160, %v123, 0
    %v471 = vsel %vm160, %v124, 0
    %v474 = vsel %vm160, %v125, 0
    %v477 = vsel %vm160, %v126, 0
    %v480 = vsel %vm160, %v127, 0
    %v483 = vsel %vm160, %v128, 0
    %v486 = vsel %vm160, %v129, 0
    %v489 = vsel %vm160, %v130, 0
    %v492 = vsel %vm160, %v131, 0
    %v495 = vsel %vm160, %v132, 0
    %v498 = vsel %vm160, %v133, 0
    %v501 = vsel %vm160, %v134, 0
    %v504 = vsel %vm160, %v135, 0
    %v507 = vsel %vm160, %v136, 0
    %v510 = vsel %vm160, %v137, 0
    %v513 = vsel %vm160, %v138, 0
    %v516 = vsel %vm160, %v139, 0
    %v519 = vsel %vm160, %v140, 0
    %v522 = vsel %vm160, %v141, 0
    %v525 = vsel %vm160, %v142, 0
    %v528 = vsel %vm160, %v143, 0
    %v531 = vsel %vm160, %v144, 0
    %v534 = vsel %vm160, %v145, 0
    %v537 = vsel %vm160, %v146, 0
    %v540 = vsel %vm160, %v147, 0
    %v543 = vsel %vm160, %v148, 0
    %545 = vmatprep.subr.mxu0 0.0
    %546 = vmatpush1.msra.mxu0 %v149
    %547 = vmatprep.subr.mxu0 0.0
    %548 = vmatpush1.msra.mxu0 %v150
    %549 = vmatprep.subr.mxu0 0.0
    %550 = vmatpush1.msra.mxu0 %v151
    %551 = vmatprep.subr.mxu0 0.0
    %552 = vmatpush1.msra.mxu0 %v152
    %553 = vmatprep.subr.mxu0 0.0
    %554 = vmatpush1.msra.mxu0 0.0
    %555 = vmatprep.subr.mxu0 0.0
    %556 = vmatpush1.msra.mxu0 0.0
    %557 = vmatprep.subr.mxu0 0.0
    %558 = vmatpush1.msra.mxu0 0.0
    %559 = vmatprep.subr.mxu0 0.0
    %560 = vmatpush1.msra.mxu0 0.0
    %561 = vmatprep.subr.mxu0 0.0
    %562 = vmatpush1.msra.mxu0 0.0
    %563 = vmatprep.subr.mxu0 0.0
    %564 = vmatpush1.msra.mxu0 0.0
    %565 = vmatprep.subr.mxu0 0.0
    %566 = vmatpush1.msra.mxu0 0.0
    %567 = vmatprep.subr.mxu0 0.0
    %568 = vmatpush1.msra.mxu0 0.0
    %569 = vmatprep.subr.mxu0 0.0
    %570 = vmatpush1.msra.mxu0 0.0
    %571 = vmatprep.subr.mxu0 0.0
    %572 = vmatpush1.msra.mxu0 0.0
    %573 = vmatprep.subr.mxu0 0.0
    %574 = vmatpush1.msra.mxu0 0.0
    %575 = vmatprep.subr.mxu0 0.0
    %576 = vmatpush1.msra.mxu0 0.0
    %577 = vmatprep.subr.mxu0 0.0
    %578 = vmatpush1.msra.mxu0 0.0
    %579 = vmatprep.subr.mxu0 0.0
    %580 = vmatpush1.msra.mxu0 0.0
    %581 = vmatprep.subr.mxu0 0.0
    %582 = vmatpush1.msra.mxu0 0.0
    %583 = vmatprep.subr.mxu0 0.0
    %584 = vmatpush1.msra.mxu0 0.0
    %585 = vmatprep.subr.mxu0 0.0
    %586 = vmatpush1.msra.mxu0 0.0
    %587 = vmatprep.subr.mxu0 0.0
    %588 = vmatpush1.msra.mxu0 0.0
    %589 = vmatprep.subr.mxu0 0.0
    %590 = vmatpush1.msra.mxu0 0.0
    %591 = vmatprep.subr.mxu0 0.0
    %592 = vmatpush1.msra.mxu0 0.0
    %593 = vmatprep.subr.mxu0 0.0
    %594 = vmatpush1.msra.mxu0 0.0
    %595 = vmatprep.subr.mxu0 0.0
    %596 = vmatpush1.msra.mxu0 0.0
    %597 = vmatprep.subr.mxu0 0.0
    %598 = vmatpush1.msra.mxu0 0.0
    %599 = vmatprep.subr.mxu0 0.0
    %600 = vmatpush1.msra.mxu0 0.0
    %601 = vmatprep.subr.mxu0 0.0
    %602 = vmatpush1.msra.mxu0 0.0
    %603 = vmatprep.subr.mxu0 0.0
    %604 = vmatpush1.msra.mxu0 0.0
    %605 = vmatprep.subr.mxu0 0.0
    %606 = vmatpush1.msra.mxu0 0.0
    %607 = vmatprep.subr.mxu0 0.0
    %608 = vmatpush1.msra.mxu0 0.0
    %609 = vmatprep.mubr.f32.mxu0 0.0
    %610 = vmatmul.mubr.f32.gmra.mrb[0].mxu0 %v162
    %v611 = vpop.f32.mrb[0].mxu0
    %v612 = vadd.f32 %v158, %v611
    %v613 = vpop.f32.mrb[0].mxu0
    %614 = vmatprep.mubr.f32.mxu0 0.0
    %615 = vmatmul.mubr.f32.gmra.mrb[0].mxu0 %v165
    %v616 = vpop.f32.mrb[0].mxu0
    %v617 = vadd.f32 %v158, %v616
    %v618 = vpop.f32.mrb[0].mxu0
    %619 = vmatprep.mubr.f32.mxu0 0.0
    %620 = vmatmul.mubr.f32.gmra.mrb[0].mxu0 %v168
    %v621 = vpop.f32.mrb[0].mxu0
    %v622 = vadd.f32 %v158, %v621
    %v623 = vpop.f32.mrb[0].mxu0
    %624 = vmatprep.mubr.f32.mxu0 0.0
    %625 = vmatmul.mubr.f32.gmra.mrb[0].mxu0 %v171
    %v626 = vpop.f32.mrb[0].mxu0
    %v627 = vadd.f32 %v158, %v626
    %v628 = vpop.f32.mrb[0].mxu0
    %629 = vmatprep.mubr.f32.mxu0 0.0
    %630 = vmatmul.mubr.f32.gmra.mrb[0].mxu0 %v174
    %v631 = vpop.f32.mrb[0].mxu0
    %v632 = vadd.f32 %v158, %v631
    %v633 = vpop.f32.mrb[0].mxu0
    %634 = vmatprep.mubr.f32.mxu0 0.0
    %635 = vmatmul.mubr.f32.gmra.mrb[0].mxu0 %v177
    %v636 = vpop.f32.mrb[0].mxu0
    %v637 = vadd.f32 %v158, %v636
    %v638 = vpop.f32.mrb[0].mxu0
    %639 = vmatprep.mubr.f32.mxu0 0.0
    %640 = vmatmul.mubr.f32.gmra.mrb[0].mxu0 %v180
    %v641 = vpop.f32.mrb[0].mxu0
    %v642 = vadd.f32 %v158, %v641
    %v643 = vpop.f32.mrb[0].mxu0
    %644 = vmatprep.mubr.f32.mxu0 0.0
    %645 = vmatmul.mubr.f32.gmra.mrb[0].mxu0 %v183
    %v646 = vpop.f32.mrb[0].mxu0
    %v647 = vadd.f32 %v158, %v646
    %v648 = vpop.f32.mrb[0].mxu0
    %649 = vmatprep.mubr.f32.mxu0 0.0
    %650 = vmatmul.mubr.f32.gmra.mrb[0].mxu0 %v186
    %v651 = vpop.f32.mrb[0].mxu0
    %v652 = vadd.f32 %v158, %v651
    %v653 = vpop.f32.mrb[0].mxu0
    %654 = vmatprep.mubr.f32.mxu0 0.0
    %655 = vmatmul.mubr.f32.gmra.mrb[0].mxu0 %v189
    %v656 = vpop.f32.mrb[0].mxu0
    %v657 = vadd.f32 %v158, %v656
    %v658 = vpop.f32.mrb[0].mxu0
    %659 = vmatprep.mubr.f32.mxu0 0.0
    %660 = vmatmul.mubr.f32.gmra.mrb[0].mxu0 %v192
    %v661 = vpop.f32.mrb[0].mxu0
    %v662 = vadd.f32 %v158, %v661
    %v663 = vpop.f32.mrb[0].mxu0
    %664 = vmatprep.mubr.f32.mxu0 0.0
    %665 = vmatmul.mubr.f32.gmra.mrb[0].mxu0 %v195
    %v666 = vpop.f32.mrb[0].mxu0
    %v667 = vadd.f32 %v158, %v666
    %v668 = vpop.f32.mrb[0].mxu0
    %669 = vmatprep.mubr.f32.mxu0 0.0
    %670 = vmatmul.mubr.f32.gmra.mrb[0].mxu0 %v198
    %v671 = vpop.f32.mrb[0].mxu0
    %v672 = vadd.f32 %v158, %v671
    %v673 = vpop.f32.mrb[0].mxu0
    %674 = vmatprep.mubr.f32.mxu0 0.0
    %675 = vmatmul.mubr.f32.gmra.mrb[0].mxu0 %v201
    %v676 = vpop.f32.mrb[0].mxu0
    %v677 = vadd.f32 %v158, %v676
    %v678 = vpop.f32.mrb[0].mxu0
    %679 = vmatprep.mubr.f32.mxu0 0.0
    %680 = vmatmul.mubr.f32.gmra.mrb[0].mxu0 %v204
    %v681 = vpop.f32.mrb[0].mxu0
    %v682 = vadd.f32 %v158, %v681
    %v683 = vpop.f32.mrb[0].mxu0
    %684 = vmatprep.mubr.f32.mxu0 0.0
    %685 = vmatmul.mubr.f32.gmra.mrb[0].mxu0 %v207
    %v686 = vpop.f32.mrb[0].mxu0
    %v687 = vadd.f32 %v158, %v686
    %v688 = vpop.f32.mrb[0].mxu0
    %689 = vmatprep.mubr.f32.mxu0 0.0
    %690 = vmatmul.mubr.f32.gmra.mrb[0].mxu0 %v210
    %v691 = vpop.f32.mrb[0].mxu0
    %v692 = vadd.f32 %v158, %v691
    %v693 = vpop.f32.mrb[0].mxu0
    %694 = vmatprep.mubr.f32.mxu0 0.0
    %695 = vmatmul.mubr.f32.gmra.mrb[0].mxu0 %v213
    %v696 = vpop.f32.mrb[0].mxu0
    %v697 = vadd.f32 %v158, %v696
    %v698 = vpop.f32.mrb[0].mxu0
    %699 = vmatprep.mubr.f32.mxu0 0.0
    %700 = vmatmul.mubr.f32.gmra.mrb[0].mxu0 %v216
    %v701 = vpop.f32.mrb[0].mxu0
    %v702 = vadd.f32 %v158, %v701
    %v703 = vpop.f32.mrb[0].mxu0
    %704 = vmatprep.mubr.f32.mxu0 0.0
    %705 = vmatmul.mubr.f32.gmra.mrb[0].mxu0 %v219
    %v706 = vpop.f32.mrb[0].mxu0
    %v707 = vadd.f32 %v158, %v706
    %v708 = vpop.f32.mrb[0].mxu0
    %709 = vmatprep.mubr.f32.mxu0 0.0
    %710 = vmatmul.mubr.f32.gmra.mrb[0].mxu0 %v222
    %v711 = vpop.f32.mrb[0].mxu0
    %v712 = vadd.f32 %v158, %v711
    %v713 = vpop.f32.mrb[0].mxu0
    %714 = vmatprep.mubr.f32.mxu0 0.0
    %715 = vmatmul.mubr.f32.gmra.mrb[0].mxu0 %v225
    %v716 = vpop.f32.mrb[0].mxu0
    %v717 = vadd.f32 %v158, %v716
    %v718 = vpop.f32.mrb[0].mxu0
    %719 = vmatprep.mubr.f32.mxu0 0.0
    %720 = vmatmul.mubr.f32.gmra.mrb[0].mxu0 %v228
    %v721 = vpop.f32.mrb[0].mxu0
    %v722 = vadd.f32 %v158, %v721
    %v723 = vpop.f32.mrb[0].mxu0
    %724 = vmatprep.mubr.f32.mxu0 0.0
    %725 = vmatmul.mubr.f32.gmra.mrb[0].mxu0 %v231
    %v726 = vpop.f32.mrb[0].mxu0
    %v727 = vadd.f32 %v158, %v726
    %v728 = vpop.f32.mrb[0].mxu0
    %729 = vmatprep.mubr.f32.mxu0 0.0
    %730 = vmatmul.mubr.f32.gmra.mrb[0].mxu0 %v234
    %v731 = vpop.f32.mrb[0].mxu0
    %v732 = vadd.f32 %v158, %v731
    %v733 = vpop.f32.mrb[0].mxu0
    %734 = vmatprep.mubr.f32.mxu0 0.0
    %735 = vmatmul.mubr.f32.gmra.mrb[0].mxu0 %v237
    %v736 = vpop.f32.mrb[0].mxu0
    %v737 = vadd.f32 %v158, %v736
    %v738 = vpop.f32.mrb[0].mxu0
    %739 = vmatprep.mubr.f32.mxu0 0.0
    %740 = vmatmul.mubr.f32.gmra.mrb[0].mxu0 %v240
    %v741 = vpop.f32.mrb[0].mxu0
    %v742 = vadd.f32 %v158, %v741
    %v743 = vpop.f32.mrb[0].mxu0
    %744 = vmatprep.mubr.f32.mxu0 0.0
    %745 = vmatmul.mubr.f32.gmra.mrb[0].mxu0 %v243
    %v746 = vpop.f32.mrb[0].mxu0
    %v747 = vadd.f32 %v158, %v746
    %v748 = vpop.f32.mrb[0].mxu0
    %749 = vmatprep.mubr.f32.mxu0 0.0
    %750 = vmatmul.mubr.f32.gmra.mrb[0].mxu0 %v246
    %v751 = vpop.f32.mrb[0].mxu0
    %v752 = vadd.f32 %v158, %v751
    %v753 = vpop.f32.mrb[0].mxu0
    %754 = vmatprep.mubr.f32.mxu0 0.0
    %755 = vmatmul.mubr.f32.gmra.mrb[0].mxu0 %v249
    %v756 = vpop.f32.mrb[0].mxu0
    %v757 = vadd.f32 %v158, %v756
    %v758 = vpop.f32.mrb[0].mxu0
    %759 = vmatprep.mubr.f32.mxu0 0.0
    %760 = vmatmul.mubr.f32.gmra.mrb[0].mxu0 %v252
    %v761 = vpop.f32.mrb[0].mxu0
    %v762 = vadd.f32 %v158, %v761
    %v763 = vpop.f32.mrb[0].mxu0
    %764 = vmatprep.mubr.f32.mxu0 0.0
    %765 = vmatmul.mubr.f32.gmra.mrb[0].mxu0 %v255
    %v766 = vpop.f32.mrb[0].mxu0
    %v767 = vadd.f32 %v158, %v766
    %v768 = vpop.f32.mrb[0].mxu0
    %769 = vmatprep.mubr.f32.mxu0 0.0
    %770 = vmatmul.mubr.f32.gmra.mrb[0].mxu0 %v258
    %v771 = vpop.f32.mrb[0].mxu0
    %v772 = vadd.f32 %v158, %v771
    %v773 = vpop.f32.mrb[0].mxu0
    %774 = vmatprep.mubr.f32.mxu0 0.0
    %775 = vmatmul.mubr.f32.gmra.mrb[0].mxu0 %v261
    %v776 = vpop.f32.mrb[0].mxu0
    %v777 = vadd.f32 %v158, %v776
    %v778 = vpop.f32.mrb[0].mxu0
    %779 = vmatprep.mubr.f32.mxu0 0.0
    %780 = vmatmul.mubr.f32.gmra.mrb[0].mxu0 %v264
    %v781 = vpop.f32.mrb[0].mxu0
    %v782 = vadd.f32 %v158, %v781
    %v783 = vpop.f32.mrb[0].mxu0
    %784 = vmatprep.mubr.f32.mxu0 0.0
    %785 = vmatmul.mubr.f32.gmra.mrb[0].mxu0 %v267
    %v786 = vpop.f32.mrb[0].mxu0
    %v787 = vadd.f32 %v158, %v786
    %v788 = vpop.f32.mrb[0].mxu0
    %789 = vmatprep.mubr.f32.mxu0 0.0
    %790 = vmatmul.mubr.f32.gmra.mrb[0].mxu0 %v270
    %v791 = vpop.f32.mrb[0].mxu0
    %v792 = vadd.f32 %v158, %v791
    %v793 = vpop.f32.mrb[0].mxu0
    %794 = vmatprep.mubr.f32.mxu0 0.0
    %795 = vmatmul.mubr.f32.gmra.mrb[0].mxu0 %v273
    %v796 = vpop.f32.mrb[0].mxu0
    %v797 = vadd.f32 %v158, %v796
    %v798 = vpop.f32.mrb[0].mxu0
    %799 = vmatprep.mubr.f32.mxu0 0.0
    %800 = vmatmul.mubr.f32.gmra.mrb[0].mxu0 %v276
    %v801 = vpop.f32.mrb[0].mxu0
    %v802 = vadd.f32 %v158, %v801
    %v803 = vpop.f32.mrb[0].mxu0
    %804 = vmatprep.mubr.f32.mxu0 0.0
    %805 = vmatmul.mubr.f32.gmra.mrb[0].mxu0 %v279
    %v806 = vpop.f32.mrb[0].mxu0
    %v807 = vadd.f32 %v158, %v806
    %v808 = vpop.f32.mrb[0].mxu0
    %809 = vmatprep.mubr.f32.mxu0 0.0
    %810 = vmatmul.mubr.f32.gmra.mrb[0].mxu0 %v282
    %v811 = vpop.f32.mrb[0].mxu0
    %v812 = vadd.f32 %v158, %v811
    %v813 = vpop.f32.mrb[0].mxu0
    %814 = vmatprep.mubr.f32.mxu0 0.0
    %815 = vmatmul.mubr.f32.gmra.mrb[0].mxu0 %v285
    %v816 = vpop.f32.mrb[0].mxu0
    %v817 = vadd.f32 %v158, %v816
    %v818 = vpop.f32.mrb[0].mxu0
    %819 = vmatprep.mubr.f32.mxu0 0.0
    %820 = vmatmul.mubr.f32.gmra.mrb[0].mxu0 %v288
    %v821 = vpop.f32.mrb[0].mxu0
    %v822 = vadd.f32 %v158, %v821
    %v823 = vpop.f32.mrb[0].mxu0
    %824 = vmatprep.mubr.f32.mxu0 0.0
    %825 = vmatmul.mubr.f32.gmra.mrb[0].mxu0 %v291
    %v826 = vpop.f32.mrb[0].mxu0
    %v827 = vadd.f32 %v158, %v826
    %v828 = vpop.f32.mrb[0].mxu0
    %829 = vmatprep.mubr.f32.mxu0 0.0
    %830 = vmatmul.mubr.f32.gmra.mrb[0].mxu0 %v294
    %v831 = vpop.f32.mrb[0].mxu0
    %v832 = vadd.f32 %v158, %v831
    %v833 = vpop.f32.mrb[0].mxu0
    %834 = vmatprep.mubr.f32.mxu0 0.0
    %835 = vmatmul.mubr.f32.gmra.mrb[0].mxu0 %v297
    %v836 = vpop.f32.mrb[0].mxu0
    %v837 = vadd.f32 %v158, %v836
    %v838 = vpop.f32.mrb[0].mxu0
    %839 = vmatprep.mubr.f32.mxu0 0.0
    %840 = vmatmul.mubr.f32.gmra.mrb[0].mxu0 %v300
    %v841 = vpop.f32.mrb[0].mxu0
    %v842 = vadd.f32 %v158, %v841
    %v843 = vpop.f32.mrb[0].mxu0
    %844 = vmatprep.mubr.f32.mxu0 0.0
    %845 = vmatmul.mubr.f32.gmra.mrb[0].mxu0 %v303
    %v846 = vpop.f32.mrb[0].mxu0
    %v847 = vadd.f32 %v158, %v846
    %v848 = vpop.f32.mrb[0].mxu0
    %849 = vmatprep.mubr.f32.mxu0 0.0
    %850 = vmatmul.mubr.f32.gmra.mrb[0].mxu0 %v306
    %v851 = vpop.f32.mrb[0].mxu0
    %v852 = vadd.f32 %v158, %v851
    %v853 = vpop.f32.mrb[0].mxu0
    %854 = vmatprep.mubr.f32.mxu0 0.0
    %855 = vmatmul.mubr.f32.gmra.mrb[0].mxu0 %v309
    %v856 = vpop.f32.mrb[0].mxu0
    %v857 = vadd.f32 %v158, %v856
    %v858 = vpop.f32.mrb[0].mxu0
    %859 = vmatprep.mubr.f32.mxu0 0.0
    %860 = vmatmul.mubr.f32.gmra.mrb[0].mxu0 %v312
    %v861 = vpop.f32.mrb[0].mxu0
    %v862 = vadd.f32 %v158, %v861
    %v863 = vpop.f32.mrb[0].mxu0
    %864 = vmatprep.mubr.f32.mxu0 0.0
    %865 = vmatmul.mubr.f32.gmra.mrb[0].mxu0 %v315
    %v866 = vpop.f32.mrb[0].mxu0
    %v867 = vadd.f32 %v158, %v866
    %v868 = vpop.f32.mrb[0].mxu0
    %869 = vmatprep.mubr.f32.mxu0 0.0
    %870 = vmatmul.mubr.f32.gmra.mrb[0].mxu0 %v318
    %v871 = vpop.f32.mrb[0].mxu0
    %v872 = vadd.f32 %v158, %v871
    %v873 = vpop.f32.mrb[0].mxu0
    %874 = vmatprep.mubr.f32.mxu0 0.0
    %875 = vmatmul.mubr.f32.gmra.mrb[0].mxu0 %v321
    %v876 = vpop.f32.mrb[0].mxu0
    %v877 = vadd.f32 %v158, %v876
    %v878 = vpop.f32.mrb[0].mxu0
    %879 = vmatprep.mubr.f32.mxu0 0.0
    %880 = vmatmul.mubr.f32.gmra.mrb[0].mxu0 %v324
    %v881 = vpop.f32.mrb[0].mxu0
    %v882 = vadd.f32 %v158, %v881
    %v883 = vpop.f32.mrb[0].mxu0
    %884 = vmatprep.mubr.f32.mxu0 0.0
    %885 = vmatmul.mubr.f32.gmra.mrb[0].mxu0 %v327
    %v886 = vpop.f32.mrb[0].mxu0
    %v887 = vadd.f32 %v158, %v886
    %v888 = vpop.f32.mrb[0].mxu0
    %889 = vmatprep.mubr.f32.mxu0 0.0
    %890 = vmatmul.mubr.f32.gmra.mrb[0].mxu0 %v330
    %v891 = vpop.f32.mrb[0].mxu0
    %v892 = vadd.f32 %v158, %v891
    %v893 = vpop.f32.mrb[0].mxu0
    %894 = vmatprep.mubr.f32.mxu0 0.0
    %895 = vmatmul.mubr.f32.gmra.mrb[0].mxu0 %v333
    %v896 = vpop.f32.mrb[0].mxu0
    %v897 = vadd.f32 %v158, %v896
    %v898 = vpop.f32.mrb[0].mxu0
    %899 = vmatprep.mubr.f32.mxu0 0.0
    %900 = vmatmul.mubr.f32.gmra.mrb[0].mxu0 %v336
    %v901 = vpop.f32.mrb[0].mxu0
    %v902 = vadd.f32 %v158, %v901
    %v903 = vpop.f32.mrb[0].mxu0
    %904 = vmatprep.mubr.f32.mxu0 0.0
    %905 = vmatmul.mubr.f32.gmra.mrb[0].mxu0 %v339
    %v906 = vpop.f32.mrb[0].mxu0
    %v907 = vadd.f32 %v158, %v906
    %v908 = vpop.f32.mrb[0].mxu0
    %909 = vmatprep.mubr.f32.mxu0 0.0
    %910 = vmatmul.mubr.f32.gmra.mrb[0].mxu0 %v342
    %v911 = vpop.f32.mrb[0].mxu0
    %v912 = vadd.f32 %v158, %v911
    %v913 = vpop.f32.mrb[0].mxu0
    %914 = vmatprep.mubr.f32.mxu0 0.0
    %915 = vmatmul.mubr.f32.gmra.mrb[0].mxu0 %v345
    %v916 = vpop.f32.mrb[0].mxu0
    %v917 = vadd.f32 %v158, %v916
    %v918 = vpop.f32.mrb[0].mxu0
    %919 = vmatprep.mubr.f32.mxu0 0.0
    %920 = vmatmul.mubr.f32.gmra.mrb[0].mxu0 %v348
    %v921 = vpop.f32.mrb[0].mxu0
    %v922 = vadd.f32 %v158, %v921
    %v923 = vpop.f32.mrb[0].mxu0
    %924 = vmatprep.mubr.f32.mxu0 0.0
    %925 = vmatmul.mubr.f32.gmra.mrb[0].mxu0 %v351
    %v926 = vpop.f32.mrb[0].mxu0
    %v927 = vadd.f32 %v158, %v926
    %v928 = vpop.f32.mrb[0].mxu0
    %929 = vmatprep.mubr.f32.mxu0 0.0
    %930 = vmatmul.mubr.f32.gmra.mrb[0].mxu0 %v354
    %v931 = vpop.f32.mrb[0].mxu0
    %v932 = vadd.f32 %v158, %v931
    %v933 = vpop.f32.mrb[0].mxu0
    %934 = vmatprep.mubr.f32.mxu0 0.0
    %935 = vmatmul.mubr.f32.gmra.mrb[0].mxu0 %v357
    %v936 = vpop.f32.mrb[0].mxu0
    %v937 = vadd.f32 %v158, %v936
    %v938 = vpop.f32.mrb[0].mxu0
    %939 = vmatprep.mubr.f32.mxu0 0.0
    %940 = vmatmul.mubr.f32.gmra.mrb[0].mxu0 %v360
    %v941 = vpop.f32.mrb[0].mxu0
    %v942 = vadd.f32 %v158, %v941
    %v943 = vpop.f32.mrb[0].mxu0
    %944 = vmatprep.mubr.f32.mxu0 0.0
    %945 = vmatmul.mubr.f32.gmra.mrb[0].mxu0 %v363
    %v946 = vpop.f32.mrb[0].mxu0
    %v947 = vadd.f32 %v158, %v946
    %v948 = vpop.f32.mrb[0].mxu0
    %949 = vmatprep.mubr.f32.mxu0 0.0
    %950 = vmatmul.mubr.f32.gmra.mrb[0].mxu0 %v366
    %v951 = vpop.f32.mrb[0].mxu0
    %v952 = vadd.f32 %v158, %v951
    %v953 = vpop.f32.mrb[0].mxu0
    %954 = vmatprep.mubr.f32.mxu0 0.0
    %955 = vmatmul.mubr.f32.gmra.mrb[0].mxu0 %v369
    %v956 = vpop.f32.mrb[0].mxu0
    %v957 = vadd.f32 %v158, %v956
    %v958 = vpop.f32.mrb[0].mxu0
    %959 = vmatprep.mubr.f32.mxu0 0.0
    %960 = vmatmul.mubr.f32.gmra.mrb[0].mxu0 %v372
    %v961 = vpop.f32.mrb[0].mxu0
    %v962 = vadd.f32 %v158, %v961
    %v963 = vpop.f32.mrb[0].mxu0
    %964 = vmatprep.mubr.f32.mxu0 0.0
    %965 = vmatmul.mubr.f32.gmra.mrb[0].mxu0 %v375
    %v966 = vpop.f32.mrb[0].mxu0
    %v967 = vadd.f32 %v158, %v966
    %v968 = vpop.f32.mrb[0].mxu0
    %969 = vmatprep.mubr.f32.mxu0 0.0
    %970 = vmatmul.mubr.f32.gmra.mrb[0].mxu0 %v378
    %v971 = vpop.f32.mrb[0].mxu0
    %v972 = vadd.f32 %v158, %v971
    %v973 = vpop.f32.mrb[0].mxu0
    %974 = vmatprep.mubr.f32.mxu0 0.0
    %975 = vmatmul.mubr.f32.gmra.mrb[0].mxu0 %v381
    %v976 = vpop.f32.mrb[0].mxu0
    %v977 = vadd.f32 %v158, %v976
    %v978 = vpop.f32.mrb[0].mxu0
    %979 = vmatprep.mubr.f32.mxu0 0.0
    %980 = vmatmul.mubr.f32.gmra.mrb[0].mxu0 %v384
    %v981 = vpop.f32.mrb[0].mxu0
    %v982 = vadd.f32 %v158, %v981
    %v983 = vpop.f32.mrb[0].mxu0
    %984 = vmatprep.mubr.f32.mxu0 0.0
    %985 = vmatmul.mubr.f32.gmra.mrb[0].mxu0 %v387
    %v986 = vpop.f32.mrb[0].mxu0
    %v987 = vadd.f32 %v158, %v986
    %v988 = vpop.f32.mrb[0].mxu0
    %989 = vmatprep.mubr.f32.mxu0 0.0
    %990 = vmatmul.mubr.f32.gmra.mrb[0].mxu0 %v390
    %v991 = vpop.f32.mrb[0].mxu0
    %v992 = vadd.f32 %v158, %v991
    %v993 = vpop.f32.mrb[0].mxu0
    %994 = vmatprep.mubr.f32.mxu0 0.0
    %995 = vmatmul.mubr.f32.gmra.mrb[0].mxu0 %v393
    %v996 = vpop.f32.mrb[0].mxu0
    %v997 = vadd.f32 %v158, %v996
    %v998 = vpop.f32.mrb[0].mxu0
    %999 = vmatprep.mubr.f32.mxu0 0.0
    %1000 = vmatmul.mubr.f32.gmra.mrb[0].mxu0 %v396
    %v1001 = vpop.f32.mrb[0].mxu0
    %v1002 = vadd.f32 %v158, %v1001
    %v1003 = vpop.f32.mrb[0].mxu0
    %1004 = vmatprep.mubr.f32.mxu0 0.0
    %1005 = vmatmul.mubr.f32.gmra.mrb[0].mxu0 %v399
    %v1006 = vpop.f32.mrb[0].mxu0
    %v1007 = vadd.f32 %v158, %v1006
    %v1008 = vpop.f32.mrb[0].mxu0
    %1009 = vmatprep.mubr.f32.mxu0 0.0
    %1010 = vmatmul.mubr.f32.gmra.mrb[0].mxu0 %v402
    %v1011 = vpop.f32.mrb[0].mxu0
    %v1012 = vadd.f32 %v158, %v1011
    %v1013 = vpop.f32.mrb[0].mxu0
    %1014 = vmatprep.mubr.f32.mxu0 0.0
    %1015 = vmatmul.mubr.f32.gmra.mrb[0].mxu0 %v405
    %v1016 = vpop.f32.mrb[0].mxu0
    %v1017 = vadd.f32 %v158, %v1016
    %v1018 = vpop.f32.mrb[0].mxu0
    %1019 = vmatprep.mubr.f32.mxu0 0.0
    %1020 = vmatmul.mubr.f32.gmra.mrb[0].mxu0 %v408
    %v1021 = vpop.f32.mrb[0].mxu0
    %v1022 = vadd.f32 %v158, %v1021
    %v1023 = vpop.f32.mrb[0].mxu0
    %1024 = vmatprep.mubr.f32.mxu0 0.0
    %1025 = vmatmul.mubr.f32.gmra.mrb[0].mxu0 %v411
    %v1026 = vpop.f32.mrb[0].mxu0
    %v1027 = vadd.f32 %v158, %v1026
    %v1028 = vpop.f32.mrb[0].mxu0
    %1029 = vmatprep.mubr.f32.mxu0 0.0
    %1030 = vmatmul.mubr.f32.gmra.mrb[0].mxu0 %v414
    %v1031 = vpop.f32.mrb[0].mxu0
    %v1032 = vadd.f32 %v158, %v1031
    %v1033 = vpop.f32.mrb[0].mxu0
    %1034 = vmatprep.mubr.f32.mxu0 0.0
    %1035 = vmatmul.mubr.f32.gmra.mrb[0].mxu0 %v417
    %v1036 = vpop.f32.mrb[0].mxu0
    %v1037 = vadd.f32 %v158, %v1036
    %v1038 = vpop.f32.mrb[0].mxu0
    %1039 = vmatprep.mubr.f32.mxu0 0.0
    %1040 = vmatmul.mubr.f32.gmra.mrb[0].mxu0 %v420
    %v1041 = vpop.f32.mrb[0].mxu0
    %v1042 = vadd.f32 %v158, %v1041
    %v1043 = vpop.f32.mrb[0].mxu0
    %1044 = vmatprep.mubr.f32.mxu0 0.0
    %1045 = vmatmul.mubr.f32.gmra.mrb[0].mxu0 %v423
    %v1046 = vpop.f32.mrb[0].mxu0
    %v1047 = vadd.f32 %v158, %v1046
    %v1048 = vpop.f32.mrb[0].mxu0
    %1049 = vmatprep.mubr.f32.mxu0 0.0
    %1050 = vmatmul.mubr.f32.gmra.mrb[0].mxu0 %v426
    %v1051 = vpop.f32.mrb[0].mxu0
    %v1052 = vadd.f32 %v158, %v1051
    %v1053 = vpop.f32.mrb[0].mxu0
    %1054 = vmatprep.mubr.f32.mxu0 0.0
    %1055 = vmatmul.mubr.f32.gmra.mrb[0].mxu0 %v429
    %v1056 = vpop.f32.mrb[0].mxu0
    %v1057 = vadd.f32 %v158, %v1056
    %v1058 = vpop.f32.mrb[0].mxu0
    %1059 = vmatprep.mubr.f32.mxu0 0.0
    %1060 = vmatmul.mubr.f32.gmra.mrb[0].mxu0 %v432
    %v1061 = vpop.f32.mrb[0].mxu0
    %v1062 = vadd.f32 %v158, %v1061
    %v1063 = vpop.f32.mrb[0].mxu0
    %1064 = vmatprep.mubr.f32.mxu0 0.0
    %1065 = vmatmul.mubr.f32.gmra.mrb[0].mxu0 %v435
    %v1066 = vpop.f32.mrb[0].mxu0
    %v1067 = vadd.f32 %v158, %v1066
    %v1068 = vpop.f32.mrb[0].mxu0
    %1069 = vmatprep.mubr.f32.mxu0 0.0
    %1070 = vmatmul.mubr.f32.gmra.mrb[0].mxu0 %v438
    %v1071 = vpop.f32.mrb[0].mxu0
    %v1072 = vadd.f32 %v158, %v1071
    %v1073 = vpop.f32.mrb[0].mxu0
    %1074 = vmatprep.mubr.f32.mxu0 0.0
    %1075 = vmatmul.mubr.f32.gmra.mrb[0].mxu0 %v441
    %v1076 = vpop.f32.mrb[0].mxu0
    %v1077 = vadd.f32 %v158, %v1076
    %v1078 = vpop.f32.mrb[0].mxu0
    %1079 = vmatprep.mubr.f32.mxu0 0.0
    %1080 = vmatmul.mubr.f32.gmra.mrb[0].mxu0 %v444
    %v1081 = vpop.f32.mrb[0].mxu0
    %v1082 = vadd.f32 %v158, %v1081
    %v1083 = vpop.f32.mrb[0].mxu0
    %1084 = vmatprep.mubr.f32.mxu0 0.0
    %1085 = vmatmul.mubr.f32.gmra.mrb[0].mxu0 %v447
    %v1086 = vpop.f32.mrb[0].mxu0
    %v1087 = vadd.f32 %v158, %v1086
    %v1088 = vpop.f32.mrb[0].mxu0
    %1089 = vmatprep.mubr.f32.mxu0 0.0
    %1090 = vmatmul.mubr.f32.gmra.mrb[0].mxu0 %v450
    %v1091 = vpop.f32.mrb[0].mxu0
    %v1092 = vadd.f32 %v158, %v1091
    %v1093 = vpop.f32.mrb[0].mxu0
    %1094 = vmatprep.mubr.f32.mxu0 0.0
    %1095 = vmatmul.mubr.f32.gmra.mrb[0].mxu0 %v453
    %v1096 = vpop.f32.mrb[0].mxu0
    %v1097 = vadd.f32 %v158, %v1096
    %v1098 = vpop.f32.mrb[0].mxu0
    %1099 = vmatprep.mubr.f32.mxu0 0.0
    %1100 = vmatmul.mubr.f32.gmra.mrb[0].mxu0 %v456
    %v1101 = vpop.f32.mrb[0].mxu0
    %v1102 = vadd.f32 %v158, %v1101
    %v1103 = vpop.f32.mrb[0].mxu0
    %1104 = vmatprep.mubr.f32.mxu0 0.0
    %1105 = vmatmul.mubr.f32.gmra.mrb[0].mxu0 %v459
    %v1106 = vpop.f32.mrb[0].mxu0
    %v1107 = vadd.f32 %v158, %v1106
    %v1108 = vpop.f32.mrb[0].mxu0
    %1109 = vmatprep.mubr.f32.mxu0 0.0
    %1110 = vmatmul.mubr.f32.gmra.mrb[0].mxu0 %v462
    %v1111 = vpop.f32.mrb[0].mxu0
    %v1112 = vadd.f32 %v158, %v1111
    %v1113 = vpop.f32.mrb[0].mxu0
    %1114 = vmatprep.mubr.f32.mxu0 0.0
    %1115 = vmatmul.mubr.f32.gmra.mrb[0].mxu0 %v465
    %v1116 = vpop.f32.mrb[0].mxu0
    %v1117 = vadd.f32 %v158, %v1116
    %v1118 = vpop.f32.mrb[0].mxu0
    %1119 = vmatprep.mubr.f32.mxu0 0.0
    %1120 = vmatmul.mubr.f32.gmra.mrb[0].mxu0 %v468
    %v1121 = vpop.f32.mrb[0].mxu0
    %v1122 = vadd.f32 %v158, %v1121
    %v1123 = vpop.f32.mrb[0].mxu0
    %1124 = vmatprep.mubr.f32.mxu0 0.0
    %1125 = vmatmul.mubr.f32.gmra.mrb[0].mxu0 %v471
    %v1126 = vpop.f32.mrb[0].mxu0
    %v1127 = vadd.f32 %v158, %v1126
    %v1128 = vpop.f32.mrb[0].mxu0
    %1129 = vmatprep.mubr.f32.mxu0 0.0
    %1130 = vmatmul.mubr.f32.gmra.mrb[0].mxu0 %v474
    %v1131 = vpop.f32.mrb[0].mxu0
    %v1132 = vadd.f32 %v158, %v1131
    %v1133 = vpop.f32.mrb[0].mxu0
    %1134 = vmatprep.mubr.f32.mxu0 0.0
    %1135 = vmatmul.mubr.f32.gmra.mrb[0].mxu0 %v477
    %v1136 = vpop.f32.mrb[0].mxu0
    %v1137 = vadd.f32 %v158, %v1136
    %v1138 = vpop.f32.mrb[0].mxu0
    %1139 = vmatprep.mubr.f32.mxu0 0.0
    %1140 = vmatmul.mubr.f32.gmra.mrb[0].mxu0 %v480
    %v1141 = vpop.f32.mrb[0].mxu0
    %v1142 = vadd.f32 %v158, %v1141
    %v1143 = vpop.f32.mrb[0].mxu0
    %1144 = vmatprep.mubr.f32.mxu0 0.0
    %1145 = vmatmul.mubr.f32.gmra.mrb[0].mxu0 %v483
    %v1146 = vpop.f32.mrb[0].mxu0
    %v1147 = vadd.f32 %v158, %v1146
    %v1148 = vpop.f32.mrb[0].mxu0
    %1149 = vmatprep.mubr.f32.mxu0 0.0
    %1150 = vmatmul.mubr.f32.gmra.mrb[0].mxu0 %v486
    %v1151 = vpop.f32.mrb[0].mxu0
    %v1152 = vadd.f32 %v158, %v1151
    %v1153 = vpop.f32.mrb[0].mxu0
    %1154 = vmatprep.mubr.f32.mxu0 0.0
    %1155 = vmatmul.mubr.f32.gmra.mrb[0].mxu0 %v489
    %v1156 = vpop.f32.mrb[0].mxu0
    %v1157 = vadd.f32 %v158, %v1156
    %v1158 = vpop.f32.mrb[0].mxu0
    %1159 = vmatprep.mubr.f32.mxu0 0.0
    %1160 = vmatmul.mubr.f32.gmra.mrb[0].mxu0 %v492
    %v1161 = vpop.f32.mrb[0].mxu0
    %v1162 = vadd.f32 %v158, %v1161
    %v1163 = vpop.f32.mrb[0].mxu0
    %1164 = vmatprep.mubr.f32.mxu0 0.0
    %1165 = vmatmul.mubr.f32.gmra.mrb[0].mxu0 %v495
    %v1166 = vpop.f32.mrb[0].mxu0
    %v1167 = vadd.f32 %v158, %v1166
    %v1168 = vpop.f32.mrb[0].mxu0
    %1169 = vmatprep.mubr.f32.mxu0 0.0
    %1170 = vmatmul.mubr.f32.gmra.mrb[0].mxu0 %v498
    %v1171 = vpop.f32.mrb[0].mxu0
    %v1172 = vadd.f32 %v158, %v1171
    %v1173 = vpop.f32.mrb[0].mxu0
    %1174 = vmatprep.mubr.f32.mxu0 0.0
    %1175 = vmatmul.mubr.f32.gmra.mrb[0].mxu0 %v501
    %v1176 = vpop.f32.mrb[0].mxu0
    %v1177 = vadd.f32 %v158, %v1176
    %v1178 = vpop.f32.mrb[0].mxu0
    %1179 = vmatprep.mubr.f32.mxu0 0.0
    %1180 = vmatmul.mubr.f32.gmra.mrb[0].mxu0 %v504
    %v1181 = vpop.f32.mrb[0].mxu0
    %v1182 = vadd.f32 %v158, %v1181
    %v1183 = vpop.f32.mrb[0].mxu0
    %1184 = vmatprep.mubr.f32.mxu0 0.0
    %1185 = vmatmul.mubr.f32.gmra.mrb[0].mxu0 %v507
    %v1186 = vpop.f32.mrb[0].mxu0
    %v1187 = vadd.f32 %v158, %v1186
    %v1188 = vpop.f32.mrb[0].mxu0
    %1189 = vmatprep.mubr.f32.mxu0 0.0
    %1190 = vmatmul.mubr.f32.gmra.mrb[0].mxu0 %v510
    %v1191 = vpop.f32.mrb[0].mxu0
    %v1192 = vadd.f32 %v158, %v1191
    %v1193 = vpop.f32.mrb[0].mxu0
    %1194 = vmatprep.mubr.f32.mxu0 0.0
    %1195 = vmatmul.mubr.f32.gmra.mrb[0].mxu0 %v513
    %v1196 = vpop.f32.mrb[0].mxu0
    %v1197 = vadd.f32 %v158, %v1196
    %v1198 = vpop.f32.mrb[0].mxu0
    %1199 = vmatprep.mubr.f32.mxu0 0.0
    %1200 = vmatmul.mubr.f32.gmra.mrb[0].mxu0 %v516
    %v1201 = vpop.f32.mrb[0].mxu0
    %v1202 = vadd.f32 %v158, %v1201
    %v1203 = vpop.f32.mrb[0].mxu0
    %1204 = vmatprep.mubr.f32.mxu0 0.0
    %1205 = vmatmul.mubr.f32.gmra.mrb[0].mxu0 %v519
    %v1206 = vpop.f32.mrb[0].mxu0
    %v1207 = vadd.f32 %v158, %v1206
    %v1208 = vpop.f32.mrb[0].mxu0
    %1209 = vmatprep.mubr.f32.mxu0 0.0
    %1210 = vmatmul.mubr.f32.gmra.mrb[0].mxu0 %v522
    %v1211 = vpop.f32.mrb[0].mxu0
    %v1212 = vadd.f32 %v158, %v1211
    %v1213 = vpop.f32.mrb[0].mxu0
    %1214 = vmatprep.mubr.f32.mxu0 0.0
    %1215 = vmatmul.mubr.f32.gmra.mrb[0].mxu0 %v525
    %v1216 = vpop.f32.mrb[0].mxu0
    %v1217 = vadd.f32 %v158, %v1216
    %v1218 = vpop.f32.mrb[0].mxu0
    %1219 = vmatprep.mubr.f32.mxu0 0.0
    %1220 = vmatmul.mubr.f32.gmra.mrb[0].mxu0 %v528
    %v1221 = vpop.f32.mrb[0].mxu0
    %v1222 = vadd.f32 %v158, %v1221
    %v1223 = vpop.f32.mrb[0].mxu0
    %1224 = vmatprep.mubr.f32.mxu0 0.0
    %1225 = vmatmul.mubr.f32.gmra.mrb[0].mxu0 %v531
    %v1226 = vpop.f32.mrb[0].mxu0
    %v1227 = vadd.f32 %v158, %v1226
    %v1228 = vpop.f32.mrb[0].mxu0
    %1229 = vmatprep.mubr.f32.mxu0 0.0
    %1230 = vmatmul.mubr.f32.gmra.mrb[0].mxu0 %v534
    %v1231 = vpop.f32.mrb[0].mxu0
    %v1232 = vadd.f32 %v158, %v1231
    %v1233 = vpop.f32.mrb[0].mxu0
    %1234 = vmatprep.mubr.f32.mxu0 0.0
    %1235 = vmatmul.mubr.f32.gmra.mrb[0].mxu0 %v537
    %v1236 = vpop.f32.mrb[0].mxu0
    %v1237 = vadd.f32 %v158, %v1236
    %v1238 = vpop.f32.mrb[0].mxu0
    %1239 = vmatprep.mubr.f32.mxu0 0.0
    %1240 = vmatmul.mubr.f32.gmra.mrb[0].mxu0 %v540
    %v1241 = vpop.f32.mrb[0].mxu0
    %v1242 = vadd.f32 %v158, %v1241
    %v1243 = vpop.f32.mrb[0].mxu0
    %1244 = vmatprep.mubr.f32.mxu0 0.0
    %1245 = vmatmul.mubr.f32.gmra.mrb[0].mxu0 %v543
    %v1246 = vpop.f32.mrb[0].mxu0
    %v1247 = vadd.f32 %v158, %v1246
    %v1248 = vpop.f32.mrb[0].mxu0
    %1249 = vdwg.mxu0
    %v1250 = vmax.f32 %v612, 0.0
    %v1251 = vmax.f32 %v617, 0.0
    %v1252 = vmax.f32 %v622, 0.0
    %v1253 = vmax.f32 %v627, 0.0
    %v1254 = vmax.f32 %v632, 0.0
    %v1255 = vmax.f32 %v637, 0.0
    %v1256 = vmax.f32 %v642, 0.0
    %v1257 = vmax.f32 %v647, 0.0
    %v1258 = vmax.f32 %v652, 0.0
    %v1259 = vmax.f32 %v657, 0.0
    %v1260 = vmax.f32 %v662, 0.0
    %v1261 = vmax.f32 %v667, 0.0
    %v1262 = vmax.f32 %v672, 0.0
    %v1263 = vmax.f32 %v677, 0.0
    %v1264 = vmax.f32 %v682, 0.0
    %v1265 = vmax.f32 %v687, 0.0
    %v1266 = vmax.f32 %v692, 0.0
    %v1267 = vmax.f32 %v697, 0.0
    %v1268 = vmax.f32 %v702, 0.0
    %v1269 = vmax.f32 %v707, 0.0
    %v1270 = vmax.f32 %v712, 0.0
    %v1271 = vmax.f32 %v717, 0.0
    %v1272 = vmax.f32 %v722, 0.0
    %v1273 = vmax.f32 %v727, 0.0
    %v1274 = vmax.f32 %v732, 0.0
    %v1275 = vmax.f32 %v737, 0.0
    %v1276 = vmax.f32 %v742, 0.0
    %v1277 = vmax.f32 %v747, 0.0
    %v1278 = vmax.f32 %v752, 0.0
    %v1279 = vmax.f32 %v757, 0.0
    %v1280 = vmax.f32 %v762, 0.0
    %v1281 = vmax.f32 %v767, 0.0
    %v1282 = vmax.f32 %v772, 0.0
    %v1283 = vmax.f32 %v777, 0.0
    %v1284 = vmax.f32 %v782, 0.0
    %v1285 = vmax.f32 %v787, 0.0
    %v1286 = vmax.f32 %v792, 0.0
    %v1287 = vmax.f32 %v797, 0.0
    %v1288 = vmax.f32 %v802, 0.0
    %v1289 = vmax.f32 %v807, 0.0
    %v1290 = vmax.f32 %v812, 0.0
    %v1291 = vmax.f32 %v817, 0.0
    %v1292 = vmax.f32 %v822, 0.0
    %v1293 = vmax.f32 %v827, 0.0
    %v1294 = vmax.f32 %v832, 0.0
    %v1295 = vmax.f32 %v837, 0.0
    %v1296 = vmax.f32 %v842, 0.0
    %v1297 = vmax.f32 %v847, 0.0
    %v1298 = vmax.f32 %v852, 0.0
    %v1299 = vmax.f32 %v857, 0.0
    %v1300 = vmax.f32 %v862, 0.0
    %v1301 = vmax.f32 %v867, 0.0
    %v1302 = vmax.f32 %v872, 0.0
    %v1303 = vmax.f32 %v877, 0.0
    %v1304 = vmax.f32 %v882, 0.0
    %v1305 = vmax.f32 %v887, 0.0
    %v1306 = vmax.f32 %v892, 0.0
    %v1307 = vmax.f32 %v897, 0.0
    %v1308 = vmax.f32 %v902, 0.0
    %v1309 = vmax.f32 %v907, 0.0
    %v1310 = vmax.f32 %v912, 0.0
    %v1311 = vmax.f32 %v917, 0.0
    %v1312 = vmax.f32 %v922, 0.0
    %v1313 = vmax.f32 %v927, 0.0
    %v1314 = vmax.f32 %v932, 0.0
    %v1315 = vmax.f32 %v937, 0.0
    %v1316 = vmax.f32 %v942, 0.0
    %v1317 = vmax.f32 %v947, 0.0
    %v1318 = vmax.f32 %v952, 0.0
    %v1319 = vmax.f32 %v957, 0.0
    %v1320 = vmax.f32 %v962, 0.0
    %v1321 = vmax.f32 %v967, 0.0
    %v1322 = vmax.f32 %v972, 0.0
    %v1323 = vmax.f32 %v977, 0.0
    %v1324 = vmax.f32 %v982, 0.0
    %v1325 = vmax.f32 %v987, 0.0
    %v1326 = vmax.f32 %v992, 0.0
    %v1327 = vmax.f32 %v997, 0.0
    %v1328 = vmax.f32 %v1002, 0.0
    %v1329 = vmax.f32 %v1007, 0.0
    %v1330 = vmax.f32 %v1012, 0.0
    %v1331 = vmax.f32 %v1017, 0.0
    %v1332 = vmax.f32 %v1022, 0.0
    %v1333 = vmax.f32 %v1027, 0.0
    %v1334 = vmax.f32 %v1032, 0.0
    %v1335 = vmax.f32 %v1037, 0.0
    %v1336 = vmax.f32 %v1042, 0.0
    %v1337 = vmax.f32 %v1047, 0.0
    %v1338 = vmax.f32 %v1052, 0.0
    %v1339 = vmax.f32 %v1057, 0.0
    %v1340 = vmax.f32 %v1062, 0.0
    %v1341 = vmax.f32 %v1067, 0.0
    %v1342 = vmax.f32 %v1072, 0.0
    %v1343 = vmax.f32 %v1077, 0.0
    %v1344 = vmax.f32 %v1082, 0.0
    %v1345 = vmax.f32 %v1087, 0.0
    %v1346 = vmax.f32 %v1092, 0.0
    %v1347 = vmax.f32 %v1097, 0.0
    %v1348 = vmax.f32 %v1102, 0.0
    %v1349 = vmax.f32 %v1107, 0.0
    %v1350 = vmax.f32 %v1112, 0.0
    %v1351 = vmax.f32 %v1117, 0.0
    %v1352 = vmax.f32 %v1122, 0.0
    %v1353 = vmax.f32 %v1127, 0.0
    %v1354 = vmax.f32 %v1132, 0.0
    %v1355 = vmax.f32 %v1137, 0.0
    %v1356 = vmax.f32 %v1142, 0.0
    %v1357 = vmax.f32 %v1147, 0.0
    %v1358 = vmax.f32 %v1152, 0.0
    %v1359 = vmax.f32 %v1157, 0.0
    %v1360 = vmax.f32 %v1162, 0.0
    %v1361 = vmax.f32 %v1167, 0.0
    %v1362 = vmax.f32 %v1172, 0.0
    %v1363 = vmax.f32 %v1177, 0.0
    %v1364 = vmax.f32 %v1182, 0.0
    %v1365 = vmax.f32 %v1187, 0.0
    %v1366 = vmax.f32 %v1192, 0.0
    %v1367 = vmax.f32 %v1197, 0.0
    %v1368 = vmax.f32 %v1202, 0.0
    %v1369 = vmax.f32 %v1207, 0.0
    %v1370 = vmax.f32 %v1212, 0.0
    %v1371 = vmax.f32 %v1217, 0.0
    %v1372 = vmax.f32 %v1222, 0.0
    %v1373 = vmax.f32 %v1227, 0.0
    %v1374 = vmax.f32 %v1232, 0.0
    %v1375 = vmax.f32 %v1237, 0.0
    %v1376 = vmax.f32 %v1242, 0.0
    %v1377 = vmax.f32 %v1247, 0.0
    %v1378 = vld [vmem:[%s3] sm:$0xff]
    %v1379 = vld [vmem:[%s3 + $0x8] sm:$0xff]
    %v1380 = vld [vmem:[%s3 + $0x10] sm:$0xff]
    %v1381 = vld [vmem:[%s3 + $0x18] sm:$0xff]
    %v1382 = vld [vmem:[%s3 + $0x20] sm:$0xff]
    %v1383 = vld [vmem:[%s3 + $0x28] sm:$0xff]
    %v1384 = vld [vmem:[%s3 + $0x30] sm:$0xff]
    %v1385 = vld [vmem:[%s3 + $0x38] sm:$0xff]
    %v1386 = vld [vmem:[%s3 + $0x40] sm:$0xff]
    %v1387 = vld [vmem:[%s3 + $0x48] sm:$0xff]
    %v1388 = vld [vmem:[%s3 + $0x50] sm:$0xff]
    %v1389 = vld [vmem:[%s3 + $0x58] sm:$0xff]
    %v1390 = vld [vmem:[%s3 + $0x60] sm:$0xff]
    %v1391 = vld [vmem:[%s3 + $0x68] sm:$0xff]
    %v1392 = vld [vmem:[%s3 + $0x70] sm:$0xff]
    %v1393 = vld [vmem:[%s3 + $0x78] sm:$0xff]
    %v1394 = vld [vmem:[%s4] sm:$0x1]
    %v1396 = vlaneseq
    %v1397 = vshrl.u32 %v1396, 7
    %v1398 = vsub.s32 0, %v1397
    %v1399 = vrot.slane %v1394, %v1398
    %1401 = vmatprep.subr.mxu0 0.0
    %1402 = vmatpush1.msra.mxu0 %v1378
    %1403 = vmatprep.subr.mxu0 0.0
    %1404 = vmatpush1.msra.mxu0 %v1379
    %1405 = vmatprep.subr.mxu0 0.0
    %1406 = vmatpush1.msra.mxu0 %v1380
    %1407 = vmatprep.subr.mxu0 0.0
    %1408 = vmatpush1.msra.mxu0 %v1381
    %1409 = vmatprep.subr.mxu0 0.0
    %1410 = vmatpush1.msra.mxu0 %v1382
    %1411 = vmatprep.subr.mxu0 0.0
    %1412 = vmatpush1.msra.mxu0 %v1383
    %1413 = vmatprep.subr.mxu0 0.0
    %1414 = vmatpush1.msra.mxu0 %v1384
    %1415 = vmatprep.subr.mxu0 0.0
    %1416 = vmatpush1.msra.mxu0 %v1385
    %1417 = vmatprep.subr.mxu0 0.0
    %1418 = vmatpush1.msra.mxu0 %v1386
    %1419 = vmatprep.subr.mxu0 0.0
    %1420 = vmatpush1.msra.mxu0 %v1387
    %1421 = vmatprep.subr.mxu0 0.0
    %1422 = vmatpush1.msra.mxu0 %v1388
    %1423 = vmatprep.subr.mxu0 0.0
    %1424 = vmatpush1.msra.mxu0 %v1389
    %1425 = vmatprep.subr.mxu0 0.0
    %1426 = vmatpush1.msra.mxu0 %v1390
    %1427 = vmatprep.subr.mxu0 0.0
    %1428 = vmatpush1.msra.mxu0 %v1391
    %1429 = vmatprep.subr.mxu0 0.0
    %1430 = vmatpush1.msra.mxu0 %v1392
    %1431 = vmatprep.subr.mxu0 0.0
    %1432 = vmatpush1.msra.mxu0 %v1393
    %1433 = vmatprep.subr.mxu0 0.0
    %1434 = vmatpush1.msra.mxu0 0.0
    %1435 = vmatprep.subr.mxu0 0.0
    %1436 = vmatpush1.msra.mxu0 0.0
    %1437 = vmatprep.subr.mxu0 0.0
    %1438 = vmatpush1.msra.mxu0 0.0
    %1439 = vmatprep.subr.mxu0 0.0
    %1440 = vmatpush1.msra.mxu0 0.0
    %1441 = vmatprep.subr.mxu0 0.0
    %1442 = vmatpush1.msra.mxu0 0.0
    %1443 = vmatprep.subr.mxu0 0.0
    %1444 = vmatpush1.msra.mxu0 0.0
    %1445 = vmatprep.subr.mxu0 0.0
    %1446 = vmatpush1.msra.mxu0 0.0
    %1447 = vmatprep.subr.mxu0 0.0
    %1448 = vmatpush1.msra.mxu0 0.0
    %1449 = vmatprep.subr.mxu0 0.0
    %1450 = vmatpush1.msra.mxu0 0.0
    %1451 = vmatprep.subr.mxu0 0.0
    %1452 = vmatpush1.msra.mxu0 0.0
    %1453 = vmatprep.subr.mxu0 0.0
    %1454 = vmatpush1.msra.mxu0 0.0
    %1455 = vmatprep.subr.mxu0 0.0
    %1456 = vmatpush1.msra.mxu0 0.0
    %1457 = vmatprep.subr.mxu0 0.0
    %1458 = vmatpush1.msra.mxu0 0.0
    %1459 = vmatprep.subr.mxu0 0.0
    %1460 = vmatpush1.msra.mxu0 0.0
    %1461 = vmatprep.subr.mxu0 0.0
    %1462 = vmatpush1.msra.mxu0 0.0
    %1463 = vmatprep.subr.mxu0 0.0
    %1464 = vmatpush1.msra.mxu0 0.0
    %1465 = vmatprep.mubr.f32.mxu0 0.0
    %1466 = vmatmul.mubr.f32.gmra.mrb[0].mxu0 %v1250
    %v1467 = vpop.f32.mrb[0].mxu0
    %v1468 = vadd.f32 %v1399, %v1467
    %v1469 = vpop.f32.mrb[0].mxu0
    %1470 = vmatprep.mubr.f32.mxu0 0.0
    %1471 = vmatmul.mubr.f32.gmra.mrb[0].mxu0 %v1251
    %v1472 = vpop.f32.mrb[0].mxu0
    %v1473 = vadd.f32 %v1399, %v1472
    %v1474 = vpop.f32.mrb[0].mxu0
    %1475 = vmatprep.mubr.f32.mxu0 0.0
    %1476 = vmatmul.mubr.f32.gmra.mrb[0].mxu0 %v1252
    %v1477 = vpop.f32.mrb[0].mxu0
    %v1478 = vadd.f32 %v1399, %v1477
    %v1479 = vpop.f32.mrb[0].mxu0
    %1480 = vmatprep.mubr.f32.mxu0 0.0
    %1481 = vmatmul.mubr.f32.gmra.mrb[0].mxu0 %v1253
    %v1482 = vpop.f32.mrb[0].mxu0
    %v1483 = vadd.f32 %v1399, %v1482
    %v1484 = vpop.f32.mrb[0].mxu0
    %1485 = vmatprep.mubr.f32.mxu0 0.0
    %1486 = vmatmul.mubr.f32.gmra.mrb[0].mxu0 %v1254
    %v1487 = vpop.f32.mrb[0].mxu0
    %v1488 = vadd.f32 %v1399, %v1487
    %v1489 = vpop.f32.mrb[0].mxu0
    %1490 = vmatprep.mubr.f32.mxu0 0.0
    %1491 = vmatmul.mubr.f32.gmra.mrb[0].mxu0 %v1255
    %v1492 = vpop.f32.mrb[0].mxu0
    %v1493 = vadd.f32 %v1399, %v1492
    %v1494 = vpop.f32.mrb[0].mxu0
    %1495 = vmatprep.mubr.f32.mxu0 0.0
    %1496 = vmatmul.mubr.f32.gmra.mrb[0].mxu0 %v1256
    %v1497 = vpop.f32.mrb[0].mxu0
    %v1498 = vadd.f32 %v1399, %v1497
    %v1499 = vpop.f32.mrb[0].mxu0
    %1500 = vmatprep.mubr.f32.mxu0 0.0
    %1501 = vmatmul.mubr.f32.gmra.mrb[0].mxu0 %v1257
    %v1502 = vpop.f32.mrb[0].mxu0
    %v1503 = vadd.f32 %v1399, %v1502
    %v1504 = vpop.f32.mrb[0].mxu0
    %1505 = vmatprep.mubr.f32.mxu0 0.0
    %1506 = vmatmul.mubr.f32.gmra.mrb[0].mxu0 %v1258
    %v1507 = vpop.f32.mrb[0].mxu0
    %v1508 = vadd.f32 %v1399, %v1507
    %v1509 = vpop.f32.mrb[0].mxu0
    %1510 = vmatprep.mubr.f32.mxu0 0.0
    %1511 = vmatmul.mubr.f32.gmra.mrb[0].mxu0 %v1259
    %v1512 = vpop.f32.mrb[0].mxu0
    %v1513 = vadd.f32 %v1399, %v1512
    %v1514 = vpop.f32.mrb[0].mxu0
    %1515 = vmatprep.mubr.f32.mxu0 0.0
    %1516 = vmatmul.mubr.f32.gmra.mrb[0].mxu0 %v1260
    %v1517 = vpop.f32.mrb[0].mxu0
    %v1518 = vadd.f32 %v1399, %v1517
    %v1519 = vpop.f32.mrb[0].mxu0
    %1520 = vmatprep.mubr.f32.mxu0 0.0
    %1521 = vmatmul.mubr.f32.gmra.mrb[0].mxu0 %v1261
    %v1522 = vpop.f32.mrb[0].mxu0
    %v1523 = vadd.f32 %v1399, %v1522
    %v1524 = vpop.f32.mrb[0].mxu0
    %1525 = vmatprep.mubr.f32.mxu0 0.0
    %1526 = vmatmul.mubr.f32.gmra.mrb[0].mxu0 %v1262
    %v1527 = vpop.f32.mrb[0].mxu0
    %v1528 = vadd.f32 %v1399, %v1527
    %v1529 = vpop.f32.mrb[0].mxu0
    %1530 = vmatprep.mubr.f32.mxu0 0.0
    %1531 = vmatmul.mubr.f32.gmra.mrb[0].mxu0 %v1263
    %v1532 = vpop.f32.mrb[0].mxu0
    %v1533 = vadd.f32 %v1399, %v1532
    %v1534 = vpop.f32.mrb[0].mxu0
    %1535 = vmatprep.mubr.f32.mxu0 0.0
    %1536 = vmatmul.mubr.f32.gmra.mrb[0].mxu0 %v1264
    %v1537 = vpop.f32.mrb[0].mxu0
    %v1538 = vadd.f32 %v1399, %v1537
    %v1539 = vpop.f32.mrb[0].mxu0
    %1540 = vmatprep.mubr.f32.mxu0 0.0
    %1541 = vmatmul.mubr.f32.gmra.mrb[0].mxu0 %v1265
    %v1542 = vpop.f32.mrb[0].mxu0
    %v1543 = vadd.f32 %v1399, %v1542
    %v1544 = vpop.f32.mrb[0].mxu0
    %1545 = vmatprep.mubr.f32.mxu0 0.0
    %1546 = vmatmul.mubr.f32.gmra.mrb[0].mxu0 %v1266
    %v1547 = vpop.f32.mrb[0].mxu0
    %v1548 = vadd.f32 %v1399, %v1547
    %v1549 = vpop.f32.mrb[0].mxu0
    %1550 = vmatprep.mubr.f32.mxu0 0.0
    %1551 = vmatmul.mubr.f32.gmra.mrb[0].mxu0 %v1267
    %v1552 = vpop.f32.mrb[0].mxu0
    %v1553 = vadd.f32 %v1399, %v1552
    %v1554 = vpop.f32.mrb[0].mxu0
    %1555 = vmatprep.mubr.f32.mxu0 0.0
    %1556 = vmatmul.mubr.f32.gmra.mrb[0].mxu0 %v1268
    %v1557 = vpop.f32.mrb[0].mxu0
    %v1558 = vadd.f32 %v1399, %v1557
    %v1559 = vpop.f32.mrb[0].mxu0
    %1560 = vmatprep.mubr.f32.mxu0 0.0
    %1561 = vmatmul.mubr.f32.gmra.mrb[0].mxu0 %v1269
    %v1562 = vpop.f32.mrb[0].mxu0
    %v1563 = vadd.f32 %v1399, %v1562
    %v1564 = vpop.f32.mrb[0].mxu0
    %1565 = vmatprep.mubr.f32.mxu0 0.0
    %1566 = vmatmul.mubr.f32.gmra.mrb[0].mxu0 %v1270
    %v1567 = vpop.f32.mrb[0].mxu0
    %v1568 = vadd.f32 %v1399, %v1567
    %v1569 = vpop.f32.mrb[0].mxu0
    %1570 = vmatprep.mubr.f32.mxu0 0.0
    %1571 = vmatmul.mubr.f32.gmra.mrb[0].mxu0 %v1271
    %v1572 = vpop.f32.mrb[0].mxu0
    %v1573 = vadd.f32 %v1399, %v1572
    %v1574 = vpop.f32.mrb[0].mxu0
    %1575 = vmatprep.mubr.f32.mxu0 0.0
    %1576 = vmatmul.mubr.f32.gmra.mrb[0].mxu0 %v1272
    %v1577 = vpop.f32.mrb[0].mxu0
    %v1578 = vadd.f32 %v1399, %v1577
    %v1579 = vpop.f32.mrb[0].mxu0
    %1580 = vmatprep.mubr.f32.mxu0 0.0
    %1581 = vmatmul.mubr.f32.gmra.mrb[0].mxu0 %v1273
    %v1582 = vpop.f32.mrb[0].mxu0
    %v1583 = vadd.f32 %v1399, %v1582
    %v1584 = vpop.f32.mrb[0].mxu0
    %1585 = vmatprep.mubr.f32.mxu0 0.0
    %1586 = vmatmul.mubr.f32.gmra.mrb[0].mxu0 %v1274
    %v1587 = vpop.f32.mrb[0].mxu0
    %v1588 = vadd.f32 %v1399, %v1587
    %v1589 = vpop.f32.mrb[0].mxu0
    %1590 = vmatprep.mubr.f32.mxu0 0.0
    %1591 = vmatmul.mubr.f32.gmra.mrb[0].mxu0 %v1275
    %v1592 = vpop.f32.mrb[0].mxu0
    %v1593 = vadd.f32 %v1399, %v1592
    %v1594 = vpop.f32.mrb[0].mxu0
    %1595 = vmatprep.mubr.f32.mxu0 0.0
    %1596 = vmatmul.mubr.f32.gmra.mrb[0].mxu0 %v1276
    %v1597 = vpop.f32.mrb[0].mxu0
    %v1598 = vadd.f32 %v1399, %v1597
    %v1599 = vpop.f32.mrb[0].mxu0
    %1600 = vmatprep.mubr.f32.mxu0 0.0
    %1601 = vmatmul.mubr.f32.gmra.mrb[0].mxu0 %v1277
    %v1602 = vpop.f32.mrb[0].mxu0
    %v1603 = vadd.f32 %v1399, %v1602
    %v1604 = vpop.f32.mrb[0].mxu0
    %1605 = vmatprep.mubr.f32.mxu0 0.0
    %1606 = vmatmul.mubr.f32.gmra.mrb[0].mxu0 %v1278
    %v1607 = vpop.f32.mrb[0].mxu0
    %v1608 = vadd.f32 %v1399, %v1607
    %v1609 = vpop.f32.mrb[0].mxu0
    %1610 = vmatprep.mubr.f32.mxu0 0.0
    %1611 = vmatmul.mubr.f32.gmra.mrb[0].mxu0 %v1279
    %v1612 = vpop.f32.mrb[0].mxu0
    %v1613 = vadd.f32 %v1399, %v1612
    %v1614 = vpop.f32.mrb[0].mxu0
    %1615 = vmatprep.mubr.f32.mxu0 0.0
    %1616 = vmatmul.mubr.f32.gmra.mrb[0].mxu0 %v1280
    %v1617 = vpop.f32.mrb[0].mxu0
    %v1618 = vadd.f32 %v1399, %v1617
    %v1619 = vpop.f32.mrb[0].mxu0
    %1620 = vmatprep.mubr.f32.mxu0 0.0
    %1621 = vmatmul.mubr.f32.gmra.mrb[0].mxu0 %v1281
    %v1622 = vpop.f32.mrb[0].mxu0
    %v1623 = vadd.f32 %v1399, %v1622
    %v1624 = vpop.f32.mrb[0].mxu0
    %1625 = vmatprep.mubr.f32.mxu0 0.0
    %1626 = vmatmul.mubr.f32.gmra.mrb[0].mxu0 %v1282
    %v1627 = vpop.f32.mrb[0].mxu0
    %v1628 = vadd.f32 %v1399, %v1627
    %v1629 = vpop.f32.mrb[0].mxu0
    %1630 = vmatprep.mubr.f32.mxu0 0.0
    %1631 = vmatmul.mubr.f32.gmra.mrb[0].mxu0 %v1283
    %v1632 = vpop.f32.mrb[0].mxu0
    %v1633 = vadd.f32 %v1399, %v1632
    %v1634 = vpop.f32.mrb[0].mxu0
    %1635 = vmatprep.mubr.f32.mxu0 0.0
    %1636 = vmatmul.mubr.f32.gmra.mrb[0].mxu0 %v1284
    %v1637 = vpop.f32.mrb[0].mxu0
    %v1638 = vadd.f32 %v1399, %v1637
    %v1639 = vpop.f32.mrb[0].mxu0
    %1640 = vmatprep.mubr.f32.mxu0 0.0
    %1641 = vmatmul.mubr.f32.gmra.mrb[0].mxu0 %v1285
    %v1642 = vpop.f32.mrb[0].mxu0
    %v1643 = vadd.f32 %v1399, %v1642
    %v1644 = vpop.f32.mrb[0].mxu0
    %1645 = vmatprep.mubr.f32.mxu0 0.0
    %1646 = vmatmul.mubr.f32.gmra.mrb[0].mxu0 %v1286
    %v1647 = vpop.f32.mrb[0].mxu0
    %v1648 = vadd.f32 %v1399, %v1647
    %v1649 = vpop.f32.mrb[0].mxu0
    %1650 = vmatprep.mubr.f32.mxu0 0.0
    %1651 = vmatmul.mubr.f32.gmra.mrb[0].mxu0 %v1287
    %v1652 = vpop.f32.mrb[0].mxu0
    %v1653 = vadd.f32 %v1399, %v1652
    %v1654 = vpop.f32.mrb[0].mxu0
    %1655 = vmatprep.mubr.f32.mxu0 0.0
    %1656 = vmatmul.mubr.f32.gmra.mrb[0].mxu0 %v1288
    %v1657 = vpop.f32.mrb[0].mxu0
    %v1658 = vadd.f32 %v1399, %v1657
    %v1659 = vpop.f32.mrb[0].mxu0
    %1660 = vmatprep.mubr.f32.mxu0 0.0
    %1661 = vmatmul.mubr.f32.gmra.mrb[0].mxu0 %v1289
    %v1662 = vpop.f32.mrb[0].mxu0
    %v1663 = vadd.f32 %v1399, %v1662
    %v1664 = vpop.f32.mrb[0].mxu0
    %1665 = vmatprep.mubr.f32.mxu0 0.0
    %1666 = vmatmul.mubr.f32.gmra.mrb[0].mxu0 %v1290
    %v1667 = vpop.f32.mrb[0].mxu0
    %v1668 = vadd.f32 %v1399, %v1667
    %v1669 = vpop.f32.mrb[0].mxu0
    %1670 = vmatprep.mubr.f32.mxu0 0.0
    %1671 = vmatmul.mubr.f32.gmra.mrb[0].mxu0 %v1291
    %v1672 = vpop.f32.mrb[0].mxu0
    %v1673 = vadd.f32 %v1399, %v1672
    %v1674 = vpop.f32.mrb[0].mxu0
    %1675 = vmatprep.mubr.f32.mxu0 0.0
    %1676 = vmatmul.mubr.f32.gmra.mrb[0].mxu0 %v1292
    %v1677 = vpop.f32.mrb[0].mxu0
    %v1678 = vadd.f32 %v1399, %v1677
    %v1679 = vpop.f32.mrb[0].mxu0
    %1680 = vmatprep.mubr.f32.mxu0 0.0
    %1681 = vmatmul.mubr.f32.gmra.mrb[0].mxu0 %v1293
    %v1682 = vpop.f32.mrb[0].mxu0
    %v1683 = vadd.f32 %v1399, %v1682
    %v1684 = vpop.f32.mrb[0].mxu0
    %1685 = vmatprep.mubr.f32.mxu0 0.0
    %1686 = vmatmul.mubr.f32.gmra.mrb[0].mxu0 %v1294
    %v1687 = vpop.f32.mrb[0].mxu0
    %v1688 = vadd.f32 %v1399, %v1687
    %v1689 = vpop.f32.mrb[0].mxu0
    %1690 = vmatprep.mubr.f32.mxu0 0.0
    %1691 = vmatmul.mubr.f32.gmra.mrb[0].mxu0 %v1295
    %v1692 = vpop.f32.mrb[0].mxu0
    %v1693 = vadd.f32 %v1399, %v1692
    %v1694 = vpop.f32.mrb[0].mxu0
    %1695 = vmatprep.mubr.f32.mxu0 0.0
    %1696 = vmatmul.mubr.f32.gmra.mrb[0].mxu0 %v1296
    %v1697 = vpop.f32.mrb[0].mxu0
    %v1698 = vadd.f32 %v1399, %v1697
    %v1699 = vpop.f32.mrb[0].mxu0
    %1700 = vmatprep.mubr.f32.mxu0 0.0
    %1701 = vmatmul.mubr.f32.gmra.mrb[0].mxu0 %v1297
    %v1702 = vpop.f32.mrb[0].mxu0
    %v1703 = vadd.f32 %v1399, %v1702
    %v1704 = vpop.f32.mrb[0].mxu0
    %1705 = vmatprep.mubr.f32.mxu0 0.0
    %1706 = vmatmul.mubr.f32.gmra.mrb[0].mxu0 %v1298
    %v1707 = vpop.f32.mrb[0].mxu0
    %v1708 = vadd.f32 %v1399, %v1707
    %v1709 = vpop.f32.mrb[0].mxu0
    %1710 = vmatprep.mubr.f32.mxu0 0.0
    %1711 = vmatmul.mubr.f32.gmra.mrb[0].mxu0 %v1299
    %v1712 = vpop.f32.mrb[0].mxu0
    %v1713 = vadd.f32 %v1399, %v1712
    %v1714 = vpop.f32.mrb[0].mxu0
    %1715 = vmatprep.mubr.f32.mxu0 0.0
    %1716 = vmatmul.mubr.f32.gmra.mrb[0].mxu0 %v1300
    %v1717 = vpop.f32.mrb[0].mxu0
    %v1718 = vadd.f32 %v1399, %v1717
    %v1719 = vpop.f32.mrb[0].mxu0
    %1720 = vmatprep.mubr.f32.mxu0 0.0
    %1721 = vmatmul.mubr.f32.gmra.mrb[0].mxu0 %v1301
    %v1722 = vpop.f32.mrb[0].mxu0
    %v1723 = vadd.f32 %v1399, %v1722
    %v1724 = vpop.f32.mrb[0].mxu0
    %1725 = vmatprep.mubr.f32.mxu0 0.0
    %1726 = vmatmul.mubr.f32.gmra.mrb[0].mxu0 %v1302
    %v1727 = vpop.f32.mrb[0].mxu0
    %v1728 = vadd.f32 %v1399, %v1727
    %v1729 = vpop.f32.mrb[0].mxu0
    %1730 = vmatprep.mubr.f32.mxu0 0.0
    %1731 = vmatmul.mubr.f32.gmra.mrb[0].mxu0 %v1303
    %v1732 = vpop.f32.mrb[0].mxu0
    %v1733 = vadd.f32 %v1399, %v1732
    %v1734 = vpop.f32.mrb[0].mxu0
    %1735 = vmatprep.mubr.f32.mxu0 0.0
    %1736 = vmatmul.mubr.f32.gmra.mrb[0].mxu0 %v1304
    %v1737 = vpop.f32.mrb[0].mxu0
    %v1738 = vadd.f32 %v1399, %v1737
    %v1739 = vpop.f32.mrb[0].mxu0
    %1740 = vmatprep.mubr.f32.mxu0 0.0
    %1741 = vmatmul.mubr.f32.gmra.mrb[0].mxu0 %v1305
    %v1742 = vpop.f32.mrb[0].mxu0
    %v1743 = vadd.f32 %v1399, %v1742
    %v1744 = vpop.f32.mrb[0].mxu0
    %1745 = vmatprep.mubr.f32.mxu0 0.0
    %1746 = vmatmul.mubr.f32.gmra.mrb[0].mxu0 %v1306
    %v1747 = vpop.f32.mrb[0].mxu0
    %v1748 = vadd.f32 %v1399, %v1747
    %v1749 = vpop.f32.mrb[0].mxu0
    %1750 = vmatprep.mubr.f32.mxu0 0.0
    %1751 = vmatmul.mubr.f32.gmra.mrb[0].mxu0 %v1307
    %v1752 = vpop.f32.mrb[0].mxu0
    %v1753 = vadd.f32 %v1399, %v1752
    %v1754 = vpop.f32.mrb[0].mxu0
    %1755 = vmatprep.mubr.f32.mxu0 0.0
    %1756 = vmatmul.mubr.f32.gmra.mrb[0].mxu0 %v1308
    %v1757 = vpop.f32.mrb[0].mxu0
    %v1758 = vadd.f32 %v1399, %v1757
    %v1759 = vpop.f32.mrb[0].mxu0
    %1760 = vmatprep.mubr.f32.mxu0 0.0
    %1761 = vmatmul.mubr.f32.gmra.mrb[0].mxu0 %v1309
    %v1762 = vpop.f32.mrb[0].mxu0
    %v1763 = vadd.f32 %v1399, %v1762
    %v1764 = vpop.f32.mrb[0].mxu0
    %1765 = vmatprep.mubr.f32.mxu0 0.0
    %1766 = vmatmul.mubr.f32.gmra.mrb[0].mxu0 %v1310
    %v1767 = vpop.f32.mrb[0].mxu0
    %v1768 = vadd.f32 %v1399, %v1767
    %v1769 = vpop.f32.mrb[0].mxu0
    %1770 = vmatprep.mubr.f32.mxu0 0.0
    %1771 = vmatmul.mubr.f32.gmra.mrb[0].mxu0 %v1311
    %v1772 = vpop.f32.mrb[0].mxu0
    %v1773 = vadd.f32 %v1399, %v1772
    %v1774 = vpop.f32.mrb[0].mxu0
    %1775 = vmatprep.mubr.f32.mxu0 0.0
    %1776 = vmatmul.mubr.f32.gmra.mrb[0].mxu0 %v1312
    %v1777 = vpop.f32.mrb[0].mxu0
    %v1778 = vadd.f32 %v1399, %v1777
    %v1779 = vpop.f32.mrb[0].mxu0
    %1780 = vmatprep.mubr.f32.mxu0 0.0
    %1781 = vmatmul.mubr.f32.gmra.mrb[0].mxu0 %v1313
    %v1782 = vpop.f32.mrb[0].mxu0
    %v1783 = vadd.f32 %v1399, %v1782
    %v1784 = vpop.f32.mrb[0].mxu0
    %1785 = vmatprep.mubr.f32.mxu0 0.0
    %1786 = vmatmul.mubr.f32.gmra.mrb[0].mxu0 %v1314
    %v1787 = vpop.f32.mrb[0].mxu0
    %v1788 = vadd.f32 %v1399, %v1787
    %v1789 = vpop.f32.mrb[0].mxu0
    %1790 = vmatprep.mubr.f32.mxu0 0.0
    %1791 = vmatmul.mubr.f32.gmra.mrb[0].mxu0 %v1315
    %v1792 = vpop.f32.mrb[0].mxu0
    %v1793 = vadd.f32 %v1399, %v1792
    %v1794 = vpop.f32.mrb[0].mxu0
    %1795 = vmatprep.mubr.f32.mxu0 0.0
    %1796 = vmatmul.mubr.f32.gmra.mrb[0].mxu0 %v1316
    %v1797 = vpop.f32.mrb[0].mxu0
    %v1798 = vadd.f32 %v1399, %v1797
    %v1799 = vpop.f32.mrb[0].mxu0
    %1800 = vmatprep.mubr.f32.mxu0 0.0
    %1801 = vmatmul.mubr.f32.gmra.mrb[0].mxu0 %v1317
    %v1802 = vpop.f32.mrb[0].mxu0
    %v1803 = vadd.f32 %v1399, %v1802
    %v1804 = vpop.f32.mrb[0].mxu0
    %1805 = vmatprep.mubr.f32.mxu0 0.0
    %1806 = vmatmul.mubr.f32.gmra.mrb[0].mxu0 %v1318
    %v1807 = vpop.f32.mrb[0].mxu0
    %v1808 = vadd.f32 %v1399, %v1807
    %v1809 = vpop.f32.mrb[0].mxu0
    %1810 = vmatprep.mubr.f32.mxu0 0.0
    %1811 = vmatmul.mubr.f32.gmra.mrb[0].mxu0 %v1319
    %v1812 = vpop.f32.mrb[0].mxu0
    %v1813 = vadd.f32 %v1399, %v1812
    %v1814 = vpop.f32.mrb[0].mxu0
    %1815 = vmatprep.mubr.f32.mxu0 0.0
    %1816 = vmatmul.mubr.f32.gmra.mrb[0].mxu0 %v1320
    %v1817 = vpop.f32.mrb[0].mxu0
    %v1818 = vadd.f32 %v1399, %v1817
    %v1819 = vpop.f32.mrb[0].mxu0
    %1820 = vmatprep.mubr.f32.mxu0 0.0
    %1821 = vmatmul.mubr.f32.gmra.mrb[0].mxu0 %v1321
    %v1822 = vpop.f32.mrb[0].mxu0
    %v1823 = vadd.f32 %v1399, %v1822
    %v1824 = vpop.f32.mrb[0].mxu0
    %1825 = vmatprep.mubr.f32.mxu0 0.0
    %1826 = vmatmul.mubr.f32.gmra.mrb[0].mxu0 %v1322
    %v1827 = vpop.f32.mrb[0].mxu0
    %v1828 = vadd.f32 %v1399, %v1827
    %v1829 = vpop.f32.mrb[0].mxu0
    %1830 = vmatprep.mubr.f32.mxu0 0.0
    %1831 = vmatmul.mubr.f32.gmra.mrb[0].mxu0 %v1323
    %v1832 = vpop.f32.mrb[0].mxu0
    %v1833 = vadd.f32 %v1399, %v1832
    %v1834 = vpop.f32.mrb[0].mxu0
    %1835 = vmatprep.mubr.f32.mxu0 0.0
    %1836 = vmatmul.mubr.f32.gmra.mrb[0].mxu0 %v1324
    %v1837 = vpop.f32.mrb[0].mxu0
    %v1838 = vadd.f32 %v1399, %v1837
    %v1839 = vpop.f32.mrb[0].mxu0
    %1840 = vmatprep.mubr.f32.mxu0 0.0
    %1841 = vmatmul.mubr.f32.gmra.mrb[0].mxu0 %v1325
    %v1842 = vpop.f32.mrb[0].mxu0
    %v1843 = vadd.f32 %v1399, %v1842
    %v1844 = vpop.f32.mrb[0].mxu0
    %1845 = vmatprep.mubr.f32.mxu0 0.0
    %1846 = vmatmul.mubr.f32.gmra.mrb[0].mxu0 %v1326
    %v1847 = vpop.f32.mrb[0].mxu0
    %v1848 = vadd.f32 %v1399, %v1847
    %v1849 = vpop.f32.mrb[0].mxu0
    %1850 = vmatprep.mubr.f32.mxu0 0.0
    %1851 = vmatmul.mubr.f32.gmra.mrb[0].mxu0 %v1327
    %v1852 = vpop.f32.mrb[0].mxu0
    %v1853 = vadd.f32 %v1399, %v1852
    %v1854 = vpop.f32.mrb[0].mxu0
    %1855 = vmatprep.mubr.f32.mxu0 0.0
    %1856 = vmatmul.mubr.f32.gmra.mrb[0].mxu0 %v1328
    %v1857 = vpop.f32.mrb[0].mxu0
    %v1858 = vadd.f32 %v1399, %v1857
    %v1859 = vpop.f32.mrb[0].mxu0
    %1860 = vmatprep.mubr.f32.mxu0 0.0
    %1861 = vmatmul.mubr.f32.gmra.mrb[0].mxu0 %v1329
    %v1862 = vpop.f32.mrb[0].mxu0
    %v1863 = vadd.f32 %v1399, %v1862
    %v1864 = vpop.f32.mrb[0].mxu0
    %1865 = vmatprep.mubr.f32.mxu0 0.0
    %1866 = vmatmul.mubr.f32.gmra.mrb[0].mxu0 %v1330
    %v1867 = vpop.f32.mrb[0].mxu0
    %v1868 = vadd.f32 %v1399, %v1867
    %v1869 = vpop.f32.mrb[0].mxu0
    %1870 = vmatprep.mubr.f32.mxu0 0.0
    %1871 = vmatmul.mubr.f32.gmra.mrb[0].mxu0 %v1331
    %v1872 = vpop.f32.mrb[0].mxu0
    %v1873 = vadd.f32 %v1399, %v1872
    %v1874 = vpop.f32.mrb[0].mxu0
    %1875 = vmatprep.mubr.f32.mxu0 0.0
    %1876 = vmatmul.mubr.f32.gmra.mrb[0].mxu0 %v1332
    %v1877 = vpop.f32.mrb[0].mxu0
    %v1878 = vadd.f32 %v1399, %v1877
    %v1879 = vpop.f32.mrb[0].mxu0
    %1880 = vmatprep.mubr.f32.mxu0 0.0
    %1881 = vmatmul.mubr.f32.gmra.mrb[0].mxu0 %v1333
    %v1882 = vpop.f32.mrb[0].mxu0
    %v1883 = vadd.f32 %v1399, %v1882
    %v1884 = vpop.f32.mrb[0].mxu0
    %1885 = vmatprep.mubr.f32.mxu0 0.0
    %1886 = vmatmul.mubr.f32.gmra.mrb[0].mxu0 %v1334
    %v1887 = vpop.f32.mrb[0].mxu0
    %v1888 = vadd.f32 %v1399, %v1887
    %v1889 = vpop.f32.mrb[0].mxu0
    %1890 = vmatprep.mubr.f32.mxu0 0.0
    %1891 = vmatmul.mubr.f32.gmra.mrb[0].mxu0 %v1335
    %v1892 = vpop.f32.mrb[0].mxu0
    %v1893 = vadd.f32 %v1399, %v1892
    %v1894 = vpop.f32.mrb[0].mxu0
    %1895 = vmatprep.mubr.f32.mxu0 0.0
    %1896 = vmatmul.mubr.f32.gmra.mrb[0].mxu0 %v1336
    %v1897 = vpop.f32.mrb[0].mxu0
    %v1898 = vadd.f32 %v1399, %v1897
    %v1899 = vpop.f32.mrb[0].mxu0
    %1900 = vmatprep.mubr.f32.mxu0 0.0
    %1901 = vmatmul.mubr.f32.gmra.mrb[0].mxu0 %v1337
    %v1902 = vpop.f32.mrb[0].mxu0
    %v1903 = vadd.f32 %v1399, %v1902
    %v1904 = vpop.f32.mrb[0].mxu0
    %1905 = vmatprep.mubr.f32.mxu0 0.0
    %1906 = vmatmul.mubr.f32.gmra.mrb[0].mxu0 %v1338
    %v1907 = vpop.f32.mrb[0].mxu0
    %v1908 = vadd.f32 %v1399, %v1907
    %v1909 = vpop.f32.mrb[0].mxu0
    %1910 = vmatprep.mubr.f32.mxu0 0.0
    %1911 = vmatmul.mubr.f32.gmra.mrb[0].mxu0 %v1339
    %v1912 = vpop.f32.mrb[0].mxu0
    %v1913 = vadd.f32 %v1399, %v1912
    %v1914 = vpop.f32.mrb[0].mxu0
    %1915 = vmatprep.mubr.f32.mxu0 0.0
    %1916 = vmatmul.mubr.f32.gmra.mrb[0].mxu0 %v1340
    %v1917 = vpop.f32.mrb[0].mxu0
    %v1918 = vadd.f32 %v1399, %v1917
    %v1919 = vpop.f32.mrb[0].mxu0
    %1920 = vmatprep.mubr.f32.mxu0 0.0
    %1921 = vmatmul.mubr.f32.gmra.mrb[0].mxu0 %v1341
    %v1922 = vpop.f32.mrb[0].mxu0
    %v1923 = vadd.f32 %v1399, %v1922
    %v1924 = vpop.f32.mrb[0].mxu0
    %1925 = vmatprep.mubr.f32.mxu0 0.0
    %1926 = vmatmul.mubr.f32.gmra.mrb[0].mxu0 %v1342
    %v1927 = vpop.f32.mrb[0].mxu0
    %v1928 = vadd.f32 %v1399, %v1927
    %v1929 = vpop.f32.mrb[0].mxu0
    %1930 = vmatprep.mubr.f32.mxu0 0.0
    %1931 = vmatmul.mubr.f32.gmra.mrb[0].mxu0 %v1343
    %v1932 = vpop.f32.mrb[0].mxu0
    %v1933 = vadd.f32 %v1399, %v1932
    %v1934 = vpop.f32.mrb[0].mxu0
    %1935 = vmatprep.mubr.f32.mxu0 0.0
    %1936 = vmatmul.mubr.f32.gmra.mrb[0].mxu0 %v1344
    %v1937 = vpop.f32.mrb[0].mxu0
    %v1938 = vadd.f32 %v1399, %v1937
    %v1939 = vpop.f32.mrb[0].mxu0
    %1940 = vmatprep.mubr.f32.mxu0 0.0
    %1941 = vmatmul.mubr.f32.gmra.mrb[0].mxu0 %v1345
    %v1942 = vpop.f32.mrb[0].mxu0
    %v1943 = vadd.f32 %v1399, %v1942
    %v1944 = vpop.f32.mrb[0].mxu0
    %1945 = vmatprep.mubr.f32.mxu0 0.0
    %1946 = vmatmul.mubr.f32.gmra.mrb[0].mxu0 %v1346
    %v1947 = vpop.f32.mrb[0].mxu0
    %v1948 = vadd.f32 %v1399, %v1947
    %v1949 = vpop.f32.mrb[0].mxu0
    %1950 = vmatprep.mubr.f32.mxu0 0.0
    %1951 = vmatmul.mubr.f32.gmra.mrb[0].mxu0 %v1347
    %v1952 = vpop.f32.mrb[0].mxu0
    %v1953 = vadd.f32 %v1399, %v1952
    %v1954 = vpop.f32.mrb[0].mxu0
    %1955 = vmatprep.mubr.f32.mxu0 0.0
    %1956 = vmatmul.mubr.f32.gmra.mrb[0].mxu0 %v1348
    %v1957 = vpop.f32.mrb[0].mxu0
    %v1958 = vadd.f32 %v1399, %v1957
    %v1959 = vpop.f32.mrb[0].mxu0
    %1960 = vmatprep.mubr.f32.mxu0 0.0
    %1961 = vmatmul.mubr.f32.gmra.mrb[0].mxu0 %v1349
    %v1962 = vpop.f32.mrb[0].mxu0
    %v1963 = vadd.f32 %v1399, %v1962
    %v1964 = vpop.f32.mrb[0].mxu0
    %1965 = vmatprep.mubr.f32.mxu0 0.0
    %1966 = vmatmul.mubr.f32.gmra.mrb[0].mxu0 %v1350
    %v1967 = vpop.f32.mrb[0].mxu0
    %v1968 = vadd.f32 %v1399, %v1967
    %v1969 = vpop.f32.mrb[0].mxu0
    %1970 = vmatprep.mubr.f32.mxu0 0.0
    %1971 = vmatmul.mubr.f32.gmra.mrb[0].mxu0 %v1351
    %v1972 = vpop.f32.mrb[0].mxu0
    %v1973 = vadd.f32 %v1399, %v1972
    %v1974 = vpop.f32.mrb[0].mxu0
    %1975 = vmatprep.mubr.f32.mxu0 0.0
    %1976 = vmatmul.mubr.f32.gmra.mrb[0].mxu0 %v1352
    %v1977 = vpop.f32.mrb[0].mxu0
    %v1978 = vadd.f32 %v1399, %v1977
    %v1979 = vpop.f32.mrb[0].mxu0
    %1980 = vmatprep.mubr.f32.mxu0 0.0
    %1981 = vmatmul.mubr.f32.gmra.mrb[0].mxu0 %v1353
    %v1982 = vpop.f32.mrb[0].mxu0
    %v1983 = vadd.f32 %v1399, %v1982
    %v1984 = vpop.f32.mrb[0].mxu0
    %1985 = vmatprep.mubr.f32.mxu0 0.0
    %1986 = vmatmul.mubr.f32.gmra.mrb[0].mxu0 %v1354
    %v1987 = vpop.f32.mrb[0].mxu0
    %v1988 = vadd.f32 %v1399, %v1987
    %v1989 = vpop.f32.mrb[0].mxu0
    %1990 = vmatprep.mubr.f32.mxu0 0.0
    %1991 = vmatmul.mubr.f32.gmra.mrb[0].mxu0 %v1355
    %v1992 = vpop.f32.mrb[0].mxu0
    %v1993 = vadd.f32 %v1399, %v1992
    %v1994 = vpop.f32.mrb[0].mxu0
    %1995 = vmatprep.mubr.f32.mxu0 0.0
    %1996 = vmatmul.mubr.f32.gmra.mrb[0].mxu0 %v1356
    %v1997 = vpop.f32.mrb[0].mxu0
    %v1998 = vadd.f32 %v1399, %v1997
    %v1999 = vpop.f32.mrb[0].mxu0
    %2000 = vmatprep.mubr.f32.mxu0 0.0
    %2001 = vmatmul.mubr.f32.gmra.mrb[0].mxu0 %v1357
    %v2002 = vpop.f32.mrb[0].mxu0
    %v2003 = vadd.f32 %v1399, %v2002
    %v2004 = vpop.f32.mrb[0].mxu0
    %2005 = vmatprep.mubr.f32.mxu0 0.0
    %2006 = vmatmul.mubr.f32.gmra.mrb[0].mxu0 %v1358
    %v2007 = vpop.f32.mrb[0].mxu0
    %v2008 = vadd.f32 %v1399, %v2007
    %v2009 = vpop.f32.mrb[0].mxu0
    %2010 = vmatprep.mubr.f32.mxu0 0.0
    %2011 = vmatmul.mubr.f32.gmra.mrb[0].mxu0 %v1359
    %v2012 = vpop.f32.mrb[0].mxu0
    %v2013 = vadd.f32 %v1399, %v2012
    %v2014 = vpop.f32.mrb[0].mxu0
    %2015 = vmatprep.mubr.f32.mxu0 0.0
    %2016 = vmatmul.mubr.f32.gmra.mrb[0].mxu0 %v1360
    %v2017 = vpop.f32.mrb[0].mxu0
    %v2018 = vadd.f32 %v1399, %v2017
    %v2019 = vpop.f32.mrb[0].mxu0
    %2020 = vmatprep.mubr.f32.mxu0 0.0
    %2021 = vmatmul.mubr.f32.gmra.mrb[0].mxu0 %v1361
    %v2022 = vpop.f32.mrb[0].mxu0
    %v2023 = vadd.f32 %v1399, %v2022
    %v2024 = vpop.f32.mrb[0].mxu0
    %2025 = vmatprep.mubr.f32.mxu0 0.0
    %2026 = vmatmul.mubr.f32.gmra.mrb[0].mxu0 %v1362
    %v2027 = vpop.f32.mrb[0].mxu0
    %v2028 = vadd.f32 %v1399, %v2027
    %v2029 = vpop.f32.mrb[0].mxu0
    %2030 = vmatprep.mubr.f32.mxu0 0.0
    %2031 = vmatmul.mubr.f32.gmra.mrb[0].mxu0 %v1363
    %v2032 = vpop.f32.mrb[0].mxu0
    %v2033 = vadd.f32 %v1399, %v2032
    %v2034 = vpop.f32.mrb[0].mxu0
    %2035 = vmatprep.mubr.f32.mxu0 0.0
    %2036 = vmatmul.mubr.f32.gmra.mrb[0].mxu0 %v1364
    %v2037 = vpop.f32.mrb[0].mxu0
    %v2038 = vadd.f32 %v1399, %v2037
    %v2039 = vpop.f32.mrb[0].mxu0
    %2040 = vmatprep.mubr.f32.mxu0 0.0
    %2041 = vmatmul.mubr.f32.gmra.mrb[0].mxu0 %v1365
    %v2042 = vpop.f32.mrb[0].mxu0
    %v2043 = vadd.f32 %v1399, %v2042
    %v2044 = vpop.f32.mrb[0].mxu0
    %2045 = vmatprep.mubr.f32.mxu0 0.0
    %2046 = vmatmul.mubr.f32.gmra.mrb[0].mxu0 %v1366
    %v2047 = vpop.f32.mrb[0].mxu0
    %v2048 = vadd.f32 %v1399, %v2047
    %v2049 = vpop.f32.mrb[0].mxu0
    %2050 = vmatprep.mubr.f32.mxu0 0.0
    %2051 = vmatmul.mubr.f32.gmra.mrb[0].mxu0 %v1367
    %v2052 = vpop.f32.mrb[0].mxu0
    %v2053 = vadd.f32 %v1399, %v2052
    %v2054 = vpop.f32.mrb[0].mxu0
    %2055 = vmatprep.mubr.f32.mxu0 0.0
    %2056 = vmatmul.mubr.f32.gmra.mrb[0].mxu0 %v1368
    %v2057 = vpop.f32.mrb[0].mxu0
    %v2058 = vadd.f32 %v1399, %v2057
    %v2059 = vpop.f32.mrb[0].mxu0
    %2060 = vmatprep.mubr.f32.mxu0 0.0
    %2061 = vmatmul.mubr.f32.gmra.mrb[0].mxu0 %v1369
    %v2062 = vpop.f32.mrb[0].mxu0
    %v2063 = vadd.f32 %v1399, %v2062
    %v2064 = vpop.f32.mrb[0].mxu0
    %2065 = vmatprep.mubr.f32.mxu0 0.0
    %2066 = vmatmul.mubr.f32.gmra.mrb[0].mxu0 %v1370
    %v2067 = vpop.f32.mrb[0].mxu0
    %v2068 = vadd.f32 %v1399, %v2067
    %v2069 = vpop.f32.mrb[0].mxu0
    %2070 = vmatprep.mubr.f32.mxu0 0.0
    %2071 = vmatmul.mubr.f32.gmra.mrb[0].mxu0 %v1371
    %v2072 = vpop.f32.mrb[0].mxu0
    %v2073 = vadd.f32 %v1399, %v2072
    %v2074 = vpop.f32.mrb[0].mxu0
    %2075 = vmatprep.mubr.f32.mxu0 0.0
    %2076 = vmatmul.mubr.f32.gmra.mrb[0].mxu0 %v1372
    %v2077 = vpop.f32.mrb[0].mxu0
    %v2078 = vadd.f32 %v1399, %v2077
    %v2079 = vpop.f32.mrb[0].mxu0
    %2080 = vmatprep.mubr.f32.mxu0 0.0
    %2081 = vmatmul.mubr.f32.gmra.mrb[0].mxu0 %v1373
    %v2082 = vpop.f32.mrb[0].mxu0
    %v2083 = vadd.f32 %v1399, %v2082
    %v2084 = vpop.f32.mrb[0].mxu0
    %2085 = vmatprep.mubr.f32.mxu0 0.0
    %2086 = vmatmul.mubr.f32.gmra.mrb[0].mxu0 %v1374
    %v2087 = vpop.f32.mrb[0].mxu0
    %v2088 = vadd.f32 %v1399, %v2087
    %v2089 = vpop.f32.mrb[0].mxu0
    %2090 = vmatprep.mubr.f32.mxu0 0.0
    %2091 = vmatmul.mubr.f32.gmra.mrb[0].mxu0 %v1375
    %v2092 = vpop.f32.mrb[0].mxu0
    %v2093 = vadd.f32 %v1399, %v2092
    %v2094 = vpop.f32.mrb[0].mxu0
    %2095 = vmatprep.mubr.f32.mxu0 0.0
    %2096 = vmatmul.mubr.f32.gmra.mrb[0].mxu0 %v1376
    %v2097 = vpop.f32.mrb[0].mxu0
    %v2098 = vadd.f32 %v1399, %v2097
    %v2099 = vpop.f32.mrb[0].mxu0
    %2100 = vmatprep.mubr.f32.mxu0 0.0
    %2101 = vmatmul.mubr.f32.gmra.mrb[0].mxu0 %v1377
    %v2102 = vpop.f32.mrb[0].mxu0
    %v2103 = vadd.f32 %v1399, %v2102
    %v2104 = vpop.f32.mrb[0].mxu0
    %2105 = vdwg.mxu0
    %v2106 = vlaneseq
    %v2107 = vand.u32 %v2106, 127
    %vm2108 = vcmp.ge.s32.totalorder %v2107, 87
    %vm2109 = vcmp.lt.s32.totalorder %v2107, 95
    %vm2110 = vmand %vm2108, %vm2109
    %v2111 = vsel %vm2110, %v1468, -inf
    %v2112 = vsel %vm2110, %v1473, -inf
    %v2113 = vsel %vm2110, %v1478, -inf
    %v2114 = vsel %vm2110, %v1483, -inf
    %v2115 = vsel %vm2110, %v1488, -inf
    %v2116 = vsel %vm2110, %v1493, -inf
    %v2117 = vsel %vm2110, %v1498, -inf
    %v2118 = vsel %vm2110, %v1503, -inf
    %v2119 = vsel %vm2110, %v1508, -inf
    %v2120 = vsel %vm2110, %v1513, -inf
    %v2121 = vsel %vm2110, %v1518, -inf
    %v2122 = vsel %vm2110, %v1523, -inf
    %v2123 = vsel %vm2110, %v1528, -inf
    %v2124 = vsel %vm2110, %v1533, -inf
    %v2125 = vsel %vm2110, %v1538, -inf
    %v2126 = vsel %vm2110, %v1543, -inf
    %v2127 = vsel %vm2110, %v1548, -inf
    %v2128 = vsel %vm2110, %v1553, -inf
    %v2129 = vsel %vm2110, %v1558, -inf
    %v2130 = vsel %vm2110, %v1563, -inf
    %v2131 = vsel %vm2110, %v1568, -inf
    %v2132 = vsel %vm2110, %v1573, -inf
    %v2133 = vsel %vm2110, %v1578, -inf
    %v2134 = vsel %vm2110, %v1583, -inf
    %v2135 = vsel %vm2110, %v1588, -inf
    %v2136 = vsel %vm2110, %v1593, -inf
    %v2137 = vsel %vm2110, %v1598, -inf
    %v2138 = vsel %vm2110, %v1603, -inf
    %v2139 = vsel %vm2110, %v1608, -inf
    %v2140 = vsel %vm2110, %v1613, -inf
    %v2141 = vsel %vm2110, %v1618, -inf
    %v2142 = vsel %vm2110, %v1623, -inf
    %v2143 = vsel %vm2110, %v1628, -inf
    %v2144 = vsel %vm2110, %v1633, -inf
    %v2145 = vsel %vm2110, %v1638, -inf
    %v2146 = vsel %vm2110, %v1643, -inf
    %v2147 = vsel %vm2110, %v1648, -inf
    %v2148 = vsel %vm2110, %v1653, -inf
    %v2149 = vsel %vm2110, %v1658, -inf
    %v2150 = vsel %vm2110, %v1663, -inf
    %v2151 = vsel %vm2110, %v1668, -inf
    %v2152 = vsel %vm2110, %v1673, -inf
    %v2153 = vsel %vm2110, %v1678, -inf
    %v2154 = vsel %vm2110, %v1683, -inf
    %v2155 = vsel %vm2110, %v1688, -inf
    %v2156 = vsel %vm2110, %v1693, -inf
    %v2157 = vsel %vm2110, %v1698, -inf
    %v2158 = vsel %vm2110, %v1703, -inf
    %v2159 = vsel %vm2110, %v1708, -inf
    %v2160 = vsel %vm2110, %v1713, -inf
    %v2161 = vsel %vm2110, %v1718, -inf
    %v2162 = vsel %vm2110, %v1723, -inf
    %v2163 = vsel %vm2110, %v1728, -inf
    %v2164 = vsel %vm2110, %v1733, -inf
    %v2165 = vsel %vm2110, %v1738, -inf
    %v2166 = vsel %vm2110, %v1743, -inf
    %v2167 = vsel %vm2110, %v1748, -inf
    %v2168 = vsel %vm2110, %v1753, -inf
    %v2169 = vsel %vm2110, %v1758, -inf
    %v2170 = vsel %vm2110, %v1763, -inf
    %v2171 = vsel %vm2110, %v1768, -inf
    %v2172 = vsel %vm2110, %v1773, -inf
    %v2173 = vsel %vm2110, %v1778, -inf
    %v2174 = vsel %vm2110, %v1783, -inf
    %v2175 = vsel %vm2110, %v1788, -inf
    %v2176 = vsel %vm2110, %v1793, -inf
    %v2177 = vsel %vm2110, %v1798, -inf
    %v2178 = vsel %vm2110, %v1803, -inf
    %v2179 = vsel %vm2110, %v1808, -inf
    %v2180 = vsel %vm2110, %v1813, -inf
    %v2181 = vsel %vm2110, %v1818, -inf
    %v2182 = vsel %vm2110, %v1823, -inf
    %v2183 = vsel %vm2110, %v1828, -inf
    %v2184 = vsel %vm2110, %v1833, -inf
    %v2185 = vsel %vm2110, %v1838, -inf
    %v2186 = vsel %vm2110, %v1843, -inf
    %v2187 = vsel %vm2110, %v1848, -inf
    %v2188 = vsel %vm2110, %v1853, -inf
    %v2189 = vsel %vm2110, %v1858, -inf
    %v2190 = vsel %vm2110, %v1863, -inf
    %v2191 = vsel %vm2110, %v1868, -inf
    %v2192 = vsel %vm2110, %v1873, -inf
    %v2193 = vsel %vm2110, %v1878, -inf
    %v2194 = vsel %vm2110, %v1883, -inf
    %v2195 = vsel %vm2110, %v1888, -inf
    %v2196 = vsel %vm2110, %v1893, -inf
    %v2197 = vsel %vm2110, %v1898, -inf
    %v2198 = vsel %vm2110, %v1903, -inf
    %v2199 = vsel %vm2110, %v1908, -inf
    %v2200 = vsel %vm2110, %v1913, -inf
    %v2201 = vsel %vm2110, %v1918, -inf
    %v2202 = vsel %vm2110, %v1923, -inf
    %v2203 = vsel %vm2110, %v1928, -inf
    %v2204 = vsel %vm2110, %v1933, -inf
    %v2205 = vsel %vm2110, %v1938, -inf
    %v2206 = vsel %vm2110, %v1943, -inf
    %v2207 = vsel %vm2110, %v1948, -inf
    %v2208 = vsel %vm2110, %v1953, -inf
    %v2209 = vsel %vm2110, %v1958, -inf
    %v2210 = vsel %vm2110, %v1963, -inf
    %v2211 = vsel %vm2110, %v1968, -inf
    %v2212 = vsel %vm2110, %v1973, -inf
    %v2213 = vsel %vm2110, %v1978, -inf
    %v2214 = vsel %vm2110, %v1983, -inf
    %v2215 = vsel %vm2110, %v1988, -inf
    %v2216 = vsel %vm2110, %v1993, -inf
    %v2217 = vsel %vm2110, %v1998, -inf
    %v2218 = vsel %vm2110, %v2003, -inf
    %v2219 = vsel %vm2110, %v2008, -inf
    %v2220 = vsel %vm2110, %v2013, -inf
    %v2221 = vsel %vm2110, %v2018, -inf
    %v2222 = vsel %vm2110, %v2023, -inf
    %v2223 = vsel %vm2110, %v2028, -inf
    %v2224 = vsel %vm2110, %v2033, -inf
    %v2225 = vsel %vm2110, %v2038, -inf
    %v2226 = vsel %vm2110, %v2043, -inf
    %v2227 = vsel %vm2110, %v2048, -inf
    %v2228 = vsel %vm2110, %v2053, -inf
    %v2229 = vsel %vm2110, %v2058, -inf
    %v2230 = vsel %vm2110, %v2063, -inf
    %v2231 = vsel %vm2110, %v2068, -inf
    %v2232 = vsel %vm2110, %v2073, -inf
    %v2233 = vsel %vm2110, %v2078, -inf
    %v2234 = vsel %vm2110, %v2083, -inf
    %v2235 = vsel %vm2110, %v2088, -inf
    %v2236 = vsel %vm2110, %v2093, -inf
    %v2237 = vsel %vm2110, %v2098, -inf
    %v2238 = vsel %vm2110, %v2103, -inf
    %2239 = vmax.xlane.f32.xlu0 %v2111
    %v2240 = vpop.xlane.xlu0 %2239
    %2241 = vmax.xlane.f32.xlu0 %v2112
    %v2242 = vpop.xlane.xlu0 %2241
    %2243 = vmax.xlane.f32.xlu0 %v2113
    %v2244 = vpop.xlane.xlu0 %2243
    %2245 = vmax.xlane.f32.xlu0 %v2114
    %v2246 = vpop.xlane.xlu0 %2245
    %2247 = vmax.xlane.f32.xlu0 %v2115
    %v2248 = vpop.xlane.xlu0 %2247
    %2249 = vmax.xlane.f32.xlu0 %v2116
    %v2250 = vpop.xlane.xlu0 %2249
    %2251 = vmax.xlane.f32.xlu0 %v2117
    %v2252 = vpop.xlane.xlu0 %2251
    %2253 = vmax.xlane.f32.xlu0 %v2118
    %v2254 = vpop.xlane.xlu0 %2253
    %2255 = vmax.xlane.f32.xlu0 %v2119
    %v2256 = vpop.xlane.xlu0 %2255
    %2257 = vmax.xlane.f32.xlu0 %v2120
    %v2258 = vpop.xlane.xlu0 %2257
    %2259 = vmax.xlane.f32.xlu0 %v2121
    %v2260 = vpop.xlane.xlu0 %2259
    %2261 = vmax.xlane.f32.xlu0 %v2122
    %v2262 = vpop.xlane.xlu0 %2261
    %2263 = vmax.xlane.f32.xlu0 %v2123
    %v2264 = vpop.xlane.xlu0 %2263
    %2265 = vmax.xlane.f32.xlu0 %v2124
    %v2266 = vpop.xlane.xlu0 %2265
    %2267 = vmax.xlane.f32.xlu0 %v2125
    %v2268 = vpop.xlane.xlu0 %2267
    %2269 = vmax.xlane.f32.xlu0 %v2126
    %v2270 = vpop.xlane.xlu0 %2269
    %2271 = vmax.xlane.f32.xlu0 %v2127
    %v2272 = vpop.xlane.xlu0 %2271
    %2273 = vmax.xlane.f32.xlu0 %v2128
    %v2274 = vpop.xlane.xlu0 %2273
    %2275 = vmax.xlane.f32.xlu0 %v2129
    %v2276 = vpop.xlane.xlu0 %2275
    %2277 = vmax.xlane.f32.xlu0 %v2130
    %v2278 = vpop.xlane.xlu0 %2277
    %2279 = vmax.xlane.f32.xlu0 %v2131
    %v2280 = vpop.xlane.xlu0 %2279
    %2281 = vmax.xlane.f32.xlu0 %v2132
    %v2282 = vpop.xlane.xlu0 %2281
    %2283 = vmax.xlane.f32.xlu0 %v2133
    %v2284 = vpop.xlane.xlu0 %2283
    %2285 = vmax.xlane.f32.xlu0 %v2134
    %v2286 = vpop.xlane.xlu0 %2285
    %2287 = vmax.xlane.f32.xlu0 %v2135
    %v2288 = vpop.xlane.xlu0 %2287
    %2289 = vmax.xlane.f32.xlu0 %v2136
    %v2290 = vpop.xlane.xlu0 %2289
    %2291 = vmax.xlane.f32.xlu0 %v2137
    %v2292 = vpop.xlane.xlu0 %2291
    %2293 = vmax.xlane.f32.xlu0 %v2138
    %v2294 = vpop.xlane.xlu0 %2293
    %2295 = vmax.xlane.f32.xlu0 %v2139
    %v2296 = vpop.xlane.xlu0 %2295
    %2297 = vmax.xlane.f32.xlu0 %v2140
    %v2298 = vpop.xlane.xlu0 %2297
    %2299 = vmax.xlane.f32.xlu0 %v2141
    %v2300 = vpop.xlane.xlu0 %2299
    %2301 = vmax.xlane.f32.xlu0 %v2142
    %v2302 = vpop.xlane.xlu0 %2301
    %2303 = vmax.xlane.f32.xlu0 %v2143
    %v2304 = vpop.xlane.xlu0 %2303
    %2305 = vmax.xlane.f32.xlu0 %v2144
    %v2306 = vpop.xlane.xlu0 %2305
    %2307 = vmax.xlane.f32.xlu0 %v2145
    %v2308 = vpop.xlane.xlu0 %2307
    %2309 = vmax.xlane.f32.xlu0 %v2146
    %v2310 = vpop.xlane.xlu0 %2309
    %2311 = vmax.xlane.f32.xlu0 %v2147
    %v2312 = vpop.xlane.xlu0 %2311
    %2313 = vmax.xlane.f32.xlu0 %v2148
    %v2314 = vpop.xlane.xlu0 %2313
    %2315 = vmax.xlane.f32.xlu0 %v2149
    %v2316 = vpop.xlane.xlu0 %2315
    %2317 = vmax.xlane.f32.xlu0 %v2150
    %v2318 = vpop.xlane.xlu0 %2317
    %2319 = vmax.xlane.f32.xlu0 %v2151
    %v2320 = vpop.xlane.xlu0 %2319
    %2321 = vmax.xlane.f32.xlu0 %v2152
    %v2322 = vpop.xlane.xlu0 %2321
    %2323 = vmax.xlane.f32.xlu0 %v2153
    %v2324 = vpop.xlane.xlu0 %2323
    %2325 = vmax.xlane.f32.xlu0 %v2154
    %v2326 = vpop.xlane.xlu0 %2325
    %2327 = vmax.xlane.f32.xlu0 %v2155
    %v2328 = vpop.xlane.xlu0 %2327
    %2329 = vmax.xlane.f32.xlu0 %v2156
    %v2330 = vpop.xlane.xlu0 %2329
    %2331 = vmax.xlane.f32.xlu0 %v2157
    %v2332 = vpop.xlane.xlu0 %2331
    %2333 = vmax.xlane.f32.xlu0 %v2158
    %v2334 = vpop.xlane.xlu0 %2333
    %2335 = vmax.xlane.f32.xlu0 %v2159
    %v2336 = vpop.xlane.xlu0 %2335
    %2337 = vmax.xlane.f32.xlu0 %v2160
    %v2338 = vpop.xlane.xlu0 %2337
    %2339 = vmax.xlane.f32.xlu0 %v2161
    %v2340 = vpop.xlane.xlu0 %2339
    %2341 = vmax.xlane.f32.xlu0 %v2162
    %v2342 = vpop.xlane.xlu0 %2341
    %2343 = vmax.xlane.f32.xlu0 %v2163
    %v2344 = vpop.xlane.xlu0 %2343
    %2345 = vmax.xlane.f32.xlu0 %v2164
    %v2346 = vpop.xlane.xlu0 %2345
    %2347 = vmax.xlane.f32.xlu0 %v2165
    %v2348 = vpop.xlane.xlu0 %2347
    %2349 = vmax.xlane.f32.xlu0 %v2166
    %v2350 = vpop.xlane.xlu0 %2349
    %2351 = vmax.xlane.f32.xlu0 %v2167
    %v2352 = vpop.xlane.xlu0 %2351
    %2353 = vmax.xlane.f32.xlu0 %v2168
    %v2354 = vpop.xlane.xlu0 %2353
    %2355 = vmax.xlane.f32.xlu0 %v2169
    %v2356 = vpop.xlane.xlu0 %2355
    %2357 = vmax.xlane.f32.xlu0 %v2170
    %v2358 = vpop.xlane.xlu0 %2357
    %2359 = vmax.xlane.f32.xlu0 %v2171
    %v2360 = vpop.xlane.xlu0 %2359
    %2361 = vmax.xlane.f32.xlu0 %v2172
    %v2362 = vpop.xlane.xlu0 %2361
    %2363 = vmax.xlane.f32.xlu0 %v2173
    %v2364 = vpop.xlane.xlu0 %2363
    %2365 = vmax.xlane.f32.xlu0 %v2174
    %v2366 = vpop.xlane.xlu0 %2365
    %2367 = vmax.xlane.f32.xlu0 %v2175
    %v2368 = vpop.xlane.xlu0 %2367
    %2369 = vmax.xlane.f32.xlu0 %v2176
    %v2370 = vpop.xlane.xlu0 %2369
    %2371 = vmax.xlane.f32.xlu0 %v2177
    %v2372 = vpop.xlane.xlu0 %2371
    %2373 = vmax.xlane.f32.xlu0 %v2178
    %v2374 = vpop.xlane.xlu0 %2373
    %2375 = vmax.xlane.f32.xlu0 %v2179
    %v2376 = vpop.xlane.xlu0 %2375
    %2377 = vmax.xlane.f32.xlu0 %v2180
    %v2378 = vpop.xlane.xlu0 %2377
    %2379 = vmax.xlane.f32.xlu0 %v2181
    %v2380 = vpop.xlane.xlu0 %2379
    %2381 = vmax.xlane.f32.xlu0 %v2182
    %v2382 = vpop.xlane.xlu0 %2381
    %2383 = vmax.xlane.f32.xlu0 %v2183
    %v2384 = vpop.xlane.xlu0 %2383
    %2385 = vmax.xlane.f32.xlu0 %v2184
    %v2386 = vpop.xlane.xlu0 %2385
    %2387 = vmax.xlane.f32.xlu0 %v2185
    %v2388 = vpop.xlane.xlu0 %2387
    %2389 = vmax.xlane.f32.xlu0 %v2186
    %v2390 = vpop.xlane.xlu0 %2389
    %2391 = vmax.xlane.f32.xlu0 %v2187
    %v2392 = vpop.xlane.xlu0 %2391
    %2393 = vmax.xlane.f32.xlu0 %v2188
    %v2394 = vpop.xlane.xlu0 %2393
    %2395 = vmax.xlane.f32.xlu0 %v2189
    %v2396 = vpop.xlane.xlu0 %2395
    %2397 = vmax.xlane.f32.xlu0 %v2190
    %v2398 = vpop.xlane.xlu0 %2397
    %2399 = vmax.xlane.f32.xlu0 %v2191
    %v2400 = vpop.xlane.xlu0 %2399
    %2401 = vmax.xlane.f32.xlu0 %v2192
    %v2402 = vpop.xlane.xlu0 %2401
    %2403 = vmax.xlane.f32.xlu0 %v2193
    %v2404 = vpop.xlane.xlu0 %2403
    %2405 = vmax.xlane.f32.xlu0 %v2194
    %v2406 = vpop.xlane.xlu0 %2405
    %2407 = vmax.xlane.f32.xlu0 %v2195
    %v2408 = vpop.xlane.xlu0 %2407
    %2409 = vmax.xlane.f32.xlu0 %v2196
    %v2410 = vpop.xlane.xlu0 %2409
    %2411 = vmax.xlane.f32.xlu0 %v2197
    %v2412 = vpop.xlane.xlu0 %2411
    %2413 = vmax.xlane.f32.xlu0 %v2198
    %v2414 = vpop.xlane.xlu0 %2413
    %2415 = vmax.xlane.f32.xlu0 %v2199
    %v2416 = vpop.xlane.xlu0 %2415
    %2417 = vmax.xlane.f32.xlu0 %v2200
    %v2418 = vpop.xlane.xlu0 %2417
    %2419 = vmax.xlane.f32.xlu0 %v2201
    %v2420 = vpop.xlane.xlu0 %2419
    %2421 = vmax.xlane.f32.xlu0 %v2202
    %v2422 = vpop.xlane.xlu0 %2421
    %2423 = vmax.xlane.f32.xlu0 %v2203
    %v2424 = vpop.xlane.xlu0 %2423
    %2425 = vmax.xlane.f32.xlu0 %v2204
    %v2426 = vpop.xlane.xlu0 %2425
    %2427 = vmax.xlane.f32.xlu0 %v2205
    %v2428 = vpop.xlane.xlu0 %2427
    %2429 = vmax.xlane.f32.xlu0 %v2206
    %v2430 = vpop.xlane.xlu0 %2429
    %2431 = vmax.xlane.f32.xlu0 %v2207
    %v2432 = vpop.xlane.xlu0 %2431
    %2433 = vmax.xlane.f32.xlu0 %v2208
    %v2434 = vpop.xlane.xlu0 %2433
    %2435 = vmax.xlane.f32.xlu0 %v2209
    %v2436 = vpop.xlane.xlu0 %2435
    %2437 = vmax.xlane.f32.xlu0 %v2210
    %v2438 = vpop.xlane.xlu0 %2437
    %2439 = vmax.xlane.f32.xlu0 %v2211
    %v2440 = vpop.xlane.xlu0 %2439
    %2441 = vmax.xlane.f32.xlu0 %v2212
    %v2442 = vpop.xlane.xlu0 %2441
    %2443 = vmax.xlane.f32.xlu0 %v2213
    %v2444 = vpop.xlane.xlu0 %2443
    %2445 = vmax.xlane.f32.xlu0 %v2214
    %v2446 = vpop.xlane.xlu0 %2445
    %2447 = vmax.xlane.f32.xlu0 %v2215
    %v2448 = vpop.xlane.xlu0 %2447
    %2449 = vmax.xlane.f32.xlu0 %v2216
    %v2450 = vpop.xlane.xlu0 %2449
    %2451 = vmax.xlane.f32.xlu0 %v2217
    %v2452 = vpop.xlane.xlu0 %2451
    %2453 = vmax.xlane.f32.xlu0 %v2218
    %v2454 = vpop.xlane.xlu0 %2453
    %2455 = vmax.xlane.f32.xlu0 %v2219
    %v2456 = vpop.xlane.xlu0 %2455
    %2457 = vmax.xlane.f32.xlu0 %v2220
    %v2458 = vpop.xlane.xlu0 %2457
    %2459 = vmax.xlane.f32.xlu0 %v2221
    %v2460 = vpop.xlane.xlu0 %2459
    %2461 = vmax.xlane.f32.xlu0 %v2222
    %v2462 = vpop.xlane.xlu0 %2461
    %2463 = vmax.xlane.f32.xlu0 %v2223
    %v2464 = vpop.xlane.xlu0 %2463
    %2465 = vmax.xlane.f32.xlu0 %v2224
    %v2466 = vpop.xlane.xlu0 %2465
    %2467 = vmax.xlane.f32.xlu0 %v2225
    %v2468 = vpop.xlane.xlu0 %2467
    %2469 = vmax.xlane.f32.xlu0 %v2226
    %v2470 = vpop.xlane.xlu0 %2469
    %2471 = vmax.xlane.f32.xlu0 %v2227
    %v2472 = vpop.xlane.xlu0 %2471
    %2473 = vmax.xlane.f32.xlu0 %v2228
    %v2474 = vpop.xlane.xlu0 %2473
    %2475 = vmax.xlane.f32.xlu0 %v2229
    %v2476 = vpop.xlane.xlu0 %2475
    %2477 = vmax.xlane.f32.xlu0 %v2230
    %v2478 = vpop.xlane.xlu0 %2477
    %2479 = vmax.xlane.f32.xlu0 %v2231
    %v2480 = vpop.xlane.xlu0 %2479
    %2481 = vmax.xlane.f32.xlu0 %v2232
    %v2482 = vpop.xlane.xlu0 %2481
    %2483 = vmax.xlane.f32.xlu0 %v2233
    %v2484 = vpop.xlane.xlu0 %2483
    %2485 = vmax.xlane.f32.xlu0 %v2234
    %v2486 = vpop.xlane.xlu0 %2485
    %2487 = vmax.xlane.f32.xlu0 %v2235
    %v2488 = vpop.xlane.xlu0 %2487
    %2489 = vmax.xlane.f32.xlu0 %v2236
    %v2490 = vpop.xlane.xlu0 %2489
    %2491 = vmax.xlane.f32.xlu0 %v2237
    %v2492 = vpop.xlane.xlu0 %2491
    %2493 = vmax.xlane.f32.xlu0 %v2238
    %v2494 = vpop.xlane.xlu0 %2493
    %vm2495 = vcmp.eq.f32.partialorder %v1468, %v2240
    %vm2496 = vcmp.eq.f32.partialorder %v1473, %v2242
    %vm2497 = vcmp.eq.f32.partialorder %v1478, %v2244
    %vm2498 = vcmp.eq.f32.partialorder %v1483, %v2246
    %vm2499 = vcmp.eq.f32.partialorder %v1488, %v2248
    %vm2500 = vcmp.eq.f32.partialorder %v1493, %v2250
    %vm2501 = vcmp.eq.f32.partialorder %v1498, %v2252
    %vm2502 = vcmp.eq.f32.partialorder %v1503, %v2254
    %vm2503 = vcmp.eq.f32.partialorder %v1508, %v2256
    %vm2504 = vcmp.eq.f32.partialorder %v1513, %v2258
    %vm2505 = vcmp.eq.f32.partialorder %v1518, %v2260
    %vm2506 = vcmp.eq.f32.partialorder %v1523, %v2262
    %vm2507 = vcmp.eq.f32.partialorder %v1528, %v2264
    %vm2508 = vcmp.eq.f32.partialorder %v1533, %v2266
    %vm2509 = vcmp.eq.f32.partialorder %v1538, %v2268
    %vm2510 = vcmp.eq.f32.partialorder %v1543, %v2270
    %vm2511 = vcmp.eq.f32.partialorder %v1548, %v2272
    %vm2512 = vcmp.eq.f32.partialorder %v1553, %v2274
    %vm2513 = vcmp.eq.f32.partialorder %v1558, %v2276
    %vm2514 = vcmp.eq.f32.partialorder %v1563, %v2278
    %vm2515 = vcmp.eq.f32.partialorder %v1568, %v2280
    %vm2516 = vcmp.eq.f32.partialorder %v1573, %v2282
    %vm2517 = vcmp.eq.f32.partialorder %v1578, %v2284
    %vm2518 = vcmp.eq.f32.partialorder %v1583, %v2286
    %vm2519 = vcmp.eq.f32.partialorder %v1588, %v2288
    %vm2520 = vcmp.eq.f32.partialorder %v1593, %v2290
    %vm2521 = vcmp.eq.f32.partialorder %v1598, %v2292
    %vm2522 = vcmp.eq.f32.partialorder %v1603, %v2294
    %vm2523 = vcmp.eq.f32.partialorder %v1608, %v2296
    %vm2524 = vcmp.eq.f32.partialorder %v1613, %v2298
    %vm2525 = vcmp.eq.f32.partialorder %v1618, %v2300
    %vm2526 = vcmp.eq.f32.partialorder %v1623, %v2302
    %vm2527 = vcmp.eq.f32.partialorder %v1628, %v2304
    %vm2528 = vcmp.eq.f32.partialorder %v1633, %v2306
    %vm2529 = vcmp.eq.f32.partialorder %v1638, %v2308
    %vm2530 = vcmp.eq.f32.partialorder %v1643, %v2310
    %vm2531 = vcmp.eq.f32.partialorder %v1648, %v2312
    %vm2532 = vcmp.eq.f32.partialorder %v1653, %v2314
    %vm2533 = vcmp.eq.f32.partialorder %v1658, %v2316
    %vm2534 = vcmp.eq.f32.partialorder %v1663, %v2318
    %vm2535 = vcmp.eq.f32.partialorder %v1668, %v2320
    %vm2536 = vcmp.eq.f32.partialorder %v1673, %v2322
    %vm2537 = vcmp.eq.f32.partialorder %v1678, %v2324
    %vm2538 = vcmp.eq.f32.partialorder %v1683, %v2326
    %vm2539 = vcmp.eq.f32.partialorder %v1688, %v2328
    %vm2540 = vcmp.eq.f32.partialorder %v1693, %v2330
    %vm2541 = vcmp.eq.f32.partialorder %v1698, %v2332
    %vm2542 = vcmp.eq.f32.partialorder %v1703, %v2334
    %vm2543 = vcmp.eq.f32.partialorder %v1708, %v2336
    %vm2544 = vcmp.eq.f32.partialorder %v1713, %v2338
    %vm2545 = vcmp.eq.f32.partialorder %v1718, %v2340
    %vm2546 = vcmp.eq.f32.partialorder %v1723, %v2342
    %vm2547 = vcmp.eq.f32.partialorder %v1728, %v2344
    %vm2548 = vcmp.eq.f32.partialorder %v1733, %v2346
    %vm2549 = vcmp.eq.f32.partialorder %v1738, %v2348
    %vm2550 = vcmp.eq.f32.partialorder %v1743, %v2350
    %vm2551 = vcmp.eq.f32.partialorder %v1748, %v2352
    %vm2552 = vcmp.eq.f32.partialorder %v1753, %v2354
    %vm2553 = vcmp.eq.f32.partialorder %v1758, %v2356
    %vm2554 = vcmp.eq.f32.partialorder %v1763, %v2358
    %vm2555 = vcmp.eq.f32.partialorder %v1768, %v2360
    %vm2556 = vcmp.eq.f32.partialorder %v1773, %v2362
    %vm2557 = vcmp.eq.f32.partialorder %v1778, %v2364
    %vm2558 = vcmp.eq.f32.partialorder %v1783, %v2366
    %vm2559 = vcmp.eq.f32.partialorder %v1788, %v2368
    %vm2560 = vcmp.eq.f32.partialorder %v1793, %v2370
    %vm2561 = vcmp.eq.f32.partialorder %v1798, %v2372
    %vm2562 = vcmp.eq.f32.partialorder %v1803, %v2374
    %vm2563 = vcmp.eq.f32.partialorder %v1808, %v2376
    %vm2564 = vcmp.eq.f32.partialorder %v1813, %v2378
    %vm2565 = vcmp.eq.f32.partialorder %v1818, %v2380
    %vm2566 = vcmp.eq.f32.partialorder %v1823, %v2382
    %vm2567 = vcmp.eq.f32.partialorder %v1828, %v2384
    %vm2568 = vcmp.eq.f32.partialorder %v1833, %v2386
    %vm2569 = vcmp.eq.f32.partialorder %v1838, %v2388
    %vm2570 = vcmp.eq.f32.partialorder %v1843, %v2390
    %vm2571 = vcmp.eq.f32.partialorder %v1848, %v2392
    %vm2572 = vcmp.eq.f32.partialorder %v1853, %v2394
    %vm2573 = vcmp.eq.f32.partialorder %v1858, %v2396
    %vm2574 = vcmp.eq.f32.partialorder %v1863, %v2398
    %vm2575 = vcmp.eq.f32.partialorder %v1868, %v2400
    %vm2576 = vcmp.eq.f32.partialorder %v1873, %v2402
    %vm2577 = vcmp.eq.f32.partialorder %v1878, %v2404
    %vm2578 = vcmp.eq.f32.partialorder %v1883, %v2406
    %vm2579 = vcmp.eq.f32.partialorder %v1888, %v2408
    %vm2580 = vcmp.eq.f32.partialorder %v1893, %v2410
    %vm2581 = vcmp.eq.f32.partialorder %v1898, %v2412
    %vm2582 = vcmp.eq.f32.partialorder %v1903, %v2414
    %vm2583 = vcmp.eq.f32.partialorder %v1908, %v2416
    %vm2584 = vcmp.eq.f32.partialorder %v1913, %v2418
    %vm2585 = vcmp.eq.f32.partialorder %v1918, %v2420
    %vm2586 = vcmp.eq.f32.partialorder %v1923, %v2422
    %vm2587 = vcmp.eq.f32.partialorder %v1928, %v2424
    %vm2588 = vcmp.eq.f32.partialorder %v1933, %v2426
    %vm2589 = vcmp.eq.f32.partialorder %v1938, %v2428
    %vm2590 = vcmp.eq.f32.partialorder %v1943, %v2430
    %vm2591 = vcmp.eq.f32.partialorder %v1948, %v2432
    %vm2592 = vcmp.eq.f32.partialorder %v1953, %v2434
    %vm2593 = vcmp.eq.f32.partialorder %v1958, %v2436
    %vm2594 = vcmp.eq.f32.partialorder %v1963, %v2438
    %vm2595 = vcmp.eq.f32.partialorder %v1968, %v2440
    %vm2596 = vcmp.eq.f32.partialorder %v1973, %v2442
    %vm2597 = vcmp.eq.f32.partialorder %v1978, %v2444
    %vm2598 = vcmp.eq.f32.partialorder %v1983, %v2446
    %vm2599 = vcmp.eq.f32.partialorder %v1988, %v2448
    %vm2600 = vcmp.eq.f32.partialorder %v1993, %v2450
    %vm2601 = vcmp.eq.f32.partialorder %v1998, %v2452
    %vm2602 = vcmp.eq.f32.partialorder %v2003, %v2454
    %vm2603 = vcmp.eq.f32.partialorder %v2008, %v2456
    %vm2604 = vcmp.eq.f32.partialorder %v2013, %v2458
    %vm2605 = vcmp.eq.f32.partialorder %v2018, %v2460
    %vm2606 = vcmp.eq.f32.partialorder %v2023, %v2462
    %vm2607 = vcmp.eq.f32.partialorder %v2028, %v2464
    %vm2608 = vcmp.eq.f32.partialorder %v2033, %v2466
    %vm2609 = vcmp.eq.f32.partialorder %v2038, %v2468
    %vm2610 = vcmp.eq.f32.partialorder %v2043, %v2470
    %vm2611 = vcmp.eq.f32.partialorder %v2048, %v2472
    %vm2612 = vcmp.eq.f32.partialorder %v2053, %v2474
    %vm2613 = vcmp.eq.f32.partialorder %v2058, %v2476
    %vm2614 = vcmp.eq.f32.partialorder %v2063, %v2478
    %vm2615 = vcmp.eq.f32.partialorder %v2068, %v2480
    %vm2616 = vcmp.eq.f32.partialorder %v2073, %v2482
    %vm2617 = vcmp.eq.f32.partialorder %v2078, %v2484
    %vm2618 = vcmp.eq.f32.partialorder %v2083, %v2486
    %vm2619 = vcmp.eq.f32.partialorder %v2088, %v2488
    %vm2620 = vcmp.eq.f32.partialorder %v2093, %v2490
    %vm2621 = vcmp.eq.f32.partialorder %v2098, %v2492
    %vm2622 = vcmp.eq.f32.partialorder %v2103, %v2494
    %vm2623 = vmand %vm2110, %vm2495
    %vm2624 = vmand %vm2110, %vm2496
    %vm2625 = vmand %vm2110, %vm2497
    %vm2626 = vmand %vm2110, %vm2498
    %vm2627 = vmand %vm2110, %vm2499
    %vm2628 = vmand %vm2110, %vm2500
    %vm2629 = vmand %vm2110, %vm2501
    %vm2630 = vmand %vm2110, %vm2502
    %vm2631 = vmand %vm2110, %vm2503
    %vm2632 = vmand %vm2110, %vm2504
    %vm2633 = vmand %vm2110, %vm2505
    %vm2634 = vmand %vm2110, %vm2506
    %vm2635 = vmand %vm2110, %vm2507
    %vm2636 = vmand %vm2110, %vm2508
    %vm2637 = vmand %vm2110, %vm2509
    %vm2638 = vmand %vm2110, %vm2510
    %vm2639 = vmand %vm2110, %vm2511
    %vm2640 = vmand %vm2110, %vm2512
    %vm2641 = vmand %vm2110, %vm2513
    %vm2642 = vmand %vm2110, %vm2514
    %vm2643 = vmand %vm2110, %vm2515
    %vm2644 = vmand %vm2110, %vm2516
    %vm2645 = vmand %vm2110, %vm2517
    %vm2646 = vmand %vm2110, %vm2518
    %vm2647 = vmand %vm2110, %vm2519
    %vm2648 = vmand %vm2110, %vm2520
    %vm2649 = vmand %vm2110, %vm2521
    %vm2650 = vmand %vm2110, %vm2522
    %vm2651 = vmand %vm2110, %vm2523
    %vm2652 = vmand %vm2110, %vm2524
    %vm2653 = vmand %vm2110, %vm2525
    %vm2654 = vmand %vm2110, %vm2526
    %vm2655 = vmand %vm2110, %vm2527
    %vm2656 = vmand %vm2110, %vm2528
    %vm2657 = vmand %vm2110, %vm2529
    %vm2658 = vmand %vm2110, %vm2530
    %vm2659 = vmand %vm2110, %vm2531
    %vm2660 = vmand %vm2110, %vm2532
    %vm2661 = vmand %vm2110, %vm2533
    %vm2662 = vmand %vm2110, %vm2534
    %vm2663 = vmand %vm2110, %vm2535
    %vm2664 = vmand %vm2110, %vm2536
    %vm2665 = vmand %vm2110, %vm2537
    %vm2666 = vmand %vm2110, %vm2538
    %vm2667 = vmand %vm2110, %vm2539
    %vm2668 = vmand %vm2110, %vm2540
    %vm2669 = vmand %vm2110, %vm2541
    %vm2670 = vmand %vm2110, %vm2542
    %vm2671 = vmand %vm2110, %vm2543
    %vm2672 = vmand %vm2110, %vm2544
    %vm2673 = vmand %vm2110, %vm2545
    %vm2674 = vmand %vm2110, %vm2546
    %vm2675 = vmand %vm2110, %vm2547
    %vm2676 = vmand %vm2110, %vm2548
    %vm2677 = vmand %vm2110, %vm2549
    %vm2678 = vmand %vm2110, %vm2550
    %vm2679 = vmand %vm2110, %vm2551
    %vm2680 = vmand %vm2110, %vm2552
    %vm2681 = vmand %vm2110, %vm2553
    %vm2682 = vmand %vm2110, %vm2554
    %vm2683 = vmand %vm2110, %vm2555
    %vm2684 = vmand %vm2110, %vm2556
    %vm2685 = vmand %vm2110, %vm2557
    %vm2686 = vmand %vm2110, %vm2558
    %vm2687 = vmand %vm2110, %vm2559
    %vm2688 = vmand %vm2110, %vm2560
    %vm2689 = vmand %vm2110, %vm2561
    %vm2690 = vmand %vm2110, %vm2562
    %vm2691 = vmand %vm2110, %vm2563
    %vm2692 = vmand %vm2110, %vm2564
    %vm2693 = vmand %vm2110, %vm2565
    %vm2694 = vmand %vm2110, %vm2566
    %vm2695 = vmand %vm2110, %vm2567
    %vm2696 = vmand %vm2110, %vm2568
    %vm2697 = vmand %vm2110, %vm2569
    %vm2698 = vmand %vm2110, %vm2570
    %vm2699 = vmand %vm2110, %vm2571
    %vm2700 = vmand %vm2110, %vm2572
    %vm2701 = vmand %vm2110, %vm2573
    %vm2702 = vmand %vm2110, %vm2574
    %vm2703 = vmand %vm2110, %vm2575
    %vm2704 = vmand %vm2110, %vm2576
    %vm2705 = vmand %vm2110, %vm2577
    %vm2706 = vmand %vm2110, %vm2578
    %vm2707 = vmand %vm2110, %vm2579
    %vm2708 = vmand %vm2110, %vm2580
    %vm2709 = vmand %vm2110, %vm2581
    %vm2710 = vmand %vm2110, %vm2582
    %vm2711 = vmand %vm2110, %vm2583
    %vm2712 = vmand %vm2110, %vm2584
    %vm2713 = vmand %vm2110, %vm2585
    %vm2714 = vmand %vm2110, %vm2586
    %vm2715 = vmand %vm2110, %vm2587
    %vm2716 = vmand %vm2110, %vm2588
    %vm2717 = vmand %vm2110, %vm2589
    %vm2718 = vmand %vm2110, %vm2590
    %vm2719 = vmand %vm2110, %vm2591
    %vm2720 = vmand %vm2110, %vm2592
    %vm2721 = vmand %vm2110, %vm2593
    %vm2722 = vmand %vm2110, %vm2594
    %vm2723 = vmand %vm2110, %vm2595
    %vm2724 = vmand %vm2110, %vm2596
    %vm2725 = vmand %vm2110, %vm2597
    %vm2726 = vmand %vm2110, %vm2598
    %vm2727 = vmand %vm2110, %vm2599
    %vm2728 = vmand %vm2110, %vm2600
    %vm2729 = vmand %vm2110, %vm2601
    %vm2730 = vmand %vm2110, %vm2602
    %vm2731 = vmand %vm2110, %vm2603
    %vm2732 = vmand %vm2110, %vm2604
    %vm2733 = vmand %vm2110, %vm2605
    %vm2734 = vmand %vm2110, %vm2606
    %vm2735 = vmand %vm2110, %vm2607
    %vm2736 = vmand %vm2110, %vm2608
    %vm2737 = vmand %vm2110, %vm2609
    %vm2738 = vmand %vm2110, %vm2610
    %vm2739 = vmand %vm2110, %vm2611
    %vm2740 = vmand %vm2110, %vm2612
    %vm2741 = vmand %vm2110, %vm2613
    %vm2742 = vmand %vm2110, %vm2614
    %vm2743 = vmand %vm2110, %vm2615
    %vm2744 = vmand %vm2110, %vm2616
    %vm2745 = vmand %vm2110, %vm2617
    %vm2746 = vmand %vm2110, %vm2618
    %vm2747 = vmand %vm2110, %vm2619
    %vm2748 = vmand %vm2110, %vm2620
    %vm2749 = vmand %vm2110, %vm2621
    %vm2750 = vmand %vm2110, %vm2622
    %v2751 = vsel %vm2623, %v2107, 128
    %v2752 = vsel %vm2624, %v2107, 128
    %v2753 = vsel %vm2625, %v2107, 128
    %v2754 = vsel %vm2626, %v2107, 128
    %v2755 = vsel %vm2627, %v2107, 128
    %v2756 = vsel %vm2628, %v2107, 128
    %v2757 = vsel %vm2629, %v2107, 128
    %v2758 = vsel %vm2630, %v2107, 128
    %v2759 = vsel %vm2631, %v2107, 128
    %v2760 = vsel %vm2632, %v2107, 128
    %v2761 = vsel %vm2633, %v2107, 128
    %v2762 = vsel %vm2634, %v2107, 128
    %v2763 = vsel %vm2635, %v2107, 128
    %v2764 = vsel %vm2636, %v2107, 128
    %v2765 = vsel %vm2637, %v2107, 128
    %v2766 = vsel %vm2638, %v2107, 128
    %v2767 = vsel %vm2639, %v2107, 128
    %v2768 = vsel %vm2640, %v2107, 128
    %v2769 = vsel %vm2641, %v2107, 128
    %v2770 = vsel %vm2642, %v2107, 128
    %v2771 = vsel %vm2643, %v2107, 128
    %v2772 = vsel %vm2644, %v2107, 128
    %v2773 = vsel %vm2645, %v2107, 128
    %v2774 = vsel %vm2646, %v2107, 128
    %v2775 = vsel %vm2647, %v2107, 128
    %v2776 = vsel %vm2648, %v2107, 128
    %v2777 = vsel %vm2649, %v2107, 128
    %v2778 = vsel %vm2650, %v2107, 128
    %v2779 = vsel %vm2651, %v2107, 128
    %v2780 = vsel %vm2652, %v2107, 128
    %v2781 = vsel %vm2653, %v2107, 128
    %v2782 = vsel %vm2654, %v2107, 128
    %v2783 = vsel %vm2655, %v2107, 128
    %v2784 = vsel %vm2656, %v2107, 128
    %v2785 = vsel %vm2657, %v2107, 128
    %v2786 = vsel %vm2658, %v2107, 128
    %v2787 = vsel %vm2659, %v2107, 128
    %v2788 = vsel %vm2660, %v2107, 128
    %v2789 = vsel %vm2661, %v2107, 128
    %v2790 = vsel %vm2662, %v2107, 128
    %v2791 = vsel %vm2663, %v2107, 128
    %v2792 = vsel %vm2664, %v2107, 128
    %v2793 = vsel %vm2665, %v2107, 128
    %v2794 = vsel %vm2666, %v2107, 128
    %v2795 = vsel %vm2667, %v2107, 128
    %v2796 = vsel %vm2668, %v2107, 128
    %v2797 = vsel %vm2669, %v2107, 128
    %v2798 = vsel %vm2670, %v2107, 128
    %v2799 = vsel %vm2671, %v2107, 128
    %v2800 = vsel %vm2672, %v2107, 128
    %v2801 = vsel %vm2673, %v2107, 128
    %v2802 = vsel %vm2674, %v2107, 128
    %v2803 = vsel %vm2675, %v2107, 128
    %v2804 = vsel %vm2676, %v2107, 128
    %v2805 = vsel %vm2677, %v2107, 128
    %v2806 = vsel %vm2678, %v2107, 128
    %v2807 = vsel %vm2679, %v2107, 128
    %v2808 = vsel %vm2680, %v2107, 128
    %v2809 = vsel %vm2681, %v2107, 128
    %v2810 = vsel %vm2682, %v2107, 128
    %v2811 = vsel %vm2683, %v2107, 128
    %v2812 = vsel %vm2684, %v2107, 128
    %v2813 = vsel %vm2685, %v2107, 128
    %v2814 = vsel %vm2686, %v2107, 128
    %v2815 = vsel %vm2687, %v2107, 128
    %v2816 = vsel %vm2688, %v2107, 128
    %v2817 = vsel %vm2689, %v2107, 128
    %v2818 = vsel %vm2690, %v2107, 128
    %v2819 = vsel %vm2691, %v2107, 128
    %v2820 = vsel %vm2692, %v2107, 128
    %v2821 = vsel %vm2693, %v2107, 128
    %v2822 = vsel %vm2694, %v2107, 128
    %v2823 = vsel %vm2695, %v2107, 128
    %v2824 = vsel %vm2696, %v2107, 128
    %v2825 = vsel %vm2697, %v2107, 128
    %v2826 = vsel %vm2698, %v2107, 128
    %v2827 = vsel %vm2699, %v2107, 128
    %v2828 = vsel %vm2700, %v2107, 128
    %v2829 = vsel %vm2701, %v2107, 128
    %v2830 = vsel %vm2702, %v2107, 128
    %v2831 = vsel %vm2703, %v2107, 128
    %v2832 = vsel %vm2704, %v2107, 128
    %v2833 = vsel %vm2705, %v2107, 128
    %v2834 = vsel %vm2706, %v2107, 128
    %v2835 = vsel %vm2707, %v2107, 128
    %v2836 = vsel %vm2708, %v2107, 128
    %v2837 = vsel %vm2709, %v2107, 128
    %v2838 = vsel %vm2710, %v2107, 128
    %v2839 = vsel %vm2711, %v2107, 128
    %v2840 = vsel %vm2712, %v2107, 128
    %v2841 = vsel %vm2713, %v2107, 128
    %v2842 = vsel %vm2714, %v2107, 128
    %v2843 = vsel %vm2715, %v2107, 128
    %v2844 = vsel %vm2716, %v2107, 128
    %v2845 = vsel %vm2717, %v2107, 128
    %v2846 = vsel %vm2718, %v2107, 128
    %v2847 = vsel %vm2719, %v2107, 128
    %v2848 = vsel %vm2720, %v2107, 128
    %v2849 = vsel %vm2721, %v2107, 128
    %v2850 = vsel %vm2722, %v2107, 128
    %v2851 = vsel %vm2723, %v2107, 128
    %v2852 = vsel %vm2724, %v2107, 128
    %v2853 = vsel %vm2725, %v2107, 128
    %v2854 = vsel %vm2726, %v2107, 128
    %v2855 = vsel %vm2727, %v2107, 128
    %v2856 = vsel %vm2728, %v2107, 128
    %v2857 = vsel %vm2729, %v2107, 128
    %v2858 = vsel %vm2730, %v2107, 128
    %v2859 = vsel %vm2731, %v2107, 128
    %v2860 = vsel %vm2732, %v2107, 128
    %v2861 = vsel %vm2733, %v2107, 128
    %v2862 = vsel %vm2734, %v2107, 128
    %v2863 = vsel %vm2735, %v2107, 128
    %v2864 = vsel %vm2736, %v2107, 128
    %v2865 = vsel %vm2737, %v2107, 128
    %v2866 = vsel %vm2738, %v2107, 128
    %v2867 = vsel %vm2739, %v2107, 128
    %v2868 = vsel %vm2740, %v2107, 128
    %v2869 = vsel %vm2741, %v2107, 128
    %v2870 = vsel %vm2742, %v2107, 128
    %v2871 = vsel %vm2743, %v2107, 128
    %v2872 = vsel %vm2744, %v2107, 128
    %v2873 = vsel %vm2745, %v2107, 128
    %v2874 = vsel %vm2746, %v2107, 128
    %v2875 = vsel %vm2747, %v2107, 128
    %v2876 = vsel %vm2748, %v2107, 128
    %v2877 = vsel %vm2749, %v2107, 128
    %v2878 = vsel %vm2750, %v2107, 128
    %v2879 = vand.u32 %v2751, 65535
    %v2880 = vshra.s32 %v2751, 16
    %v2881 = vcvt.s32.f32 %v2879
    %v2882 = vcvt.s32.f32 %v2880
    %2883 = vmin.xlane.f32.xlu0 %v2882
    %v2884 = vpop.xlane.xlu0 %2883
    %vm2885 = vcmp.eq.f32.partialorder %v2882, %v2884
    %v2886 = vsel %vm2885, %v2881, inf
    %2887 = vmin.xlane.f32.xlu0 %v2886
    %v2888 = vpop.xlane.xlu0 %2887
    %v2889 = vcvt.f32.s32 %v2888
    %v2890 = vcvt.f32.s32 %v2884
    %v2891 = vshll.u32 %v2890, 16
    %v2892 = vadd.s32 %v2891, %v2889
    %v2893 = vand.u32 %v2752, 65535
    %v2894 = vshra.s32 %v2752, 16
    %v2895 = vcvt.s32.f32 %v2893
    %v2896 = vcvt.s32.f32 %v2894
    %2897 = vmin.xlane.f32.xlu0 %v2896
    %v2898 = vpop.xlane.xlu0 %2897
    %vm2899 = vcmp.eq.f32.partialorder %v2896, %v2898
    %v2900 = vsel %vm2899, %v2895, inf
    %2901 = vmin.xlane.f32.xlu0 %v2900
    %v2902 = vpop.xlane.xlu0 %2901
    %v2903 = vcvt.f32.s32 %v2902
    %v2904 = vcvt.f32.s32 %v2898
    %v2905 = vshll.u32 %v2904, 16
    %v2906 = vadd.s32 %v2905, %v2903
    %v2907 = vand.u32 %v2753, 65535
    %v2908 = vshra.s32 %v2753, 16
    %v2909 = vcvt.s32.f32 %v2907
    %v2910 = vcvt.s32.f32 %v2908
    %2911 = vmin.xlane.f32.xlu0 %v2910
    %v2912 = vpop.xlane.xlu0 %2911
    %vm2913 = vcmp.eq.f32.partialorder %v2910, %v2912
    %v2914 = vsel %vm2913, %v2909, inf
    %2915 = vmin.xlane.f32.xlu0 %v2914
    %v2916 = vpop.xlane.xlu0 %2915
    %v2917 = vcvt.f32.s32 %v2916
    %v2918 = vcvt.f32.s32 %v2912
    %v2919 = vshll.u32 %v2918, 16
    %v2920 = vadd.s32 %v2919, %v2917
    %v2921 = vand.u32 %v2754, 65535
    %v2922 = vshra.s32 %v2754, 16
    %v2923 = vcvt.s32.f32 %v2921
    %v2924 = vcvt.s32.f32 %v2922
    %2925 = vmin.xlane.f32.xlu0 %v2924
    %v2926 = vpop.xlane.xlu0 %2925
    %vm2927 = vcmp.eq.f32.partialorder %v2924, %v2926
    %v2928 = vsel %vm2927, %v2923, inf
    %2929 = vmin.xlane.f32.xlu0 %v2928
    %v2930 = vpop.xlane.xlu0 %2929
    %v2931 = vcvt.f32.s32 %v2930
    %v2932 = vcvt.f32.s32 %v2926
    %v2933 = vshll.u32 %v2932, 16
    %v2934 = vadd.s32 %v2933, %v2931
    %v2935 = vand.u32 %v2755, 65535
    %v2936 = vshra.s32 %v2755, 16
    %v2937 = vcvt.s32.f32 %v2935
    %v2938 = vcvt.s32.f32 %v2936
    %2939 = vmin.xlane.f32.xlu0 %v2938
    %v2940 = vpop.xlane.xlu0 %2939
    %vm2941 = vcmp.eq.f32.partialorder %v2938, %v2940
    %v2942 = vsel %vm2941, %v2937, inf
    %2943 = vmin.xlane.f32.xlu0 %v2942
    %v2944 = vpop.xlane.xlu0 %2943
    %v2945 = vcvt.f32.s32 %v2944
    %v2946 = vcvt.f32.s32 %v2940
    %v2947 = vshll.u32 %v2946, 16
    %v2948 = vadd.s32 %v2947, %v2945
    %v2949 = vand.u32 %v2756, 65535
    %v2950 = vshra.s32 %v2756, 16
    %v2951 = vcvt.s32.f32 %v2949
    %v2952 = vcvt.s32.f32 %v2950
    %2953 = vmin.xlane.f32.xlu0 %v2952
    %v2954 = vpop.xlane.xlu0 %2953
    %vm2955 = vcmp.eq.f32.partialorder %v2952, %v2954
    %v2956 = vsel %vm2955, %v2951, inf
    %2957 = vmin.xlane.f32.xlu0 %v2956
    %v2958 = vpop.xlane.xlu0 %2957
    %v2959 = vcvt.f32.s32 %v2958
    %v2960 = vcvt.f32.s32 %v2954
    %v2961 = vshll.u32 %v2960, 16
    %v2962 = vadd.s32 %v2961, %v2959
    %v2963 = vand.u32 %v2757, 65535
    %v2964 = vshra.s32 %v2757, 16
    %v2965 = vcvt.s32.f32 %v2963
    %v2966 = vcvt.s32.f32 %v2964
    %2967 = vmin.xlane.f32.xlu0 %v2966
    %v2968 = vpop.xlane.xlu0 %2967
    %vm2969 = vcmp.eq.f32.partialorder %v2966, %v2968
    %v2970 = vsel %vm2969, %v2965, inf
    %2971 = vmin.xlane.f32.xlu0 %v2970
    %v2972 = vpop.xlane.xlu0 %2971
    %v2973 = vcvt.f32.s32 %v2972
    %v2974 = vcvt.f32.s32 %v2968
    %v2975 = vshll.u32 %v2974, 16
    %v2976 = vadd.s32 %v2975, %v2973
    %v2977 = vand.u32 %v2758, 65535
    %v2978 = vshra.s32 %v2758, 16
    %v2979 = vcvt.s32.f32 %v2977
    %v2980 = vcvt.s32.f32 %v2978
    %2981 = vmin.xlane.f32.xlu0 %v2980
    %v2982 = vpop.xlane.xlu0 %2981
    %vm2983 = vcmp.eq.f32.partialorder %v2980, %v2982
    %v2984 = vsel %vm2983, %v2979, inf
    %2985 = vmin.xlane.f32.xlu0 %v2984
    %v2986 = vpop.xlane.xlu0 %2985
    %v2987 = vcvt.f32.s32 %v2986
    %v2988 = vcvt.f32.s32 %v2982
    %v2989 = vshll.u32 %v2988, 16
    %v2990 = vadd.s32 %v2989, %v2987
    %v2991 = vand.u32 %v2759, 65535
    %v2992 = vshra.s32 %v2759, 16
    %v2993 = vcvt.s32.f32 %v2991
    %v2994 = vcvt.s32.f32 %v2992
    %2995 = vmin.xlane.f32.xlu0 %v2994
    %v2996 = vpop.xlane.xlu0 %2995
    %vm2997 = vcmp.eq.f32.partialorder %v2994, %v2996
    %v2998 = vsel %vm2997, %v2993, inf
    %2999 = vmin.xlane.f32.xlu0 %v2998
    %v3000 = vpop.xlane.xlu0 %2999
    %v3001 = vcvt.f32.s32 %v3000
    %v3002 = vcvt.f32.s32 %v2996
    %v3003 = vshll.u32 %v3002, 16
    %v3004 = vadd.s32 %v3003, %v3001
    %v3005 = vand.u32 %v2760, 65535
    %v3006 = vshra.s32 %v2760, 16
    %v3007 = vcvt.s32.f32 %v3005
    %v3008 = vcvt.s32.f32 %v3006
    %3009 = vmin.xlane.f32.xlu0 %v3008
    %v3010 = vpop.xlane.xlu0 %3009
    %vm3011 = vcmp.eq.f32.partialorder %v3008, %v3010
    %v3012 = vsel %vm3011, %v3007, inf
    %3013 = vmin.xlane.f32.xlu0 %v3012
    %v3014 = vpop.xlane.xlu0 %3013
    %v3015 = vcvt.f32.s32 %v3014
    %v3016 = vcvt.f32.s32 %v3010
    %v3017 = vshll.u32 %v3016, 16
    %v3018 = vadd.s32 %v3017, %v3015
    %v3019 = vand.u32 %v2761, 65535
    %v3020 = vshra.s32 %v2761, 16
    %v3021 = vcvt.s32.f32 %v3019
    %v3022 = vcvt.s32.f32 %v3020
    %3023 = vmin.xlane.f32.xlu0 %v3022
    %v3024 = vpop.xlane.xlu0 %3023
    %vm3025 = vcmp.eq.f32.partialorder %v3022, %v3024
    %v3026 = vsel %vm3025, %v3021, inf
    %3027 = vmin.xlane.f32.xlu0 %v3026
    %v3028 = vpop.xlane.xlu0 %3027
    %v3029 = vcvt.f32.s32 %v3028
    %v3030 = vcvt.f32.s32 %v3024
    %v3031 = vshll.u32 %v3030, 16
    %v3032 = vadd.s32 %v3031, %v3029
    %v3033 = vand.u32 %v2762, 65535
    %v3034 = vshra.s32 %v2762, 16
    %v3035 = vcvt.s32.f32 %v3033
    %v3036 = vcvt.s32.f32 %v3034
    %3037 = vmin.xlane.f32.xlu0 %v3036
    %v3038 = vpop.xlane.xlu0 %3037
    %vm3039 = vcmp.eq.f32.partialorder %v3036, %v3038
    %v3040 = vsel %vm3039, %v3035, inf
    %3041 = vmin.xlane.f32.xlu0 %v3040
    %v3042 = vpop.xlane.xlu0 %3041
    %v3043 = vcvt.f32.s32 %v3042
    %v3044 = vcvt.f32.s32 %v3038
    %v3045 = vshll.u32 %v3044, 16
    %v3046 = vadd.s32 %v3045, %v3043
    %v3047 = vand.u32 %v2763, 65535
    %v3048 = vshra.s32 %v2763, 16
    %v3049 = vcvt.s32.f32 %v3047
    %v3050 = vcvt.s32.f32 %v3048
    %3051 = vmin.xlane.f32.xlu0 %v3050
    %v3052 = vpop.xlane.xlu0 %3051
    %vm3053 = vcmp.eq.f32.partialorder %v3050, %v3052
    %v3054 = vsel %vm3053, %v3049, inf
    %3055 = vmin.xlane.f32.xlu0 %v3054
    %v3056 = vpop.xlane.xlu0 %3055
    %v3057 = vcvt.f32.s32 %v3056
    %v3058 = vcvt.f32.s32 %v3052
    %v3059 = vshll.u32 %v3058, 16
    %v3060 = vadd.s32 %v3059, %v3057
    %v3061 = vand.u32 %v2764, 65535
    %v3062 = vshra.s32 %v2764, 16
    %v3063 = vcvt.s32.f32 %v3061
    %v3064 = vcvt.s32.f32 %v3062
    %3065 = vmin.xlane.f32.xlu0 %v3064
    %v3066 = vpop.xlane.xlu0 %3065
    %vm3067 = vcmp.eq.f32.partialorder %v3064, %v3066
    %v3068 = vsel %vm3067, %v3063, inf
    %3069 = vmin.xlane.f32.xlu0 %v3068
    %v3070 = vpop.xlane.xlu0 %3069
    %v3071 = vcvt.f32.s32 %v3070
    %v3072 = vcvt.f32.s32 %v3066
    %v3073 = vshll.u32 %v3072, 16
    %v3074 = vadd.s32 %v3073, %v3071
    %v3075 = vand.u32 %v2765, 65535
    %v3076 = vshra.s32 %v2765, 16
    %v3077 = vcvt.s32.f32 %v3075
    %v3078 = vcvt.s32.f32 %v3076
    %3079 = vmin.xlane.f32.xlu0 %v3078
    %v3080 = vpop.xlane.xlu0 %3079
    %vm3081 = vcmp.eq.f32.partialorder %v3078, %v3080
    %v3082 = vsel %vm3081, %v3077, inf
    %3083 = vmin.xlane.f32.xlu0 %v3082
    %v3084 = vpop.xlane.xlu0 %3083
    %v3085 = vcvt.f32.s32 %v3084
    %v3086 = vcvt.f32.s32 %v3080
    %v3087 = vshll.u32 %v3086, 16
    %v3088 = vadd.s32 %v3087, %v3085
    %v3089 = vand.u32 %v2766, 65535
    %v3090 = vshra.s32 %v2766, 16
    %v3091 = vcvt.s32.f32 %v3089
    %v3092 = vcvt.s32.f32 %v3090
    %3093 = vmin.xlane.f32.xlu0 %v3092
    %v3094 = vpop.xlane.xlu0 %3093
    %vm3095 = vcmp.eq.f32.partialorder %v3092, %v3094
    %v3096 = vsel %vm3095, %v3091, inf
    %3097 = vmin.xlane.f32.xlu0 %v3096
    %v3098 = vpop.xlane.xlu0 %3097
    %v3099 = vcvt.f32.s32 %v3098
    %v3100 = vcvt.f32.s32 %v3094
    %v3101 = vshll.u32 %v3100, 16
    %v3102 = vadd.s32 %v3101, %v3099
    %v3103 = vand.u32 %v2767, 65535
    %v3104 = vshra.s32 %v2767, 16
    %v3105 = vcvt.s32.f32 %v3103
    %v3106 = vcvt.s32.f32 %v3104
    %3107 = vmin.xlane.f32.xlu0 %v3106
    %v3108 = vpop.xlane.xlu0 %3107
    %vm3109 = vcmp.eq.f32.partialorder %v3106, %v3108
    %v3110 = vsel %vm3109, %v3105, inf
    %3111 = vmin.xlane.f32.xlu0 %v3110
    %v3112 = vpop.xlane.xlu0 %3111
    %v3113 = vcvt.f32.s32 %v3112
    %v3114 = vcvt.f32.s32 %v3108
    %v3115 = vshll.u32 %v3114, 16
    %v3116 = vadd.s32 %v3115, %v3113
    %v3117 = vand.u32 %v2768, 65535
    %v3118 = vshra.s32 %v2768, 16
    %v3119 = vcvt.s32.f32 %v3117
    %v3120 = vcvt.s32.f32 %v3118
    %3121 = vmin.xlane.f32.xlu0 %v3120
    %v3122 = vpop.xlane.xlu0 %3121
    %vm3123 = vcmp.eq.f32.partialorder %v3120, %v3122
    %v3124 = vsel %vm3123, %v3119, inf
    %3125 = vmin.xlane.f32.xlu0 %v3124
    %v3126 = vpop.xlane.xlu0 %3125
    %v3127 = vcvt.f32.s32 %v3126
    %v3128 = vcvt.f32.s32 %v3122
    %v3129 = vshll.u32 %v3128, 16
    %v3130 = vadd.s32 %v3129, %v3127
    %v3131 = vand.u32 %v2769, 65535
    %v3132 = vshra.s32 %v2769, 16
    %v3133 = vcvt.s32.f32 %v3131
    %v3134 = vcvt.s32.f32 %v3132
    %3135 = vmin.xlane.f32.xlu0 %v3134
    %v3136 = vpop.xlane.xlu0 %3135
    %vm3137 = vcmp.eq.f32.partialorder %v3134, %v3136
    %v3138 = vsel %vm3137, %v3133, inf
    %3139 = vmin.xlane.f32.xlu0 %v3138
    %v3140 = vpop.xlane.xlu0 %3139
    %v3141 = vcvt.f32.s32 %v3140
    %v3142 = vcvt.f32.s32 %v3136
    %v3143 = vshll.u32 %v3142, 16
    %v3144 = vadd.s32 %v3143, %v3141
    %v3145 = vand.u32 %v2770, 65535
    %v3146 = vshra.s32 %v2770, 16
    %v3147 = vcvt.s32.f32 %v3145
    %v3148 = vcvt.s32.f32 %v3146
    %3149 = vmin.xlane.f32.xlu0 %v3148
    %v3150 = vpop.xlane.xlu0 %3149
    %vm3151 = vcmp.eq.f32.partialorder %v3148, %v3150
    %v3152 = vsel %vm3151, %v3147, inf
    %3153 = vmin.xlane.f32.xlu0 %v3152
    %v3154 = vpop.xlane.xlu0 %3153
    %v3155 = vcvt.f32.s32 %v3154
    %v3156 = vcvt.f32.s32 %v3150
    %v3157 = vshll.u32 %v3156, 16
    %v3158 = vadd.s32 %v3157, %v3155
    %v3159 = vand.u32 %v2771, 65535
    %v3160 = vshra.s32 %v2771, 16
    %v3161 = vcvt.s32.f32 %v3159
    %v3162 = vcvt.s32.f32 %v3160
    %3163 = vmin.xlane.f32.xlu0 %v3162
    %v3164 = vpop.xlane.xlu0 %3163
    %vm3165 = vcmp.eq.f32.partialorder %v3162, %v3164
    %v3166 = vsel %vm3165, %v3161, inf
    %3167 = vmin.xlane.f32.xlu0 %v3166
    %v3168 = vpop.xlane.xlu0 %3167
    %v3169 = vcvt.f32.s32 %v3168
    %v3170 = vcvt.f32.s32 %v3164
    %v3171 = vshll.u32 %v3170, 16
    %v3172 = vadd.s32 %v3171, %v3169
    %v3173 = vand.u32 %v2772, 65535
    %v3174 = vshra.s32 %v2772, 16
    %v3175 = vcvt.s32.f32 %v3173
    %v3176 = vcvt.s32.f32 %v3174
    %3177 = vmin.xlane.f32.xlu0 %v3176
    %v3178 = vpop.xlane.xlu0 %3177
    %vm3179 = vcmp.eq.f32.partialorder %v3176, %v3178
    %v3180 = vsel %vm3179, %v3175, inf
    %3181 = vmin.xlane.f32.xlu0 %v3180
    %v3182 = vpop.xlane.xlu0 %3181
    %v3183 = vcvt.f32.s32 %v3182
    %v3184 = vcvt.f32.s32 %v3178
    %v3185 = vshll.u32 %v3184, 16
    %v3186 = vadd.s32 %v3185, %v3183
    %v3187 = vand.u32 %v2773, 65535
    %v3188 = vshra.s32 %v2773, 16
    %v3189 = vcvt.s32.f32 %v3187
    %v3190 = vcvt.s32.f32 %v3188
    %3191 = vmin.xlane.f32.xlu0 %v3190
    %v3192 = vpop.xlane.xlu0 %3191
    %vm3193 = vcmp.eq.f32.partialorder %v3190, %v3192
    %v3194 = vsel %vm3193, %v3189, inf
    %3195 = vmin.xlane.f32.xlu0 %v3194
    %v3196 = vpop.xlane.xlu0 %3195
    %v3197 = vcvt.f32.s32 %v3196
    %v3198 = vcvt.f32.s32 %v3192
    %v3199 = vshll.u32 %v3198, 16
    %v3200 = vadd.s32 %v3199, %v3197
    %v3201 = vand.u32 %v2774, 65535
    %v3202 = vshra.s32 %v2774, 16
    %v3203 = vcvt.s32.f32 %v3201
    %v3204 = vcvt.s32.f32 %v3202
    %3205 = vmin.xlane.f32.xlu0 %v3204
    %v3206 = vpop.xlane.xlu0 %3205
    %vm3207 = vcmp.eq.f32.partialorder %v3204, %v3206
    %v3208 = vsel %vm3207, %v3203, inf
    %3209 = vmin.xlane.f32.xlu0 %v3208
    %v3210 = vpop.xlane.xlu0 %3209
    %v3211 = vcvt.f32.s32 %v3210
    %v3212 = vcvt.f32.s32 %v3206
    %v3213 = vshll.u32 %v3212, 16
    %v3214 = vadd.s32 %v3213, %v3211
    %v3215 = vand.u32 %v2775, 65535
    %v3216 = vshra.s32 %v2775, 16
    %v3217 = vcvt.s32.f32 %v3215
    %v3218 = vcvt.s32.f32 %v3216
    %3219 = vmin.xlane.f32.xlu0 %v3218
    %v3220 = vpop.xlane.xlu0 %3219
    %vm3221 = vcmp.eq.f32.partialorder %v3218, %v3220
    %v3222 = vsel %vm3221, %v3217, inf
    %3223 = vmin.xlane.f32.xlu0 %v3222
    %v3224 = vpop.xlane.xlu0 %3223
    %v3225 = vcvt.f32.s32 %v3224
    %v3226 = vcvt.f32.s32 %v3220
    %v3227 = vshll.u32 %v3226, 16
    %v3228 = vadd.s32 %v3227, %v3225
    %v3229 = vand.u32 %v2776, 65535
    %v3230 = vshra.s32 %v2776, 16
    %v3231 = vcvt.s32.f32 %v3229
    %v3232 = vcvt.s32.f32 %v3230
    %3233 = vmin.xlane.f32.xlu0 %v3232
    %v3234 = vpop.xlane.xlu0 %3233
    %vm3235 = vcmp.eq.f32.partialorder %v3232, %v3234
    %v3236 = vsel %vm3235, %v3231, inf
    %3237 = vmin.xlane.f32.xlu0 %v3236
    %v3238 = vpop.xlane.xlu0 %3237
    %v3239 = vcvt.f32.s32 %v3238
    %v3240 = vcvt.f32.s32 %v3234
    %v3241 = vshll.u32 %v3240, 16
    %v3242 = vadd.s32 %v3241, %v3239
    %v3243 = vand.u32 %v2777, 65535
    %v3244 = vshra.s32 %v2777, 16
    %v3245 = vcvt.s32.f32 %v3243
    %v3246 = vcvt.s32.f32 %v3244
    %3247 = vmin.xlane.f32.xlu0 %v3246
    %v3248 = vpop.xlane.xlu0 %3247
    %vm3249 = vcmp.eq.f32.partialorder %v3246, %v3248
    %v3250 = vsel %vm3249, %v3245, inf
    %3251 = vmin.xlane.f32.xlu0 %v3250
    %v3252 = vpop.xlane.xlu0 %3251
    %v3253 = vcvt.f32.s32 %v3252
    %v3254 = vcvt.f32.s32 %v3248
    %v3255 = vshll.u32 %v3254, 16
    %v3256 = vadd.s32 %v3255, %v3253
    %v3257 = vand.u32 %v2778, 65535
    %v3258 = vshra.s32 %v2778, 16
    %v3259 = vcvt.s32.f32 %v3257
    %v3260 = vcvt.s32.f32 %v3258
    %3261 = vmin.xlane.f32.xlu0 %v3260
    %v3262 = vpop.xlane.xlu0 %3261
    %vm3263 = vcmp.eq.f32.partialorder %v3260, %v3262
    %v3264 = vsel %vm3263, %v3259, inf
    %3265 = vmin.xlane.f32.xlu0 %v3264
    %v3266 = vpop.xlane.xlu0 %3265
    %v3267 = vcvt.f32.s32 %v3266
    %v3268 = vcvt.f32.s32 %v3262
    %v3269 = vshll.u32 %v3268, 16
    %v3270 = vadd.s32 %v3269, %v3267
    %v3271 = vand.u32 %v2779, 65535
    %v3272 = vshra.s32 %v2779, 16
    %v3273 = vcvt.s32.f32 %v3271
    %v3274 = vcvt.s32.f32 %v3272
    %3275 = vmin.xlane.f32.xlu0 %v3274
    %v3276 = vpop.xlane.xlu0 %3275
    %vm3277 = vcmp.eq.f32.partialorder %v3274, %v3276
    %v3278 = vsel %vm3277, %v3273, inf
    %3279 = vmin.xlane.f32.xlu0 %v3278
    %v3280 = vpop.xlane.xlu0 %3279
    %v3281 = vcvt.f32.s32 %v3280
    %v3282 = vcvt.f32.s32 %v3276
    %v3283 = vshll.u32 %v3282, 16
    %v3284 = vadd.s32 %v3283, %v3281
    %v3285 = vand.u32 %v2780, 65535
    %v3286 = vshra.s32 %v2780, 16
    %v3287 = vcvt.s32.f32 %v3285
    %v3288 = vcvt.s32.f32 %v3286
    %3289 = vmin.xlane.f32.xlu0 %v3288
    %v3290 = vpop.xlane.xlu0 %3289
    %vm3291 = vcmp.eq.f32.partialorder %v3288, %v3290
    %v3292 = vsel %vm3291, %v3287, inf
    %3293 = vmin.xlane.f32.xlu0 %v3292
    %v3294 = vpop.xlane.xlu0 %3293
    %v3295 = vcvt.f32.s32 %v3294
    %v3296 = vcvt.f32.s32 %v3290
    %v3297 = vshll.u32 %v3296, 16
    %v3298 = vadd.s32 %v3297, %v3295
    %v3299 = vand.u32 %v2781, 65535
    %v3300 = vshra.s32 %v2781, 16
    %v3301 = vcvt.s32.f32 %v3299
    %v3302 = vcvt.s32.f32 %v3300
    %3303 = vmin.xlane.f32.xlu0 %v3302
    %v3304 = vpop.xlane.xlu0 %3303
    %vm3305 = vcmp.eq.f32.partialorder %v3302, %v3304
    %v3306 = vsel %vm3305, %v3301, inf
    %3307 = vmin.xlane.f32.xlu0 %v3306
    %v3308 = vpop.xlane.xlu0 %3307
    %v3309 = vcvt.f32.s32 %v3308
    %v3310 = vcvt.f32.s32 %v3304
    %v3311 = vshll.u32 %v3310, 16
    %v3312 = vadd.s32 %v3311, %v3309
    %v3313 = vand.u32 %v2782, 65535
    %v3314 = vshra.s32 %v2782, 16
    %v3315 = vcvt.s32.f32 %v3313
    %v3316 = vcvt.s32.f32 %v3314
    %3317 = vmin.xlane.f32.xlu0 %v3316
    %v3318 = vpop.xlane.xlu0 %3317
    %vm3319 = vcmp.eq.f32.partialorder %v3316, %v3318
    %v3320 = vsel %vm3319, %v3315, inf
    %3321 = vmin.xlane.f32.xlu0 %v3320
    %v3322 = vpop.xlane.xlu0 %3321
    %v3323 = vcvt.f32.s32 %v3322
    %v3324 = vcvt.f32.s32 %v3318
    %v3325 = vshll.u32 %v3324, 16
    %v3326 = vadd.s32 %v3325, %v3323
    %v3327 = vand.u32 %v2783, 65535
    %v3328 = vshra.s32 %v2783, 16
    %v3329 = vcvt.s32.f32 %v3327
    %v3330 = vcvt.s32.f32 %v3328
    %3331 = vmin.xlane.f32.xlu0 %v3330
    %v3332 = vpop.xlane.xlu0 %3331
    %vm3333 = vcmp.eq.f32.partialorder %v3330, %v3332
    %v3334 = vsel %vm3333, %v3329, inf
    %3335 = vmin.xlane.f32.xlu0 %v3334
    %v3336 = vpop.xlane.xlu0 %3335
    %v3337 = vcvt.f32.s32 %v3336
    %v3338 = vcvt.f32.s32 %v3332
    %v3339 = vshll.u32 %v3338, 16
    %v3340 = vadd.s32 %v3339, %v3337
    %v3341 = vand.u32 %v2784, 65535
    %v3342 = vshra.s32 %v2784, 16
    %v3343 = vcvt.s32.f32 %v3341
    %v3344 = vcvt.s32.f32 %v3342
    %3345 = vmin.xlane.f32.xlu0 %v3344
    %v3346 = vpop.xlane.xlu0 %3345
    %vm3347 = vcmp.eq.f32.partialorder %v3344, %v3346
    %v3348 = vsel %vm3347, %v3343, inf
    %3349 = vmin.xlane.f32.xlu0 %v3348
    %v3350 = vpop.xlane.xlu0 %3349
    %v3351 = vcvt.f32.s32 %v3350
    %v3352 = vcvt.f32.s32 %v3346
    %v3353 = vshll.u32 %v3352, 16
    %v3354 = vadd.s32 %v3353, %v3351
    %v3355 = vand.u32 %v2785, 65535
    %v3356 = vshra.s32 %v2785, 16
    %v3357 = vcvt.s32.f32 %v3355
    %v3358 = vcvt.s32.f32 %v3356
    %3359 = vmin.xlane.f32.xlu0 %v3358
    %v3360 = vpop.xlane.xlu0 %3359
    %vm3361 = vcmp.eq.f32.partialorder %v3358, %v3360
    %v3362 = vsel %vm3361, %v3357, inf
    %3363 = vmin.xlane.f32.xlu0 %v3362
    %v3364 = vpop.xlane.xlu0 %3363
    %v3365 = vcvt.f32.s32 %v3364
    %v3366 = vcvt.f32.s32 %v3360
    %v3367 = vshll.u32 %v3366, 16
    %v3368 = vadd.s32 %v3367, %v3365
    %v3369 = vand.u32 %v2786, 65535
    %v3370 = vshra.s32 %v2786, 16
    %v3371 = vcvt.s32.f32 %v3369
    %v3372 = vcvt.s32.f32 %v3370
    %3373 = vmin.xlane.f32.xlu0 %v3372
    %v3374 = vpop.xlane.xlu0 %3373
    %vm3375 = vcmp.eq.f32.partialorder %v3372, %v3374
    %v3376 = vsel %vm3375, %v3371, inf
    %3377 = vmin.xlane.f32.xlu0 %v3376
    %v3378 = vpop.xlane.xlu0 %3377
    %v3379 = vcvt.f32.s32 %v3378
    %v3380 = vcvt.f32.s32 %v3374
    %v3381 = vshll.u32 %v3380, 16
    %v3382 = vadd.s32 %v3381, %v3379
    %v3383 = vand.u32 %v2787, 65535
    %v3384 = vshra.s32 %v2787, 16
    %v3385 = vcvt.s32.f32 %v3383
    %v3386 = vcvt.s32.f32 %v3384
    %3387 = vmin.xlane.f32.xlu0 %v3386
    %v3388 = vpop.xlane.xlu0 %3387
    %vm3389 = vcmp.eq.f32.partialorder %v3386, %v3388
    %v3390 = vsel %vm3389, %v3385, inf
    %3391 = vmin.xlane.f32.xlu0 %v3390
    %v3392 = vpop.xlane.xlu0 %3391
    %v3393 = vcvt.f32.s32 %v3392
    %v3394 = vcvt.f32.s32 %v3388
    %v3395 = vshll.u32 %v3394, 16
    %v3396 = vadd.s32 %v3395, %v3393
    %v3397 = vand.u32 %v2788, 65535
    %v3398 = vshra.s32 %v2788, 16
    %v3399 = vcvt.s32.f32 %v3397
    %v3400 = vcvt.s32.f32 %v3398
    %3401 = vmin.xlane.f32.xlu0 %v3400
    %v3402 = vpop.xlane.xlu0 %3401
    %vm3403 = vcmp.eq.f32.partialorder %v3400, %v3402
    %v3404 = vsel %vm3403, %v3399, inf
    %3405 = vmin.xlane.f32.xlu0 %v3404
    %v3406 = vpop.xlane.xlu0 %3405
    %v3407 = vcvt.f32.s32 %v3406
    %v3408 = vcvt.f32.s32 %v3402
    %v3409 = vshll.u32 %v3408, 16
    %v3410 = vadd.s32 %v3409, %v3407
    %v3411 = vand.u32 %v2789, 65535
    %v3412 = vshra.s32 %v2789, 16
    %v3413 = vcvt.s32.f32 %v3411
    %v3414 = vcvt.s32.f32 %v3412
    %3415 = vmin.xlane.f32.xlu0 %v3414
    %v3416 = vpop.xlane.xlu0 %3415
    %vm3417 = vcmp.eq.f32.partialorder %v3414, %v3416
    %v3418 = vsel %vm3417, %v3413, inf
    %3419 = vmin.xlane.f32.xlu0 %v3418
    %v3420 = vpop.xlane.xlu0 %3419
    %v3421 = vcvt.f32.s32 %v3420
    %v3422 = vcvt.f32.s32 %v3416
    %v3423 = vshll.u32 %v3422, 16
    %v3424 = vadd.s32 %v3423, %v3421
    %v3425 = vand.u32 %v2790, 65535
    %v3426 = vshra.s32 %v2790, 16
    %v3427 = vcvt.s32.f32 %v3425
    %v3428 = vcvt.s32.f32 %v3426
    %3429 = vmin.xlane.f32.xlu0 %v3428
    %v3430 = vpop.xlane.xlu0 %3429
    %vm3431 = vcmp.eq.f32.partialorder %v3428, %v3430
    %v3432 = vsel %vm3431, %v3427, inf
    %3433 = vmin.xlane.f32.xlu0 %v3432
    %v3434 = vpop.xlane.xlu0 %3433
    %v3435 = vcvt.f32.s32 %v3434
    %v3436 = vcvt.f32.s32 %v3430
    %v3437 = vshll.u32 %v3436, 16
    %v3438 = vadd.s32 %v3437, %v3435
    %v3439 = vand.u32 %v2791, 65535
    %v3440 = vshra.s32 %v2791, 16
    %v3441 = vcvt.s32.f32 %v3439
    %v3442 = vcvt.s32.f32 %v3440
    %3443 = vmin.xlane.f32.xlu0 %v3442
    %v3444 = vpop.xlane.xlu0 %3443
    %vm3445 = vcmp.eq.f32.partialorder %v3442, %v3444
    %v3446 = vsel %vm3445, %v3441, inf
    %3447 = vmin.xlane.f32.xlu0 %v3446
    %v3448 = vpop.xlane.xlu0 %3447
    %v3449 = vcvt.f32.s32 %v3448
    %v3450 = vcvt.f32.s32 %v3444
    %v3451 = vshll.u32 %v3450, 16
    %v3452 = vadd.s32 %v3451, %v3449
    %v3453 = vand.u32 %v2792, 65535
    %v3454 = vshra.s32 %v2792, 16
    %v3455 = vcvt.s32.f32 %v3453
    %v3456 = vcvt.s32.f32 %v3454
    %3457 = vmin.xlane.f32.xlu0 %v3456
    %v3458 = vpop.xlane.xlu0 %3457
    %vm3459 = vcmp.eq.f32.partialorder %v3456, %v3458
    %v3460 = vsel %vm3459, %v3455, inf
    %3461 = vmin.xlane.f32.xlu0 %v3460
    %v3462 = vpop.xlane.xlu0 %3461
    %v3463 = vcvt.f32.s32 %v3462
    %v3464 = vcvt.f32.s32 %v3458
    %v3465 = vshll.u32 %v3464, 16
    %v3466 = vadd.s32 %v3465, %v3463
    %v3467 = vand.u32 %v2793, 65535
    %v3468 = vshra.s32 %v2793, 16
    %v3469 = vcvt.s32.f32 %v3467
    %v3470 = vcvt.s32.f32 %v3468
    %3471 = vmin.xlane.f32.xlu0 %v3470
    %v3472 = vpop.xlane.xlu0 %3471
    %vm3473 = vcmp.eq.f32.partialorder %v3470, %v3472
    %v3474 = vsel %vm3473, %v3469, inf
    %3475 = vmin.xlane.f32.xlu0 %v3474
    %v3476 = vpop.xlane.xlu0 %3475
    %v3477 = vcvt.f32.s32 %v3476
    %v3478 = vcvt.f32.s32 %v3472
    %v3479 = vshll.u32 %v3478, 16
    %v3480 = vadd.s32 %v3479, %v3477
    %v3481 = vand.u32 %v2794, 65535
    %v3482 = vshra.s32 %v2794, 16
    %v3483 = vcvt.s32.f32 %v3481
    %v3484 = vcvt.s32.f32 %v3482
    %3485 = vmin.xlane.f32.xlu0 %v3484
    %v3486 = vpop.xlane.xlu0 %3485
    %vm3487 = vcmp.eq.f32.partialorder %v3484, %v3486
    %v3488 = vsel %vm3487, %v3483, inf
    %3489 = vmin.xlane.f32.xlu0 %v3488
    %v3490 = vpop.xlane.xlu0 %3489
    %v3491 = vcvt.f32.s32 %v3490
    %v3492 = vcvt.f32.s32 %v3486
    %v3493 = vshll.u32 %v3492, 16
    %v3494 = vadd.s32 %v3493, %v3491
    %v3495 = vand.u32 %v2795, 65535
    %v3496 = vshra.s32 %v2795, 16
    %v3497 = vcvt.s32.f32 %v3495
    %v3498 = vcvt.s32.f32 %v3496
    %3499 = vmin.xlane.f32.xlu0 %v3498
    %v3500 = vpop.xlane.xlu0 %3499
    %vm3501 = vcmp.eq.f32.partialorder %v3498, %v3500
    %v3502 = vsel %vm3501, %v3497, inf
    %3503 = vmin.xlane.f32.xlu0 %v3502
    %v3504 = vpop.xlane.xlu0 %3503
    %v3505 = vcvt.f32.s32 %v3504
    %v3506 = vcvt.f32.s32 %v3500
    %v3507 = vshll.u32 %v3506, 16
    %v3508 = vadd.s32 %v3507, %v3505
    %v3509 = vand.u32 %v2796, 65535
    %v3510 = vshra.s32 %v2796, 16
    %v3511 = vcvt.s32.f32 %v3509
    %v3512 = vcvt.s32.f32 %v3510
    %3513 = vmin.xlane.f32.xlu0 %v3512
    %v3514 = vpop.xlane.xlu0 %3513
    %vm3515 = vcmp.eq.f32.partialorder %v3512, %v3514
    %v3516 = vsel %vm3515, %v3511, inf
    %3517 = vmin.xlane.f32.xlu0 %v3516
    %v3518 = vpop.xlane.xlu0 %3517
    %v3519 = vcvt.f32.s32 %v3518
    %v3520 = vcvt.f32.s32 %v3514
    %v3521 = vshll.u32 %v3520, 16
    %v3522 = vadd.s32 %v3521, %v3519
    %v3523 = vand.u32 %v2797, 65535
    %v3524 = vshra.s32 %v2797, 16
    %v3525 = vcvt.s32.f32 %v3523
    %v3526 = vcvt.s32.f32 %v3524
    %3527 = vmin.xlane.f32.xlu0 %v3526
    %v3528 = vpop.xlane.xlu0 %3527
    %vm3529 = vcmp.eq.f32.partialorder %v3526, %v3528
    %v3530 = vsel %vm3529, %v3525, inf
    %3531 = vmin.xlane.f32.xlu0 %v3530
    %v3532 = vpop.xlane.xlu0 %3531
    %v3533 = vcvt.f32.s32 %v3532
    %v3534 = vcvt.f32.s32 %v3528
    %v3535 = vshll.u32 %v3534, 16
    %v3536 = vadd.s32 %v3535, %v3533
    %v3537 = vand.u32 %v2798, 65535
    %v3538 = vshra.s32 %v2798, 16
    %v3539 = vcvt.s32.f32 %v3537
    %v3540 = vcvt.s32.f32 %v3538
    %3541 = vmin.xlane.f32.xlu0 %v3540
    %v3542 = vpop.xlane.xlu0 %3541
    %vm3543 = vcmp.eq.f32.partialorder %v3540, %v3542
    %v3544 = vsel %vm3543, %v3539, inf
    %3545 = vmin.xlane.f32.xlu0 %v3544
    %v3546 = vpop.xlane.xlu0 %3545
    %v3547 = vcvt.f32.s32 %v3546
    %v3548 = vcvt.f32.s32 %v3542
    %v3549 = vshll.u32 %v3548, 16
    %v3550 = vadd.s32 %v3549, %v3547
    %v3551 = vand.u32 %v2799, 65535
    %v3552 = vshra.s32 %v2799, 16
    %v3553 = vcvt.s32.f32 %v3551
    %v3554 = vcvt.s32.f32 %v3552
    %3555 = vmin.xlane.f32.xlu0 %v3554
    %v3556 = vpop.xlane.xlu0 %3555
    %vm3557 = vcmp.eq.f32.partialorder %v3554, %v3556
    %v3558 = vsel %vm3557, %v3553, inf
    %3559 = vmin.xlane.f32.xlu0 %v3558
    %v3560 = vpop.xlane.xlu0 %3559
    %v3561 = vcvt.f32.s32 %v3560
    %v3562 = vcvt.f32.s32 %v3556
    %v3563 = vshll.u32 %v3562, 16
    %v3564 = vadd.s32 %v3563, %v3561
    %v3565 = vand.u32 %v2800, 65535
    %v3566 = vshra.s32 %v2800, 16
    %v3567 = vcvt.s32.f32 %v3565
    %v3568 = vcvt.s32.f32 %v3566
    %3569 = vmin.xlane.f32.xlu0 %v3568
    %v3570 = vpop.xlane.xlu0 %3569
    %vm3571 = vcmp.eq.f32.partialorder %v3568, %v3570
    %v3572 = vsel %vm3571, %v3567, inf
    %3573 = vmin.xlane.f32.xlu0 %v3572
    %v3574 = vpop.xlane.xlu0 %3573
    %v3575 = vcvt.f32.s32 %v3574
    %v3576 = vcvt.f32.s32 %v3570
    %v3577 = vshll.u32 %v3576, 16
    %v3578 = vadd.s32 %v3577, %v3575
    %v3579 = vand.u32 %v2801, 65535
    %v3580 = vshra.s32 %v2801, 16
    %v3581 = vcvt.s32.f32 %v3579
    %v3582 = vcvt.s32.f32 %v3580
    %3583 = vmin.xlane.f32.xlu0 %v3582
    %v3584 = vpop.xlane.xlu0 %3583
    %vm3585 = vcmp.eq.f32.partialorder %v3582, %v3584
    %v3586 = vsel %vm3585, %v3581, inf
    %3587 = vmin.xlane.f32.xlu0 %v3586
    %v3588 = vpop.xlane.xlu0 %3587
    %v3589 = vcvt.f32.s32 %v3588
    %v3590 = vcvt.f32.s32 %v3584
    %v3591 = vshll.u32 %v3590, 16
    %v3592 = vadd.s32 %v3591, %v3589
    %v3593 = vand.u32 %v2802, 65535
    %v3594 = vshra.s32 %v2802, 16
    %v3595 = vcvt.s32.f32 %v3593
    %v3596 = vcvt.s32.f32 %v3594
    %3597 = vmin.xlane.f32.xlu0 %v3596
    %v3598 = vpop.xlane.xlu0 %3597
    %vm3599 = vcmp.eq.f32.partialorder %v3596, %v3598
    %v3600 = vsel %vm3599, %v3595, inf
    %3601 = vmin.xlane.f32.xlu0 %v3600
    %v3602 = vpop.xlane.xlu0 %3601
    %v3603 = vcvt.f32.s32 %v3602
    %v3604 = vcvt.f32.s32 %v3598
    %v3605 = vshll.u32 %v3604, 16
    %v3606 = vadd.s32 %v3605, %v3603
    %v3607 = vand.u32 %v2803, 65535
    %v3608 = vshra.s32 %v2803, 16
    %v3609 = vcvt.s32.f32 %v3607
    %v3610 = vcvt.s32.f32 %v3608
    %3611 = vmin.xlane.f32.xlu0 %v3610
    %v3612 = vpop.xlane.xlu0 %3611
    %vm3613 = vcmp.eq.f32.partialorder %v3610, %v3612
    %v3614 = vsel %vm3613, %v3609, inf
    %3615 = vmin.xlane.f32.xlu0 %v3614
    %v3616 = vpop.xlane.xlu0 %3615
    %v3617 = vcvt.f32.s32 %v3616
    %v3618 = vcvt.f32.s32 %v3612
    %v3619 = vshll.u32 %v3618, 16
    %v3620 = vadd.s32 %v3619, %v3617
    %v3621 = vand.u32 %v2804, 65535
    %v3622 = vshra.s32 %v2804, 16
    %v3623 = vcvt.s32.f32 %v3621
    %v3624 = vcvt.s32.f32 %v3622
    %3625 = vmin.xlane.f32.xlu0 %v3624
    %v3626 = vpop.xlane.xlu0 %3625
    %vm3627 = vcmp.eq.f32.partialorder %v3624, %v3626
    %v3628 = vsel %vm3627, %v3623, inf
    %3629 = vmin.xlane.f32.xlu0 %v3628
    %v3630 = vpop.xlane.xlu0 %3629
    %v3631 = vcvt.f32.s32 %v3630
    %v3632 = vcvt.f32.s32 %v3626
    %v3633 = vshll.u32 %v3632, 16
    %v3634 = vadd.s32 %v3633, %v3631
    %v3635 = vand.u32 %v2805, 65535
    %v3636 = vshra.s32 %v2805, 16
    %v3637 = vcvt.s32.f32 %v3635
    %v3638 = vcvt.s32.f32 %v3636
    %3639 = vmin.xlane.f32.xlu0 %v3638
    %v3640 = vpop.xlane.xlu0 %3639
    %vm3641 = vcmp.eq.f32.partialorder %v3638, %v3640
    %v3642 = vsel %vm3641, %v3637, inf
    %3643 = vmin.xlane.f32.xlu0 %v3642
    %v3644 = vpop.xlane.xlu0 %3643
    %v3645 = vcvt.f32.s32 %v3644
    %v3646 = vcvt.f32.s32 %v3640
    %v3647 = vshll.u32 %v3646, 16
    %v3648 = vadd.s32 %v3647, %v3645
    %v3649 = vand.u32 %v2806, 65535
    %v3650 = vshra.s32 %v2806, 16
    %v3651 = vcvt.s32.f32 %v3649
    %v3652 = vcvt.s32.f32 %v3650
    %3653 = vmin.xlane.f32.xlu0 %v3652
    %v3654 = vpop.xlane.xlu0 %3653
    %vm3655 = vcmp.eq.f32.partialorder %v3652, %v3654
    %v3656 = vsel %vm3655, %v3651, inf
    %3657 = vmin.xlane.f32.xlu0 %v3656
    %v3658 = vpop.xlane.xlu0 %3657
    %v3659 = vcvt.f32.s32 %v3658
    %v3660 = vcvt.f32.s32 %v3654
    %v3661 = vshll.u32 %v3660, 16
    %v3662 = vadd.s32 %v3661, %v3659
    %v3663 = vand.u32 %v2807, 65535
    %v3664 = vshra.s32 %v2807, 16
    %v3665 = vcvt.s32.f32 %v3663
    %v3666 = vcvt.s32.f32 %v3664
    %3667 = vmin.xlane.f32.xlu0 %v3666
    %v3668 = vpop.xlane.xlu0 %3667
    %vm3669 = vcmp.eq.f32.partialorder %v3666, %v3668
    %v3670 = vsel %vm3669, %v3665, inf
    %3671 = vmin.xlane.f32.xlu0 %v3670
    %v3672 = vpop.xlane.xlu0 %3671
    %v3673 = vcvt.f32.s32 %v3672
    %v3674 = vcvt.f32.s32 %v3668
    %v3675 = vshll.u32 %v3674, 16
    %v3676 = vadd.s32 %v3675, %v3673
    %v3677 = vand.u32 %v2808, 65535
    %v3678 = vshra.s32 %v2808, 16
    %v3679 = vcvt.s32.f32 %v3677
    %v3680 = vcvt.s32.f32 %v3678
    %3681 = vmin.xlane.f32.xlu0 %v3680
    %v3682 = vpop.xlane.xlu0 %3681
    %vm3683 = vcmp.eq.f32.partialorder %v3680, %v3682
    %v3684 = vsel %vm3683, %v3679, inf
    %3685 = vmin.xlane.f32.xlu0 %v3684
    %v3686 = vpop.xlane.xlu0 %3685
    %v3687 = vcvt.f32.s32 %v3686
    %v3688 = vcvt.f32.s32 %v3682
    %v3689 = vshll.u32 %v3688, 16
    %v3690 = vadd.s32 %v3689, %v3687
    %v3691 = vand.u32 %v2809, 65535
    %v3692 = vshra.s32 %v2809, 16
    %v3693 = vcvt.s32.f32 %v3691
    %v3694 = vcvt.s32.f32 %v3692
    %3695 = vmin.xlane.f32.xlu0 %v3694
    %v3696 = vpop.xlane.xlu0 %3695
    %vm3697 = vcmp.eq.f32.partialorder %v3694, %v3696
    %v3698 = vsel %vm3697, %v3693, inf
    %3699 = vmin.xlane.f32.xlu0 %v3698
    %v3700 = vpop.xlane.xlu0 %3699
    %v3701 = vcvt.f32.s32 %v3700
    %v3702 = vcvt.f32.s32 %v3696
    %v3703 = vshll.u32 %v3702, 16
    %v3704 = vadd.s32 %v3703, %v3701
    %v3705 = vand.u32 %v2810, 65535
    %v3706 = vshra.s32 %v2810, 16
    %v3707 = vcvt.s32.f32 %v3705
    %v3708 = vcvt.s32.f32 %v3706
    %3709 = vmin.xlane.f32.xlu0 %v3708
    %v3710 = vpop.xlane.xlu0 %3709
    %vm3711 = vcmp.eq.f32.partialorder %v3708, %v3710
    %v3712 = vsel %vm3711, %v3707, inf
    %3713 = vmin.xlane.f32.xlu0 %v3712
    %v3714 = vpop.xlane.xlu0 %3713
    %v3715 = vcvt.f32.s32 %v3714
    %v3716 = vcvt.f32.s32 %v3710
    %v3717 = vshll.u32 %v3716, 16
    %v3718 = vadd.s32 %v3717, %v3715
    %v3719 = vand.u32 %v2811, 65535
    %v3720 = vshra.s32 %v2811, 16
    %v3721 = vcvt.s32.f32 %v3719
    %v3722 = vcvt.s32.f32 %v3720
    %3723 = vmin.xlane.f32.xlu0 %v3722
    %v3724 = vpop.xlane.xlu0 %3723
    %vm3725 = vcmp.eq.f32.partialorder %v3722, %v3724
    %v3726 = vsel %vm3725, %v3721, inf
    %3727 = vmin.xlane.f32.xlu0 %v3726
    %v3728 = vpop.xlane.xlu0 %3727
    %v3729 = vcvt.f32.s32 %v3728
    %v3730 = vcvt.f32.s32 %v3724
    %v3731 = vshll.u32 %v3730, 16
    %v3732 = vadd.s32 %v3731, %v3729
    %v3733 = vand.u32 %v2812, 65535
    %v3734 = vshra.s32 %v2812, 16
    %v3735 = vcvt.s32.f32 %v3733
    %v3736 = vcvt.s32.f32 %v3734
    %3737 = vmin.xlane.f32.xlu0 %v3736
    %v3738 = vpop.xlane.xlu0 %3737
    %vm3739 = vcmp.eq.f32.partialorder %v3736, %v3738
    %v3740 = vsel %vm3739, %v3735, inf
    %3741 = vmin.xlane.f32.xlu0 %v3740
    %v3742 = vpop.xlane.xlu0 %3741
    %v3743 = vcvt.f32.s32 %v3742
    %v3744 = vcvt.f32.s32 %v3738
    %v3745 = vshll.u32 %v3744, 16
    %v3746 = vadd.s32 %v3745, %v3743
    %v3747 = vand.u32 %v2813, 65535
    %v3748 = vshra.s32 %v2813, 16
    %v3749 = vcvt.s32.f32 %v3747
    %v3750 = vcvt.s32.f32 %v3748
    %3751 = vmin.xlane.f32.xlu0 %v3750
    %v3752 = vpop.xlane.xlu0 %3751
    %vm3753 = vcmp.eq.f32.partialorder %v3750, %v3752
    %v3754 = vsel %vm3753, %v3749, inf
    %3755 = vmin.xlane.f32.xlu0 %v3754
    %v3756 = vpop.xlane.xlu0 %3755
    %v3757 = vcvt.f32.s32 %v3756
    %v3758 = vcvt.f32.s32 %v3752
    %v3759 = vshll.u32 %v3758, 16
    %v3760 = vadd.s32 %v3759, %v3757
    %v3761 = vand.u32 %v2814, 65535
    %v3762 = vshra.s32 %v2814, 16
    %v3763 = vcvt.s32.f32 %v3761
    %v3764 = vcvt.s32.f32 %v3762
    %3765 = vmin.xlane.f32.xlu0 %v3764
    %v3766 = vpop.xlane.xlu0 %3765
    %vm3767 = vcmp.eq.f32.partialorder %v3764, %v3766
    %v3768 = vsel %vm3767, %v3763, inf
    %3769 = vmin.xlane.f32.xlu0 %v3768
    %v3770 = vpop.xlane.xlu0 %3769
    %v3771 = vcvt.f32.s32 %v3770
    %v3772 = vcvt.f32.s32 %v3766
    %v3773 = vshll.u32 %v3772, 16
    %v3774 = vadd.s32 %v3773, %v3771
    %v3775 = vand.u32 %v2815, 65535
    %v3776 = vshra.s32 %v2815, 16
    %v3777 = vcvt.s32.f32 %v3775
    %v3778 = vcvt.s32.f32 %v3776
    %3779 = vmin.xlane.f32.xlu0 %v3778
    %v3780 = vpop.xlane.xlu0 %3779
    %vm3781 = vcmp.eq.f32.partialorder %v3778, %v3780
    %v3782 = vsel %vm3781, %v3777, inf
    %3783 = vmin.xlane.f32.xlu0 %v3782
    %v3784 = vpop.xlane.xlu0 %3783
    %v3785 = vcvt.f32.s32 %v3784
    %v3786 = vcvt.f32.s32 %v3780
    %v3787 = vshll.u32 %v3786, 16
    %v3788 = vadd.s32 %v3787, %v3785
    %v3789 = vand.u32 %v2816, 65535
    %v3790 = vshra.s32 %v2816, 16
    %v3791 = vcvt.s32.f32 %v3789
    %v3792 = vcvt.s32.f32 %v3790
    %3793 = vmin.xlane.f32.xlu0 %v3792
    %v3794 = vpop.xlane.xlu0 %3793
    %vm3795 = vcmp.eq.f32.partialorder %v3792, %v3794
    %v3796 = vsel %vm3795, %v3791, inf
    %3797 = vmin.xlane.f32.xlu0 %v3796
    %v3798 = vpop.xlane.xlu0 %3797
    %v3799 = vcvt.f32.s32 %v3798
    %v3800 = vcvt.f32.s32 %v3794
    %v3801 = vshll.u32 %v3800, 16
    %v3802 = vadd.s32 %v3801, %v3799
    %v3803 = vand.u32 %v2817, 65535
    %v3804 = vshra.s32 %v2817, 16
    %v3805 = vcvt.s32.f32 %v3803
    %v3806 = vcvt.s32.f32 %v3804
    %3807 = vmin.xlane.f32.xlu0 %v3806
    %v3808 = vpop.xlane.xlu0 %3807
    %vm3809 = vcmp.eq.f32.partialorder %v3806, %v3808
    %v3810 = vsel %vm3809, %v3805, inf
    %3811 = vmin.xlane.f32.xlu0 %v3810
    %v3812 = vpop.xlane.xlu0 %3811
    %v3813 = vcvt.f32.s32 %v3812
    %v3814 = vcvt.f32.s32 %v3808
    %v3815 = vshll.u32 %v3814, 16
    %v3816 = vadd.s32 %v3815, %v3813
    %v3817 = vand.u32 %v2818, 65535
    %v3818 = vshra.s32 %v2818, 16
    %v3819 = vcvt.s32.f32 %v3817
    %v3820 = vcvt.s32.f32 %v3818
    %3821 = vmin.xlane.f32.xlu0 %v3820
    %v3822 = vpop.xlane.xlu0 %3821
    %vm3823 = vcmp.eq.f32.partialorder %v3820, %v3822
    %v3824 = vsel %vm3823, %v3819, inf
    %3825 = vmin.xlane.f32.xlu0 %v3824
    %v3826 = vpop.xlane.xlu0 %3825
    %v3827 = vcvt.f32.s32 %v3826
    %v3828 = vcvt.f32.s32 %v3822
    %v3829 = vshll.u32 %v3828, 16
    %v3830 = vadd.s32 %v3829, %v3827
    %v3831 = vand.u32 %v2819, 65535
    %v3832 = vshra.s32 %v2819, 16
    %v3833 = vcvt.s32.f32 %v3831
    %v3834 = vcvt.s32.f32 %v3832
    %3835 = vmin.xlane.f32.xlu0 %v3834
    %v3836 = vpop.xlane.xlu0 %3835
    %vm3837 = vcmp.eq.f32.partialorder %v3834, %v3836
    %v3838 = vsel %vm3837, %v3833, inf
    %3839 = vmin.xlane.f32.xlu0 %v3838
    %v3840 = vpop.xlane.xlu0 %3839
    %v3841 = vcvt.f32.s32 %v3840
    %v3842 = vcvt.f32.s32 %v3836
    %v3843 = vshll.u32 %v3842, 16
    %v3844 = vadd.s32 %v3843, %v3841
    %v3845 = vand.u32 %v2820, 65535
    %v3846 = vshra.s32 %v2820, 16
    %v3847 = vcvt.s32.f32 %v3845
    %v3848 = vcvt.s32.f32 %v3846
    %3849 = vmin.xlane.f32.xlu0 %v3848
    %v3850 = vpop.xlane.xlu0 %3849
    %vm3851 = vcmp.eq.f32.partialorder %v3848, %v3850
    %v3852 = vsel %vm3851, %v3847, inf
    %3853 = vmin.xlane.f32.xlu0 %v3852
    %v3854 = vpop.xlane.xlu0 %3853
    %v3855 = vcvt.f32.s32 %v3854
    %v3856 = vcvt.f32.s32 %v3850
    %v3857 = vshll.u32 %v3856, 16
    %v3858 = vadd.s32 %v3857, %v3855
    %v3859 = vand.u32 %v2821, 65535
    %v3860 = vshra.s32 %v2821, 16
    %v3861 = vcvt.s32.f32 %v3859
    %v3862 = vcvt.s32.f32 %v3860
    %3863 = vmin.xlane.f32.xlu0 %v3862
    %v3864 = vpop.xlane.xlu0 %3863
    %vm3865 = vcmp.eq.f32.partialorder %v3862, %v3864
    %v3866 = vsel %vm3865, %v3861, inf
    %3867 = vmin.xlane.f32.xlu0 %v3866
    %v3868 = vpop.xlane.xlu0 %3867
    %v3869 = vcvt.f32.s32 %v3868
    %v3870 = vcvt.f32.s32 %v3864
    %v3871 = vshll.u32 %v3870, 16
    %v3872 = vadd.s32 %v3871, %v3869
    %v3873 = vand.u32 %v2822, 65535
    %v3874 = vshra.s32 %v2822, 16
    %v3875 = vcvt.s32.f32 %v3873
    %v3876 = vcvt.s32.f32 %v3874
    %3877 = vmin.xlane.f32.xlu0 %v3876
    %v3878 = vpop.xlane.xlu0 %3877
    %vm3879 = vcmp.eq.f32.partialorder %v3876, %v3878
    %v3880 = vsel %vm3879, %v3875, inf
    %3881 = vmin.xlane.f32.xlu0 %v3880
    %v3882 = vpop.xlane.xlu0 %3881
    %v3883 = vcvt.f32.s32 %v3882
    %v3884 = vcvt.f32.s32 %v3878
    %v3885 = vshll.u32 %v3884, 16
    %v3886 = vadd.s32 %v3885, %v3883
    %v3887 = vand.u32 %v2823, 65535
    %v3888 = vshra.s32 %v2823, 16
    %v3889 = vcvt.s32.f32 %v3887
    %v3890 = vcvt.s32.f32 %v3888
    %3891 = vmin.xlane.f32.xlu0 %v3890
    %v3892 = vpop.xlane.xlu0 %3891
    %vm3893 = vcmp.eq.f32.partialorder %v3890, %v3892
    %v3894 = vsel %vm3893, %v3889, inf
    %3895 = vmin.xlane.f32.xlu0 %v3894
    %v3896 = vpop.xlane.xlu0 %3895
    %v3897 = vcvt.f32.s32 %v3896
    %v3898 = vcvt.f32.s32 %v3892
    %v3899 = vshll.u32 %v3898, 16
    %v3900 = vadd.s32 %v3899, %v3897
    %v3901 = vand.u32 %v2824, 65535
    %v3902 = vshra.s32 %v2824, 16
    %v3903 = vcvt.s32.f32 %v3901
    %v3904 = vcvt.s32.f32 %v3902
    %3905 = vmin.xlane.f32.xlu0 %v3904
    %v3906 = vpop.xlane.xlu0 %3905
    %vm3907 = vcmp.eq.f32.partialorder %v3904, %v3906
    %v3908 = vsel %vm3907, %v3903, inf
    %3909 = vmin.xlane.f32.xlu0 %v3908
    %v3910 = vpop.xlane.xlu0 %3909
    %v3911 = vcvt.f32.s32 %v3910
    %v3912 = vcvt.f32.s32 %v3906
    %v3913 = vshll.u32 %v3912, 16
    %v3914 = vadd.s32 %v3913, %v3911
    %v3915 = vand.u32 %v2825, 65535
    %v3916 = vshra.s32 %v2825, 16
    %v3917 = vcvt.s32.f32 %v3915
    %v3918 = vcvt.s32.f32 %v3916
    %3919 = vmin.xlane.f32.xlu0 %v3918
    %v3920 = vpop.xlane.xlu0 %3919
    %vm3921 = vcmp.eq.f32.partialorder %v3918, %v3920
    %v3922 = vsel %vm3921, %v3917, inf
    %3923 = vmin.xlane.f32.xlu0 %v3922
    %v3924 = vpop.xlane.xlu0 %3923
    %v3925 = vcvt.f32.s32 %v3924
    %v3926 = vcvt.f32.s32 %v3920
    %v3927 = vshll.u32 %v3926, 16
    %v3928 = vadd.s32 %v3927, %v3925
    %v3929 = vand.u32 %v2826, 65535
    %v3930 = vshra.s32 %v2826, 16
    %v3931 = vcvt.s32.f32 %v3929
    %v3932 = vcvt.s32.f32 %v3930
    %3933 = vmin.xlane.f32.xlu0 %v3932
    %v3934 = vpop.xlane.xlu0 %3933
    %vm3935 = vcmp.eq.f32.partialorder %v3932, %v3934
    %v3936 = vsel %vm3935, %v3931, inf
    %3937 = vmin.xlane.f32.xlu0 %v3936
    %v3938 = vpop.xlane.xlu0 %3937
    %v3939 = vcvt.f32.s32 %v3938
    %v3940 = vcvt.f32.s32 %v3934
    %v3941 = vshll.u32 %v3940, 16
    %v3942 = vadd.s32 %v3941, %v3939
    %v3943 = vand.u32 %v2827, 65535
    %v3944 = vshra.s32 %v2827, 16
    %v3945 = vcvt.s32.f32 %v3943
    %v3946 = vcvt.s32.f32 %v3944
    %3947 = vmin.xlane.f32.xlu0 %v3946
    %v3948 = vpop.xlane.xlu0 %3947
    %vm3949 = vcmp.eq.f32.partialorder %v3946, %v3948
    %v3950 = vsel %vm3949, %v3945, inf
    %3951 = vmin.xlane.f32.xlu0 %v3950
    %v3952 = vpop.xlane.xlu0 %3951
    %v3953 = vcvt.f32.s32 %v3952
    %v3954 = vcvt.f32.s32 %v3948
    %v3955 = vshll.u32 %v3954, 16
    %v3956 = vadd.s32 %v3955, %v3953
    %v3957 = vand.u32 %v2828, 65535
    %v3958 = vshra.s32 %v2828, 16
    %v3959 = vcvt.s32.f32 %v3957
    %v3960 = vcvt.s32.f32 %v3958
    %3961 = vmin.xlane.f32.xlu0 %v3960
    %v3962 = vpop.xlane.xlu0 %3961
    %vm3963 = vcmp.eq.f32.partialorder %v3960, %v3962
    %v3964 = vsel %vm3963, %v3959, inf
    %3965 = vmin.xlane.f32.xlu0 %v3964
    %v3966 = vpop.xlane.xlu0 %3965
    %v3967 = vcvt.f32.s32 %v3966
    %v3968 = vcvt.f32.s32 %v3962
    %v3969 = vshll.u32 %v3968, 16
    %v3970 = vadd.s32 %v3969, %v3967
    %v3971 = vand.u32 %v2829, 65535
    %v3972 = vshra.s32 %v2829, 16
    %v3973 = vcvt.s32.f32 %v3971
    %v3974 = vcvt.s32.f32 %v3972
    %3975 = vmin.xlane.f32.xlu0 %v3974
    %v3976 = vpop.xlane.xlu0 %3975
    %vm3977 = vcmp.eq.f32.partialorder %v3974, %v3976
    %v3978 = vsel %vm3977, %v3973, inf
    %3979 = vmin.xlane.f32.xlu0 %v3978
    %v3980 = vpop.xlane.xlu0 %3979
    %v3981 = vcvt.f32.s32 %v3980
    %v3982 = vcvt.f32.s32 %v3976
    %v3983 = vshll.u32 %v3982, 16
    %v3984 = vadd.s32 %v3983, %v3981
    %v3985 = vand.u32 %v2830, 65535
    %v3986 = vshra.s32 %v2830, 16
    %v3987 = vcvt.s32.f32 %v3985
    %v3988 = vcvt.s32.f32 %v3986
    %3989 = vmin.xlane.f32.xlu0 %v3988
    %v3990 = vpop.xlane.xlu0 %3989
    %vm3991 = vcmp.eq.f32.partialorder %v3988, %v3990
    %v3992 = vsel %vm3991, %v3987, inf
    %3993 = vmin.xlane.f32.xlu0 %v3992
    %v3994 = vpop.xlane.xlu0 %3993
    %v3995 = vcvt.f32.s32 %v3994
    %v3996 = vcvt.f32.s32 %v3990
    %v3997 = vshll.u32 %v3996, 16
    %v3998 = vadd.s32 %v3997, %v3995
    %v3999 = vand.u32 %v2831, 65535
    %v4000 = vshra.s32 %v2831, 16
    %v4001 = vcvt.s32.f32 %v3999
    %v4002 = vcvt.s32.f32 %v4000
    %4003 = vmin.xlane.f32.xlu0 %v4002
    %v4004 = vpop.xlane.xlu0 %4003
    %vm4005 = vcmp.eq.f32.partialorder %v4002, %v4004
    %v4006 = vsel %vm4005, %v4001, inf
    %4007 = vmin.xlane.f32.xlu0 %v4006
    %v4008 = vpop.xlane.xlu0 %4007
    %v4009 = vcvt.f32.s32 %v4008
    %v4010 = vcvt.f32.s32 %v4004
    %v4011 = vshll.u32 %v4010, 16
    %v4012 = vadd.s32 %v4011, %v4009
    %v4013 = vand.u32 %v2832, 65535
    %v4014 = vshra.s32 %v2832, 16
    %v4015 = vcvt.s32.f32 %v4013
    %v4016 = vcvt.s32.f32 %v4014
    %4017 = vmin.xlane.f32.xlu0 %v4016
    %v4018 = vpop.xlane.xlu0 %4017
    %vm4019 = vcmp.eq.f32.partialorder %v4016, %v4018
    %v4020 = vsel %vm4019, %v4015, inf
    %4021 = vmin.xlane.f32.xlu0 %v4020
    %v4022 = vpop.xlane.xlu0 %4021
    %v4023 = vcvt.f32.s32 %v4022
    %v4024 = vcvt.f32.s32 %v4018
    %v4025 = vshll.u32 %v4024, 16
    %v4026 = vadd.s32 %v4025, %v4023
    %v4027 = vand.u32 %v2833, 65535
    %v4028 = vshra.s32 %v2833, 16
    %v4029 = vcvt.s32.f32 %v4027
    %v4030 = vcvt.s32.f32 %v4028
    %4031 = vmin.xlane.f32.xlu0 %v4030
    %v4032 = vpop.xlane.xlu0 %4031
    %vm4033 = vcmp.eq.f32.partialorder %v4030, %v4032
    %v4034 = vsel %vm4033, %v4029, inf
    %4035 = vmin.xlane.f32.xlu0 %v4034
    %v4036 = vpop.xlane.xlu0 %4035
    %v4037 = vcvt.f32.s32 %v4036
    %v4038 = vcvt.f32.s32 %v4032
    %v4039 = vshll.u32 %v4038, 16
    %v4040 = vadd.s32 %v4039, %v4037
    %v4041 = vand.u32 %v2834, 65535
    %v4042 = vshra.s32 %v2834, 16
    %v4043 = vcvt.s32.f32 %v4041
    %v4044 = vcvt.s32.f32 %v4042
    %4045 = vmin.xlane.f32.xlu0 %v4044
    %v4046 = vpop.xlane.xlu0 %4045
    %vm4047 = vcmp.eq.f32.partialorder %v4044, %v4046
    %v4048 = vsel %vm4047, %v4043, inf
    %4049 = vmin.xlane.f32.xlu0 %v4048
    %v4050 = vpop.xlane.xlu0 %4049
    %v4051 = vcvt.f32.s32 %v4050
    %v4052 = vcvt.f32.s32 %v4046
    %v4053 = vshll.u32 %v4052, 16
    %v4054 = vadd.s32 %v4053, %v4051
    %v4055 = vand.u32 %v2835, 65535
    %v4056 = vshra.s32 %v2835, 16
    %v4057 = vcvt.s32.f32 %v4055
    %v4058 = vcvt.s32.f32 %v4056
    %4059 = vmin.xlane.f32.xlu0 %v4058
    %v4060 = vpop.xlane.xlu0 %4059
    %vm4061 = vcmp.eq.f32.partialorder %v4058, %v4060
    %v4062 = vsel %vm4061, %v4057, inf
    %4063 = vmin.xlane.f32.xlu0 %v4062
    %v4064 = vpop.xlane.xlu0 %4063
    %v4065 = vcvt.f32.s32 %v4064
    %v4066 = vcvt.f32.s32 %v4060
    %v4067 = vshll.u32 %v4066, 16
    %v4068 = vadd.s32 %v4067, %v4065
    %v4069 = vand.u32 %v2836, 65535
    %v4070 = vshra.s32 %v2836, 16
    %v4071 = vcvt.s32.f32 %v4069
    %v4072 = vcvt.s32.f32 %v4070
    %4073 = vmin.xlane.f32.xlu0 %v4072
    %v4074 = vpop.xlane.xlu0 %4073
    %vm4075 = vcmp.eq.f32.partialorder %v4072, %v4074
    %v4076 = vsel %vm4075, %v4071, inf
    %4077 = vmin.xlane.f32.xlu0 %v4076
    %v4078 = vpop.xlane.xlu0 %4077
    %v4079 = vcvt.f32.s32 %v4078
    %v4080 = vcvt.f32.s32 %v4074
    %v4081 = vshll.u32 %v4080, 16
    %v4082 = vadd.s32 %v4081, %v4079
    %v4083 = vand.u32 %v2837, 65535
    %v4084 = vshra.s32 %v2837, 16
    %v4085 = vcvt.s32.f32 %v4083
    %v4086 = vcvt.s32.f32 %v4084
    %4087 = vmin.xlane.f32.xlu0 %v4086
    %v4088 = vpop.xlane.xlu0 %4087
    %vm4089 = vcmp.eq.f32.partialorder %v4086, %v4088
    %v4090 = vsel %vm4089, %v4085, inf
    %4091 = vmin.xlane.f32.xlu0 %v4090
    %v4092 = vpop.xlane.xlu0 %4091
    %v4093 = vcvt.f32.s32 %v4092
    %v4094 = vcvt.f32.s32 %v4088
    %v4095 = vshll.u32 %v4094, 16
    %v4096 = vadd.s32 %v4095, %v4093
    %v4097 = vand.u32 %v2838, 65535
    %v4098 = vshra.s32 %v2838, 16
    %v4099 = vcvt.s32.f32 %v4097
    %v4100 = vcvt.s32.f32 %v4098
    %4101 = vmin.xlane.f32.xlu0 %v4100
    %v4102 = vpop.xlane.xlu0 %4101
    %vm4103 = vcmp.eq.f32.partialorder %v4100, %v4102
    %v4104 = vsel %vm4103, %v4099, inf
    %4105 = vmin.xlane.f32.xlu0 %v4104
    %v4106 = vpop.xlane.xlu0 %4105
    %v4107 = vcvt.f32.s32 %v4106
    %v4108 = vcvt.f32.s32 %v4102
    %v4109 = vshll.u32 %v4108, 16
    %v4110 = vadd.s32 %v4109, %v4107
    %v4111 = vand.u32 %v2839, 65535
    %v4112 = vshra.s32 %v2839, 16
    %v4113 = vcvt.s32.f32 %v4111
    %v4114 = vcvt.s32.f32 %v4112
    %4115 = vmin.xlane.f32.xlu0 %v4114
    %v4116 = vpop.xlane.xlu0 %4115
    %vm4117 = vcmp.eq.f32.partialorder %v4114, %v4116
    %v4118 = vsel %vm4117, %v4113, inf
    %4119 = vmin.xlane.f32.xlu0 %v4118
    %v4120 = vpop.xlane.xlu0 %4119
    %v4121 = vcvt.f32.s32 %v4120
    %v4122 = vcvt.f32.s32 %v4116
    %v4123 = vshll.u32 %v4122, 16
    %v4124 = vadd.s32 %v4123, %v4121
    %v4125 = vand.u32 %v2840, 65535
    %v4126 = vshra.s32 %v2840, 16
    %v4127 = vcvt.s32.f32 %v4125
    %v4128 = vcvt.s32.f32 %v4126
    %4129 = vmin.xlane.f32.xlu0 %v4128
    %v4130 = vpop.xlane.xlu0 %4129
    %vm4131 = vcmp.eq.f32.partialorder %v4128, %v4130
    %v4132 = vsel %vm4131, %v4127, inf
    %4133 = vmin.xlane.f32.xlu0 %v4132
    %v4134 = vpop.xlane.xlu0 %4133
    %v4135 = vcvt.f32.s32 %v4134
    %v4136 = vcvt.f32.s32 %v4130
    %v4137 = vshll.u32 %v4136, 16
    %v4138 = vadd.s32 %v4137, %v4135
    %v4139 = vand.u32 %v2841, 65535
    %v4140 = vshra.s32 %v2841, 16
    %v4141 = vcvt.s32.f32 %v4139
    %v4142 = vcvt.s32.f32 %v4140
    %4143 = vmin.xlane.f32.xlu0 %v4142
    %v4144 = vpop.xlane.xlu0 %4143
    %vm4145 = vcmp.eq.f32.partialorder %v4142, %v4144
    %v4146 = vsel %vm4145, %v4141, inf
    %4147 = vmin.xlane.f32.xlu0 %v4146
    %v4148 = vpop.xlane.xlu0 %4147
    %v4149 = vcvt.f32.s32 %v4148
    %v4150 = vcvt.f32.s32 %v4144
    %v4151 = vshll.u32 %v4150, 16
    %v4152 = vadd.s32 %v4151, %v4149
    %v4153 = vand.u32 %v2842, 65535
    %v4154 = vshra.s32 %v2842, 16
    %v4155 = vcvt.s32.f32 %v4153
    %v4156 = vcvt.s32.f32 %v4154
    %4157 = vmin.xlane.f32.xlu0 %v4156
    %v4158 = vpop.xlane.xlu0 %4157
    %vm4159 = vcmp.eq.f32.partialorder %v4156, %v4158
    %v4160 = vsel %vm4159, %v4155, inf
    %4161 = vmin.xlane.f32.xlu0 %v4160
    %v4162 = vpop.xlane.xlu0 %4161
    %v4163 = vcvt.f32.s32 %v4162
    %v4164 = vcvt.f32.s32 %v4158
    %v4165 = vshll.u32 %v4164, 16
    %v4166 = vadd.s32 %v4165, %v4163
    %v4167 = vand.u32 %v2843, 65535
    %v4168 = vshra.s32 %v2843, 16
    %v4169 = vcvt.s32.f32 %v4167
    %v4170 = vcvt.s32.f32 %v4168
    %4171 = vmin.xlane.f32.xlu0 %v4170
    %v4172 = vpop.xlane.xlu0 %4171
    %vm4173 = vcmp.eq.f32.partialorder %v4170, %v4172
    %v4174 = vsel %vm4173, %v4169, inf
    %4175 = vmin.xlane.f32.xlu0 %v4174
    %v4176 = vpop.xlane.xlu0 %4175
    %v4177 = vcvt.f32.s32 %v4176
    %v4178 = vcvt.f32.s32 %v4172
    %v4179 = vshll.u32 %v4178, 16
    %v4180 = vadd.s32 %v4179, %v4177
    %v4181 = vand.u32 %v2844, 65535
    %v4182 = vshra.s32 %v2844, 16
    %v4183 = vcvt.s32.f32 %v4181
    %v4184 = vcvt.s32.f32 %v4182
    %4185 = vmin.xlane.f32.xlu0 %v4184
    %v4186 = vpop.xlane.xlu0 %4185
    %vm4187 = vcmp.eq.f32.partialorder %v4184, %v4186
    %v4188 = vsel %vm4187, %v4183, inf
    %4189 = vmin.xlane.f32.xlu0 %v4188
    %v4190 = vpop.xlane.xlu0 %4189
    %v4191 = vcvt.f32.s32 %v4190
    %v4192 = vcvt.f32.s32 %v4186
    %v4193 = vshll.u32 %v4192, 16
    %v4194 = vadd.s32 %v4193, %v4191
    %v4195 = vand.u32 %v2845, 65535
    %v4196 = vshra.s32 %v2845, 16
    %v4197 = vcvt.s32.f32 %v4195
    %v4198 = vcvt.s32.f32 %v4196
    %4199 = vmin.xlane.f32.xlu0 %v4198
    %v4200 = vpop.xlane.xlu0 %4199
    %vm4201 = vcmp.eq.f32.partialorder %v4198, %v4200
    %v4202 = vsel %vm4201, %v4197, inf
    %4203 = vmin.xlane.f32.xlu0 %v4202
    %v4204 = vpop.xlane.xlu0 %4203
    %v4205 = vcvt.f32.s32 %v4204
    %v4206 = vcvt.f32.s32 %v4200
    %v4207 = vshll.u32 %v4206, 16
    %v4208 = vadd.s32 %v4207, %v4205
    %v4209 = vand.u32 %v2846, 65535
    %v4210 = vshra.s32 %v2846, 16
    %v4211 = vcvt.s32.f32 %v4209
    %v4212 = vcvt.s32.f32 %v4210
    %4213 = vmin.xlane.f32.xlu0 %v4212
    %v4214 = vpop.xlane.xlu0 %4213
    %vm4215 = vcmp.eq.f32.partialorder %v4212, %v4214
    %v4216 = vsel %vm4215, %v4211, inf
    %4217 = vmin.xlane.f32.xlu0 %v4216
    %v4218 = vpop.xlane.xlu0 %4217
    %v4219 = vcvt.f32.s32 %v4218
    %v4220 = vcvt.f32.s32 %v4214
    %v4221 = vshll.u32 %v4220, 16
    %v4222 = vadd.s32 %v4221, %v4219
    %v4223 = vand.u32 %v2847, 65535
    %v4224 = vshra.s32 %v2847, 16
    %v4225 = vcvt.s32.f32 %v4223
    %v4226 = vcvt.s32.f32 %v4224
    %4227 = vmin.xlane.f32.xlu0 %v4226
    %v4228 = vpop.xlane.xlu0 %4227
    %vm4229 = vcmp.eq.f32.partialorder %v4226, %v4228
    %v4230 = vsel %vm4229, %v4225, inf
    %4231 = vmin.xlane.f32.xlu0 %v4230
    %v4232 = vpop.xlane.xlu0 %4231
    %v4233 = vcvt.f32.s32 %v4232
    %v4234 = vcvt.f32.s32 %v4228
    %v4235 = vshll.u32 %v4234, 16
    %v4236 = vadd.s32 %v4235, %v4233
    %v4237 = vand.u32 %v2848, 65535
    %v4238 = vshra.s32 %v2848, 16
    %v4239 = vcvt.s32.f32 %v4237
    %v4240 = vcvt.s32.f32 %v4238
    %4241 = vmin.xlane.f32.xlu0 %v4240
    %v4242 = vpop.xlane.xlu0 %4241
    %vm4243 = vcmp.eq.f32.partialorder %v4240, %v4242
    %v4244 = vsel %vm4243, %v4239, inf
    %4245 = vmin.xlane.f32.xlu0 %v4244
    %v4246 = vpop.xlane.xlu0 %4245
    %v4247 = vcvt.f32.s32 %v4246
    %v4248 = vcvt.f32.s32 %v4242
    %v4249 = vshll.u32 %v4248, 16
    %v4250 = vadd.s32 %v4249, %v4247
    %v4251 = vand.u32 %v2849, 65535
    %v4252 = vshra.s32 %v2849, 16
    %v4253 = vcvt.s32.f32 %v4251
    %v4254 = vcvt.s32.f32 %v4252
    %4255 = vmin.xlane.f32.xlu0 %v4254
    %v4256 = vpop.xlane.xlu0 %4255
    %vm4257 = vcmp.eq.f32.partialorder %v4254, %v4256
    %v4258 = vsel %vm4257, %v4253, inf
    %4259 = vmin.xlane.f32.xlu0 %v4258
    %v4260 = vpop.xlane.xlu0 %4259
    %v4261 = vcvt.f32.s32 %v4260
    %v4262 = vcvt.f32.s32 %v4256
    %v4263 = vshll.u32 %v4262, 16
    %v4264 = vadd.s32 %v4263, %v4261
    %v4265 = vand.u32 %v2850, 65535
    %v4266 = vshra.s32 %v2850, 16
    %v4267 = vcvt.s32.f32 %v4265
    %v4268 = vcvt.s32.f32 %v4266
    %4269 = vmin.xlane.f32.xlu0 %v4268
    %v4270 = vpop.xlane.xlu0 %4269
    %vm4271 = vcmp.eq.f32.partialorder %v4268, %v4270
    %v4272 = vsel %vm4271, %v4267, inf
    %4273 = vmin.xlane.f32.xlu0 %v4272
    %v4274 = vpop.xlane.xlu0 %4273
    %v4275 = vcvt.f32.s32 %v4274
    %v4276 = vcvt.f32.s32 %v4270
    %v4277 = vshll.u32 %v4276, 16
    %v4278 = vadd.s32 %v4277, %v4275
    %v4279 = vand.u32 %v2851, 65535
    %v4280 = vshra.s32 %v2851, 16
    %v4281 = vcvt.s32.f32 %v4279
    %v4282 = vcvt.s32.f32 %v4280
    %4283 = vmin.xlane.f32.xlu0 %v4282
    %v4284 = vpop.xlane.xlu0 %4283
    %vm4285 = vcmp.eq.f32.partialorder %v4282, %v4284
    %v4286 = vsel %vm4285, %v4281, inf
    %4287 = vmin.xlane.f32.xlu0 %v4286
    %v4288 = vpop.xlane.xlu0 %4287
    %v4289 = vcvt.f32.s32 %v4288
    %v4290 = vcvt.f32.s32 %v4284
    %v4291 = vshll.u32 %v4290, 16
    %v4292 = vadd.s32 %v4291, %v4289
    %v4293 = vand.u32 %v2852, 65535
    %v4294 = vshra.s32 %v2852, 16
    %v4295 = vcvt.s32.f32 %v4293
    %v4296 = vcvt.s32.f32 %v4294
    %4297 = vmin.xlane.f32.xlu0 %v4296
    %v4298 = vpop.xlane.xlu0 %4297
    %vm4299 = vcmp.eq.f32.partialorder %v4296, %v4298
    %v4300 = vsel %vm4299, %v4295, inf
    %4301 = vmin.xlane.f32.xlu0 %v4300
    %v4302 = vpop.xlane.xlu0 %4301
    %v4303 = vcvt.f32.s32 %v4302
    %v4304 = vcvt.f32.s32 %v4298
    %v4305 = vshll.u32 %v4304, 16
    %v4306 = vadd.s32 %v4305, %v4303
    %v4307 = vand.u32 %v2853, 65535
    %v4308 = vshra.s32 %v2853, 16
    %v4309 = vcvt.s32.f32 %v4307
    %v4310 = vcvt.s32.f32 %v4308
    %4311 = vmin.xlane.f32.xlu0 %v4310
    %v4312 = vpop.xlane.xlu0 %4311
    %vm4313 = vcmp.eq.f32.partialorder %v4310, %v4312
    %v4314 = vsel %vm4313, %v4309, inf
    %4315 = vmin.xlane.f32.xlu0 %v4314
    %v4316 = vpop.xlane.xlu0 %4315
    %v4317 = vcvt.f32.s32 %v4316
    %v4318 = vcvt.f32.s32 %v4312
    %v4319 = vshll.u32 %v4318, 16
    %v4320 = vadd.s32 %v4319, %v4317
    %v4321 = vand.u32 %v2854, 65535
    %v4322 = vshra.s32 %v2854, 16
    %v4323 = vcvt.s32.f32 %v4321
    %v4324 = vcvt.s32.f32 %v4322
    %4325 = vmin.xlane.f32.xlu0 %v4324
    %v4326 = vpop.xlane.xlu0 %4325
    %vm4327 = vcmp.eq.f32.partialorder %v4324, %v4326
    %v4328 = vsel %vm4327, %v4323, inf
    %4329 = vmin.xlane.f32.xlu0 %v4328
    %v4330 = vpop.xlane.xlu0 %4329
    %v4331 = vcvt.f32.s32 %v4330
    %v4332 = vcvt.f32.s32 %v4326
    %v4333 = vshll.u32 %v4332, 16
    %v4334 = vadd.s32 %v4333, %v4331
    %v4335 = vand.u32 %v2855, 65535
    %v4336 = vshra.s32 %v2855, 16
    %v4337 = vcvt.s32.f32 %v4335
    %v4338 = vcvt.s32.f32 %v4336
    %4339 = vmin.xlane.f32.xlu0 %v4338
    %v4340 = vpop.xlane.xlu0 %4339
    %vm4341 = vcmp.eq.f32.partialorder %v4338, %v4340
    %v4342 = vsel %vm4341, %v4337, inf
    %4343 = vmin.xlane.f32.xlu0 %v4342
    %v4344 = vpop.xlane.xlu0 %4343
    %v4345 = vcvt.f32.s32 %v4344
    %v4346 = vcvt.f32.s32 %v4340
    %v4347 = vshll.u32 %v4346, 16
    %v4348 = vadd.s32 %v4347, %v4345
    %v4349 = vand.u32 %v2856, 65535
    %v4350 = vshra.s32 %v2856, 16
    %v4351 = vcvt.s32.f32 %v4349
    %v4352 = vcvt.s32.f32 %v4350
    %4353 = vmin.xlane.f32.xlu0 %v4352
    %v4354 = vpop.xlane.xlu0 %4353
    %vm4355 = vcmp.eq.f32.partialorder %v4352, %v4354
    %v4356 = vsel %vm4355, %v4351, inf
    %4357 = vmin.xlane.f32.xlu0 %v4356
    %v4358 = vpop.xlane.xlu0 %4357
    %v4359 = vcvt.f32.s32 %v4358
    %v4360 = vcvt.f32.s32 %v4354
    %v4361 = vshll.u32 %v4360, 16
    %v4362 = vadd.s32 %v4361, %v4359
    %v4363 = vand.u32 %v2857, 65535
    %v4364 = vshra.s32 %v2857, 16
    %v4365 = vcvt.s32.f32 %v4363
    %v4366 = vcvt.s32.f32 %v4364
    %4367 = vmin.xlane.f32.xlu0 %v4366
    %v4368 = vpop.xlane.xlu0 %4367
    %vm4369 = vcmp.eq.f32.partialorder %v4366, %v4368
    %v4370 = vsel %vm4369, %v4365, inf
    %4371 = vmin.xlane.f32.xlu0 %v4370
    %v4372 = vpop.xlane.xlu0 %4371
    %v4373 = vcvt.f32.s32 %v4372
    %v4374 = vcvt.f32.s32 %v4368
    %v4375 = vshll.u32 %v4374, 16
    %v4376 = vadd.s32 %v4375, %v4373
    %v4377 = vand.u32 %v2858, 65535
    %v4378 = vshra.s32 %v2858, 16
    %v4379 = vcvt.s32.f32 %v4377
    %v4380 = vcvt.s32.f32 %v4378
    %4381 = vmin.xlane.f32.xlu0 %v4380
    %v4382 = vpop.xlane.xlu0 %4381
    %vm4383 = vcmp.eq.f32.partialorder %v4380, %v4382
    %v4384 = vsel %vm4383, %v4379, inf
    %4385 = vmin.xlane.f32.xlu0 %v4384
    %v4386 = vpop.xlane.xlu0 %4385
    %v4387 = vcvt.f32.s32 %v4386
    %v4388 = vcvt.f32.s32 %v4382
    %v4389 = vshll.u32 %v4388, 16
    %v4390 = vadd.s32 %v4389, %v4387
    %v4391 = vand.u32 %v2859, 65535
    %v4392 = vshra.s32 %v2859, 16
    %v4393 = vcvt.s32.f32 %v4391
    %v4394 = vcvt.s32.f32 %v4392
    %4395 = vmin.xlane.f32.xlu0 %v4394
    %v4396 = vpop.xlane.xlu0 %4395
    %vm4397 = vcmp.eq.f32.partialorder %v4394, %v4396
    %v4398 = vsel %vm4397, %v4393, inf
    %4399 = vmin.xlane.f32.xlu0 %v4398
    %v4400 = vpop.xlane.xlu0 %4399
    %v4401 = vcvt.f32.s32 %v4400
    %v4402 = vcvt.f32.s32 %v4396
    %v4403 = vshll.u32 %v4402, 16
    %v4404 = vadd.s32 %v4403, %v4401
    %v4405 = vand.u32 %v2860, 65535
    %v4406 = vshra.s32 %v2860, 16
    %v4407 = vcvt.s32.f32 %v4405
    %v4408 = vcvt.s32.f32 %v4406
    %4409 = vmin.xlane.f32.xlu0 %v4408
    %v4410 = vpop.xlane.xlu0 %4409
    %vm4411 = vcmp.eq.f32.partialorder %v4408, %v4410
    %v4412 = vsel %vm4411, %v4407, inf
    %4413 = vmin.xlane.f32.xlu0 %v4412
    %v4414 = vpop.xlane.xlu0 %4413
    %v4415 = vcvt.f32.s32 %v4414
    %v4416 = vcvt.f32.s32 %v4410
    %v4417 = vshll.u32 %v4416, 16
    %v4418 = vadd.s32 %v4417, %v4415
    %v4419 = vand.u32 %v2861, 65535
    %v4420 = vshra.s32 %v2861, 16
    %v4421 = vcvt.s32.f32 %v4419
    %v4422 = vcvt.s32.f32 %v4420
    %4423 = vmin.xlane.f32.xlu0 %v4422
    %v4424 = vpop.xlane.xlu0 %4423
    %vm4425 = vcmp.eq.f32.partialorder %v4422, %v4424
    %v4426 = vsel %vm4425, %v4421, inf
    %4427 = vmin.xlane.f32.xlu0 %v4426
    %v4428 = vpop.xlane.xlu0 %4427
    %v4429 = vcvt.f32.s32 %v4428
    %v4430 = vcvt.f32.s32 %v4424
    %v4431 = vshll.u32 %v4430, 16
    %v4432 = vadd.s32 %v4431, %v4429
    %v4433 = vand.u32 %v2862, 65535
    %v4434 = vshra.s32 %v2862, 16
    %v4435 = vcvt.s32.f32 %v4433
    %v4436 = vcvt.s32.f32 %v4434
    %4437 = vmin.xlane.f32.xlu0 %v4436
    %v4438 = vpop.xlane.xlu0 %4437
    %vm4439 = vcmp.eq.f32.partialorder %v4436, %v4438
    %v4440 = vsel %vm4439, %v4435, inf
    %4441 = vmin.xlane.f32.xlu0 %v4440
    %v4442 = vpop.xlane.xlu0 %4441
    %v4443 = vcvt.f32.s32 %v4442
    %v4444 = vcvt.f32.s32 %v4438
    %v4445 = vshll.u32 %v4444, 16
    %v4446 = vadd.s32 %v4445, %v4443
    %v4447 = vand.u32 %v2863, 65535
    %v4448 = vshra.s32 %v2863, 16
    %v4449 = vcvt.s32.f32 %v4447
    %v4450 = vcvt.s32.f32 %v4448
    %4451 = vmin.xlane.f32.xlu0 %v4450
    %v4452 = vpop.xlane.xlu0 %4451
    %vm4453 = vcmp.eq.f32.partialorder %v4450, %v4452
    %v4454 = vsel %vm4453, %v4449, inf
    %4455 = vmin.xlane.f32.xlu0 %v4454
    %v4456 = vpop.xlane.xlu0 %4455
    %v4457 = vcvt.f32.s32 %v4456
    %v4458 = vcvt.f32.s32 %v4452
    %v4459 = vshll.u32 %v4458, 16
    %v4460 = vadd.s32 %v4459, %v4457
    %v4461 = vand.u32 %v2864, 65535
    %v4462 = vshra.s32 %v2864, 16
    %v4463 = vcvt.s32.f32 %v4461
    %v4464 = vcvt.s32.f32 %v4462
    %4465 = vmin.xlane.f32.xlu0 %v4464
    %v4466 = vpop.xlane.xlu0 %4465
    %vm4467 = vcmp.eq.f32.partialorder %v4464, %v4466
    %v4468 = vsel %vm4467, %v4463, inf
    %4469 = vmin.xlane.f32.xlu0 %v4468
    %v4470 = vpop.xlane.xlu0 %4469
    %v4471 = vcvt.f32.s32 %v4470
    %v4472 = vcvt.f32.s32 %v4466
    %v4473 = vshll.u32 %v4472, 16
    %v4474 = vadd.s32 %v4473, %v4471
    %v4475 = vand.u32 %v2865, 65535
    %v4476 = vshra.s32 %v2865, 16
    %v4477 = vcvt.s32.f32 %v4475
    %v4478 = vcvt.s32.f32 %v4476
    %4479 = vmin.xlane.f32.xlu0 %v4478
    %v4480 = vpop.xlane.xlu0 %4479
    %vm4481 = vcmp.eq.f32.partialorder %v4478, %v4480
    %v4482 = vsel %vm4481, %v4477, inf
    %4483 = vmin.xlane.f32.xlu0 %v4482
    %v4484 = vpop.xlane.xlu0 %4483
    %v4485 = vcvt.f32.s32 %v4484
    %v4486 = vcvt.f32.s32 %v4480
    %v4487 = vshll.u32 %v4486, 16
    %v4488 = vadd.s32 %v4487, %v4485
    %v4489 = vand.u32 %v2866, 65535
    %v4490 = vshra.s32 %v2866, 16
    %v4491 = vcvt.s32.f32 %v4489
    %v4492 = vcvt.s32.f32 %v4490
    %4493 = vmin.xlane.f32.xlu0 %v4492
    %v4494 = vpop.xlane.xlu0 %4493
    %vm4495 = vcmp.eq.f32.partialorder %v4492, %v4494
    %v4496 = vsel %vm4495, %v4491, inf
    %4497 = vmin.xlane.f32.xlu0 %v4496
    %v4498 = vpop.xlane.xlu0 %4497
    %v4499 = vcvt.f32.s32 %v4498
    %v4500 = vcvt.f32.s32 %v4494
    %v4501 = vshll.u32 %v4500, 16
    %v4502 = vadd.s32 %v4501, %v4499
    %v4503 = vand.u32 %v2867, 65535
    %v4504 = vshra.s32 %v2867, 16
    %v4505 = vcvt.s32.f32 %v4503
    %v4506 = vcvt.s32.f32 %v4504
    %4507 = vmin.xlane.f32.xlu0 %v4506
    %v4508 = vpop.xlane.xlu0 %4507
    %vm4509 = vcmp.eq.f32.partialorder %v4506, %v4508
    %v4510 = vsel %vm4509, %v4505, inf
    %4511 = vmin.xlane.f32.xlu0 %v4510
    %v4512 = vpop.xlane.xlu0 %4511
    %v4513 = vcvt.f32.s32 %v4512
    %v4514 = vcvt.f32.s32 %v4508
    %v4515 = vshll.u32 %v4514, 16
    %v4516 = vadd.s32 %v4515, %v4513
    %v4517 = vand.u32 %v2868, 65535
    %v4518 = vshra.s32 %v2868, 16
    %v4519 = vcvt.s32.f32 %v4517
    %v4520 = vcvt.s32.f32 %v4518
    %4521 = vmin.xlane.f32.xlu0 %v4520
    %v4522 = vpop.xlane.xlu0 %4521
    %vm4523 = vcmp.eq.f32.partialorder %v4520, %v4522
    %v4524 = vsel %vm4523, %v4519, inf
    %4525 = vmin.xlane.f32.xlu0 %v4524
    %v4526 = vpop.xlane.xlu0 %4525
    %v4527 = vcvt.f32.s32 %v4526
    %v4528 = vcvt.f32.s32 %v4522
    %v4529 = vshll.u32 %v4528, 16
    %v4530 = vadd.s32 %v4529, %v4527
    %v4531 = vand.u32 %v2869, 65535
    %v4532 = vshra.s32 %v2869, 16
    %v4533 = vcvt.s32.f32 %v4531
    %v4534 = vcvt.s32.f32 %v4532
    %4535 = vmin.xlane.f32.xlu0 %v4534
    %v4536 = vpop.xlane.xlu0 %4535
    %vm4537 = vcmp.eq.f32.partialorder %v4534, %v4536
    %v4538 = vsel %vm4537, %v4533, inf
    %4539 = vmin.xlane.f32.xlu0 %v4538
    %v4540 = vpop.xlane.xlu0 %4539
    %v4541 = vcvt.f32.s32 %v4540
    %v4542 = vcvt.f32.s32 %v4536
    %v4543 = vshll.u32 %v4542, 16
    %v4544 = vadd.s32 %v4543, %v4541
    %v4545 = vand.u32 %v2870, 65535
    %v4546 = vshra.s32 %v2870, 16
    %v4547 = vcvt.s32.f32 %v4545
    %v4548 = vcvt.s32.f32 %v4546
    %4549 = vmin.xlane.f32.xlu0 %v4548
    %v4550 = vpop.xlane.xlu0 %4549
    %vm4551 = vcmp.eq.f32.partialorder %v4548, %v4550
    %v4552 = vsel %vm4551, %v4547, inf
    %4553 = vmin.xlane.f32.xlu0 %v4552
    %v4554 = vpop.xlane.xlu0 %4553
    %v4555 = vcvt.f32.s32 %v4554
    %v4556 = vcvt.f32.s32 %v4550
    %v4557 = vshll.u32 %v4556, 16
    %v4558 = vadd.s32 %v4557, %v4555
    %v4559 = vand.u32 %v2871, 65535
    %v4560 = vshra.s32 %v2871, 16
    %v4561 = vcvt.s32.f32 %v4559
    %v4562 = vcvt.s32.f32 %v4560
    %4563 = vmin.xlane.f32.xlu0 %v4562
    %v4564 = vpop.xlane.xlu0 %4563
    %vm4565 = vcmp.eq.f32.partialorder %v4562, %v4564
    %v4566 = vsel %vm4565, %v4561, inf
    %4567 = vmin.xlane.f32.xlu0 %v4566
    %v4568 = vpop.xlane.xlu0 %4567
    %v4569 = vcvt.f32.s32 %v4568
    %v4570 = vcvt.f32.s32 %v4564
    %v4571 = vshll.u32 %v4570, 16
    %v4572 = vadd.s32 %v4571, %v4569
    %v4573 = vand.u32 %v2872, 65535
    %v4574 = vshra.s32 %v2872, 16
    %v4575 = vcvt.s32.f32 %v4573
    %v4576 = vcvt.s32.f32 %v4574
    %4577 = vmin.xlane.f32.xlu0 %v4576
    %v4578 = vpop.xlane.xlu0 %4577
    %vm4579 = vcmp.eq.f32.partialorder %v4576, %v4578
    %v4580 = vsel %vm4579, %v4575, inf
    %4581 = vmin.xlane.f32.xlu0 %v4580
    %v4582 = vpop.xlane.xlu0 %4581
    %v4583 = vcvt.f32.s32 %v4582
    %v4584 = vcvt.f32.s32 %v4578
    %v4585 = vshll.u32 %v4584, 16
    %v4586 = vadd.s32 %v4585, %v4583
    %v4587 = vand.u32 %v2873, 65535
    %v4588 = vshra.s32 %v2873, 16
    %v4589 = vcvt.s32.f32 %v4587
    %v4590 = vcvt.s32.f32 %v4588
    %4591 = vmin.xlane.f32.xlu0 %v4590
    %v4592 = vpop.xlane.xlu0 %4591
    %vm4593 = vcmp.eq.f32.partialorder %v4590, %v4592
    %v4594 = vsel %vm4593, %v4589, inf
    %4595 = vmin.xlane.f32.xlu0 %v4594
    %v4596 = vpop.xlane.xlu0 %4595
    %v4597 = vcvt.f32.s32 %v4596
    %v4598 = vcvt.f32.s32 %v4592
    %v4599 = vshll.u32 %v4598, 16
    %v4600 = vadd.s32 %v4599, %v4597
    %v4601 = vand.u32 %v2874, 65535
    %v4602 = vshra.s32 %v2874, 16
    %v4603 = vcvt.s32.f32 %v4601
    %v4604 = vcvt.s32.f32 %v4602
    %4605 = vmin.xlane.f32.xlu0 %v4604
    %v4606 = vpop.xlane.xlu0 %4605
    %vm4607 = vcmp.eq.f32.partialorder %v4604, %v4606
    %v4608 = vsel %vm4607, %v4603, inf
    %4609 = vmin.xlane.f32.xlu0 %v4608
    %v4610 = vpop.xlane.xlu0 %4609
    %v4611 = vcvt.f32.s32 %v4610
    %v4612 = vcvt.f32.s32 %v4606
    %v4613 = vshll.u32 %v4612, 16
    %v4614 = vadd.s32 %v4613, %v4611
    %v4615 = vand.u32 %v2875, 65535
    %v4616 = vshra.s32 %v2875, 16
    %v4617 = vcvt.s32.f32 %v4615
    %v4618 = vcvt.s32.f32 %v4616
    %4619 = vmin.xlane.f32.xlu0 %v4618
    %v4620 = vpop.xlane.xlu0 %4619
    %vm4621 = vcmp.eq.f32.partialorder %v4618, %v4620
    %v4622 = vsel %vm4621, %v4617, inf
    %4623 = vmin.xlane.f32.xlu0 %v4622
    %v4624 = vpop.xlane.xlu0 %4623
    %v4625 = vcvt.f32.s32 %v4624
    %v4626 = vcvt.f32.s32 %v4620
    %v4627 = vshll.u32 %v4626, 16
    %v4628 = vadd.s32 %v4627, %v4625
    %v4629 = vand.u32 %v2876, 65535
    %v4630 = vshra.s32 %v2876, 16
    %v4631 = vcvt.s32.f32 %v4629
    %v4632 = vcvt.s32.f32 %v4630
    %4633 = vmin.xlane.f32.xlu0 %v4632
    %v4634 = vpop.xlane.xlu0 %4633
    %vm4635 = vcmp.eq.f32.partialorder %v4632, %v4634
    %v4636 = vsel %vm4635, %v4631, inf
    %4637 = vmin.xlane.f32.xlu0 %v4636
    %v4638 = vpop.xlane.xlu0 %4637
    %v4639 = vcvt.f32.s32 %v4638
    %v4640 = vcvt.f32.s32 %v4634
    %v4641 = vshll.u32 %v4640, 16
    %v4642 = vadd.s32 %v4641, %v4639
    %v4643 = vand.u32 %v2877, 65535
    %v4644 = vshra.s32 %v2877, 16
    %v4645 = vcvt.s32.f32 %v4643
    %v4646 = vcvt.s32.f32 %v4644
    %4647 = vmin.xlane.f32.xlu0 %v4646
    %v4648 = vpop.xlane.xlu0 %4647
    %vm4649 = vcmp.eq.f32.partialorder %v4646, %v4648
    %v4650 = vsel %vm4649, %v4645, inf
    %4651 = vmin.xlane.f32.xlu0 %v4650
    %v4652 = vpop.xlane.xlu0 %4651
    %v4653 = vcvt.f32.s32 %v4652
    %v4654 = vcvt.f32.s32 %v4648
    %v4655 = vshll.u32 %v4654, 16
    %v4656 = vadd.s32 %v4655, %v4653
    %v4657 = vand.u32 %v2878, 65535
    %v4658 = vshra.s32 %v2878, 16
    %v4659 = vcvt.s32.f32 %v4657
    %v4660 = vcvt.s32.f32 %v4658
    %4661 = vmin.xlane.f32.xlu0 %v4660
    %v4662 = vpop.xlane.xlu0 %4661
    %vm4663 = vcmp.eq.f32.partialorder %v4660, %v4662
    %v4664 = vsel %vm4663, %v4659, inf
    %4665 = vmin.xlane.f32.xlu0 %v4664
    %v4666 = vpop.xlane.xlu0 %4665
    %v4667 = vcvt.f32.s32 %v4666
    %v4668 = vcvt.f32.s32 %v4662
    %v4669 = vshll.u32 %v4668, 16
    %v4670 = vadd.s32 %v4669, %v4667
    %vm4671 = vcmp.eq.s32.totalorder %v2107, %v2892
    %vm4672 = vcmp.eq.s32.totalorder %v2107, %v2906
    %vm4673 = vcmp.eq.s32.totalorder %v2107, %v2920
    %vm4674 = vcmp.eq.s32.totalorder %v2107, %v2934
    %vm4675 = vcmp.eq.s32.totalorder %v2107, %v2948
    %vm4676 = vcmp.eq.s32.totalorder %v2107, %v2962
    %vm4677 = vcmp.eq.s32.totalorder %v2107, %v2976
    %vm4678 = vcmp.eq.s32.totalorder %v2107, %v2990
    %vm4679 = vcmp.eq.s32.totalorder %v2107, %v3004
    %vm4680 = vcmp.eq.s32.totalorder %v2107, %v3018
    %vm4681 = vcmp.eq.s32.totalorder %v2107, %v3032
    %vm4682 = vcmp.eq.s32.totalorder %v2107, %v3046
    %vm4683 = vcmp.eq.s32.totalorder %v2107, %v3060
    %vm4684 = vcmp.eq.s32.totalorder %v2107, %v3074
    %vm4685 = vcmp.eq.s32.totalorder %v2107, %v3088
    %vm4686 = vcmp.eq.s32.totalorder %v2107, %v3102
    %vm4687 = vcmp.eq.s32.totalorder %v2107, %v3116
    %vm4688 = vcmp.eq.s32.totalorder %v2107, %v3130
    %vm4689 = vcmp.eq.s32.totalorder %v2107, %v3144
    %vm4690 = vcmp.eq.s32.totalorder %v2107, %v3158
    %vm4691 = vcmp.eq.s32.totalorder %v2107, %v3172
    %vm4692 = vcmp.eq.s32.totalorder %v2107, %v3186
    %vm4693 = vcmp.eq.s32.totalorder %v2107, %v3200
    %vm4694 = vcmp.eq.s32.totalorder %v2107, %v3214
    %vm4695 = vcmp.eq.s32.totalorder %v2107, %v3228
    %vm4696 = vcmp.eq.s32.totalorder %v2107, %v3242
    %vm4697 = vcmp.eq.s32.totalorder %v2107, %v3256
    %vm4698 = vcmp.eq.s32.totalorder %v2107, %v3270
    %vm4699 = vcmp.eq.s32.totalorder %v2107, %v3284
    %vm4700 = vcmp.eq.s32.totalorder %v2107, %v3298
    %vm4701 = vcmp.eq.s32.totalorder %v2107, %v3312
    %vm4702 = vcmp.eq.s32.totalorder %v2107, %v3326
    %vm4703 = vcmp.eq.s32.totalorder %v2107, %v3340
    %vm4704 = vcmp.eq.s32.totalorder %v2107, %v3354
    %vm4705 = vcmp.eq.s32.totalorder %v2107, %v3368
    %vm4706 = vcmp.eq.s32.totalorder %v2107, %v3382
    %vm4707 = vcmp.eq.s32.totalorder %v2107, %v3396
    %vm4708 = vcmp.eq.s32.totalorder %v2107, %v3410
    %vm4709 = vcmp.eq.s32.totalorder %v2107, %v3424
    %vm4710 = vcmp.eq.s32.totalorder %v2107, %v3438
    %vm4711 = vcmp.eq.s32.totalorder %v2107, %v3452
    %vm4712 = vcmp.eq.s32.totalorder %v2107, %v3466
    %vm4713 = vcmp.eq.s32.totalorder %v2107, %v3480
    %vm4714 = vcmp.eq.s32.totalorder %v2107, %v3494
    %vm4715 = vcmp.eq.s32.totalorder %v2107, %v3508
    %vm4716 = vcmp.eq.s32.totalorder %v2107, %v3522
    %vm4717 = vcmp.eq.s32.totalorder %v2107, %v3536
    %vm4718 = vcmp.eq.s32.totalorder %v2107, %v3550
    %vm4719 = vcmp.eq.s32.totalorder %v2107, %v3564
    %vm4720 = vcmp.eq.s32.totalorder %v2107, %v3578
    %vm4721 = vcmp.eq.s32.totalorder %v2107, %v3592
    %vm4722 = vcmp.eq.s32.totalorder %v2107, %v3606
    %vm4723 = vcmp.eq.s32.totalorder %v2107, %v3620
    %vm4724 = vcmp.eq.s32.totalorder %v2107, %v3634
    %vm4725 = vcmp.eq.s32.totalorder %v2107, %v3648
    %vm4726 = vcmp.eq.s32.totalorder %v2107, %v3662
    %vm4727 = vcmp.eq.s32.totalorder %v2107, %v3676
    %vm4728 = vcmp.eq.s32.totalorder %v2107, %v3690
    %vm4729 = vcmp.eq.s32.totalorder %v2107, %v3704
    %vm4730 = vcmp.eq.s32.totalorder %v2107, %v3718
    %vm4731 = vcmp.eq.s32.totalorder %v2107, %v3732
    %vm4732 = vcmp.eq.s32.totalorder %v2107, %v3746
    %vm4733 = vcmp.eq.s32.totalorder %v2107, %v3760
    %vm4734 = vcmp.eq.s32.totalorder %v2107, %v3774
    %vm4735 = vcmp.eq.s32.totalorder %v2107, %v3788
    %vm4736 = vcmp.eq.s32.totalorder %v2107, %v3802
    %vm4737 = vcmp.eq.s32.totalorder %v2107, %v3816
    %vm4738 = vcmp.eq.s32.totalorder %v2107, %v3830
    %vm4739 = vcmp.eq.s32.totalorder %v2107, %v3844
    %vm4740 = vcmp.eq.s32.totalorder %v2107, %v3858
    %vm4741 = vcmp.eq.s32.totalorder %v2107, %v3872
    %vm4742 = vcmp.eq.s32.totalorder %v2107, %v3886
    %vm4743 = vcmp.eq.s32.totalorder %v2107, %v3900
    %vm4744 = vcmp.eq.s32.totalorder %v2107, %v3914
    %vm4745 = vcmp.eq.s32.totalorder %v2107, %v3928
    %vm4746 = vcmp.eq.s32.totalorder %v2107, %v3942
    %vm4747 = vcmp.eq.s32.totalorder %v2107, %v3956
    %vm4748 = vcmp.eq.s32.totalorder %v2107, %v3970
    %vm4749 = vcmp.eq.s32.totalorder %v2107, %v3984
    %vm4750 = vcmp.eq.s32.totalorder %v2107, %v3998
    %vm4751 = vcmp.eq.s32.totalorder %v2107, %v4012
    %vm4752 = vcmp.eq.s32.totalorder %v2107, %v4026
    %vm4753 = vcmp.eq.s32.totalorder %v2107, %v4040
    %vm4754 = vcmp.eq.s32.totalorder %v2107, %v4054
    %vm4755 = vcmp.eq.s32.totalorder %v2107, %v4068
    %vm4756 = vcmp.eq.s32.totalorder %v2107, %v4082
    %vm4757 = vcmp.eq.s32.totalorder %v2107, %v4096
    %vm4758 = vcmp.eq.s32.totalorder %v2107, %v4110
    %vm4759 = vcmp.eq.s32.totalorder %v2107, %v4124
    %vm4760 = vcmp.eq.s32.totalorder %v2107, %v4138
    %vm4761 = vcmp.eq.s32.totalorder %v2107, %v4152
    %vm4762 = vcmp.eq.s32.totalorder %v2107, %v4166
    %vm4763 = vcmp.eq.s32.totalorder %v2107, %v4180
    %vm4764 = vcmp.eq.s32.totalorder %v2107, %v4194
    %vm4765 = vcmp.eq.s32.totalorder %v2107, %v4208
    %vm4766 = vcmp.eq.s32.totalorder %v2107, %v4222
    %vm4767 = vcmp.eq.s32.totalorder %v2107, %v4236
    %vm4768 = vcmp.eq.s32.totalorder %v2107, %v4250
    %vm4769 = vcmp.eq.s32.totalorder %v2107, %v4264
    %vm4770 = vcmp.eq.s32.totalorder %v2107, %v4278
    %vm4771 = vcmp.eq.s32.totalorder %v2107, %v4292
    %vm4772 = vcmp.eq.s32.totalorder %v2107, %v4306
    %vm4773 = vcmp.eq.s32.totalorder %v2107, %v4320
    %vm4774 = vcmp.eq.s32.totalorder %v2107, %v4334
    %vm4775 = vcmp.eq.s32.totalorder %v2107, %v4348
    %vm4776 = vcmp.eq.s32.totalorder %v2107, %v4362
    %vm4777 = vcmp.eq.s32.totalorder %v2107, %v4376
    %vm4778 = vcmp.eq.s32.totalorder %v2107, %v4390
    %vm4779 = vcmp.eq.s32.totalorder %v2107, %v4404
    %vm4780 = vcmp.eq.s32.totalorder %v2107, %v4418
    %vm4781 = vcmp.eq.s32.totalorder %v2107, %v4432
    %vm4782 = vcmp.eq.s32.totalorder %v2107, %v4446
    %vm4783 = vcmp.eq.s32.totalorder %v2107, %v4460
    %vm4784 = vcmp.eq.s32.totalorder %v2107, %v4474
    %vm4785 = vcmp.eq.s32.totalorder %v2107, %v4488
    %vm4786 = vcmp.eq.s32.totalorder %v2107, %v4502
    %vm4787 = vcmp.eq.s32.totalorder %v2107, %v4516
    %vm4788 = vcmp.eq.s32.totalorder %v2107, %v4530
    %vm4789 = vcmp.eq.s32.totalorder %v2107, %v4544
    %vm4790 = vcmp.eq.s32.totalorder %v2107, %v4558
    %vm4791 = vcmp.eq.s32.totalorder %v2107, %v4572
    %vm4792 = vcmp.eq.s32.totalorder %v2107, %v4586
    %vm4793 = vcmp.eq.s32.totalorder %v2107, %v4600
    %vm4794 = vcmp.eq.s32.totalorder %v2107, %v4614
    %vm4795 = vcmp.eq.s32.totalorder %v2107, %v4628
    %vm4796 = vcmp.eq.s32.totalorder %v2107, %v4642
    %vm4797 = vcmp.eq.s32.totalorder %v2107, %v4656
    %vm4798 = vcmp.eq.s32.totalorder %v2107, %v4670
    %v4799 = vsel %vm4671, 1, 0
    %v4800 = vsel %vm4672, 1, 0
    %v4801 = vsel %vm4673, 1, 0
    %v4802 = vsel %vm4674, 1, 0
    %v4803 = vsel %vm4675, 1, 0
    %v4804 = vsel %vm4676, 1, 0
    %v4805 = vsel %vm4677, 1, 0
    %v4806 = vsel %vm4678, 1, 0
    %v4807 = vsel %vm4679, 1, 0
    %v4808 = vsel %vm4680, 1, 0
    %v4809 = vsel %vm4681, 1, 0
    %v4810 = vsel %vm4682, 1, 0
    %v4811 = vsel %vm4683, 1, 0
    %v4812 = vsel %vm4684, 1, 0
    %v4813 = vsel %vm4685, 1, 0
    %v4814 = vsel %vm4686, 1, 0
    %v4815 = vsel %vm4687, 1, 0
    %v4816 = vsel %vm4688, 1, 0
    %v4817 = vsel %vm4689, 1, 0
    %v4818 = vsel %vm4690, 1, 0
    %v4819 = vsel %vm4691, 1, 0
    %v4820 = vsel %vm4692, 1, 0
    %v4821 = vsel %vm4693, 1, 0
    %v4822 = vsel %vm4694, 1, 0
    %v4823 = vsel %vm4695, 1, 0
    %v4824 = vsel %vm4696, 1, 0
    %v4825 = vsel %vm4697, 1, 0
    %v4826 = vsel %vm4698, 1, 0
    %v4827 = vsel %vm4699, 1, 0
    %v4828 = vsel %vm4700, 1, 0
    %v4829 = vsel %vm4701, 1, 0
    %v4830 = vsel %vm4702, 1, 0
    %v4831 = vsel %vm4703, 1, 0
    %v4832 = vsel %vm4704, 1, 0
    %v4833 = vsel %vm4705, 1, 0
    %v4834 = vsel %vm4706, 1, 0
    %v4835 = vsel %vm4707, 1, 0
    %v4836 = vsel %vm4708, 1, 0
    %v4837 = vsel %vm4709, 1, 0
    %v4838 = vsel %vm4710, 1, 0
    %v4839 = vsel %vm4711, 1, 0
    %v4840 = vsel %vm4712, 1, 0
    %v4841 = vsel %vm4713, 1, 0
    %v4842 = vsel %vm4714, 1, 0
    %v4843 = vsel %vm4715, 1, 0
    %v4844 = vsel %vm4716, 1, 0
    %v4845 = vsel %vm4717, 1, 0
    %v4846 = vsel %vm4718, 1, 0
    %v4847 = vsel %vm4719, 1, 0
    %v4848 = vsel %vm4720, 1, 0
    %v4849 = vsel %vm4721, 1, 0
    %v4850 = vsel %vm4722, 1, 0
    %v4851 = vsel %vm4723, 1, 0
    %v4852 = vsel %vm4724, 1, 0
    %v4853 = vsel %vm4725, 1, 0
    %v4854 = vsel %vm4726, 1, 0
    %v4855 = vsel %vm4727, 1, 0
    %v4856 = vsel %vm4728, 1, 0
    %v4857 = vsel %vm4729, 1, 0
    %v4858 = vsel %vm4730, 1, 0
    %v4859 = vsel %vm4731, 1, 0
    %v4860 = vsel %vm4732, 1, 0
    %v4861 = vsel %vm4733, 1, 0
    %v4862 = vsel %vm4734, 1, 0
    %v4863 = vsel %vm4735, 1, 0
    %v4864 = vsel %vm4736, 1, 0
    %v4865 = vsel %vm4737, 1, 0
    %v4866 = vsel %vm4738, 1, 0
    %v4867 = vsel %vm4739, 1, 0
    %v4868 = vsel %vm4740, 1, 0
    %v4869 = vsel %vm4741, 1, 0
    %v4870 = vsel %vm4742, 1, 0
    %v4871 = vsel %vm4743, 1, 0
    %v4872 = vsel %vm4744, 1, 0
    %v4873 = vsel %vm4745, 1, 0
    %v4874 = vsel %vm4746, 1, 0
    %v4875 = vsel %vm4747, 1, 0
    %v4876 = vsel %vm4748, 1, 0
    %v4877 = vsel %vm4749, 1, 0
    %v4878 = vsel %vm4750, 1, 0
    %v4879 = vsel %vm4751, 1, 0
    %v4880 = vsel %vm4752, 1, 0
    %v4881 = vsel %vm4753, 1, 0
    %v4882 = vsel %vm4754, 1, 0
    %v4883 = vsel %vm4755, 1, 0
    %v4884 = vsel %vm4756, 1, 0
    %v4885 = vsel %vm4757, 1, 0
    %v4886 = vsel %vm4758, 1, 0
    %v4887 = vsel %vm4759, 1, 0
    %v4888 = vsel %vm4760, 1, 0
    %v4889 = vsel %vm4761, 1, 0
    %v4890 = vsel %vm4762, 1, 0
    %v4891 = vsel %vm4763, 1, 0
    %v4892 = vsel %vm4764, 1, 0
    %v4893 = vsel %vm4765, 1, 0
    %v4894 = vsel %vm4766, 1, 0
    %v4895 = vsel %vm4767, 1, 0
    %v4896 = vsel %vm4768, 1, 0
    %v4897 = vsel %vm4769, 1, 0
    %v4898 = vsel %vm4770, 1, 0
    %v4899 = vsel %vm4771, 1, 0
    %v4900 = vsel %vm4772, 1, 0
    %v4901 = vsel %vm4773, 1, 0
    %v4902 = vsel %vm4774, 1, 0
    %v4903 = vsel %vm4775, 1, 0
    %v4904 = vsel %vm4776, 1, 0
    %v4905 = vsel %vm4777, 1, 0
    %v4906 = vsel %vm4778, 1, 0
    %v4907 = vsel %vm4779, 1, 0
    %v4908 = vsel %vm4780, 1, 0
    %v4909 = vsel %vm4781, 1, 0
    %v4910 = vsel %vm4782, 1, 0
    %v4911 = vsel %vm4783, 1, 0
    %v4912 = vsel %vm4784, 1, 0
    %v4913 = vsel %vm4785, 1, 0
    %v4914 = vsel %vm4786, 1, 0
    %v4915 = vsel %vm4787, 1, 0
    %v4916 = vsel %vm4788, 1, 0
    %v4917 = vsel %vm4789, 1, 0
    %v4918 = vsel %vm4790, 1, 0
    %v4919 = vsel %vm4791, 1, 0
    %v4920 = vsel %vm4792, 1, 0
    %v4921 = vsel %vm4793, 1, 0
    %v4922 = vsel %vm4794, 1, 0
    %v4923 = vsel %vm4795, 1, 0
    %v4924 = vsel %vm4796, 1, 0
    %v4925 = vsel %vm4797, 1, 0
    %v4926 = vsel %vm4798, 1, 0
    %v4927 = vcvt.s32.f32 %v4799
    %v4928 = vcvt.s32.f32 %v4800
    %v4929 = vcvt.s32.f32 %v4801
    %v4930 = vcvt.s32.f32 %v4802
    %v4931 = vcvt.s32.f32 %v4803
    %v4932 = vcvt.s32.f32 %v4804
    %v4933 = vcvt.s32.f32 %v4805
    %v4934 = vcvt.s32.f32 %v4806
    %v4935 = vcvt.s32.f32 %v4807
    %v4936 = vcvt.s32.f32 %v4808
    %v4937 = vcvt.s32.f32 %v4809
    %v4938 = vcvt.s32.f32 %v4810
    %v4939 = vcvt.s32.f32 %v4811
    %v4940 = vcvt.s32.f32 %v4812
    %v4941 = vcvt.s32.f32 %v4813
    %v4942 = vcvt.s32.f32 %v4814
    %v4943 = vcvt.s32.f32 %v4815
    %v4944 = vcvt.s32.f32 %v4816
    %v4945 = vcvt.s32.f32 %v4817
    %v4946 = vcvt.s32.f32 %v4818
    %v4947 = vcvt.s32.f32 %v4819
    %v4948 = vcvt.s32.f32 %v4820
    %v4949 = vcvt.s32.f32 %v4821
    %v4950 = vcvt.s32.f32 %v4822
    %v4951 = vcvt.s32.f32 %v4823
    %v4952 = vcvt.s32.f32 %v4824
    %v4953 = vcvt.s32.f32 %v4825
    %v4954 = vcvt.s32.f32 %v4826
    %v4955 = vcvt.s32.f32 %v4827
    %v4956 = vcvt.s32.f32 %v4828
    %v4957 = vcvt.s32.f32 %v4829
    %v4958 = vcvt.s32.f32 %v4830
    %v4959 = vcvt.s32.f32 %v4831
    %v4960 = vcvt.s32.f32 %v4832
    %v4961 = vcvt.s32.f32 %v4833
    %v4962 = vcvt.s32.f32 %v4834
    %v4963 = vcvt.s32.f32 %v4835
    %v4964 = vcvt.s32.f32 %v4836
    %v4965 = vcvt.s32.f32 %v4837
    %v4966 = vcvt.s32.f32 %v4838
    %v4967 = vcvt.s32.f32 %v4839
    %v4968 = vcvt.s32.f32 %v4840
    %v4969 = vcvt.s32.f32 %v4841
    %v4970 = vcvt.s32.f32 %v4842
    %v4971 = vcvt.s32.f32 %v4843
    %v4972 = vcvt.s32.f32 %v4844
    %v4973 = vcvt.s32.f32 %v4845
    %v4974 = vcvt.s32.f32 %v4846
    %v4975 = vcvt.s32.f32 %v4847
    %v4976 = vcvt.s32.f32 %v4848
    %v4977 = vcvt.s32.f32 %v4849
    %v4978 = vcvt.s32.f32 %v4850
    %v4979 = vcvt.s32.f32 %v4851
    %v4980 = vcvt.s32.f32 %v4852
    %v4981 = vcvt.s32.f32 %v4853
    %v4982 = vcvt.s32.f32 %v4854
    %v4983 = vcvt.s32.f32 %v4855
    %v4984 = vcvt.s32.f32 %v4856
    %v4985 = vcvt.s32.f32 %v4857
    %v4986 = vcvt.s32.f32 %v4858
    %v4987 = vcvt.s32.f32 %v4859
    %v4988 = vcvt.s32.f32 %v4860
    %v4989 = vcvt.s32.f32 %v4861
    %v4990 = vcvt.s32.f32 %v4862
    %v4991 = vcvt.s32.f32 %v4863
    %v4992 = vcvt.s32.f32 %v4864
    %v4993 = vcvt.s32.f32 %v4865
    %v4994 = vcvt.s32.f32 %v4866
    %v4995 = vcvt.s32.f32 %v4867
    %v4996 = vcvt.s32.f32 %v4868
    %v4997 = vcvt.s32.f32 %v4869
    %v4998 = vcvt.s32.f32 %v4870
    %v4999 = vcvt.s32.f32 %v4871
    %v5000 = vcvt.s32.f32 %v4872
    %v5001 = vcvt.s32.f32 %v4873
    %v5002 = vcvt.s32.f32 %v4874
    %v5003 = vcvt.s32.f32 %v4875
    %v5004 = vcvt.s32.f32 %v4876
    %v5005 = vcvt.s32.f32 %v4877
    %v5006 = vcvt.s32.f32 %v4878
    %v5007 = vcvt.s32.f32 %v4879
    %v5008 = vcvt.s32.f32 %v4880
    %v5009 = vcvt.s32.f32 %v4881
    %v5010 = vcvt.s32.f32 %v4882
    %v5011 = vcvt.s32.f32 %v4883
    %v5012 = vcvt.s32.f32 %v4884
    %v5013 = vcvt.s32.f32 %v4885
    %v5014 = vcvt.s32.f32 %v4886
    %v5015 = vcvt.s32.f32 %v4887
    %v5016 = vcvt.s32.f32 %v4888
    %v5017 = vcvt.s32.f32 %v4889
    %v5018 = vcvt.s32.f32 %v4890
    %v5019 = vcvt.s32.f32 %v4891
    %v5020 = vcvt.s32.f32 %v4892
    %v5021 = vcvt.s32.f32 %v4893
    %v5022 = vcvt.s32.f32 %v4894
    %v5023 = vcvt.s32.f32 %v4895
    %v5024 = vcvt.s32.f32 %v4896
    %v5025 = vcvt.s32.f32 %v4897
    %v5026 = vcvt.s32.f32 %v4898
    %v5027 = vcvt.s32.f32 %v4899
    %v5028 = vcvt.s32.f32 %v4900
    %v5029 = vcvt.s32.f32 %v4901
    %v5030 = vcvt.s32.f32 %v4902
    %v5031 = vcvt.s32.f32 %v4903
    %v5032 = vcvt.s32.f32 %v4904
    %v5033 = vcvt.s32.f32 %v4905
    %v5034 = vcvt.s32.f32 %v4906
    %v5035 = vcvt.s32.f32 %v4907
    %v5036 = vcvt.s32.f32 %v4908
    %v5037 = vcvt.s32.f32 %v4909
    %v5038 = vcvt.s32.f32 %v4910
    %v5039 = vcvt.s32.f32 %v4911
    %v5040 = vcvt.s32.f32 %v4912
    %v5041 = vcvt.s32.f32 %v4913
    %v5042 = vcvt.s32.f32 %v4914
    %v5043 = vcvt.s32.f32 %v4915
    %v5044 = vcvt.s32.f32 %v4916
    %v5045 = vcvt.s32.f32 %v4917
    %v5046 = vcvt.s32.f32 %v4918
    %v5047 = vcvt.s32.f32 %v4919
    %v5048 = vcvt.s32.f32 %v4920
    %v5049 = vcvt.s32.f32 %v4921
    %v5050 = vcvt.s32.f32 %v4922
    %v5051 = vcvt.s32.f32 %v4923
    %v5052 = vcvt.s32.f32 %v4924
    %v5053 = vcvt.s32.f32 %v4925
    %v5054 = vcvt.s32.f32 %v4926
    %v5055 = vsel %vm2110, %v4927, %v1468
    %v5056 = vsel %vm2110, %v4928, %v1473
    %v5057 = vsel %vm2110, %v4929, %v1478
    %v5058 = vsel %vm2110, %v4930, %v1483
    %v5059 = vsel %vm2110, %v4931, %v1488
    %v5060 = vsel %vm2110, %v4932, %v1493
    %v5061 = vsel %vm2110, %v4933, %v1498
    %v5062 = vsel %vm2110, %v4934, %v1503
    %v5063 = vsel %vm2110, %v4935, %v1508
    %v5064 = vsel %vm2110, %v4936, %v1513
    %v5065 = vsel %vm2110, %v4937, %v1518
    %v5066 = vsel %vm2110, %v4938, %v1523
    %v5067 = vsel %vm2110, %v4939, %v1528
    %v5068 = vsel %vm2110, %v4940, %v1533
    %v5069 = vsel %vm2110, %v4941, %v1538
    %v5070 = vsel %vm2110, %v4942, %v1543
    %v5071 = vsel %vm2110, %v4943, %v1548
    %v5072 = vsel %vm2110, %v4944, %v1553
    %v5073 = vsel %vm2110, %v4945, %v1558
    %v5074 = vsel %vm2110, %v4946, %v1563
    %v5075 = vsel %vm2110, %v4947, %v1568
    %v5076 = vsel %vm2110, %v4948, %v1573
    %v5077 = vsel %vm2110, %v4949, %v1578
    %v5078 = vsel %vm2110, %v4950, %v1583
    %v5079 = vsel %vm2110, %v4951, %v1588
    %v5080 = vsel %vm2110, %v4952, %v1593
    %v5081 = vsel %vm2110, %v4953, %v1598
    %v5082 = vsel %vm2110, %v4954, %v1603
    %v5083 = vsel %vm2110, %v4955, %v1608
    %v5084 = vsel %vm2110, %v4956, %v1613
    %v5085 = vsel %vm2110, %v4957, %v1618
    %v5086 = vsel %vm2110, %v4958, %v1623
    %v5087 = vsel %vm2110, %v4959, %v1628
    %v5088 = vsel %vm2110, %v4960, %v1633
    %v5089 = vsel %vm2110, %v4961, %v1638
    %v5090 = vsel %vm2110, %v4962, %v1643
    %v5091 = vsel %vm2110, %v4963, %v1648
    %v5092 = vsel %vm2110, %v4964, %v1653
    %v5093 = vsel %vm2110, %v4965, %v1658
    %v5094 = vsel %vm2110, %v4966, %v1663
    %v5095 = vsel %vm2110, %v4967, %v1668
    %v5096 = vsel %vm2110, %v4968, %v1673
    %v5097 = vsel %vm2110, %v4969, %v1678
    %v5098 = vsel %vm2110, %v4970, %v1683
    %v5099 = vsel %vm2110, %v4971, %v1688
    %v5100 = vsel %vm2110, %v4972, %v1693
    %v5101 = vsel %vm2110, %v4973, %v1698
    %v5102 = vsel %vm2110, %v4974, %v1703
    %v5103 = vsel %vm2110, %v4975, %v1708
    %v5104 = vsel %vm2110, %v4976, %v1713
    %v5105 = vsel %vm2110, %v4977, %v1718
    %v5106 = vsel %vm2110, %v4978, %v1723
    %v5107 = vsel %vm2110, %v4979, %v1728
    %v5108 = vsel %vm2110, %v4980, %v1733
    %v5109 = vsel %vm2110, %v4981, %v1738
    %v5110 = vsel %vm2110, %v4982, %v1743
    %v5111 = vsel %vm2110, %v4983, %v1748
    %v5112 = vsel %vm2110, %v4984, %v1753
    %v5113 = vsel %vm2110, %v4985, %v1758
    %v5114 = vsel %vm2110, %v4986, %v1763
    %v5115 = vsel %vm2110, %v4987, %v1768
    %v5116 = vsel %vm2110, %v4988, %v1773
    %v5117 = vsel %vm2110, %v4989, %v1778
    %v5118 = vsel %vm2110, %v4990, %v1783
    %v5119 = vsel %vm2110, %v4991, %v1788
    %v5120 = vsel %vm2110, %v4992, %v1793
    %v5121 = vsel %vm2110, %v4993, %v1798
    %v5122 = vsel %vm2110, %v4994, %v1803
    %v5123 = vsel %vm2110, %v4995, %v1808
    %v5124 = vsel %vm2110, %v4996, %v1813
    %v5125 = vsel %vm2110, %v4997, %v1818
    %v5126 = vsel %vm2110, %v4998, %v1823
    %v5127 = vsel %vm2110, %v4999, %v1828
    %v5128 = vsel %vm2110, %v5000, %v1833
    %v5129 = vsel %vm2110, %v5001, %v1838
    %v5130 = vsel %vm2110, %v5002, %v1843
    %v5131 = vsel %vm2110, %v5003, %v1848
    %v5132 = vsel %vm2110, %v5004, %v1853
    %v5133 = vsel %vm2110, %v5005, %v1858
    %v5134 = vsel %vm2110, %v5006, %v1863
    %v5135 = vsel %vm2110, %v5007, %v1868
    %v5136 = vsel %vm2110, %v5008, %v1873
    %v5137 = vsel %vm2110, %v5009, %v1878
    %v5138 = vsel %vm2110, %v5010, %v1883
    %v5139 = vsel %vm2110, %v5011, %v1888
    %v5140 = vsel %vm2110, %v5012, %v1893
    %v5141 = vsel %vm2110, %v5013, %v1898
    %v5142 = vsel %vm2110, %v5014, %v1903
    %v5143 = vsel %vm2110, %v5015, %v1908
    %v5144 = vsel %vm2110, %v5016, %v1913
    %v5145 = vsel %vm2110, %v5017, %v1918
    %v5146 = vsel %vm2110, %v5018, %v1923
    %v5147 = vsel %vm2110, %v5019, %v1928
    %v5148 = vsel %vm2110, %v5020, %v1933
    %v5149 = vsel %vm2110, %v5021, %v1938
    %v5150 = vsel %vm2110, %v5022, %v1943
    %v5151 = vsel %vm2110, %v5023, %v1948
    %v5152 = vsel %vm2110, %v5024, %v1953
    %v5153 = vsel %vm2110, %v5025, %v1958
    %v5154 = vsel %vm2110, %v5026, %v1963
    %v5155 = vsel %vm2110, %v5027, %v1968
    %v5156 = vsel %vm2110, %v5028, %v1973
    %v5157 = vsel %vm2110, %v5029, %v1978
    %v5158 = vsel %vm2110, %v5030, %v1983
    %v5159 = vsel %vm2110, %v5031, %v1988
    %v5160 = vsel %vm2110, %v5032, %v1993
    %v5161 = vsel %vm2110, %v5033, %v1998
    %v5162 = vsel %vm2110, %v5034, %v2003
    %v5163 = vsel %vm2110, %v5035, %v2008
    %v5164 = vsel %vm2110, %v5036, %v2013
    %v5165 = vsel %vm2110, %v5037, %v2018
    %v5166 = vsel %vm2110, %v5038, %v2023
    %v5167 = vsel %vm2110, %v5039, %v2028
    %v5168 = vsel %vm2110, %v5040, %v2033
    %v5169 = vsel %vm2110, %v5041, %v2038
    %v5170 = vsel %vm2110, %v5042, %v2043
    %v5171 = vsel %vm2110, %v5043, %v2048
    %v5172 = vsel %vm2110, %v5044, %v2053
    %v5173 = vsel %vm2110, %v5045, %v2058
    %v5174 = vsel %vm2110, %v5046, %v2063
    %v5175 = vsel %vm2110, %v5047, %v2068
    %v5176 = vsel %vm2110, %v5048, %v2073
    %v5177 = vsel %vm2110, %v5049, %v2078
    %v5178 = vsel %vm2110, %v5050, %v2083
    %v5179 = vsel %vm2110, %v5051, %v2088
    %v5180 = vsel %vm2110, %v5052, %v2093
    %v5181 = vsel %vm2110, %v5053, %v2098
    %v5182 = vsel %vm2110, %v5054, %v2103
    %vm5183 = vcmp.ge.s32.totalorder %v2107, 84
    %vm5184 = vcmp.lt.s32.totalorder %v2107, 87
    %vm5185 = vmand %vm5183, %vm5184
    %v5186 = vsel %vm5185, %v1468, -inf
    %v5187 = vsel %vm5185, %v1473, -inf
    %v5188 = vsel %vm5185, %v1478, -inf
    %v5189 = vsel %vm5185, %v1483, -inf
    %v5190 = vsel %vm5185, %v1488, -inf
    %v5191 = vsel %vm5185, %v1493, -inf
    %v5192 = vsel %vm5185, %v1498, -inf
    %v5193 = vsel %vm5185, %v1503, -inf
    %v5194 = vsel %vm5185, %v1508, -inf
    %v5195 = vsel %vm5185, %v1513, -inf
    %v5196 = vsel %vm5185, %v1518, -inf
    %v5197 = vsel %vm5185, %v1523, -inf
    %v5198 = vsel %vm5185, %v1528, -inf
    %v5199 = vsel %vm5185, %v1533, -inf
    %v5200 = vsel %vm5185, %v1538, -inf
    %v5201 = vsel %vm5185, %v1543, -inf
    %v5202 = vsel %vm5185, %v1548, -inf
    %v5203 = vsel %vm5185, %v1553, -inf
    %v5204 = vsel %vm5185, %v1558, -inf
    %v5205 = vsel %vm5185, %v1563, -inf
    %v5206 = vsel %vm5185, %v1568, -inf
    %v5207 = vsel %vm5185, %v1573, -inf
    %v5208 = vsel %vm5185, %v1578, -inf
    %v5209 = vsel %vm5185, %v1583, -inf
    %v5210 = vsel %vm5185, %v1588, -inf
    %v5211 = vsel %vm5185, %v1593, -inf
    %v5212 = vsel %vm5185, %v1598, -inf
    %v5213 = vsel %vm5185, %v1603, -inf
    %v5214 = vsel %vm5185, %v1608, -inf
    %v5215 = vsel %vm5185, %v1613, -inf
    %v5216 = vsel %vm5185, %v1618, -inf
    %v5217 = vsel %vm5185, %v1623, -inf
    %v5218 = vsel %vm5185, %v1628, -inf
    %v5219 = vsel %vm5185, %v1633, -inf
    %v5220 = vsel %vm5185, %v1638, -inf
    %v5221 = vsel %vm5185, %v1643, -inf
    %v5222 = vsel %vm5185, %v1648, -inf
    %v5223 = vsel %vm5185, %v1653, -inf
    %v5224 = vsel %vm5185, %v1658, -inf
    %v5225 = vsel %vm5185, %v1663, -inf
    %v5226 = vsel %vm5185, %v1668, -inf
    %v5227 = vsel %vm5185, %v1673, -inf
    %v5228 = vsel %vm5185, %v1678, -inf
    %v5229 = vsel %vm5185, %v1683, -inf
    %v5230 = vsel %vm5185, %v1688, -inf
    %v5231 = vsel %vm5185, %v1693, -inf
    %v5232 = vsel %vm5185, %v1698, -inf
    %v5233 = vsel %vm5185, %v1703, -inf
    %v5234 = vsel %vm5185, %v1708, -inf
    %v5235 = vsel %vm5185, %v1713, -inf
    %v5236 = vsel %vm5185, %v1718, -inf
    %v5237 = vsel %vm5185, %v1723, -inf
    %v5238 = vsel %vm5185, %v1728, -inf
    %v5239 = vsel %vm5185, %v1733, -inf
    %v5240 = vsel %vm5185, %v1738, -inf
    %v5241 = vsel %vm5185, %v1743, -inf
    %v5242 = vsel %vm5185, %v1748, -inf
    %v5243 = vsel %vm5185, %v1753, -inf
    %v5244 = vsel %vm5185, %v1758, -inf
    %v5245 = vsel %vm5185, %v1763, -inf
    %v5246 = vsel %vm5185, %v1768, -inf
    %v5247 = vsel %vm5185, %v1773, -inf
    %v5248 = vsel %vm5185, %v1778, -inf
    %v5249 = vsel %vm5185, %v1783, -inf
    %v5250 = vsel %vm5185, %v1788, -inf
    %v5251 = vsel %vm5185, %v1793, -inf
    %v5252 = vsel %vm5185, %v1798, -inf
    %v5253 = vsel %vm5185, %v1803, -inf
    %v5254 = vsel %vm5185, %v1808, -inf
    %v5255 = vsel %vm5185, %v1813, -inf
    %v5256 = vsel %vm5185, %v1818, -inf
    %v5257 = vsel %vm5185, %v1823, -inf
    %v5258 = vsel %vm5185, %v1828, -inf
    %v5259 = vsel %vm5185, %v1833, -inf
    %v5260 = vsel %vm5185, %v1838, -inf
    %v5261 = vsel %vm5185, %v1843, -inf
    %v5262 = vsel %vm5185, %v1848, -inf
    %v5263 = vsel %vm5185, %v1853, -inf
    %v5264 = vsel %vm5185, %v1858, -inf
    %v5265 = vsel %vm5185, %v1863, -inf
    %v5266 = vsel %vm5185, %v1868, -inf
    %v5267 = vsel %vm5185, %v1873, -inf
    %v5268 = vsel %vm5185, %v1878, -inf
    %v5269 = vsel %vm5185, %v1883, -inf
    %v5270 = vsel %vm5185, %v1888, -inf
    %v5271 = vsel %vm5185, %v1893, -inf
    %v5272 = vsel %vm5185, %v1898, -inf
    %v5273 = vsel %vm5185, %v1903, -inf
    %v5274 = vsel %vm5185, %v1908, -inf
    %v5275 = vsel %vm5185, %v1913, -inf
    %v5276 = vsel %vm5185, %v1918, -inf
    %v5277 = vsel %vm5185, %v1923, -inf
    %v5278 = vsel %vm5185, %v1928, -inf
    %v5279 = vsel %vm5185, %v1933, -inf
    %v5280 = vsel %vm5185, %v1938, -inf
    %v5281 = vsel %vm5185, %v1943, -inf
    %v5282 = vsel %vm5185, %v1948, -inf
    %v5283 = vsel %vm5185, %v1953, -inf
    %v5284 = vsel %vm5185, %v1958, -inf
    %v5285 = vsel %vm5185, %v1963, -inf
    %v5286 = vsel %vm5185, %v1968, -inf
    %v5287 = vsel %vm5185, %v1973, -inf
    %v5288 = vsel %vm5185, %v1978, -inf
    %v5289 = vsel %vm5185, %v1983, -inf
    %v5290 = vsel %vm5185, %v1988, -inf
    %v5291 = vsel %vm5185, %v1993, -inf
    %v5292 = vsel %vm5185, %v1998, -inf
    %v5293 = vsel %vm5185, %v2003, -inf
    %v5294 = vsel %vm5185, %v2008, -inf
    %v5295 = vsel %vm5185, %v2013, -inf
    %v5296 = vsel %vm5185, %v2018, -inf
    %v5297 = vsel %vm5185, %v2023, -inf
    %v5298 = vsel %vm5185, %v2028, -inf
    %v5299 = vsel %vm5185, %v2033, -inf
    %v5300 = vsel %vm5185, %v2038, -inf
    %v5301 = vsel %vm5185, %v2043, -inf
    %v5302 = vsel %vm5185, %v2048, -inf
    %v5303 = vsel %vm5185, %v2053, -inf
    %v5304 = vsel %vm5185, %v2058, -inf
    %v5305 = vsel %vm5185, %v2063, -inf
    %v5306 = vsel %vm5185, %v2068, -inf
    %v5307 = vsel %vm5185, %v2073, -inf
    %v5308 = vsel %vm5185, %v2078, -inf
    %v5309 = vsel %vm5185, %v2083, -inf
    %v5310 = vsel %vm5185, %v2088, -inf
    %v5311 = vsel %vm5185, %v2093, -inf
    %v5312 = vsel %vm5185, %v2098, -inf
    %v5313 = vsel %vm5185, %v2103, -inf
    %5314 = vmax.xlane.f32.xlu0 %v5186
    %v5315 = vpop.xlane.xlu0 %5314
    %5316 = vmax.xlane.f32.xlu0 %v5187
    %v5317 = vpop.xlane.xlu0 %5316
    %5318 = vmax.xlane.f32.xlu0 %v5188
    %v5319 = vpop.xlane.xlu0 %5318
    %5320 = vmax.xlane.f32.xlu0 %v5189
    %v5321 = vpop.xlane.xlu0 %5320
    %5322 = vmax.xlane.f32.xlu0 %v5190
    %v5323 = vpop.xlane.xlu0 %5322
    %5324 = vmax.xlane.f32.xlu0 %v5191
    %v5325 = vpop.xlane.xlu0 %5324
    %5326 = vmax.xlane.f32.xlu0 %v5192
    %v5327 = vpop.xlane.xlu0 %5326
    %5328 = vmax.xlane.f32.xlu0 %v5193
    %v5329 = vpop.xlane.xlu0 %5328
    %5330 = vmax.xlane.f32.xlu0 %v5194
    %v5331 = vpop.xlane.xlu0 %5330
    %5332 = vmax.xlane.f32.xlu0 %v5195
    %v5333 = vpop.xlane.xlu0 %5332
    %5334 = vmax.xlane.f32.xlu0 %v5196
    %v5335 = vpop.xlane.xlu0 %5334
    %5336 = vmax.xlane.f32.xlu0 %v5197
    %v5337 = vpop.xlane.xlu0 %5336
    %5338 = vmax.xlane.f32.xlu0 %v5198
    %v5339 = vpop.xlane.xlu0 %5338
    %5340 = vmax.xlane.f32.xlu0 %v5199
    %v5341 = vpop.xlane.xlu0 %5340
    %5342 = vmax.xlane.f32.xlu0 %v5200
    %v5343 = vpop.xlane.xlu0 %5342
    %5344 = vmax.xlane.f32.xlu0 %v5201
    %v5345 = vpop.xlane.xlu0 %5344
    %5346 = vmax.xlane.f32.xlu0 %v5202
    %v5347 = vpop.xlane.xlu0 %5346
    %5348 = vmax.xlane.f32.xlu0 %v5203
    %v5349 = vpop.xlane.xlu0 %5348
    %5350 = vmax.xlane.f32.xlu0 %v5204
    %v5351 = vpop.xlane.xlu0 %5350
    %5352 = vmax.xlane.f32.xlu0 %v5205
    %v5353 = vpop.xlane.xlu0 %5352
    %5354 = vmax.xlane.f32.xlu0 %v5206
    %v5355 = vpop.xlane.xlu0 %5354
    %5356 = vmax.xlane.f32.xlu0 %v5207
    %v5357 = vpop.xlane.xlu0 %5356
    %5358 = vmax.xlane.f32.xlu0 %v5208
    %v5359 = vpop.xlane.xlu0 %5358
    %5360 = vmax.xlane.f32.xlu0 %v5209
    %v5361 = vpop.xlane.xlu0 %5360
    %5362 = vmax.xlane.f32.xlu0 %v5210
    %v5363 = vpop.xlane.xlu0 %5362
    %5364 = vmax.xlane.f32.xlu0 %v5211
    %v5365 = vpop.xlane.xlu0 %5364
    %5366 = vmax.xlane.f32.xlu0 %v5212
    %v5367 = vpop.xlane.xlu0 %5366
    %5368 = vmax.xlane.f32.xlu0 %v5213
    %v5369 = vpop.xlane.xlu0 %5368
    %5370 = vmax.xlane.f32.xlu0 %v5214
    %v5371 = vpop.xlane.xlu0 %5370
    %5372 = vmax.xlane.f32.xlu0 %v5215
    %v5373 = vpop.xlane.xlu0 %5372
    %5374 = vmax.xlane.f32.xlu0 %v5216
    %v5375 = vpop.xlane.xlu0 %5374
    %5376 = vmax.xlane.f32.xlu0 %v5217
    %v5377 = vpop.xlane.xlu0 %5376
    %5378 = vmax.xlane.f32.xlu0 %v5218
    %v5379 = vpop.xlane.xlu0 %5378
    %5380 = vmax.xlane.f32.xlu0 %v5219
    %v5381 = vpop.xlane.xlu0 %5380
    %5382 = vmax.xlane.f32.xlu0 %v5220
    %v5383 = vpop.xlane.xlu0 %5382
    %5384 = vmax.xlane.f32.xlu0 %v5221
    %v5385 = vpop.xlane.xlu0 %5384
    %5386 = vmax.xlane.f32.xlu0 %v5222
    %v5387 = vpop.xlane.xlu0 %5386
    %5388 = vmax.xlane.f32.xlu0 %v5223
    %v5389 = vpop.xlane.xlu0 %5388
    %5390 = vmax.xlane.f32.xlu0 %v5224
    %v5391 = vpop.xlane.xlu0 %5390
    %5392 = vmax.xlane.f32.xlu0 %v5225
    %v5393 = vpop.xlane.xlu0 %5392
    %5394 = vmax.xlane.f32.xlu0 %v5226
    %v5395 = vpop.xlane.xlu0 %5394
    %5396 = vmax.xlane.f32.xlu0 %v5227
    %v5397 = vpop.xlane.xlu0 %5396
    %5398 = vmax.xlane.f32.xlu0 %v5228
    %v5399 = vpop.xlane.xlu0 %5398
    %5400 = vmax.xlane.f32.xlu0 %v5229
    %v5401 = vpop.xlane.xlu0 %5400
    %5402 = vmax.xlane.f32.xlu0 %v5230
    %v5403 = vpop.xlane.xlu0 %5402
    %5404 = vmax.xlane.f32.xlu0 %v5231
    %v5405 = vpop.xlane.xlu0 %5404
    %5406 = vmax.xlane.f32.xlu0 %v5232
    %v5407 = vpop.xlane.xlu0 %5406
    %5408 = vmax.xlane.f32.xlu0 %v5233
    %v5409 = vpop.xlane.xlu0 %5408
    %5410 = vmax.xlane.f32.xlu0 %v5234
    %v5411 = vpop.xlane.xlu0 %5410
    %5412 = vmax.xlane.f32.xlu0 %v5235
    %v5413 = vpop.xlane.xlu0 %5412
    %5414 = vmax.xlane.f32.xlu0 %v5236
    %v5415 = vpop.xlane.xlu0 %5414
    %5416 = vmax.xlane.f32.xlu0 %v5237
    %v5417 = vpop.xlane.xlu0 %5416
    %5418 = vmax.xlane.f32.xlu0 %v5238
    %v5419 = vpop.xlane.xlu0 %5418
    %5420 = vmax.xlane.f32.xlu0 %v5239
    %v5421 = vpop.xlane.xlu0 %5420
    %5422 = vmax.xlane.f32.xlu0 %v5240
    %v5423 = vpop.xlane.xlu0 %5422
    %5424 = vmax.xlane.f32.xlu0 %v5241
    %v5425 = vpop.xlane.xlu0 %5424
    %5426 = vmax.xlane.f32.xlu0 %v5242
    %v5427 = vpop.xlane.xlu0 %5426
    %5428 = vmax.xlane.f32.xlu0 %v5243
    %v5429 = vpop.xlane.xlu0 %5428
    %5430 = vmax.xlane.f32.xlu0 %v5244
    %v5431 = vpop.xlane.xlu0 %5430
    %5432 = vmax.xlane.f32.xlu0 %v5245
    %v5433 = vpop.xlane.xlu0 %5432
    %5434 = vmax.xlane.f32.xlu0 %v5246
    %v5435 = vpop.xlane.xlu0 %5434
    %5436 = vmax.xlane.f32.xlu0 %v5247
    %v5437 = vpop.xlane.xlu0 %5436
    %5438 = vmax.xlane.f32.xlu0 %v5248
    %v5439 = vpop.xlane.xlu0 %5438
    %5440 = vmax.xlane.f32.xlu0 %v5249
    %v5441 = vpop.xlane.xlu0 %5440
    %5442 = vmax.xlane.f32.xlu0 %v5250
    %v5443 = vpop.xlane.xlu0 %5442
    %5444 = vmax.xlane.f32.xlu0 %v5251
    %v5445 = vpop.xlane.xlu0 %5444
    %5446 = vmax.xlane.f32.xlu0 %v5252
    %v5447 = vpop.xlane.xlu0 %5446
    %5448 = vmax.xlane.f32.xlu0 %v5253
    %v5449 = vpop.xlane.xlu0 %5448
    %5450 = vmax.xlane.f32.xlu0 %v5254
    %v5451 = vpop.xlane.xlu0 %5450
    %5452 = vmax.xlane.f32.xlu0 %v5255
    %v5453 = vpop.xlane.xlu0 %5452
    %5454 = vmax.xlane.f32.xlu0 %v5256
    %v5455 = vpop.xlane.xlu0 %5454
    %5456 = vmax.xlane.f32.xlu0 %v5257
    %v5457 = vpop.xlane.xlu0 %5456
    %5458 = vmax.xlane.f32.xlu0 %v5258
    %v5459 = vpop.xlane.xlu0 %5458
    %5460 = vmax.xlane.f32.xlu0 %v5259
    %v5461 = vpop.xlane.xlu0 %5460
    %5462 = vmax.xlane.f32.xlu0 %v5260
    %v5463 = vpop.xlane.xlu0 %5462
    %5464 = vmax.xlane.f32.xlu0 %v5261
    %v5465 = vpop.xlane.xlu0 %5464
    %5466 = vmax.xlane.f32.xlu0 %v5262
    %v5467 = vpop.xlane.xlu0 %5466
    %5468 = vmax.xlane.f32.xlu0 %v5263
    %v5469 = vpop.xlane.xlu0 %5468
    %5470 = vmax.xlane.f32.xlu0 %v5264
    %v5471 = vpop.xlane.xlu0 %5470
    %5472 = vmax.xlane.f32.xlu0 %v5265
    %v5473 = vpop.xlane.xlu0 %5472
    %5474 = vmax.xlane.f32.xlu0 %v5266
    %v5475 = vpop.xlane.xlu0 %5474
    %5476 = vmax.xlane.f32.xlu0 %v5267
    %v5477 = vpop.xlane.xlu0 %5476
    %5478 = vmax.xlane.f32.xlu0 %v5268
    %v5479 = vpop.xlane.xlu0 %5478
    %5480 = vmax.xlane.f32.xlu0 %v5269
    %v5481 = vpop.xlane.xlu0 %5480
    %5482 = vmax.xlane.f32.xlu0 %v5270
    %v5483 = vpop.xlane.xlu0 %5482
    %5484 = vmax.xlane.f32.xlu0 %v5271
    %v5485 = vpop.xlane.xlu0 %5484
    %5486 = vmax.xlane.f32.xlu0 %v5272
    %v5487 = vpop.xlane.xlu0 %5486
    %5488 = vmax.xlane.f32.xlu0 %v5273
    %v5489 = vpop.xlane.xlu0 %5488
    %5490 = vmax.xlane.f32.xlu0 %v5274
    %v5491 = vpop.xlane.xlu0 %5490
    %5492 = vmax.xlane.f32.xlu0 %v5275
    %v5493 = vpop.xlane.xlu0 %5492
    %5494 = vmax.xlane.f32.xlu0 %v5276
    %v5495 = vpop.xlane.xlu0 %5494
    %5496 = vmax.xlane.f32.xlu0 %v5277
    %v5497 = vpop.xlane.xlu0 %5496
    %5498 = vmax.xlane.f32.xlu0 %v5278
    %v5499 = vpop.xlane.xlu0 %5498
    %5500 = vmax.xlane.f32.xlu0 %v5279
    %v5501 = vpop.xlane.xlu0 %5500
    %5502 = vmax.xlane.f32.xlu0 %v5280
    %v5503 = vpop.xlane.xlu0 %5502
    %5504 = vmax.xlane.f32.xlu0 %v5281
    %v5505 = vpop.xlane.xlu0 %5504
    %5506 = vmax.xlane.f32.xlu0 %v5282
    %v5507 = vpop.xlane.xlu0 %5506
    %5508 = vmax.xlane.f32.xlu0 %v5283
    %v5509 = vpop.xlane.xlu0 %5508
    %5510 = vmax.xlane.f32.xlu0 %v5284
    %v5511 = vpop.xlane.xlu0 %5510
    %5512 = vmax.xlane.f32.xlu0 %v5285
    %v5513 = vpop.xlane.xlu0 %5512
    %5514 = vmax.xlane.f32.xlu0 %v5286
    %v5515 = vpop.xlane.xlu0 %5514
    %5516 = vmax.xlane.f32.xlu0 %v5287
    %v5517 = vpop.xlane.xlu0 %5516
    %5518 = vmax.xlane.f32.xlu0 %v5288
    %v5519 = vpop.xlane.xlu0 %5518
    %5520 = vmax.xlane.f32.xlu0 %v5289
    %v5521 = vpop.xlane.xlu0 %5520
    %5522 = vmax.xlane.f32.xlu0 %v5290
    %v5523 = vpop.xlane.xlu0 %5522
    %5524 = vmax.xlane.f32.xlu0 %v5291
    %v5525 = vpop.xlane.xlu0 %5524
    %5526 = vmax.xlane.f32.xlu0 %v5292
    %v5527 = vpop.xlane.xlu0 %5526
    %5528 = vmax.xlane.f32.xlu0 %v5293
    %v5529 = vpop.xlane.xlu0 %5528
    %5530 = vmax.xlane.f32.xlu0 %v5294
    %v5531 = vpop.xlane.xlu0 %5530
    %5532 = vmax.xlane.f32.xlu0 %v5295
    %v5533 = vpop.xlane.xlu0 %5532
    %5534 = vmax.xlane.f32.xlu0 %v5296
    %v5535 = vpop.xlane.xlu0 %5534
    %5536 = vmax.xlane.f32.xlu0 %v5297
    %v5537 = vpop.xlane.xlu0 %5536
    %5538 = vmax.xlane.f32.xlu0 %v5298
    %v5539 = vpop.xlane.xlu0 %5538
    %5540 = vmax.xlane.f32.xlu0 %v5299
    %v5541 = vpop.xlane.xlu0 %5540
    %5542 = vmax.xlane.f32.xlu0 %v5300
    %v5543 = vpop.xlane.xlu0 %5542
    %5544 = vmax.xlane.f32.xlu0 %v5301
    %v5545 = vpop.xlane.xlu0 %5544
    %5546 = vmax.xlane.f32.xlu0 %v5302
    %v5547 = vpop.xlane.xlu0 %5546
    %5548 = vmax.xlane.f32.xlu0 %v5303
    %v5549 = vpop.xlane.xlu0 %5548
    %5550 = vmax.xlane.f32.xlu0 %v5304
    %v5551 = vpop.xlane.xlu0 %5550
    %5552 = vmax.xlane.f32.xlu0 %v5305
    %v5553 = vpop.xlane.xlu0 %5552
    %5554 = vmax.xlane.f32.xlu0 %v5306
    %v5555 = vpop.xlane.xlu0 %5554
    %5556 = vmax.xlane.f32.xlu0 %v5307
    %v5557 = vpop.xlane.xlu0 %5556
    %5558 = vmax.xlane.f32.xlu0 %v5308
    %v5559 = vpop.xlane.xlu0 %5558
    %5560 = vmax.xlane.f32.xlu0 %v5309
    %v5561 = vpop.xlane.xlu0 %5560
    %5562 = vmax.xlane.f32.xlu0 %v5310
    %v5563 = vpop.xlane.xlu0 %5562
    %5564 = vmax.xlane.f32.xlu0 %v5311
    %v5565 = vpop.xlane.xlu0 %5564
    %5566 = vmax.xlane.f32.xlu0 %v5312
    %v5567 = vpop.xlane.xlu0 %5566
    %5568 = vmax.xlane.f32.xlu0 %v5313
    %v5569 = vpop.xlane.xlu0 %5568
    %vm5570 = vcmp.eq.f32.partialorder %v1468, %v5315
    %vm5571 = vcmp.eq.f32.partialorder %v1473, %v5317
    %vm5572 = vcmp.eq.f32.partialorder %v1478, %v5319
    %vm5573 = vcmp.eq.f32.partialorder %v1483, %v5321
    %vm5574 = vcmp.eq.f32.partialorder %v1488, %v5323
    %vm5575 = vcmp.eq.f32.partialorder %v1493, %v5325
    %vm5576 = vcmp.eq.f32.partialorder %v1498, %v5327
    %vm5577 = vcmp.eq.f32.partialorder %v1503, %v5329
    %vm5578 = vcmp.eq.f32.partialorder %v1508, %v5331
    %vm5579 = vcmp.eq.f32.partialorder %v1513, %v5333
    %vm5580 = vcmp.eq.f32.partialorder %v1518, %v5335
    %vm5581 = vcmp.eq.f32.partialorder %v1523, %v5337
    %vm5582 = vcmp.eq.f32.partialorder %v1528, %v5339
    %vm5583 = vcmp.eq.f32.partialorder %v1533, %v5341
    %vm5584 = vcmp.eq.f32.partialorder %v1538, %v5343
    %vm5585 = vcmp.eq.f32.partialorder %v1543, %v5345
    %vm5586 = vcmp.eq.f32.partialorder %v1548, %v5347
    %vm5587 = vcmp.eq.f32.partialorder %v1553, %v5349
    %vm5588 = vcmp.eq.f32.partialorder %v1558, %v5351
    %vm5589 = vcmp.eq.f32.partialorder %v1563, %v5353
    %vm5590 = vcmp.eq.f32.partialorder %v1568, %v5355
    %vm5591 = vcmp.eq.f32.partialorder %v1573, %v5357
    %vm5592 = vcmp.eq.f32.partialorder %v1578, %v5359
    %vm5593 = vcmp.eq.f32.partialorder %v1583, %v5361
    %vm5594 = vcmp.eq.f32.partialorder %v1588, %v5363
    %vm5595 = vcmp.eq.f32.partialorder %v1593, %v5365
    %vm5596 = vcmp.eq.f32.partialorder %v1598, %v5367
    %vm5597 = vcmp.eq.f32.partialorder %v1603, %v5369
    %vm5598 = vcmp.eq.f32.partialorder %v1608, %v5371
    %vm5599 = vcmp.eq.f32.partialorder %v1613, %v5373
    %vm5600 = vcmp.eq.f32.partialorder %v1618, %v5375
    %vm5601 = vcmp.eq.f32.partialorder %v1623, %v5377
    %vm5602 = vcmp.eq.f32.partialorder %v1628, %v5379
    %vm5603 = vcmp.eq.f32.partialorder %v1633, %v5381
    %vm5604 = vcmp.eq.f32.partialorder %v1638, %v5383
    %vm5605 = vcmp.eq.f32.partialorder %v1643, %v5385
    %vm5606 = vcmp.eq.f32.partialorder %v1648, %v5387
    %vm5607 = vcmp.eq.f32.partialorder %v1653, %v5389
    %vm5608 = vcmp.eq.f32.partialorder %v1658, %v5391
    %vm5609 = vcmp.eq.f32.partialorder %v1663, %v5393
    %vm5610 = vcmp.eq.f32.partialorder %v1668, %v5395
    %vm5611 = vcmp.eq.f32.partialorder %v1673, %v5397
    %vm5612 = vcmp.eq.f32.partialorder %v1678, %v5399
    %vm5613 = vcmp.eq.f32.partialorder %v1683, %v5401
    %vm5614 = vcmp.eq.f32.partialorder %v1688, %v5403
    %vm5615 = vcmp.eq.f32.partialorder %v1693, %v5405
    %vm5616 = vcmp.eq.f32.partialorder %v1698, %v5407
    %vm5617 = vcmp.eq.f32.partialorder %v1703, %v5409
    %vm5618 = vcmp.eq.f32.partialorder %v1708, %v5411
    %vm5619 = vcmp.eq.f32.partialorder %v1713, %v5413
    %vm5620 = vcmp.eq.f32.partialorder %v1718, %v5415
    %vm5621 = vcmp.eq.f32.partialorder %v1723, %v5417
    %vm5622 = vcmp.eq.f32.partialorder %v1728, %v5419
    %vm5623 = vcmp.eq.f32.partialorder %v1733, %v5421
    %vm5624 = vcmp.eq.f32.partialorder %v1738, %v5423
    %vm5625 = vcmp.eq.f32.partialorder %v1743, %v5425
    %vm5626 = vcmp.eq.f32.partialorder %v1748, %v5427
    %vm5627 = vcmp.eq.f32.partialorder %v1753, %v5429
    %vm5628 = vcmp.eq.f32.partialorder %v1758, %v5431
    %vm5629 = vcmp.eq.f32.partialorder %v1763, %v5433
    %vm5630 = vcmp.eq.f32.partialorder %v1768, %v5435
    %vm5631 = vcmp.eq.f32.partialorder %v1773, %v5437
    %vm5632 = vcmp.eq.f32.partialorder %v1778, %v5439
    %vm5633 = vcmp.eq.f32.partialorder %v1783, %v5441
    %vm5634 = vcmp.eq.f32.partialorder %v1788, %v5443
    %vm5635 = vcmp.eq.f32.partialorder %v1793, %v5445
    %vm5636 = vcmp.eq.f32.partialorder %v1798, %v5447
    %vm5637 = vcmp.eq.f32.partialorder %v1803, %v5449
    %vm5638 = vcmp.eq.f32.partialorder %v1808, %v5451
    %vm5639 = vcmp.eq.f32.partialorder %v1813, %v5453
    %vm5640 = vcmp.eq.f32.partialorder %v1818, %v5455
    %vm5641 = vcmp.eq.f32.partialorder %v1823, %v5457
    %vm5642 = vcmp.eq.f32.partialorder %v1828, %v5459
    %vm5643 = vcmp.eq.f32.partialorder %v1833, %v5461
    %vm5644 = vcmp.eq.f32.partialorder %v1838, %v5463
    %vm5645 = vcmp.eq.f32.partialorder %v1843, %v5465
    %vm5646 = vcmp.eq.f32.partialorder %v1848, %v5467
    %vm5647 = vcmp.eq.f32.partialorder %v1853, %v5469
    %vm5648 = vcmp.eq.f32.partialorder %v1858, %v5471
    %vm5649 = vcmp.eq.f32.partialorder %v1863, %v5473
    %vm5650 = vcmp.eq.f32.partialorder %v1868, %v5475
    %vm5651 = vcmp.eq.f32.partialorder %v1873, %v5477
    %vm5652 = vcmp.eq.f32.partialorder %v1878, %v5479
    %vm5653 = vcmp.eq.f32.partialorder %v1883, %v5481
    %vm5654 = vcmp.eq.f32.partialorder %v1888, %v5483
    %vm5655 = vcmp.eq.f32.partialorder %v1893, %v5485
    %vm5656 = vcmp.eq.f32.partialorder %v1898, %v5487
    %vm5657 = vcmp.eq.f32.partialorder %v1903, %v5489
    %vm5658 = vcmp.eq.f32.partialorder %v1908, %v5491
    %vm5659 = vcmp.eq.f32.partialorder %v1913, %v5493
    %vm5660 = vcmp.eq.f32.partialorder %v1918, %v5495
    %vm5661 = vcmp.eq.f32.partialorder %v1923, %v5497
    %vm5662 = vcmp.eq.f32.partialorder %v1928, %v5499
    %vm5663 = vcmp.eq.f32.partialorder %v1933, %v5501
    %vm5664 = vcmp.eq.f32.partialorder %v1938, %v5503
    %vm5665 = vcmp.eq.f32.partialorder %v1943, %v5505
    %vm5666 = vcmp.eq.f32.partialorder %v1948, %v5507
    %vm5667 = vcmp.eq.f32.partialorder %v1953, %v5509
    %vm5668 = vcmp.eq.f32.partialorder %v1958, %v5511
    %vm5669 = vcmp.eq.f32.partialorder %v1963, %v5513
    %vm5670 = vcmp.eq.f32.partialorder %v1968, %v5515
    %vm5671 = vcmp.eq.f32.partialorder %v1973, %v5517
    %vm5672 = vcmp.eq.f32.partialorder %v1978, %v5519
    %vm5673 = vcmp.eq.f32.partialorder %v1983, %v5521
    %vm5674 = vcmp.eq.f32.partialorder %v1988, %v5523
    %vm5675 = vcmp.eq.f32.partialorder %v1993, %v5525
    %vm5676 = vcmp.eq.f32.partialorder %v1998, %v5527
    %vm5677 = vcmp.eq.f32.partialorder %v2003, %v5529
    %vm5678 = vcmp.eq.f32.partialorder %v2008, %v5531
    %vm5679 = vcmp.eq.f32.partialorder %v2013, %v5533
    %vm5680 = vcmp.eq.f32.partialorder %v2018, %v5535
    %vm5681 = vcmp.eq.f32.partialorder %v2023, %v5537
    %vm5682 = vcmp.eq.f32.partialorder %v2028, %v5539
    %vm5683 = vcmp.eq.f32.partialorder %v2033, %v5541
    %vm5684 = vcmp.eq.f32.partialorder %v2038, %v5543
    %vm5685 = vcmp.eq.f32.partialorder %v2043, %v5545
    %vm5686 = vcmp.eq.f32.partialorder %v2048, %v5547
    %vm5687 = vcmp.eq.f32.partialorder %v2053, %v5549
    %vm5688 = vcmp.eq.f32.partialorder %v2058, %v5551
    %vm5689 = vcmp.eq.f32.partialorder %v2063, %v5553
    %vm5690 = vcmp.eq.f32.partialorder %v2068, %v5555
    %vm5691 = vcmp.eq.f32.partialorder %v2073, %v5557
    %vm5692 = vcmp.eq.f32.partialorder %v2078, %v5559
    %vm5693 = vcmp.eq.f32.partialorder %v2083, %v5561
    %vm5694 = vcmp.eq.f32.partialorder %v2088, %v5563
    %vm5695 = vcmp.eq.f32.partialorder %v2093, %v5565
    %vm5696 = vcmp.eq.f32.partialorder %v2098, %v5567
    %vm5697 = vcmp.eq.f32.partialorder %v2103, %v5569
    %vm5698 = vmand %vm5185, %vm5570
    %vm5699 = vmand %vm5185, %vm5571
    %vm5700 = vmand %vm5185, %vm5572
    %vm5701 = vmand %vm5185, %vm5573
    %vm5702 = vmand %vm5185, %vm5574
    %vm5703 = vmand %vm5185, %vm5575
    %vm5704 = vmand %vm5185, %vm5576
    %vm5705 = vmand %vm5185, %vm5577
    %vm5706 = vmand %vm5185, %vm5578
    %vm5707 = vmand %vm5185, %vm5579
    %vm5708 = vmand %vm5185, %vm5580
    %vm5709 = vmand %vm5185, %vm5581
    %vm5710 = vmand %vm5185, %vm5582
    %vm5711 = vmand %vm5185, %vm5583
    %vm5712 = vmand %vm5185, %vm5584
    %vm5713 = vmand %vm5185, %vm5585
    %vm5714 = vmand %vm5185, %vm5586
    %vm5715 = vmand %vm5185, %vm5587
    %vm5716 = vmand %vm5185, %vm5588
    %vm5717 = vmand %vm5185, %vm5589
    %vm5718 = vmand %vm5185, %vm5590
    %vm5719 = vmand %vm5185, %vm5591
    %vm5720 = vmand %vm5185, %vm5592
    %vm5721 = vmand %vm5185, %vm5593
    %vm5722 = vmand %vm5185, %vm5594
    %vm5723 = vmand %vm5185, %vm5595
    %vm5724 = vmand %vm5185, %vm5596
    %vm5725 = vmand %vm5185, %vm5597
    %vm5726 = vmand %vm5185, %vm5598
    %vm5727 = vmand %vm5185, %vm5599
    %vm5728 = vmand %vm5185, %vm5600
    %vm5729 = vmand %vm5185, %vm5601
    %vm5730 = vmand %vm5185, %vm5602
    %vm5731 = vmand %vm5185, %vm5603
    %vm5732 = vmand %vm5185, %vm5604
    %vm5733 = vmand %vm5185, %vm5605
    %vm5734 = vmand %vm5185, %vm5606
    %vm5735 = vmand %vm5185, %vm5607
    %vm5736 = vmand %vm5185, %vm5608
    %vm5737 = vmand %vm5185, %vm5609
    %vm5738 = vmand %vm5185, %vm5610
    %vm5739 = vmand %vm5185, %vm5611
    %vm5740 = vmand %vm5185, %vm5612
    %vm5741 = vmand %vm5185, %vm5613
    %vm5742 = vmand %vm5185, %vm5614
    %vm5743 = vmand %vm5185, %vm5615
    %vm5744 = vmand %vm5185, %vm5616
    %vm5745 = vmand %vm5185, %vm5617
    %vm5746 = vmand %vm5185, %vm5618
    %vm5747 = vmand %vm5185, %vm5619
    %vm5748 = vmand %vm5185, %vm5620
    %vm5749 = vmand %vm5185, %vm5621
    %vm5750 = vmand %vm5185, %vm5622
    %vm5751 = vmand %vm5185, %vm5623
    %vm5752 = vmand %vm5185, %vm5624
    %vm5753 = vmand %vm5185, %vm5625
    %vm5754 = vmand %vm5185, %vm5626
    %vm5755 = vmand %vm5185, %vm5627
    %vm5756 = vmand %vm5185, %vm5628
    %vm5757 = vmand %vm5185, %vm5629
    %vm5758 = vmand %vm5185, %vm5630
    %vm5759 = vmand %vm5185, %vm5631
    %vm5760 = vmand %vm5185, %vm5632
    %vm5761 = vmand %vm5185, %vm5633
    %vm5762 = vmand %vm5185, %vm5634
    %vm5763 = vmand %vm5185, %vm5635
    %vm5764 = vmand %vm5185, %vm5636
    %vm5765 = vmand %vm5185, %vm5637
    %vm5766 = vmand %vm5185, %vm5638
    %vm5767 = vmand %vm5185, %vm5639
    %vm5768 = vmand %vm5185, %vm5640
    %vm5769 = vmand %vm5185, %vm5641
    %vm5770 = vmand %vm5185, %vm5642
    %vm5771 = vmand %vm5185, %vm5643
    %vm5772 = vmand %vm5185, %vm5644
    %vm5773 = vmand %vm5185, %vm5645
    %vm5774 = vmand %vm5185, %vm5646
    %vm5775 = vmand %vm5185, %vm5647
    %vm5776 = vmand %vm5185, %vm5648
    %vm5777 = vmand %vm5185, %vm5649
    %vm5778 = vmand %vm5185, %vm5650
    %vm5779 = vmand %vm5185, %vm5651
    %vm5780 = vmand %vm5185, %vm5652
    %vm5781 = vmand %vm5185, %vm5653
    %vm5782 = vmand %vm5185, %vm5654
    %vm5783 = vmand %vm5185, %vm5655
    %vm5784 = vmand %vm5185, %vm5656
    %vm5785 = vmand %vm5185, %vm5657
    %vm5786 = vmand %vm5185, %vm5658
    %vm5787 = vmand %vm5185, %vm5659
    %vm5788 = vmand %vm5185, %vm5660
    %vm5789 = vmand %vm5185, %vm5661
    %vm5790 = vmand %vm5185, %vm5662
    %vm5791 = vmand %vm5185, %vm5663
    %vm5792 = vmand %vm5185, %vm5664
    %vm5793 = vmand %vm5185, %vm5665
    %vm5794 = vmand %vm5185, %vm5666
    %vm5795 = vmand %vm5185, %vm5667
    %vm5796 = vmand %vm5185, %vm5668
    %vm5797 = vmand %vm5185, %vm5669
    %vm5798 = vmand %vm5185, %vm5670
    %vm5799 = vmand %vm5185, %vm5671
    %vm5800 = vmand %vm5185, %vm5672
    %vm5801 = vmand %vm5185, %vm5673
    %vm5802 = vmand %vm5185, %vm5674
    %vm5803 = vmand %vm5185, %vm5675
    %vm5804 = vmand %vm5185, %vm5676
    %vm5805 = vmand %vm5185, %vm5677
    %vm5806 = vmand %vm5185, %vm5678
    %vm5807 = vmand %vm5185, %vm5679
    %vm5808 = vmand %vm5185, %vm5680
    %vm5809 = vmand %vm5185, %vm5681
    %vm5810 = vmand %vm5185, %vm5682
    %vm5811 = vmand %vm5185, %vm5683
    %vm5812 = vmand %vm5185, %vm5684
    %vm5813 = vmand %vm5185, %vm5685
    %vm5814 = vmand %vm5185, %vm5686
    %vm5815 = vmand %vm5185, %vm5687
    %vm5816 = vmand %vm5185, %vm5688
    %vm5817 = vmand %vm5185, %vm5689
    %vm5818 = vmand %vm5185, %vm5690
    %vm5819 = vmand %vm5185, %vm5691
    %vm5820 = vmand %vm5185, %vm5692
    %vm5821 = vmand %vm5185, %vm5693
    %vm5822 = vmand %vm5185, %vm5694
    %vm5823 = vmand %vm5185, %vm5695
    %vm5824 = vmand %vm5185, %vm5696
    %vm5825 = vmand %vm5185, %vm5697
    %v5826 = vsel %vm5698, %v2107, 128
    %v5827 = vsel %vm5699, %v2107, 128
    %v5828 = vsel %vm5700, %v2107, 128
    %v5829 = vsel %vm5701, %v2107, 128
    %v5830 = vsel %vm5702, %v2107, 128
    %v5831 = vsel %vm5703, %v2107, 128
    %v5832 = vsel %vm5704, %v2107, 128
    %v5833 = vsel %vm5705, %v2107, 128
    %v5834 = vsel %vm5706, %v2107, 128
    %v5835 = vsel %vm5707, %v2107, 128
    %v5836 = vsel %vm5708, %v2107, 128
    %v5837 = vsel %vm5709, %v2107, 128
    %v5838 = vsel %vm5710, %v2107, 128
    %v5839 = vsel %vm5711, %v2107, 128
    %v5840 = vsel %vm5712, %v2107, 128
    %v5841 = vsel %vm5713, %v2107, 128
    %v5842 = vsel %vm5714, %v2107, 128
    %v5843 = vsel %vm5715, %v2107, 128
    %v5844 = vsel %vm5716, %v2107, 128
    %v5845 = vsel %vm5717, %v2107, 128
    %v5846 = vsel %vm5718, %v2107, 128
    %v5847 = vsel %vm5719, %v2107, 128
    %v5848 = vsel %vm5720, %v2107, 128
    %v5849 = vsel %vm5721, %v2107, 128
    %v5850 = vsel %vm5722, %v2107, 128
    %v5851 = vsel %vm5723, %v2107, 128
    %v5852 = vsel %vm5724, %v2107, 128
    %v5853 = vsel %vm5725, %v2107, 128
    %v5854 = vsel %vm5726, %v2107, 128
    %v5855 = vsel %vm5727, %v2107, 128
    %v5856 = vsel %vm5728, %v2107, 128
    %v5857 = vsel %vm5729, %v2107, 128
    %v5858 = vsel %vm5730, %v2107, 128
    %v5859 = vsel %vm5731, %v2107, 128
    %v5860 = vsel %vm5732, %v2107, 128
    %v5861 = vsel %vm5733, %v2107, 128
    %v5862 = vsel %vm5734, %v2107, 128
    %v5863 = vsel %vm5735, %v2107, 128
    %v5864 = vsel %vm5736, %v2107, 128
    %v5865 = vsel %vm5737, %v2107, 128
    %v5866 = vsel %vm5738, %v2107, 128
    %v5867 = vsel %vm5739, %v2107, 128
    %v5868 = vsel %vm5740, %v2107, 128
    %v5869 = vsel %vm5741, %v2107, 128
    %v5870 = vsel %vm5742, %v2107, 128
    %v5871 = vsel %vm5743, %v2107, 128
    %v5872 = vsel %vm5744, %v2107, 128
    %v5873 = vsel %vm5745, %v2107, 128
    %v5874 = vsel %vm5746, %v2107, 128
    %v5875 = vsel %vm5747, %v2107, 128
    %v5876 = vsel %vm5748, %v2107, 128
    %v5877 = vsel %vm5749, %v2107, 128
    %v5878 = vsel %vm5750, %v2107, 128
    %v5879 = vsel %vm5751, %v2107, 128
    %v5880 = vsel %vm5752, %v2107, 128
    %v5881 = vsel %vm5753, %v2107, 128
    %v5882 = vsel %vm5754, %v2107, 128
    %v5883 = vsel %vm5755, %v2107, 128
    %v5884 = vsel %vm5756, %v2107, 128
    %v5885 = vsel %vm5757, %v2107, 128
    %v5886 = vsel %vm5758, %v2107, 128
    %v5887 = vsel %vm5759, %v2107, 128
    %v5888 = vsel %vm5760, %v2107, 128
    %v5889 = vsel %vm5761, %v2107, 128
    %v5890 = vsel %vm5762, %v2107, 128
    %v5891 = vsel %vm5763, %v2107, 128
    %v5892 = vsel %vm5764, %v2107, 128
    %v5893 = vsel %vm5765, %v2107, 128
    %v5894 = vsel %vm5766, %v2107, 128
    %v5895 = vsel %vm5767, %v2107, 128
    %v5896 = vsel %vm5768, %v2107, 128
    %v5897 = vsel %vm5769, %v2107, 128
    %v5898 = vsel %vm5770, %v2107, 128
    %v5899 = vsel %vm5771, %v2107, 128
    %v5900 = vsel %vm5772, %v2107, 128
    %v5901 = vsel %vm5773, %v2107, 128
    %v5902 = vsel %vm5774, %v2107, 128
    %v5903 = vsel %vm5775, %v2107, 128
    %v5904 = vsel %vm5776, %v2107, 128
    %v5905 = vsel %vm5777, %v2107, 128
    %v5906 = vsel %vm5778, %v2107, 128
    %v5907 = vsel %vm5779, %v2107, 128
    %v5908 = vsel %vm5780, %v2107, 128
    %v5909 = vsel %vm5781, %v2107, 128
    %v5910 = vsel %vm5782, %v2107, 128
    %v5911 = vsel %vm5783, %v2107, 128
    %v5912 = vsel %vm5784, %v2107, 128
    %v5913 = vsel %vm5785, %v2107, 128
    %v5914 = vsel %vm5786, %v2107, 128
    %v5915 = vsel %vm5787, %v2107, 128
    %v5916 = vsel %vm5788, %v2107, 128
    %v5917 = vsel %vm5789, %v2107, 128
    %v5918 = vsel %vm5790, %v2107, 128
    %v5919 = vsel %vm5791, %v2107, 128
    %v5920 = vsel %vm5792, %v2107, 128
    %v5921 = vsel %vm5793, %v2107, 128
    %v5922 = vsel %vm5794, %v2107, 128
    %v5923 = vsel %vm5795, %v2107, 128
    %v5924 = vsel %vm5796, %v2107, 128
    %v5925 = vsel %vm5797, %v2107, 128
    %v5926 = vsel %vm5798, %v2107, 128
    %v5927 = vsel %vm5799, %v2107, 128
    %v5928 = vsel %vm5800, %v2107, 128
    %v5929 = vsel %vm5801, %v2107, 128
    %v5930 = vsel %vm5802, %v2107, 128
    %v5931 = vsel %vm5803, %v2107, 128
    %v5932 = vsel %vm5804, %v2107, 128
    %v5933 = vsel %vm5805, %v2107, 128
    %v5934 = vsel %vm5806, %v2107, 128
    %v5935 = vsel %vm5807, %v2107, 128
    %v5936 = vsel %vm5808, %v2107, 128
    %v5937 = vsel %vm5809, %v2107, 128
    %v5938 = vsel %vm5810, %v2107, 128
    %v5939 = vsel %vm5811, %v2107, 128
    %v5940 = vsel %vm5812, %v2107, 128
    %v5941 = vsel %vm5813, %v2107, 128
    %v5942 = vsel %vm5814, %v2107, 128
    %v5943 = vsel %vm5815, %v2107, 128
    %v5944 = vsel %vm5816, %v2107, 128
    %v5945 = vsel %vm5817, %v2107, 128
    %v5946 = vsel %vm5818, %v2107, 128
    %v5947 = vsel %vm5819, %v2107, 128
    %v5948 = vsel %vm5820, %v2107, 128
    %v5949 = vsel %vm5821, %v2107, 128
    %v5950 = vsel %vm5822, %v2107, 128
    %v5951 = vsel %vm5823, %v2107, 128
    %v5952 = vsel %vm5824, %v2107, 128
    %v5953 = vsel %vm5825, %v2107, 128
    %v5954 = vand.u32 %v5826, 65535
    %v5955 = vshra.s32 %v5826, 16
    %v5956 = vcvt.s32.f32 %v5954
    %v5957 = vcvt.s32.f32 %v5955
    %5958 = vmin.xlane.f32.xlu0 %v5957
    %v5959 = vpop.xlane.xlu0 %5958
    %vm5960 = vcmp.eq.f32.partialorder %v5957, %v5959
    %v5961 = vsel %vm5960, %v5956, inf
    %5962 = vmin.xlane.f32.xlu0 %v5961
    %v5963 = vpop.xlane.xlu0 %5962
    %v5964 = vcvt.f32.s32 %v5963
    %v5965 = vcvt.f32.s32 %v5959
    %v5966 = vshll.u32 %v5965, 16
    %v5967 = vadd.s32 %v5966, %v5964
    %v5968 = vand.u32 %v5827, 65535
    %v5969 = vshra.s32 %v5827, 16
    %v5970 = vcvt.s32.f32 %v5968
    %v5971 = vcvt.s32.f32 %v5969
    %5972 = vmin.xlane.f32.xlu0 %v5971
    %v5973 = vpop.xlane.xlu0 %5972
    %vm5974 = vcmp.eq.f32.partialorder %v5971, %v5973
    %v5975 = vsel %vm5974, %v5970, inf
    %5976 = vmin.xlane.f32.xlu0 %v5975
    %v5977 = vpop.xlane.xlu0 %5976
    %v5978 = vcvt.f32.s32 %v5977
    %v5979 = vcvt.f32.s32 %v5973
    %v5980 = vshll.u32 %v5979, 16
    %v5981 = vadd.s32 %v5980, %v5978
    %v5982 = vand.u32 %v5828, 65535
    %v5983 = vshra.s32 %v5828, 16
    %v5984 = vcvt.s32.f32 %v5982
    %v5985 = vcvt.s32.f32 %v5983
    %5986 = vmin.xlane.f32.xlu0 %v5985
    %v5987 = vpop.xlane.xlu0 %5986
    %vm5988 = vcmp.eq.f32.partialorder %v5985, %v5987
    %v5989 = vsel %vm5988, %v5984, inf
    %5990 = vmin.xlane.f32.xlu0 %v5989
    %v5991 = vpop.xlane.xlu0 %5990
    %v5992 = vcvt.f32.s32 %v5991
    %v5993 = vcvt.f32.s32 %v5987
    %v5994 = vshll.u32 %v5993, 16
    %v5995 = vadd.s32 %v5994, %v5992
    %v5996 = vand.u32 %v5829, 65535
    %v5997 = vshra.s32 %v5829, 16
    %v5998 = vcvt.s32.f32 %v5996
    %v5999 = vcvt.s32.f32 %v5997
    %6000 = vmin.xlane.f32.xlu0 %v5999
    %v6001 = vpop.xlane.xlu0 %6000
    %vm6002 = vcmp.eq.f32.partialorder %v5999, %v6001
    %v6003 = vsel %vm6002, %v5998, inf
    %6004 = vmin.xlane.f32.xlu0 %v6003
    %v6005 = vpop.xlane.xlu0 %6004
    %v6006 = vcvt.f32.s32 %v6005
    %v6007 = vcvt.f32.s32 %v6001
    %v6008 = vshll.u32 %v6007, 16
    %v6009 = vadd.s32 %v6008, %v6006
    %v6010 = vand.u32 %v5830, 65535
    %v6011 = vshra.s32 %v5830, 16
    %v6012 = vcvt.s32.f32 %v6010
    %v6013 = vcvt.s32.f32 %v6011
    %6014 = vmin.xlane.f32.xlu0 %v6013
    %v6015 = vpop.xlane.xlu0 %6014
    %vm6016 = vcmp.eq.f32.partialorder %v6013, %v6015
    %v6017 = vsel %vm6016, %v6012, inf
    %6018 = vmin.xlane.f32.xlu0 %v6017
    %v6019 = vpop.xlane.xlu0 %6018
    %v6020 = vcvt.f32.s32 %v6019
    %v6021 = vcvt.f32.s32 %v6015
    %v6022 = vshll.u32 %v6021, 16
    %v6023 = vadd.s32 %v6022, %v6020
    %v6024 = vand.u32 %v5831, 65535
    %v6025 = vshra.s32 %v5831, 16
    %v6026 = vcvt.s32.f32 %v6024
    %v6027 = vcvt.s32.f32 %v6025
    %6028 = vmin.xlane.f32.xlu0 %v6027
    %v6029 = vpop.xlane.xlu0 %6028
    %vm6030 = vcmp.eq.f32.partialorder %v6027, %v6029
    %v6031 = vsel %vm6030, %v6026, inf
    %6032 = vmin.xlane.f32.xlu0 %v6031
    %v6033 = vpop.xlane.xlu0 %6032
    %v6034 = vcvt.f32.s32 %v6033
    %v6035 = vcvt.f32.s32 %v6029
    %v6036 = vshll.u32 %v6035, 16
    %v6037 = vadd.s32 %v6036, %v6034
    %v6038 = vand.u32 %v5832, 65535
    %v6039 = vshra.s32 %v5832, 16
    %v6040 = vcvt.s32.f32 %v6038
    %v6041 = vcvt.s32.f32 %v6039
    %6042 = vmin.xlane.f32.xlu0 %v6041
    %v6043 = vpop.xlane.xlu0 %6042
    %vm6044 = vcmp.eq.f32.partialorder %v6041, %v6043
    %v6045 = vsel %vm6044, %v6040, inf
    %6046 = vmin.xlane.f32.xlu0 %v6045
    %v6047 = vpop.xlane.xlu0 %6046
    %v6048 = vcvt.f32.s32 %v6047
    %v6049 = vcvt.f32.s32 %v6043
    %v6050 = vshll.u32 %v6049, 16
    %v6051 = vadd.s32 %v6050, %v6048
    %v6052 = vand.u32 %v5833, 65535
    %v6053 = vshra.s32 %v5833, 16
    %v6054 = vcvt.s32.f32 %v6052
    %v6055 = vcvt.s32.f32 %v6053
    %6056 = vmin.xlane.f32.xlu0 %v6055
    %v6057 = vpop.xlane.xlu0 %6056
    %vm6058 = vcmp.eq.f32.partialorder %v6055, %v6057
    %v6059 = vsel %vm6058, %v6054, inf
    %6060 = vmin.xlane.f32.xlu0 %v6059
    %v6061 = vpop.xlane.xlu0 %6060
    %v6062 = vcvt.f32.s32 %v6061
    %v6063 = vcvt.f32.s32 %v6057
    %v6064 = vshll.u32 %v6063, 16
    %v6065 = vadd.s32 %v6064, %v6062
    %v6066 = vand.u32 %v5834, 65535
    %v6067 = vshra.s32 %v5834, 16
    %v6068 = vcvt.s32.f32 %v6066
    %v6069 = vcvt.s32.f32 %v6067
    %6070 = vmin.xlane.f32.xlu0 %v6069
    %v6071 = vpop.xlane.xlu0 %6070
    %vm6072 = vcmp.eq.f32.partialorder %v6069, %v6071
    %v6073 = vsel %vm6072, %v6068, inf
    %6074 = vmin.xlane.f32.xlu0 %v6073
    %v6075 = vpop.xlane.xlu0 %6074
    %v6076 = vcvt.f32.s32 %v6075
    %v6077 = vcvt.f32.s32 %v6071
    %v6078 = vshll.u32 %v6077, 16
    %v6079 = vadd.s32 %v6078, %v6076
    %v6080 = vand.u32 %v5835, 65535
    %v6081 = vshra.s32 %v5835, 16
    %v6082 = vcvt.s32.f32 %v6080
    %v6083 = vcvt.s32.f32 %v6081
    %6084 = vmin.xlane.f32.xlu0 %v6083
    %v6085 = vpop.xlane.xlu0 %6084
    %vm6086 = vcmp.eq.f32.partialorder %v6083, %v6085
    %v6087 = vsel %vm6086, %v6082, inf
    %6088 = vmin.xlane.f32.xlu0 %v6087
    %v6089 = vpop.xlane.xlu0 %6088
    %v6090 = vcvt.f32.s32 %v6089
    %v6091 = vcvt.f32.s32 %v6085
    %v6092 = vshll.u32 %v6091, 16
    %v6093 = vadd.s32 %v6092, %v6090
    %v6094 = vand.u32 %v5836, 65535
    %v6095 = vshra.s32 %v5836, 16
    %v6096 = vcvt.s32.f32 %v6094
    %v6097 = vcvt.s32.f32 %v6095
    %6098 = vmin.xlane.f32.xlu0 %v6097
    %v6099 = vpop.xlane.xlu0 %6098
    %vm6100 = vcmp.eq.f32.partialorder %v6097, %v6099
    %v6101 = vsel %vm6100, %v6096, inf
    %6102 = vmin.xlane.f32.xlu0 %v6101
    %v6103 = vpop.xlane.xlu0 %6102
    %v6104 = vcvt.f32.s32 %v6103
    %v6105 = vcvt.f32.s32 %v6099
    %v6106 = vshll.u32 %v6105, 16
    %v6107 = vadd.s32 %v6106, %v6104
    %v6108 = vand.u32 %v5837, 65535
    %v6109 = vshra.s32 %v5837, 16
    %v6110 = vcvt.s32.f32 %v6108
    %v6111 = vcvt.s32.f32 %v6109
    %6112 = vmin.xlane.f32.xlu0 %v6111
    %v6113 = vpop.xlane.xlu0 %6112
    %vm6114 = vcmp.eq.f32.partialorder %v6111, %v6113
    %v6115 = vsel %vm6114, %v6110, inf
    %6116 = vmin.xlane.f32.xlu0 %v6115
    %v6117 = vpop.xlane.xlu0 %6116
    %v6118 = vcvt.f32.s32 %v6117
    %v6119 = vcvt.f32.s32 %v6113
    %v6120 = vshll.u32 %v6119, 16
    %v6121 = vadd.s32 %v6120, %v6118
    %v6122 = vand.u32 %v5838, 65535
    %v6123 = vshra.s32 %v5838, 16
    %v6124 = vcvt.s32.f32 %v6122
    %v6125 = vcvt.s32.f32 %v6123
    %6126 = vmin.xlane.f32.xlu0 %v6125
    %v6127 = vpop.xlane.xlu0 %6126
    %vm6128 = vcmp.eq.f32.partialorder %v6125, %v6127
    %v6129 = vsel %vm6128, %v6124, inf
    %6130 = vmin.xlane.f32.xlu0 %v6129
    %v6131 = vpop.xlane.xlu0 %6130
    %v6132 = vcvt.f32.s32 %v6131
    %v6133 = vcvt.f32.s32 %v6127
    %v6134 = vshll.u32 %v6133, 16
    %v6135 = vadd.s32 %v6134, %v6132
    %v6136 = vand.u32 %v5839, 65535
    %v6137 = vshra.s32 %v5839, 16
    %v6138 = vcvt.s32.f32 %v6136
    %v6139 = vcvt.s32.f32 %v6137
    %6140 = vmin.xlane.f32.xlu0 %v6139
    %v6141 = vpop.xlane.xlu0 %6140
    %vm6142 = vcmp.eq.f32.partialorder %v6139, %v6141
    %v6143 = vsel %vm6142, %v6138, inf
    %6144 = vmin.xlane.f32.xlu0 %v6143
    %v6145 = vpop.xlane.xlu0 %6144
    %v6146 = vcvt.f32.s32 %v6145
    %v6147 = vcvt.f32.s32 %v6141
    %v6148 = vshll.u32 %v6147, 16
    %v6149 = vadd.s32 %v6148, %v6146
    %v6150 = vand.u32 %v5840, 65535
    %v6151 = vshra.s32 %v5840, 16
    %v6152 = vcvt.s32.f32 %v6150
    %v6153 = vcvt.s32.f32 %v6151
    %6154 = vmin.xlane.f32.xlu0 %v6153
    %v6155 = vpop.xlane.xlu0 %6154
    %vm6156 = vcmp.eq.f32.partialorder %v6153, %v6155
    %v6157 = vsel %vm6156, %v6152, inf
    %6158 = vmin.xlane.f32.xlu0 %v6157
    %v6159 = vpop.xlane.xlu0 %6158
    %v6160 = vcvt.f32.s32 %v6159
    %v6161 = vcvt.f32.s32 %v6155
    %v6162 = vshll.u32 %v6161, 16
    %v6163 = vadd.s32 %v6162, %v6160
    %v6164 = vand.u32 %v5841, 65535
    %v6165 = vshra.s32 %v5841, 16
    %v6166 = vcvt.s32.f32 %v6164
    %v6167 = vcvt.s32.f32 %v6165
    %6168 = vmin.xlane.f32.xlu0 %v6167
    %v6169 = vpop.xlane.xlu0 %6168
    %vm6170 = vcmp.eq.f32.partialorder %v6167, %v6169
    %v6171 = vsel %vm6170, %v6166, inf
    %6172 = vmin.xlane.f32.xlu0 %v6171
    %v6173 = vpop.xlane.xlu0 %6172
    %v6174 = vcvt.f32.s32 %v6173
    %v6175 = vcvt.f32.s32 %v6169
    %v6176 = vshll.u32 %v6175, 16
    %v6177 = vadd.s32 %v6176, %v6174
    %v6178 = vand.u32 %v5842, 65535
    %v6179 = vshra.s32 %v5842, 16
    %v6180 = vcvt.s32.f32 %v6178
    %v6181 = vcvt.s32.f32 %v6179
    %6182 = vmin.xlane.f32.xlu0 %v6181
    %v6183 = vpop.xlane.xlu0 %6182
    %vm6184 = vcmp.eq.f32.partialorder %v6181, %v6183
    %v6185 = vsel %vm6184, %v6180, inf
    %6186 = vmin.xlane.f32.xlu0 %v6185
    %v6187 = vpop.xlane.xlu0 %6186
    %v6188 = vcvt.f32.s32 %v6187
    %v6189 = vcvt.f32.s32 %v6183
    %v6190 = vshll.u32 %v6189, 16
    %v6191 = vadd.s32 %v6190, %v6188
    %v6192 = vand.u32 %v5843, 65535
    %v6193 = vshra.s32 %v5843, 16
    %v6194 = vcvt.s32.f32 %v6192
    %v6195 = vcvt.s32.f32 %v6193
    %6196 = vmin.xlane.f32.xlu0 %v6195
    %v6197 = vpop.xlane.xlu0 %6196
    %vm6198 = vcmp.eq.f32.partialorder %v6195, %v6197
    %v6199 = vsel %vm6198, %v6194, inf
    %6200 = vmin.xlane.f32.xlu0 %v6199
    %v6201 = vpop.xlane.xlu0 %6200
    %v6202 = vcvt.f32.s32 %v6201
    %v6203 = vcvt.f32.s32 %v6197
    %v6204 = vshll.u32 %v6203, 16
    %v6205 = vadd.s32 %v6204, %v6202
    %v6206 = vand.u32 %v5844, 65535
    %v6207 = vshra.s32 %v5844, 16
    %v6208 = vcvt.s32.f32 %v6206
    %v6209 = vcvt.s32.f32 %v6207
    %6210 = vmin.xlane.f32.xlu0 %v6209
    %v6211 = vpop.xlane.xlu0 %6210
    %vm6212 = vcmp.eq.f32.partialorder %v6209, %v6211
    %v6213 = vsel %vm6212, %v6208, inf
    %6214 = vmin.xlane.f32.xlu0 %v6213
    %v6215 = vpop.xlane.xlu0 %6214
    %v6216 = vcvt.f32.s32 %v6215
    %v6217 = vcvt.f32.s32 %v6211
    %v6218 = vshll.u32 %v6217, 16
    %v6219 = vadd.s32 %v6218, %v6216
    %v6220 = vand.u32 %v5845, 65535
    %v6221 = vshra.s32 %v5845, 16
    %v6222 = vcvt.s32.f32 %v6220
    %v6223 = vcvt.s32.f32 %v6221
    %6224 = vmin.xlane.f32.xlu0 %v6223
    %v6225 = vpop.xlane.xlu0 %6224
    %vm6226 = vcmp.eq.f32.partialorder %v6223, %v6225
    %v6227 = vsel %vm6226, %v6222, inf
    %6228 = vmin.xlane.f32.xlu0 %v6227
    %v6229 = vpop.xlane.xlu0 %6228
    %v6230 = vcvt.f32.s32 %v6229
    %v6231 = vcvt.f32.s32 %v6225
    %v6232 = vshll.u32 %v6231, 16
    %v6233 = vadd.s32 %v6232, %v6230
    %v6234 = vand.u32 %v5846, 65535
    %v6235 = vshra.s32 %v5846, 16
    %v6236 = vcvt.s32.f32 %v6234
    %v6237 = vcvt.s32.f32 %v6235
    %6238 = vmin.xlane.f32.xlu0 %v6237
    %v6239 = vpop.xlane.xlu0 %6238
    %vm6240 = vcmp.eq.f32.partialorder %v6237, %v6239
    %v6241 = vsel %vm6240, %v6236, inf
    %6242 = vmin.xlane.f32.xlu0 %v6241
    %v6243 = vpop.xlane.xlu0 %6242
    %v6244 = vcvt.f32.s32 %v6243
    %v6245 = vcvt.f32.s32 %v6239
    %v6246 = vshll.u32 %v6245, 16
    %v6247 = vadd.s32 %v6246, %v6244
    %v6248 = vand.u32 %v5847, 65535
    %v6249 = vshra.s32 %v5847, 16
    %v6250 = vcvt.s32.f32 %v6248
    %v6251 = vcvt.s32.f32 %v6249
    %6252 = vmin.xlane.f32.xlu0 %v6251
    %v6253 = vpop.xlane.xlu0 %6252
    %vm6254 = vcmp.eq.f32.partialorder %v6251, %v6253
    %v6255 = vsel %vm6254, %v6250, inf
    %6256 = vmin.xlane.f32.xlu0 %v6255
    %v6257 = vpop.xlane.xlu0 %6256
    %v6258 = vcvt.f32.s32 %v6257
    %v6259 = vcvt.f32.s32 %v6253
    %v6260 = vshll.u32 %v6259, 16
    %v6261 = vadd.s32 %v6260, %v6258
    %v6262 = vand.u32 %v5848, 65535
    %v6263 = vshra.s32 %v5848, 16
    %v6264 = vcvt.s32.f32 %v6262
    %v6265 = vcvt.s32.f32 %v6263
    %6266 = vmin.xlane.f32.xlu0 %v6265
    %v6267 = vpop.xlane.xlu0 %6266
    %vm6268 = vcmp.eq.f32.partialorder %v6265, %v6267
    %v6269 = vsel %vm6268, %v6264, inf
    %6270 = vmin.xlane.f32.xlu0 %v6269
    %v6271 = vpop.xlane.xlu0 %6270
    %v6272 = vcvt.f32.s32 %v6271
    %v6273 = vcvt.f32.s32 %v6267
    %v6274 = vshll.u32 %v6273, 16
    %v6275 = vadd.s32 %v6274, %v6272
    %v6276 = vand.u32 %v5849, 65535
    %v6277 = vshra.s32 %v5849, 16
    %v6278 = vcvt.s32.f32 %v6276
    %v6279 = vcvt.s32.f32 %v6277
    %6280 = vmin.xlane.f32.xlu0 %v6279
    %v6281 = vpop.xlane.xlu0 %6280
    %vm6282 = vcmp.eq.f32.partialorder %v6279, %v6281
    %v6283 = vsel %vm6282, %v6278, inf
    %6284 = vmin.xlane.f32.xlu0 %v6283
    %v6285 = vpop.xlane.xlu0 %6284
    %v6286 = vcvt.f32.s32 %v6285
    %v6287 = vcvt.f32.s32 %v6281
    %v6288 = vshll.u32 %v6287, 16
    %v6289 = vadd.s32 %v6288, %v6286
    %v6290 = vand.u32 %v5850, 65535
    %v6291 = vshra.s32 %v5850, 16
    %v6292 = vcvt.s32.f32 %v6290
    %v6293 = vcvt.s32.f32 %v6291
    %6294 = vmin.xlane.f32.xlu0 %v6293
    %v6295 = vpop.xlane.xlu0 %6294
    %vm6296 = vcmp.eq.f32.partialorder %v6293, %v6295
    %v6297 = vsel %vm6296, %v6292, inf
    %6298 = vmin.xlane.f32.xlu0 %v6297
    %v6299 = vpop.xlane.xlu0 %6298
    %v6300 = vcvt.f32.s32 %v6299
    %v6301 = vcvt.f32.s32 %v6295
    %v6302 = vshll.u32 %v6301, 16
    %v6303 = vadd.s32 %v6302, %v6300
    %v6304 = vand.u32 %v5851, 65535
    %v6305 = vshra.s32 %v5851, 16
    %v6306 = vcvt.s32.f32 %v6304
    %v6307 = vcvt.s32.f32 %v6305
    %6308 = vmin.xlane.f32.xlu0 %v6307
    %v6309 = vpop.xlane.xlu0 %6308
    %vm6310 = vcmp.eq.f32.partialorder %v6307, %v6309
    %v6311 = vsel %vm6310, %v6306, inf
    %6312 = vmin.xlane.f32.xlu0 %v6311
    %v6313 = vpop.xlane.xlu0 %6312
    %v6314 = vcvt.f32.s32 %v6313
    %v6315 = vcvt.f32.s32 %v6309
    %v6316 = vshll.u32 %v6315, 16
    %v6317 = vadd.s32 %v6316, %v6314
    %v6318 = vand.u32 %v5852, 65535
    %v6319 = vshra.s32 %v5852, 16
    %v6320 = vcvt.s32.f32 %v6318
    %v6321 = vcvt.s32.f32 %v6319
    %6322 = vmin.xlane.f32.xlu0 %v6321
    %v6323 = vpop.xlane.xlu0 %6322
    %vm6324 = vcmp.eq.f32.partialorder %v6321, %v6323
    %v6325 = vsel %vm6324, %v6320, inf
    %6326 = vmin.xlane.f32.xlu0 %v6325
    %v6327 = vpop.xlane.xlu0 %6326
    %v6328 = vcvt.f32.s32 %v6327
    %v6329 = vcvt.f32.s32 %v6323
    %v6330 = vshll.u32 %v6329, 16
    %v6331 = vadd.s32 %v6330, %v6328
    %v6332 = vand.u32 %v5853, 65535
    %v6333 = vshra.s32 %v5853, 16
    %v6334 = vcvt.s32.f32 %v6332
    %v6335 = vcvt.s32.f32 %v6333
    %6336 = vmin.xlane.f32.xlu0 %v6335
    %v6337 = vpop.xlane.xlu0 %6336
    %vm6338 = vcmp.eq.f32.partialorder %v6335, %v6337
    %v6339 = vsel %vm6338, %v6334, inf
    %6340 = vmin.xlane.f32.xlu0 %v6339
    %v6341 = vpop.xlane.xlu0 %6340
    %v6342 = vcvt.f32.s32 %v6341
    %v6343 = vcvt.f32.s32 %v6337
    %v6344 = vshll.u32 %v6343, 16
    %v6345 = vadd.s32 %v6344, %v6342
    %v6346 = vand.u32 %v5854, 65535
    %v6347 = vshra.s32 %v5854, 16
    %v6348 = vcvt.s32.f32 %v6346
    %v6349 = vcvt.s32.f32 %v6347
    %6350 = vmin.xlane.f32.xlu0 %v6349
    %v6351 = vpop.xlane.xlu0 %6350
    %vm6352 = vcmp.eq.f32.partialorder %v6349, %v6351
    %v6353 = vsel %vm6352, %v6348, inf
    %6354 = vmin.xlane.f32.xlu0 %v6353
    %v6355 = vpop.xlane.xlu0 %6354
    %v6356 = vcvt.f32.s32 %v6355
    %v6357 = vcvt.f32.s32 %v6351
    %v6358 = vshll.u32 %v6357, 16
    %v6359 = vadd.s32 %v6358, %v6356
    %v6360 = vand.u32 %v5855, 65535
    %v6361 = vshra.s32 %v5855, 16
    %v6362 = vcvt.s32.f32 %v6360
    %v6363 = vcvt.s32.f32 %v6361
    %6364 = vmin.xlane.f32.xlu0 %v6363
    %v6365 = vpop.xlane.xlu0 %6364
    %vm6366 = vcmp.eq.f32.partialorder %v6363, %v6365
    %v6367 = vsel %vm6366, %v6362, inf
    %6368 = vmin.xlane.f32.xlu0 %v6367
    %v6369 = vpop.xlane.xlu0 %6368
    %v6370 = vcvt.f32.s32 %v6369
    %v6371 = vcvt.f32.s32 %v6365
    %v6372 = vshll.u32 %v6371, 16
    %v6373 = vadd.s32 %v6372, %v6370
    %v6374 = vand.u32 %v5856, 65535
    %v6375 = vshra.s32 %v5856, 16
    %v6376 = vcvt.s32.f32 %v6374
    %v6377 = vcvt.s32.f32 %v6375
    %6378 = vmin.xlane.f32.xlu0 %v6377
    %v6379 = vpop.xlane.xlu0 %6378
    %vm6380 = vcmp.eq.f32.partialorder %v6377, %v6379
    %v6381 = vsel %vm6380, %v6376, inf
    %6382 = vmin.xlane.f32.xlu0 %v6381
    %v6383 = vpop.xlane.xlu0 %6382
    %v6384 = vcvt.f32.s32 %v6383
    %v6385 = vcvt.f32.s32 %v6379
    %v6386 = vshll.u32 %v6385, 16
    %v6387 = vadd.s32 %v6386, %v6384
    %v6388 = vand.u32 %v5857, 65535
    %v6389 = vshra.s32 %v5857, 16
    %v6390 = vcvt.s32.f32 %v6388
    %v6391 = vcvt.s32.f32 %v6389
    %6392 = vmin.xlane.f32.xlu0 %v6391
    %v6393 = vpop.xlane.xlu0 %6392
    %vm6394 = vcmp.eq.f32.partialorder %v6391, %v6393
    %v6395 = vsel %vm6394, %v6390, inf
    %6396 = vmin.xlane.f32.xlu0 %v6395
    %v6397 = vpop.xlane.xlu0 %6396
    %v6398 = vcvt.f32.s32 %v6397
    %v6399 = vcvt.f32.s32 %v6393
    %v6400 = vshll.u32 %v6399, 16
    %v6401 = vadd.s32 %v6400, %v6398
    %v6402 = vand.u32 %v5858, 65535
    %v6403 = vshra.s32 %v5858, 16
    %v6404 = vcvt.s32.f32 %v6402
    %v6405 = vcvt.s32.f32 %v6403
    %6406 = vmin.xlane.f32.xlu0 %v6405
    %v6407 = vpop.xlane.xlu0 %6406
    %vm6408 = vcmp.eq.f32.partialorder %v6405, %v6407
    %v6409 = vsel %vm6408, %v6404, inf
    %6410 = vmin.xlane.f32.xlu0 %v6409
    %v6411 = vpop.xlane.xlu0 %6410
    %v6412 = vcvt.f32.s32 %v6411
    %v6413 = vcvt.f32.s32 %v6407
    %v6414 = vshll.u32 %v6413, 16
    %v6415 = vadd.s32 %v6414, %v6412
    %v6416 = vand.u32 %v5859, 65535
    %v6417 = vshra.s32 %v5859, 16
    %v6418 = vcvt.s32.f32 %v6416
    %v6419 = vcvt.s32.f32 %v6417
    %6420 = vmin.xlane.f32.xlu0 %v6419
    %v6421 = vpop.xlane.xlu0 %6420
    %vm6422 = vcmp.eq.f32.partialorder %v6419, %v6421
    %v6423 = vsel %vm6422, %v6418, inf
    %6424 = vmin.xlane.f32.xlu0 %v6423
    %v6425 = vpop.xlane.xlu0 %6424
    %v6426 = vcvt.f32.s32 %v6425
    %v6427 = vcvt.f32.s32 %v6421
    %v6428 = vshll.u32 %v6427, 16
    %v6429 = vadd.s32 %v6428, %v6426
    %v6430 = vand.u32 %v5860, 65535
    %v6431 = vshra.s32 %v5860, 16
    %v6432 = vcvt.s32.f32 %v6430
    %v6433 = vcvt.s32.f32 %v6431
    %6434 = vmin.xlane.f32.xlu0 %v6433
    %v6435 = vpop.xlane.xlu0 %6434
    %vm6436 = vcmp.eq.f32.partialorder %v6433, %v6435
    %v6437 = vsel %vm6436, %v6432, inf
    %6438 = vmin.xlane.f32.xlu0 %v6437
    %v6439 = vpop.xlane.xlu0 %6438
    %v6440 = vcvt.f32.s32 %v6439
    %v6441 = vcvt.f32.s32 %v6435
    %v6442 = vshll.u32 %v6441, 16
    %v6443 = vadd.s32 %v6442, %v6440
    %v6444 = vand.u32 %v5861, 65535
    %v6445 = vshra.s32 %v5861, 16
    %v6446 = vcvt.s32.f32 %v6444
    %v6447 = vcvt.s32.f32 %v6445
    %6448 = vmin.xlane.f32.xlu0 %v6447
    %v6449 = vpop.xlane.xlu0 %6448
    %vm6450 = vcmp.eq.f32.partialorder %v6447, %v6449
    %v6451 = vsel %vm6450, %v6446, inf
    %6452 = vmin.xlane.f32.xlu0 %v6451
    %v6453 = vpop.xlane.xlu0 %6452
    %v6454 = vcvt.f32.s32 %v6453
    %v6455 = vcvt.f32.s32 %v6449
    %v6456 = vshll.u32 %v6455, 16
    %v6457 = vadd.s32 %v6456, %v6454
    %v6458 = vand.u32 %v5862, 65535
    %v6459 = vshra.s32 %v5862, 16
    %v6460 = vcvt.s32.f32 %v6458
    %v6461 = vcvt.s32.f32 %v6459
    %6462 = vmin.xlane.f32.xlu0 %v6461
    %v6463 = vpop.xlane.xlu0 %6462
    %vm6464 = vcmp.eq.f32.partialorder %v6461, %v6463
    %v6465 = vsel %vm6464, %v6460, inf
    %6466 = vmin.xlane.f32.xlu0 %v6465
    %v6467 = vpop.xlane.xlu0 %6466
    %v6468 = vcvt.f32.s32 %v6467
    %v6469 = vcvt.f32.s32 %v6463
    %v6470 = vshll.u32 %v6469, 16
    %v6471 = vadd.s32 %v6470, %v6468
    %v6472 = vand.u32 %v5863, 65535
    %v6473 = vshra.s32 %v5863, 16
    %v6474 = vcvt.s32.f32 %v6472
    %v6475 = vcvt.s32.f32 %v6473
    %6476 = vmin.xlane.f32.xlu0 %v6475
    %v6477 = vpop.xlane.xlu0 %6476
    %vm6478 = vcmp.eq.f32.partialorder %v6475, %v6477
    %v6479 = vsel %vm6478, %v6474, inf
    %6480 = vmin.xlane.f32.xlu0 %v6479
    %v6481 = vpop.xlane.xlu0 %6480
    %v6482 = vcvt.f32.s32 %v6481
    %v6483 = vcvt.f32.s32 %v6477
    %v6484 = vshll.u32 %v6483, 16
    %v6485 = vadd.s32 %v6484, %v6482
    %v6486 = vand.u32 %v5864, 65535
    %v6487 = vshra.s32 %v5864, 16
    %v6488 = vcvt.s32.f32 %v6486
    %v6489 = vcvt.s32.f32 %v6487
    %6490 = vmin.xlane.f32.xlu0 %v6489
    %v6491 = vpop.xlane.xlu0 %6490
    %vm6492 = vcmp.eq.f32.partialorder %v6489, %v6491
    %v6493 = vsel %vm6492, %v6488, inf
    %6494 = vmin.xlane.f32.xlu0 %v6493
    %v6495 = vpop.xlane.xlu0 %6494
    %v6496 = vcvt.f32.s32 %v6495
    %v6497 = vcvt.f32.s32 %v6491
    %v6498 = vshll.u32 %v6497, 16
    %v6499 = vadd.s32 %v6498, %v6496
    %v6500 = vand.u32 %v5865, 65535
    %v6501 = vshra.s32 %v5865, 16
    %v6502 = vcvt.s32.f32 %v6500
    %v6503 = vcvt.s32.f32 %v6501
    %6504 = vmin.xlane.f32.xlu0 %v6503
    %v6505 = vpop.xlane.xlu0 %6504
    %vm6506 = vcmp.eq.f32.partialorder %v6503, %v6505
    %v6507 = vsel %vm6506, %v6502, inf
    %6508 = vmin.xlane.f32.xlu0 %v6507
    %v6509 = vpop.xlane.xlu0 %6508
    %v6510 = vcvt.f32.s32 %v6509
    %v6511 = vcvt.f32.s32 %v6505
    %v6512 = vshll.u32 %v6511, 16
    %v6513 = vadd.s32 %v6512, %v6510
    %v6514 = vand.u32 %v5866, 65535
    %v6515 = vshra.s32 %v5866, 16
    %v6516 = vcvt.s32.f32 %v6514
    %v6517 = vcvt.s32.f32 %v6515
    %6518 = vmin.xlane.f32.xlu0 %v6517
    %v6519 = vpop.xlane.xlu0 %6518
    %vm6520 = vcmp.eq.f32.partialorder %v6517, %v6519
    %v6521 = vsel %vm6520, %v6516, inf
    %6522 = vmin.xlane.f32.xlu0 %v6521
    %v6523 = vpop.xlane.xlu0 %6522
    %v6524 = vcvt.f32.s32 %v6523
    %v6525 = vcvt.f32.s32 %v6519
    %v6526 = vshll.u32 %v6525, 16
    %v6527 = vadd.s32 %v6526, %v6524
    %v6528 = vand.u32 %v5867, 65535
    %v6529 = vshra.s32 %v5867, 16
    %v6530 = vcvt.s32.f32 %v6528
    %v6531 = vcvt.s32.f32 %v6529
    %6532 = vmin.xlane.f32.xlu0 %v6531
    %v6533 = vpop.xlane.xlu0 %6532
    %vm6534 = vcmp.eq.f32.partialorder %v6531, %v6533
    %v6535 = vsel %vm6534, %v6530, inf
    %6536 = vmin.xlane.f32.xlu0 %v6535
    %v6537 = vpop.xlane.xlu0 %6536
    %v6538 = vcvt.f32.s32 %v6537
    %v6539 = vcvt.f32.s32 %v6533
    %v6540 = vshll.u32 %v6539, 16
    %v6541 = vadd.s32 %v6540, %v6538
    %v6542 = vand.u32 %v5868, 65535
    %v6543 = vshra.s32 %v5868, 16
    %v6544 = vcvt.s32.f32 %v6542
    %v6545 = vcvt.s32.f32 %v6543
    %6546 = vmin.xlane.f32.xlu0 %v6545
    %v6547 = vpop.xlane.xlu0 %6546
    %vm6548 = vcmp.eq.f32.partialorder %v6545, %v6547
    %v6549 = vsel %vm6548, %v6544, inf
    %6550 = vmin.xlane.f32.xlu0 %v6549
    %v6551 = vpop.xlane.xlu0 %6550
    %v6552 = vcvt.f32.s32 %v6551
    %v6553 = vcvt.f32.s32 %v6547
    %v6554 = vshll.u32 %v6553, 16
    %v6555 = vadd.s32 %v6554, %v6552
    %v6556 = vand.u32 %v5869, 65535
    %v6557 = vshra.s32 %v5869, 16
    %v6558 = vcvt.s32.f32 %v6556
    %v6559 = vcvt.s32.f32 %v6557
    %6560 = vmin.xlane.f32.xlu0 %v6559
    %v6561 = vpop.xlane.xlu0 %6560
    %vm6562 = vcmp.eq.f32.partialorder %v6559, %v6561
    %v6563 = vsel %vm6562, %v6558, inf
    %6564 = vmin.xlane.f32.xlu0 %v6563
    %v6565 = vpop.xlane.xlu0 %6564
    %v6566 = vcvt.f32.s32 %v6565
    %v6567 = vcvt.f32.s32 %v6561
    %v6568 = vshll.u32 %v6567, 16
    %v6569 = vadd.s32 %v6568, %v6566
    %v6570 = vand.u32 %v5870, 65535
    %v6571 = vshra.s32 %v5870, 16
    %v6572 = vcvt.s32.f32 %v6570
    %v6573 = vcvt.s32.f32 %v6571
    %6574 = vmin.xlane.f32.xlu0 %v6573
    %v6575 = vpop.xlane.xlu0 %6574
    %vm6576 = vcmp.eq.f32.partialorder %v6573, %v6575
    %v6577 = vsel %vm6576, %v6572, inf
    %6578 = vmin.xlane.f32.xlu0 %v6577
    %v6579 = vpop.xlane.xlu0 %6578
    %v6580 = vcvt.f32.s32 %v6579
    %v6581 = vcvt.f32.s32 %v6575
    %v6582 = vshll.u32 %v6581, 16
    %v6583 = vadd.s32 %v6582, %v6580
    %v6584 = vand.u32 %v5871, 65535
    %v6585 = vshra.s32 %v5871, 16
    %v6586 = vcvt.s32.f32 %v6584
    %v6587 = vcvt.s32.f32 %v6585
    %6588 = vmin.xlane.f32.xlu0 %v6587
    %v6589 = vpop.xlane.xlu0 %6588
    %vm6590 = vcmp.eq.f32.partialorder %v6587, %v6589
    %v6591 = vsel %vm6590, %v6586, inf
    %6592 = vmin.xlane.f32.xlu0 %v6591
    %v6593 = vpop.xlane.xlu0 %6592
    %v6594 = vcvt.f32.s32 %v6593
    %v6595 = vcvt.f32.s32 %v6589
    %v6596 = vshll.u32 %v6595, 16
    %v6597 = vadd.s32 %v6596, %v6594
    %v6598 = vand.u32 %v5872, 65535
    %v6599 = vshra.s32 %v5872, 16
    %v6600 = vcvt.s32.f32 %v6598
    %v6601 = vcvt.s32.f32 %v6599
    %6602 = vmin.xlane.f32.xlu0 %v6601
    %v6603 = vpop.xlane.xlu0 %6602
    %vm6604 = vcmp.eq.f32.partialorder %v6601, %v6603
    %v6605 = vsel %vm6604, %v6600, inf
    %6606 = vmin.xlane.f32.xlu0 %v6605
    %v6607 = vpop.xlane.xlu0 %6606
    %v6608 = vcvt.f32.s32 %v6607
    %v6609 = vcvt.f32.s32 %v6603
    %v6610 = vshll.u32 %v6609, 16
    %v6611 = vadd.s32 %v6610, %v6608
    %v6612 = vand.u32 %v5873, 65535
    %v6613 = vshra.s32 %v5873, 16
    %v6614 = vcvt.s32.f32 %v6612
    %v6615 = vcvt.s32.f32 %v6613
    %6616 = vmin.xlane.f32.xlu0 %v6615
    %v6617 = vpop.xlane.xlu0 %6616
    %vm6618 = vcmp.eq.f32.partialorder %v6615, %v6617
    %v6619 = vsel %vm6618, %v6614, inf
    %6620 = vmin.xlane.f32.xlu0 %v6619
    %v6621 = vpop.xlane.xlu0 %6620
    %v6622 = vcvt.f32.s32 %v6621
    %v6623 = vcvt.f32.s32 %v6617
    %v6624 = vshll.u32 %v6623, 16
    %v6625 = vadd.s32 %v6624, %v6622
    %v6626 = vand.u32 %v5874, 65535
    %v6627 = vshra.s32 %v5874, 16
    %v6628 = vcvt.s32.f32 %v6626
    %v6629 = vcvt.s32.f32 %v6627
    %6630 = vmin.xlane.f32.xlu0 %v6629
    %v6631 = vpop.xlane.xlu0 %6630
    %vm6632 = vcmp.eq.f32.partialorder %v6629, %v6631
    %v6633 = vsel %vm6632, %v6628, inf
    %6634 = vmin.xlane.f32.xlu0 %v6633
    %v6635 = vpop.xlane.xlu0 %6634
    %v6636 = vcvt.f32.s32 %v6635
    %v6637 = vcvt.f32.s32 %v6631
    %v6638 = vshll.u32 %v6637, 16
    %v6639 = vadd.s32 %v6638, %v6636
    %v6640 = vand.u32 %v5875, 65535
    %v6641 = vshra.s32 %v5875, 16
    %v6642 = vcvt.s32.f32 %v6640
    %v6643 = vcvt.s32.f32 %v6641
    %6644 = vmin.xlane.f32.xlu0 %v6643
    %v6645 = vpop.xlane.xlu0 %6644
    %vm6646 = vcmp.eq.f32.partialorder %v6643, %v6645
    %v6647 = vsel %vm6646, %v6642, inf
    %6648 = vmin.xlane.f32.xlu0 %v6647
    %v6649 = vpop.xlane.xlu0 %6648
    %v6650 = vcvt.f32.s32 %v6649
    %v6651 = vcvt.f32.s32 %v6645
    %v6652 = vshll.u32 %v6651, 16
    %v6653 = vadd.s32 %v6652, %v6650
    %v6654 = vand.u32 %v5876, 65535
    %v6655 = vshra.s32 %v5876, 16
    %v6656 = vcvt.s32.f32 %v6654
    %v6657 = vcvt.s32.f32 %v6655
    %6658 = vmin.xlane.f32.xlu0 %v6657
    %v6659 = vpop.xlane.xlu0 %6658
    %vm6660 = vcmp.eq.f32.partialorder %v6657, %v6659
    %v6661 = vsel %vm6660, %v6656, inf
    %6662 = vmin.xlane.f32.xlu0 %v6661
    %v6663 = vpop.xlane.xlu0 %6662
    %v6664 = vcvt.f32.s32 %v6663
    %v6665 = vcvt.f32.s32 %v6659
    %v6666 = vshll.u32 %v6665, 16
    %v6667 = vadd.s32 %v6666, %v6664
    %v6668 = vand.u32 %v5877, 65535
    %v6669 = vshra.s32 %v5877, 16
    %v6670 = vcvt.s32.f32 %v6668
    %v6671 = vcvt.s32.f32 %v6669
    %6672 = vmin.xlane.f32.xlu0 %v6671
    %v6673 = vpop.xlane.xlu0 %6672
    %vm6674 = vcmp.eq.f32.partialorder %v6671, %v6673
    %v6675 = vsel %vm6674, %v6670, inf
    %6676 = vmin.xlane.f32.xlu0 %v6675
    %v6677 = vpop.xlane.xlu0 %6676
    %v6678 = vcvt.f32.s32 %v6677
    %v6679 = vcvt.f32.s32 %v6673
    %v6680 = vshll.u32 %v6679, 16
    %v6681 = vadd.s32 %v6680, %v6678
    %v6682 = vand.u32 %v5878, 65535
    %v6683 = vshra.s32 %v5878, 16
    %v6684 = vcvt.s32.f32 %v6682
    %v6685 = vcvt.s32.f32 %v6683
    %6686 = vmin.xlane.f32.xlu0 %v6685
    %v6687 = vpop.xlane.xlu0 %6686
    %vm6688 = vcmp.eq.f32.partialorder %v6685, %v6687
    %v6689 = vsel %vm6688, %v6684, inf
    %6690 = vmin.xlane.f32.xlu0 %v6689
    %v6691 = vpop.xlane.xlu0 %6690
    %v6692 = vcvt.f32.s32 %v6691
    %v6693 = vcvt.f32.s32 %v6687
    %v6694 = vshll.u32 %v6693, 16
    %v6695 = vadd.s32 %v6694, %v6692
    %v6696 = vand.u32 %v5879, 65535
    %v6697 = vshra.s32 %v5879, 16
    %v6698 = vcvt.s32.f32 %v6696
    %v6699 = vcvt.s32.f32 %v6697
    %6700 = vmin.xlane.f32.xlu0 %v6699
    %v6701 = vpop.xlane.xlu0 %6700
    %vm6702 = vcmp.eq.f32.partialorder %v6699, %v6701
    %v6703 = vsel %vm6702, %v6698, inf
    %6704 = vmin.xlane.f32.xlu0 %v6703
    %v6705 = vpop.xlane.xlu0 %6704
    %v6706 = vcvt.f32.s32 %v6705
    %v6707 = vcvt.f32.s32 %v6701
    %v6708 = vshll.u32 %v6707, 16
    %v6709 = vadd.s32 %v6708, %v6706
    %v6710 = vand.u32 %v5880, 65535
    %v6711 = vshra.s32 %v5880, 16
    %v6712 = vcvt.s32.f32 %v6710
    %v6713 = vcvt.s32.f32 %v6711
    %6714 = vmin.xlane.f32.xlu0 %v6713
    %v6715 = vpop.xlane.xlu0 %6714
    %vm6716 = vcmp.eq.f32.partialorder %v6713, %v6715
    %v6717 = vsel %vm6716, %v6712, inf
    %6718 = vmin.xlane.f32.xlu0 %v6717
    %v6719 = vpop.xlane.xlu0 %6718
    %v6720 = vcvt.f32.s32 %v6719
    %v6721 = vcvt.f32.s32 %v6715
    %v6722 = vshll.u32 %v6721, 16
    %v6723 = vadd.s32 %v6722, %v6720
    %v6724 = vand.u32 %v5881, 65535
    %v6725 = vshra.s32 %v5881, 16
    %v6726 = vcvt.s32.f32 %v6724
    %v6727 = vcvt.s32.f32 %v6725
    %6728 = vmin.xlane.f32.xlu0 %v6727
    %v6729 = vpop.xlane.xlu0 %6728
    %vm6730 = vcmp.eq.f32.partialorder %v6727, %v6729
    %v6731 = vsel %vm6730, %v6726, inf
    %6732 = vmin.xlane.f32.xlu0 %v6731
    %v6733 = vpop.xlane.xlu0 %6732
    %v6734 = vcvt.f32.s32 %v6733
    %v6735 = vcvt.f32.s32 %v6729
    %v6736 = vshll.u32 %v6735, 16
    %v6737 = vadd.s32 %v6736, %v6734
    %v6738 = vand.u32 %v5882, 65535
    %v6739 = vshra.s32 %v5882, 16
    %v6740 = vcvt.s32.f32 %v6738
    %v6741 = vcvt.s32.f32 %v6739
    %6742 = vmin.xlane.f32.xlu0 %v6741
    %v6743 = vpop.xlane.xlu0 %6742
    %vm6744 = vcmp.eq.f32.partialorder %v6741, %v6743
    %v6745 = vsel %vm6744, %v6740, inf
    %6746 = vmin.xlane.f32.xlu0 %v6745
    %v6747 = vpop.xlane.xlu0 %6746
    %v6748 = vcvt.f32.s32 %v6747
    %v6749 = vcvt.f32.s32 %v6743
    %v6750 = vshll.u32 %v6749, 16
    %v6751 = vadd.s32 %v6750, %v6748
    %v6752 = vand.u32 %v5883, 65535
    %v6753 = vshra.s32 %v5883, 16
    %v6754 = vcvt.s32.f32 %v6752
    %v6755 = vcvt.s32.f32 %v6753
    %6756 = vmin.xlane.f32.xlu0 %v6755
    %v6757 = vpop.xlane.xlu0 %6756
    %vm6758 = vcmp.eq.f32.partialorder %v6755, %v6757
    %v6759 = vsel %vm6758, %v6754, inf
    %6760 = vmin.xlane.f32.xlu0 %v6759
    %v6761 = vpop.xlane.xlu0 %6760
    %v6762 = vcvt.f32.s32 %v6761
    %v6763 = vcvt.f32.s32 %v6757
    %v6764 = vshll.u32 %v6763, 16
    %v6765 = vadd.s32 %v6764, %v6762
    %v6766 = vand.u32 %v5884, 65535
    %v6767 = vshra.s32 %v5884, 16
    %v6768 = vcvt.s32.f32 %v6766
    %v6769 = vcvt.s32.f32 %v6767
    %6770 = vmin.xlane.f32.xlu0 %v6769
    %v6771 = vpop.xlane.xlu0 %6770
    %vm6772 = vcmp.eq.f32.partialorder %v6769, %v6771
    %v6773 = vsel %vm6772, %v6768, inf
    %6774 = vmin.xlane.f32.xlu0 %v6773
    %v6775 = vpop.xlane.xlu0 %6774
    %v6776 = vcvt.f32.s32 %v6775
    %v6777 = vcvt.f32.s32 %v6771
    %v6778 = vshll.u32 %v6777, 16
    %v6779 = vadd.s32 %v6778, %v6776
    %v6780 = vand.u32 %v5885, 65535
    %v6781 = vshra.s32 %v5885, 16
    %v6782 = vcvt.s32.f32 %v6780
    %v6783 = vcvt.s32.f32 %v6781
    %6784 = vmin.xlane.f32.xlu0 %v6783
    %v6785 = vpop.xlane.xlu0 %6784
    %vm6786 = vcmp.eq.f32.partialorder %v6783, %v6785
    %v6787 = vsel %vm6786, %v6782, inf
    %6788 = vmin.xlane.f32.xlu0 %v6787
    %v6789 = vpop.xlane.xlu0 %6788
    %v6790 = vcvt.f32.s32 %v6789
    %v6791 = vcvt.f32.s32 %v6785
    %v6792 = vshll.u32 %v6791, 16
    %v6793 = vadd.s32 %v6792, %v6790
    %v6794 = vand.u32 %v5886, 65535
    %v6795 = vshra.s32 %v5886, 16
    %v6796 = vcvt.s32.f32 %v6794
    %v6797 = vcvt.s32.f32 %v6795
    %6798 = vmin.xlane.f32.xlu0 %v6797
    %v6799 = vpop.xlane.xlu0 %6798
    %vm6800 = vcmp.eq.f32.partialorder %v6797, %v6799
    %v6801 = vsel %vm6800, %v6796, inf
    %6802 = vmin.xlane.f32.xlu0 %v6801
    %v6803 = vpop.xlane.xlu0 %6802
    %v6804 = vcvt.f32.s32 %v6803
    %v6805 = vcvt.f32.s32 %v6799
    %v6806 = vshll.u32 %v6805, 16
    %v6807 = vadd.s32 %v6806, %v6804
    %v6808 = vand.u32 %v5887, 65535
    %v6809 = vshra.s32 %v5887, 16
    %v6810 = vcvt.s32.f32 %v6808
    %v6811 = vcvt.s32.f32 %v6809
    %6812 = vmin.xlane.f32.xlu0 %v6811
    %v6813 = vpop.xlane.xlu0 %6812
    %vm6814 = vcmp.eq.f32.partialorder %v6811, %v6813
    %v6815 = vsel %vm6814, %v6810, inf
    %6816 = vmin.xlane.f32.xlu0 %v6815
    %v6817 = vpop.xlane.xlu0 %6816
    %v6818 = vcvt.f32.s32 %v6817
    %v6819 = vcvt.f32.s32 %v6813
    %v6820 = vshll.u32 %v6819, 16
    %v6821 = vadd.s32 %v6820, %v6818
    %v6822 = vand.u32 %v5888, 65535
    %v6823 = vshra.s32 %v5888, 16
    %v6824 = vcvt.s32.f32 %v6822
    %v6825 = vcvt.s32.f32 %v6823
    %6826 = vmin.xlane.f32.xlu0 %v6825
    %v6827 = vpop.xlane.xlu0 %6826
    %vm6828 = vcmp.eq.f32.partialorder %v6825, %v6827
    %v6829 = vsel %vm6828, %v6824, inf
    %6830 = vmin.xlane.f32.xlu0 %v6829
    %v6831 = vpop.xlane.xlu0 %6830
    %v6832 = vcvt.f32.s32 %v6831
    %v6833 = vcvt.f32.s32 %v6827
    %v6834 = vshll.u32 %v6833, 16
    %v6835 = vadd.s32 %v6834, %v6832
    %v6836 = vand.u32 %v5889, 65535
    %v6837 = vshra.s32 %v5889, 16
    %v6838 = vcvt.s32.f32 %v6836
    %v6839 = vcvt.s32.f32 %v6837
    %6840 = vmin.xlane.f32.xlu0 %v6839
    %v6841 = vpop.xlane.xlu0 %6840
    %vm6842 = vcmp.eq.f32.partialorder %v6839, %v6841
    %v6843 = vsel %vm6842, %v6838, inf
    %6844 = vmin.xlane.f32.xlu0 %v6843
    %v6845 = vpop.xlane.xlu0 %6844
    %v6846 = vcvt.f32.s32 %v6845
    %v6847 = vcvt.f32.s32 %v6841
    %v6848 = vshll.u32 %v6847, 16
    %v6849 = vadd.s32 %v6848, %v6846
    %v6850 = vand.u32 %v5890, 65535
    %v6851 = vshra.s32 %v5890, 16
    %v6852 = vcvt.s32.f32 %v6850
    %v6853 = vcvt.s32.f32 %v6851
    %6854 = vmin.xlane.f32.xlu0 %v6853
    %v6855 = vpop.xlane.xlu0 %6854
    %vm6856 = vcmp.eq.f32.partialorder %v6853, %v6855
    %v6857 = vsel %vm6856, %v6852, inf
    %6858 = vmin.xlane.f32.xlu0 %v6857
    %v6859 = vpop.xlane.xlu0 %6858
    %v6860 = vcvt.f32.s32 %v6859
    %v6861 = vcvt.f32.s32 %v6855
    %v6862 = vshll.u32 %v6861, 16
    %v6863 = vadd.s32 %v6862, %v6860
    %v6864 = vand.u32 %v5891, 65535
    %v6865 = vshra.s32 %v5891, 16
    %v6866 = vcvt.s32.f32 %v6864
    %v6867 = vcvt.s32.f32 %v6865
    %6868 = vmin.xlane.f32.xlu0 %v6867
    %v6869 = vpop.xlane.xlu0 %6868
    %vm6870 = vcmp.eq.f32.partialorder %v6867, %v6869
    %v6871 = vsel %vm6870, %v6866, inf
    %6872 = vmin.xlane.f32.xlu0 %v6871
    %v6873 = vpop.xlane.xlu0 %6872
    %v6874 = vcvt.f32.s32 %v6873
    %v6875 = vcvt.f32.s32 %v6869
    %v6876 = vshll.u32 %v6875, 16
    %v6877 = vadd.s32 %v6876, %v6874
    %v6878 = vand.u32 %v5892, 65535
    %v6879 = vshra.s32 %v5892, 16
    %v6880 = vcvt.s32.f32 %v6878
    %v6881 = vcvt.s32.f32 %v6879
    %6882 = vmin.xlane.f32.xlu0 %v6881
    %v6883 = vpop.xlane.xlu0 %6882
    %vm6884 = vcmp.eq.f32.partialorder %v6881, %v6883
    %v6885 = vsel %vm6884, %v6880, inf
    %6886 = vmin.xlane.f32.xlu0 %v6885
    %v6887 = vpop.xlane.xlu0 %6886
    %v6888 = vcvt.f32.s32 %v6887
    %v6889 = vcvt.f32.s32 %v6883
    %v6890 = vshll.u32 %v6889, 16
    %v6891 = vadd.s32 %v6890, %v6888
    %v6892 = vand.u32 %v5893, 65535
    %v6893 = vshra.s32 %v5893, 16
    %v6894 = vcvt.s32.f32 %v6892
    %v6895 = vcvt.s32.f32 %v6893
    %6896 = vmin.xlane.f32.xlu0 %v6895
    %v6897 = vpop.xlane.xlu0 %6896
    %vm6898 = vcmp.eq.f32.partialorder %v6895, %v6897
    %v6899 = vsel %vm6898, %v6894, inf
    %6900 = vmin.xlane.f32.xlu0 %v6899
    %v6901 = vpop.xlane.xlu0 %6900
    %v6902 = vcvt.f32.s32 %v6901
    %v6903 = vcvt.f32.s32 %v6897
    %v6904 = vshll.u32 %v6903, 16
    %v6905 = vadd.s32 %v6904, %v6902
    %v6906 = vand.u32 %v5894, 65535
    %v6907 = vshra.s32 %v5894, 16
    %v6908 = vcvt.s32.f32 %v6906
    %v6909 = vcvt.s32.f32 %v6907
    %6910 = vmin.xlane.f32.xlu0 %v6909
    %v6911 = vpop.xlane.xlu0 %6910
    %vm6912 = vcmp.eq.f32.partialorder %v6909, %v6911
    %v6913 = vsel %vm6912, %v6908, inf
    %6914 = vmin.xlane.f32.xlu0 %v6913
    %v6915 = vpop.xlane.xlu0 %6914
    %v6916 = vcvt.f32.s32 %v6915
    %v6917 = vcvt.f32.s32 %v6911
    %v6918 = vshll.u32 %v6917, 16
    %v6919 = vadd.s32 %v6918, %v6916
    %v6920 = vand.u32 %v5895, 65535
    %v6921 = vshra.s32 %v5895, 16
    %v6922 = vcvt.s32.f32 %v6920
    %v6923 = vcvt.s32.f32 %v6921
    %6924 = vmin.xlane.f32.xlu0 %v6923
    %v6925 = vpop.xlane.xlu0 %6924
    %vm6926 = vcmp.eq.f32.partialorder %v6923, %v6925
    %v6927 = vsel %vm6926, %v6922, inf
    %6928 = vmin.xlane.f32.xlu0 %v6927
    %v6929 = vpop.xlane.xlu0 %6928
    %v6930 = vcvt.f32.s32 %v6929
    %v6931 = vcvt.f32.s32 %v6925
    %v6932 = vshll.u32 %v6931, 16
    %v6933 = vadd.s32 %v6932, %v6930
    %v6934 = vand.u32 %v5896, 65535
    %v6935 = vshra.s32 %v5896, 16
    %v6936 = vcvt.s32.f32 %v6934
    %v6937 = vcvt.s32.f32 %v6935
    %6938 = vmin.xlane.f32.xlu0 %v6937
    %v6939 = vpop.xlane.xlu0 %6938
    %vm6940 = vcmp.eq.f32.partialorder %v6937, %v6939
    %v6941 = vsel %vm6940, %v6936, inf
    %6942 = vmin.xlane.f32.xlu0 %v6941
    %v6943 = vpop.xlane.xlu0 %6942
    %v6944 = vcvt.f32.s32 %v6943
    %v6945 = vcvt.f32.s32 %v6939
    %v6946 = vshll.u32 %v6945, 16
    %v6947 = vadd.s32 %v6946, %v6944
    %v6948 = vand.u32 %v5897, 65535
    %v6949 = vshra.s32 %v5897, 16
    %v6950 = vcvt.s32.f32 %v6948
    %v6951 = vcvt.s32.f32 %v6949
    %6952 = vmin.xlane.f32.xlu0 %v6951
    %v6953 = vpop.xlane.xlu0 %6952
    %vm6954 = vcmp.eq.f32.partialorder %v6951, %v6953
    %v6955 = vsel %vm6954, %v6950, inf
    %6956 = vmin.xlane.f32.xlu0 %v6955
    %v6957 = vpop.xlane.xlu0 %6956
    %v6958 = vcvt.f32.s32 %v6957
    %v6959 = vcvt.f32.s32 %v6953
    %v6960 = vshll.u32 %v6959, 16
    %v6961 = vadd.s32 %v6960, %v6958
    %v6962 = vand.u32 %v5898, 65535
    %v6963 = vshra.s32 %v5898, 16
    %v6964 = vcvt.s32.f32 %v6962
    %v6965 = vcvt.s32.f32 %v6963
    %6966 = vmin.xlane.f32.xlu0 %v6965
    %v6967 = vpop.xlane.xlu0 %6966
    %vm6968 = vcmp.eq.f32.partialorder %v6965, %v6967
    %v6969 = vsel %vm6968, %v6964, inf
    %6970 = vmin.xlane.f32.xlu0 %v6969
    %v6971 = vpop.xlane.xlu0 %6970
    %v6972 = vcvt.f32.s32 %v6971
    %v6973 = vcvt.f32.s32 %v6967
    %v6974 = vshll.u32 %v6973, 16
    %v6975 = vadd.s32 %v6974, %v6972
    %v6976 = vand.u32 %v5899, 65535
    %v6977 = vshra.s32 %v5899, 16
    %v6978 = vcvt.s32.f32 %v6976
    %v6979 = vcvt.s32.f32 %v6977
    %6980 = vmin.xlane.f32.xlu0 %v6979
    %v6981 = vpop.xlane.xlu0 %6980
    %vm6982 = vcmp.eq.f32.partialorder %v6979, %v6981
    %v6983 = vsel %vm6982, %v6978, inf
    %6984 = vmin.xlane.f32.xlu0 %v6983
    %v6985 = vpop.xlane.xlu0 %6984
    %v6986 = vcvt.f32.s32 %v6985
    %v6987 = vcvt.f32.s32 %v6981
    %v6988 = vshll.u32 %v6987, 16
    %v6989 = vadd.s32 %v6988, %v6986
    %v6990 = vand.u32 %v5900, 65535
    %v6991 = vshra.s32 %v5900, 16
    %v6992 = vcvt.s32.f32 %v6990
    %v6993 = vcvt.s32.f32 %v6991
    %6994 = vmin.xlane.f32.xlu0 %v6993
    %v6995 = vpop.xlane.xlu0 %6994
    %vm6996 = vcmp.eq.f32.partialorder %v6993, %v6995
    %v6997 = vsel %vm6996, %v6992, inf
    %6998 = vmin.xlane.f32.xlu0 %v6997
    %v6999 = vpop.xlane.xlu0 %6998
    %v7000 = vcvt.f32.s32 %v6999
    %v7001 = vcvt.f32.s32 %v6995
    %v7002 = vshll.u32 %v7001, 16
    %v7003 = vadd.s32 %v7002, %v7000
    %v7004 = vand.u32 %v5901, 65535
    %v7005 = vshra.s32 %v5901, 16
    %v7006 = vcvt.s32.f32 %v7004
    %v7007 = vcvt.s32.f32 %v7005
    %7008 = vmin.xlane.f32.xlu0 %v7007
    %v7009 = vpop.xlane.xlu0 %7008
    %vm7010 = vcmp.eq.f32.partialorder %v7007, %v7009
    %v7011 = vsel %vm7010, %v7006, inf
    %7012 = vmin.xlane.f32.xlu0 %v7011
    %v7013 = vpop.xlane.xlu0 %7012
    %v7014 = vcvt.f32.s32 %v7013
    %v7015 = vcvt.f32.s32 %v7009
    %v7016 = vshll.u32 %v7015, 16
    %v7017 = vadd.s32 %v7016, %v7014
    %v7018 = vand.u32 %v5902, 65535
    %v7019 = vshra.s32 %v5902, 16
    %v7020 = vcvt.s32.f32 %v7018
    %v7021 = vcvt.s32.f32 %v7019
    %7022 = vmin.xlane.f32.xlu0 %v7021
    %v7023 = vpop.xlane.xlu0 %7022
    %vm7024 = vcmp.eq.f32.partialorder %v7021, %v7023
    %v7025 = vsel %vm7024, %v7020, inf
    %7026 = vmin.xlane.f32.xlu0 %v7025
    %v7027 = vpop.xlane.xlu0 %7026
    %v7028 = vcvt.f32.s32 %v7027
    %v7029 = vcvt.f32.s32 %v7023
    %v7030 = vshll.u32 %v7029, 16
    %v7031 = vadd.s32 %v7030, %v7028
    %v7032 = vand.u32 %v5903, 65535
    %v7033 = vshra.s32 %v5903, 16
    %v7034 = vcvt.s32.f32 %v7032
    %v7035 = vcvt.s32.f32 %v7033
    %7036 = vmin.xlane.f32.xlu0 %v7035
    %v7037 = vpop.xlane.xlu0 %7036
    %vm7038 = vcmp.eq.f32.partialorder %v7035, %v7037
    %v7039 = vsel %vm7038, %v7034, inf
    %7040 = vmin.xlane.f32.xlu0 %v7039
    %v7041 = vpop.xlane.xlu0 %7040
    %v7042 = vcvt.f32.s32 %v7041
    %v7043 = vcvt.f32.s32 %v7037
    %v7044 = vshll.u32 %v7043, 16
    %v7045 = vadd.s32 %v7044, %v7042
    %v7046 = vand.u32 %v5904, 65535
    %v7047 = vshra.s32 %v5904, 16
    %v7048 = vcvt.s32.f32 %v7046
    %v7049 = vcvt.s32.f32 %v7047
    %7050 = vmin.xlane.f32.xlu0 %v7049
    %v7051 = vpop.xlane.xlu0 %7050
    %vm7052 = vcmp.eq.f32.partialorder %v7049, %v7051
    %v7053 = vsel %vm7052, %v7048, inf
    %7054 = vmin.xlane.f32.xlu0 %v7053
    %v7055 = vpop.xlane.xlu0 %7054
    %v7056 = vcvt.f32.s32 %v7055
    %v7057 = vcvt.f32.s32 %v7051
    %v7058 = vshll.u32 %v7057, 16
    %v7059 = vadd.s32 %v7058, %v7056
    %v7060 = vand.u32 %v5905, 65535
    %v7061 = vshra.s32 %v5905, 16
    %v7062 = vcvt.s32.f32 %v7060
    %v7063 = vcvt.s32.f32 %v7061
    %7064 = vmin.xlane.f32.xlu0 %v7063
    %v7065 = vpop.xlane.xlu0 %7064
    %vm7066 = vcmp.eq.f32.partialorder %v7063, %v7065
    %v7067 = vsel %vm7066, %v7062, inf
    %7068 = vmin.xlane.f32.xlu0 %v7067
    %v7069 = vpop.xlane.xlu0 %7068
    %v7070 = vcvt.f32.s32 %v7069
    %v7071 = vcvt.f32.s32 %v7065
    %v7072 = vshll.u32 %v7071, 16
    %v7073 = vadd.s32 %v7072, %v7070
    %v7074 = vand.u32 %v5906, 65535
    %v7075 = vshra.s32 %v5906, 16
    %v7076 = vcvt.s32.f32 %v7074
    %v7077 = vcvt.s32.f32 %v7075
    %7078 = vmin.xlane.f32.xlu0 %v7077
    %v7079 = vpop.xlane.xlu0 %7078
    %vm7080 = vcmp.eq.f32.partialorder %v7077, %v7079
    %v7081 = vsel %vm7080, %v7076, inf
    %7082 = vmin.xlane.f32.xlu0 %v7081
    %v7083 = vpop.xlane.xlu0 %7082
    %v7084 = vcvt.f32.s32 %v7083
    %v7085 = vcvt.f32.s32 %v7079
    %v7086 = vshll.u32 %v7085, 16
    %v7087 = vadd.s32 %v7086, %v7084
    %v7088 = vand.u32 %v5907, 65535
    %v7089 = vshra.s32 %v5907, 16
    %v7090 = vcvt.s32.f32 %v7088
    %v7091 = vcvt.s32.f32 %v7089
    %7092 = vmin.xlane.f32.xlu0 %v7091
    %v7093 = vpop.xlane.xlu0 %7092
    %vm7094 = vcmp.eq.f32.partialorder %v7091, %v7093
    %v7095 = vsel %vm7094, %v7090, inf
    %7096 = vmin.xlane.f32.xlu0 %v7095
    %v7097 = vpop.xlane.xlu0 %7096
    %v7098 = vcvt.f32.s32 %v7097
    %v7099 = vcvt.f32.s32 %v7093
    %v7100 = vshll.u32 %v7099, 16
    %v7101 = vadd.s32 %v7100, %v7098
    %v7102 = vand.u32 %v5908, 65535
    %v7103 = vshra.s32 %v5908, 16
    %v7104 = vcvt.s32.f32 %v7102
    %v7105 = vcvt.s32.f32 %v7103
    %7106 = vmin.xlane.f32.xlu0 %v7105
    %v7107 = vpop.xlane.xlu0 %7106
    %vm7108 = vcmp.eq.f32.partialorder %v7105, %v7107
    %v7109 = vsel %vm7108, %v7104, inf
    %7110 = vmin.xlane.f32.xlu0 %v7109
    %v7111 = vpop.xlane.xlu0 %7110
    %v7112 = vcvt.f32.s32 %v7111
    %v7113 = vcvt.f32.s32 %v7107
    %v7114 = vshll.u32 %v7113, 16
    %v7115 = vadd.s32 %v7114, %v7112
    %v7116 = vand.u32 %v5909, 65535
    %v7117 = vshra.s32 %v5909, 16
    %v7118 = vcvt.s32.f32 %v7116
    %v7119 = vcvt.s32.f32 %v7117
    %7120 = vmin.xlane.f32.xlu0 %v7119
    %v7121 = vpop.xlane.xlu0 %7120
    %vm7122 = vcmp.eq.f32.partialorder %v7119, %v7121
    %v7123 = vsel %vm7122, %v7118, inf
    %7124 = vmin.xlane.f32.xlu0 %v7123
    %v7125 = vpop.xlane.xlu0 %7124
    %v7126 = vcvt.f32.s32 %v7125
    %v7127 = vcvt.f32.s32 %v7121
    %v7128 = vshll.u32 %v7127, 16
    %v7129 = vadd.s32 %v7128, %v7126
    %v7130 = vand.u32 %v5910, 65535
    %v7131 = vshra.s32 %v5910, 16
    %v7132 = vcvt.s32.f32 %v7130
    %v7133 = vcvt.s32.f32 %v7131
    %7134 = vmin.xlane.f32.xlu0 %v7133
    %v7135 = vpop.xlane.xlu0 %7134
    %vm7136 = vcmp.eq.f32.partialorder %v7133, %v7135
    %v7137 = vsel %vm7136, %v7132, inf
    %7138 = vmin.xlane.f32.xlu0 %v7137
    %v7139 = vpop.xlane.xlu0 %7138
    %v7140 = vcvt.f32.s32 %v7139
    %v7141 = vcvt.f32.s32 %v7135
    %v7142 = vshll.u32 %v7141, 16
    %v7143 = vadd.s32 %v7142, %v7140
    %v7144 = vand.u32 %v5911, 65535
    %v7145 = vshra.s32 %v5911, 16
    %v7146 = vcvt.s32.f32 %v7144
    %v7147 = vcvt.s32.f32 %v7145
    %7148 = vmin.xlane.f32.xlu0 %v7147
    %v7149 = vpop.xlane.xlu0 %7148
    %vm7150 = vcmp.eq.f32.partialorder %v7147, %v7149
    %v7151 = vsel %vm7150, %v7146, inf
    %7152 = vmin.xlane.f32.xlu0 %v7151
    %v7153 = vpop.xlane.xlu0 %7152
    %v7154 = vcvt.f32.s32 %v7153
    %v7155 = vcvt.f32.s32 %v7149
    %v7156 = vshll.u32 %v7155, 16
    %v7157 = vadd.s32 %v7156, %v7154
    %v7158 = vand.u32 %v5912, 65535
    %v7159 = vshra.s32 %v5912, 16
    %v7160 = vcvt.s32.f32 %v7158
    %v7161 = vcvt.s32.f32 %v7159
    %7162 = vmin.xlane.f32.xlu0 %v7161
    %v7163 = vpop.xlane.xlu0 %7162
    %vm7164 = vcmp.eq.f32.partialorder %v7161, %v7163
    %v7165 = vsel %vm7164, %v7160, inf
    %7166 = vmin.xlane.f32.xlu0 %v7165
    %v7167 = vpop.xlane.xlu0 %7166
    %v7168 = vcvt.f32.s32 %v7167
    %v7169 = vcvt.f32.s32 %v7163
    %v7170 = vshll.u32 %v7169, 16
    %v7171 = vadd.s32 %v7170, %v7168
    %v7172 = vand.u32 %v5913, 65535
    %v7173 = vshra.s32 %v5913, 16
    %v7174 = vcvt.s32.f32 %v7172
    %v7175 = vcvt.s32.f32 %v7173
    %7176 = vmin.xlane.f32.xlu0 %v7175
    %v7177 = vpop.xlane.xlu0 %7176
    %vm7178 = vcmp.eq.f32.partialorder %v7175, %v7177
    %v7179 = vsel %vm7178, %v7174, inf
    %7180 = vmin.xlane.f32.xlu0 %v7179
    %v7181 = vpop.xlane.xlu0 %7180
    %v7182 = vcvt.f32.s32 %v7181
    %v7183 = vcvt.f32.s32 %v7177
    %v7184 = vshll.u32 %v7183, 16
    %v7185 = vadd.s32 %v7184, %v7182
    %v7186 = vand.u32 %v5914, 65535
    %v7187 = vshra.s32 %v5914, 16
    %v7188 = vcvt.s32.f32 %v7186
    %v7189 = vcvt.s32.f32 %v7187
    %7190 = vmin.xlane.f32.xlu0 %v7189
    %v7191 = vpop.xlane.xlu0 %7190
    %vm7192 = vcmp.eq.f32.partialorder %v7189, %v7191
    %v7193 = vsel %vm7192, %v7188, inf
    %7194 = vmin.xlane.f32.xlu0 %v7193
    %v7195 = vpop.xlane.xlu0 %7194
    %v7196 = vcvt.f32.s32 %v7195
    %v7197 = vcvt.f32.s32 %v7191
    %v7198 = vshll.u32 %v7197, 16
    %v7199 = vadd.s32 %v7198, %v7196
    %v7200 = vand.u32 %v5915, 65535
    %v7201 = vshra.s32 %v5915, 16
    %v7202 = vcvt.s32.f32 %v7200
    %v7203 = vcvt.s32.f32 %v7201
    %7204 = vmin.xlane.f32.xlu0 %v7203
    %v7205 = vpop.xlane.xlu0 %7204
    %vm7206 = vcmp.eq.f32.partialorder %v7203, %v7205
    %v7207 = vsel %vm7206, %v7202, inf
    %7208 = vmin.xlane.f32.xlu0 %v7207
    %v7209 = vpop.xlane.xlu0 %7208
    %v7210 = vcvt.f32.s32 %v7209
    %v7211 = vcvt.f32.s32 %v7205
    %v7212 = vshll.u32 %v7211, 16
    %v7213 = vadd.s32 %v7212, %v7210
    %v7214 = vand.u32 %v5916, 65535
    %v7215 = vshra.s32 %v5916, 16
    %v7216 = vcvt.s32.f32 %v7214
    %v7217 = vcvt.s32.f32 %v7215
    %7218 = vmin.xlane.f32.xlu0 %v7217
    %v7219 = vpop.xlane.xlu0 %7218
    %vm7220 = vcmp.eq.f32.partialorder %v7217, %v7219
    %v7221 = vsel %vm7220, %v7216, inf
    %7222 = vmin.xlane.f32.xlu0 %v7221
    %v7223 = vpop.xlane.xlu0 %7222
    %v7224 = vcvt.f32.s32 %v7223
    %v7225 = vcvt.f32.s32 %v7219
    %v7226 = vshll.u32 %v7225, 16
    %v7227 = vadd.s32 %v7226, %v7224
    %v7228 = vand.u32 %v5917, 65535
    %v7229 = vshra.s32 %v5917, 16
    %v7230 = vcvt.s32.f32 %v7228
    %v7231 = vcvt.s32.f32 %v7229
    %7232 = vmin.xlane.f32.xlu0 %v7231
    %v7233 = vpop.xlane.xlu0 %7232
    %vm7234 = vcmp.eq.f32.partialorder %v7231, %v7233
    %v7235 = vsel %vm7234, %v7230, inf
    %7236 = vmin.xlane.f32.xlu0 %v7235
    %v7237 = vpop.xlane.xlu0 %7236
    %v7238 = vcvt.f32.s32 %v7237
    %v7239 = vcvt.f32.s32 %v7233
    %v7240 = vshll.u32 %v7239, 16
    %v7241 = vadd.s32 %v7240, %v7238
    %v7242 = vand.u32 %v5918, 65535
    %v7243 = vshra.s32 %v5918, 16
    %v7244 = vcvt.s32.f32 %v7242
    %v7245 = vcvt.s32.f32 %v7243
    %7246 = vmin.xlane.f32.xlu0 %v7245
    %v7247 = vpop.xlane.xlu0 %7246
    %vm7248 = vcmp.eq.f32.partialorder %v7245, %v7247
    %v7249 = vsel %vm7248, %v7244, inf
    %7250 = vmin.xlane.f32.xlu0 %v7249
    %v7251 = vpop.xlane.xlu0 %7250
    %v7252 = vcvt.f32.s32 %v7251
    %v7253 = vcvt.f32.s32 %v7247
    %v7254 = vshll.u32 %v7253, 16
    %v7255 = vadd.s32 %v7254, %v7252
    %v7256 = vand.u32 %v5919, 65535
    %v7257 = vshra.s32 %v5919, 16
    %v7258 = vcvt.s32.f32 %v7256
    %v7259 = vcvt.s32.f32 %v7257
    %7260 = vmin.xlane.f32.xlu0 %v7259
    %v7261 = vpop.xlane.xlu0 %7260
    %vm7262 = vcmp.eq.f32.partialorder %v7259, %v7261
    %v7263 = vsel %vm7262, %v7258, inf
    %7264 = vmin.xlane.f32.xlu0 %v7263
    %v7265 = vpop.xlane.xlu0 %7264
    %v7266 = vcvt.f32.s32 %v7265
    %v7267 = vcvt.f32.s32 %v7261
    %v7268 = vshll.u32 %v7267, 16
    %v7269 = vadd.s32 %v7268, %v7266
    %v7270 = vand.u32 %v5920, 65535
    %v7271 = vshra.s32 %v5920, 16
    %v7272 = vcvt.s32.f32 %v7270
    %v7273 = vcvt.s32.f32 %v7271
    %7274 = vmin.xlane.f32.xlu0 %v7273
    %v7275 = vpop.xlane.xlu0 %7274
    %vm7276 = vcmp.eq.f32.partialorder %v7273, %v7275
    %v7277 = vsel %vm7276, %v7272, inf
    %7278 = vmin.xlane.f32.xlu0 %v7277
    %v7279 = vpop.xlane.xlu0 %7278
    %v7280 = vcvt.f32.s32 %v7279
    %v7281 = vcvt.f32.s32 %v7275
    %v7282 = vshll.u32 %v7281, 16
    %v7283 = vadd.s32 %v7282, %v7280
    %v7284 = vand.u32 %v5921, 65535
    %v7285 = vshra.s32 %v5921, 16
    %v7286 = vcvt.s32.f32 %v7284
    %v7287 = vcvt.s32.f32 %v7285
    %7288 = vmin.xlane.f32.xlu0 %v7287
    %v7289 = vpop.xlane.xlu0 %7288
    %vm7290 = vcmp.eq.f32.partialorder %v7287, %v7289
    %v7291 = vsel %vm7290, %v7286, inf
    %7292 = vmin.xlane.f32.xlu0 %v7291
    %v7293 = vpop.xlane.xlu0 %7292
    %v7294 = vcvt.f32.s32 %v7293
    %v7295 = vcvt.f32.s32 %v7289
    %v7296 = vshll.u32 %v7295, 16
    %v7297 = vadd.s32 %v7296, %v7294
    %v7298 = vand.u32 %v5922, 65535
    %v7299 = vshra.s32 %v5922, 16
    %v7300 = vcvt.s32.f32 %v7298
    %v7301 = vcvt.s32.f32 %v7299
    %7302 = vmin.xlane.f32.xlu0 %v7301
    %v7303 = vpop.xlane.xlu0 %7302
    %vm7304 = vcmp.eq.f32.partialorder %v7301, %v7303
    %v7305 = vsel %vm7304, %v7300, inf
    %7306 = vmin.xlane.f32.xlu0 %v7305
    %v7307 = vpop.xlane.xlu0 %7306
    %v7308 = vcvt.f32.s32 %v7307
    %v7309 = vcvt.f32.s32 %v7303
    %v7310 = vshll.u32 %v7309, 16
    %v7311 = vadd.s32 %v7310, %v7308
    %v7312 = vand.u32 %v5923, 65535
    %v7313 = vshra.s32 %v5923, 16
    %v7314 = vcvt.s32.f32 %v7312
    %v7315 = vcvt.s32.f32 %v7313
    %7316 = vmin.xlane.f32.xlu0 %v7315
    %v7317 = vpop.xlane.xlu0 %7316
    %vm7318 = vcmp.eq.f32.partialorder %v7315, %v7317
    %v7319 = vsel %vm7318, %v7314, inf
    %7320 = vmin.xlane.f32.xlu0 %v7319
    %v7321 = vpop.xlane.xlu0 %7320
    %v7322 = vcvt.f32.s32 %v7321
    %v7323 = vcvt.f32.s32 %v7317
    %v7324 = vshll.u32 %v7323, 16
    %v7325 = vadd.s32 %v7324, %v7322
    %v7326 = vand.u32 %v5924, 65535
    %v7327 = vshra.s32 %v5924, 16
    %v7328 = vcvt.s32.f32 %v7326
    %v7329 = vcvt.s32.f32 %v7327
    %7330 = vmin.xlane.f32.xlu0 %v7329
    %v7331 = vpop.xlane.xlu0 %7330
    %vm7332 = vcmp.eq.f32.partialorder %v7329, %v7331
    %v7333 = vsel %vm7332, %v7328, inf
    %7334 = vmin.xlane.f32.xlu0 %v7333
    %v7335 = vpop.xlane.xlu0 %7334
    %v7336 = vcvt.f32.s32 %v7335
    %v7337 = vcvt.f32.s32 %v7331
    %v7338 = vshll.u32 %v7337, 16
    %v7339 = vadd.s32 %v7338, %v7336
    %v7340 = vand.u32 %v5925, 65535
    %v7341 = vshra.s32 %v5925, 16
    %v7342 = vcvt.s32.f32 %v7340
    %v7343 = vcvt.s32.f32 %v7341
    %7344 = vmin.xlane.f32.xlu0 %v7343
    %v7345 = vpop.xlane.xlu0 %7344
    %vm7346 = vcmp.eq.f32.partialorder %v7343, %v7345
    %v7347 = vsel %vm7346, %v7342, inf
    %7348 = vmin.xlane.f32.xlu0 %v7347
    %v7349 = vpop.xlane.xlu0 %7348
    %v7350 = vcvt.f32.s32 %v7349
    %v7351 = vcvt.f32.s32 %v7345
    %v7352 = vshll.u32 %v7351, 16
    %v7353 = vadd.s32 %v7352, %v7350
    %v7354 = vand.u32 %v5926, 65535
    %v7355 = vshra.s32 %v5926, 16
    %v7356 = vcvt.s32.f32 %v7354
    %v7357 = vcvt.s32.f32 %v7355
    %7358 = vmin.xlane.f32.xlu0 %v7357
    %v7359 = vpop.xlane.xlu0 %7358
    %vm7360 = vcmp.eq.f32.partialorder %v7357, %v7359
    %v7361 = vsel %vm7360, %v7356, inf
    %7362 = vmin.xlane.f32.xlu0 %v7361
    %v7363 = vpop.xlane.xlu0 %7362
    %v7364 = vcvt.f32.s32 %v7363
    %v7365 = vcvt.f32.s32 %v7359
    %v7366 = vshll.u32 %v7365, 16
    %v7367 = vadd.s32 %v7366, %v7364
    %v7368 = vand.u32 %v5927, 65535
    %v7369 = vshra.s32 %v5927, 16
    %v7370 = vcvt.s32.f32 %v7368
    %v7371 = vcvt.s32.f32 %v7369
    %7372 = vmin.xlane.f32.xlu0 %v7371
    %v7373 = vpop.xlane.xlu0 %7372
    %vm7374 = vcmp.eq.f32.partialorder %v7371, %v7373
    %v7375 = vsel %vm7374, %v7370, inf
    %7376 = vmin.xlane.f32.xlu0 %v7375
    %v7377 = vpop.xlane.xlu0 %7376
    %v7378 = vcvt.f32.s32 %v7377
    %v7379 = vcvt.f32.s32 %v7373
    %v7380 = vshll.u32 %v7379, 16
    %v7381 = vadd.s32 %v7380, %v7378
    %v7382 = vand.u32 %v5928, 65535
    %v7383 = vshra.s32 %v5928, 16
    %v7384 = vcvt.s32.f32 %v7382
    %v7385 = vcvt.s32.f32 %v7383
    %7386 = vmin.xlane.f32.xlu0 %v7385
    %v7387 = vpop.xlane.xlu0 %7386
    %vm7388 = vcmp.eq.f32.partialorder %v7385, %v7387
    %v7389 = vsel %vm7388, %v7384, inf
    %7390 = vmin.xlane.f32.xlu0 %v7389
    %v7391 = vpop.xlane.xlu0 %7390
    %v7392 = vcvt.f32.s32 %v7391
    %v7393 = vcvt.f32.s32 %v7387
    %v7394 = vshll.u32 %v7393, 16
    %v7395 = vadd.s32 %v7394, %v7392
    %v7396 = vand.u32 %v5929, 65535
    %v7397 = vshra.s32 %v5929, 16
    %v7398 = vcvt.s32.f32 %v7396
    %v7399 = vcvt.s32.f32 %v7397
    %7400 = vmin.xlane.f32.xlu0 %v7399
    %v7401 = vpop.xlane.xlu0 %7400
    %vm7402 = vcmp.eq.f32.partialorder %v7399, %v7401
    %v7403 = vsel %vm7402, %v7398, inf
    %7404 = vmin.xlane.f32.xlu0 %v7403
    %v7405 = vpop.xlane.xlu0 %7404
    %v7406 = vcvt.f32.s32 %v7405
    %v7407 = vcvt.f32.s32 %v7401
    %v7408 = vshll.u32 %v7407, 16
    %v7409 = vadd.s32 %v7408, %v7406
    %v7410 = vand.u32 %v5930, 65535
    %v7411 = vshra.s32 %v5930, 16
    %v7412 = vcvt.s32.f32 %v7410
    %v7413 = vcvt.s32.f32 %v7411
    %7414 = vmin.xlane.f32.xlu0 %v7413
    %v7415 = vpop.xlane.xlu0 %7414
    %vm7416 = vcmp.eq.f32.partialorder %v7413, %v7415
    %v7417 = vsel %vm7416, %v7412, inf
    %7418 = vmin.xlane.f32.xlu0 %v7417
    %v7419 = vpop.xlane.xlu0 %7418
    %v7420 = vcvt.f32.s32 %v7419
    %v7421 = vcvt.f32.s32 %v7415
    %v7422 = vshll.u32 %v7421, 16
    %v7423 = vadd.s32 %v7422, %v7420
    %v7424 = vand.u32 %v5931, 65535
    %v7425 = vshra.s32 %v5931, 16
    %v7426 = vcvt.s32.f32 %v7424
    %v7427 = vcvt.s32.f32 %v7425
    %7428 = vmin.xlane.f32.xlu0 %v7427
    %v7429 = vpop.xlane.xlu0 %7428
    %vm7430 = vcmp.eq.f32.partialorder %v7427, %v7429
    %v7431 = vsel %vm7430, %v7426, inf
    %7432 = vmin.xlane.f32.xlu0 %v7431
    %v7433 = vpop.xlane.xlu0 %7432
    %v7434 = vcvt.f32.s32 %v7433
    %v7435 = vcvt.f32.s32 %v7429
    %v7436 = vshll.u32 %v7435, 16
    %v7437 = vadd.s32 %v7436, %v7434
    %v7438 = vand.u32 %v5932, 65535
    %v7439 = vshra.s32 %v5932, 16
    %v7440 = vcvt.s32.f32 %v7438
    %v7441 = vcvt.s32.f32 %v7439
    %7442 = vmin.xlane.f32.xlu0 %v7441
    %v7443 = vpop.xlane.xlu0 %7442
    %vm7444 = vcmp.eq.f32.partialorder %v7441, %v7443
    %v7445 = vsel %vm7444, %v7440, inf
    %7446 = vmin.xlane.f32.xlu0 %v7445
    %v7447 = vpop.xlane.xlu0 %7446
    %v7448 = vcvt.f32.s32 %v7447
    %v7449 = vcvt.f32.s32 %v7443
    %v7450 = vshll.u32 %v7449, 16
    %v7451 = vadd.s32 %v7450, %v7448
    %v7452 = vand.u32 %v5933, 65535
    %v7453 = vshra.s32 %v5933, 16
    %v7454 = vcvt.s32.f32 %v7452
    %v7455 = vcvt.s32.f32 %v7453
    %7456 = vmin.xlane.f32.xlu0 %v7455
    %v7457 = vpop.xlane.xlu0 %7456
    %vm7458 = vcmp.eq.f32.partialorder %v7455, %v7457
    %v7459 = vsel %vm7458, %v7454, inf
    %7460 = vmin.xlane.f32.xlu0 %v7459
    %v7461 = vpop.xlane.xlu0 %7460
    %v7462 = vcvt.f32.s32 %v7461
    %v7463 = vcvt.f32.s32 %v7457
    %v7464 = vshll.u32 %v7463, 16
    %v7465 = vadd.s32 %v7464, %v7462
    %v7466 = vand.u32 %v5934, 65535
    %v7467 = vshra.s32 %v5934, 16
    %v7468 = vcvt.s32.f32 %v7466
    %v7469 = vcvt.s32.f32 %v7467
    %7470 = vmin.xlane.f32.xlu0 %v7469
    %v7471 = vpop.xlane.xlu0 %7470
    %vm7472 = vcmp.eq.f32.partialorder %v7469, %v7471
    %v7473 = vsel %vm7472, %v7468, inf
    %7474 = vmin.xlane.f32.xlu0 %v7473
    %v7475 = vpop.xlane.xlu0 %7474
    %v7476 = vcvt.f32.s32 %v7475
    %v7477 = vcvt.f32.s32 %v7471
    %v7478 = vshll.u32 %v7477, 16
    %v7479 = vadd.s32 %v7478, %v7476
    %v7480 = vand.u32 %v5935, 65535
    %v7481 = vshra.s32 %v5935, 16
    %v7482 = vcvt.s32.f32 %v7480
    %v7483 = vcvt.s32.f32 %v7481
    %7484 = vmin.xlane.f32.xlu0 %v7483
    %v7485 = vpop.xlane.xlu0 %7484
    %vm7486 = vcmp.eq.f32.partialorder %v7483, %v7485
    %v7487 = vsel %vm7486, %v7482, inf
    %7488 = vmin.xlane.f32.xlu0 %v7487
    %v7489 = vpop.xlane.xlu0 %7488
    %v7490 = vcvt.f32.s32 %v7489
    %v7491 = vcvt.f32.s32 %v7485
    %v7492 = vshll.u32 %v7491, 16
    %v7493 = vadd.s32 %v7492, %v7490
    %v7494 = vand.u32 %v5936, 65535
    %v7495 = vshra.s32 %v5936, 16
    %v7496 = vcvt.s32.f32 %v7494
    %v7497 = vcvt.s32.f32 %v7495
    %7498 = vmin.xlane.f32.xlu0 %v7497
    %v7499 = vpop.xlane.xlu0 %7498
    %vm7500 = vcmp.eq.f32.partialorder %v7497, %v7499
    %v7501 = vsel %vm7500, %v7496, inf
    %7502 = vmin.xlane.f32.xlu0 %v7501
    %v7503 = vpop.xlane.xlu0 %7502
    %v7504 = vcvt.f32.s32 %v7503
    %v7505 = vcvt.f32.s32 %v7499
    %v7506 = vshll.u32 %v7505, 16
    %v7507 = vadd.s32 %v7506, %v7504
    %v7508 = vand.u32 %v5937, 65535
    %v7509 = vshra.s32 %v5937, 16
    %v7510 = vcvt.s32.f32 %v7508
    %v7511 = vcvt.s32.f32 %v7509
    %7512 = vmin.xlane.f32.xlu0 %v7511
    %v7513 = vpop.xlane.xlu0 %7512
    %vm7514 = vcmp.eq.f32.partialorder %v7511, %v7513
    %v7515 = vsel %vm7514, %v7510, inf
    %7516 = vmin.xlane.f32.xlu0 %v7515
    %v7517 = vpop.xlane.xlu0 %7516
    %v7518 = vcvt.f32.s32 %v7517
    %v7519 = vcvt.f32.s32 %v7513
    %v7520 = vshll.u32 %v7519, 16
    %v7521 = vadd.s32 %v7520, %v7518
    %v7522 = vand.u32 %v5938, 65535
    %v7523 = vshra.s32 %v5938, 16
    %v7524 = vcvt.s32.f32 %v7522
    %v7525 = vcvt.s32.f32 %v7523
    %7526 = vmin.xlane.f32.xlu0 %v7525
    %v7527 = vpop.xlane.xlu0 %7526
    %vm7528 = vcmp.eq.f32.partialorder %v7525, %v7527
    %v7529 = vsel %vm7528, %v7524, inf
    %7530 = vmin.xlane.f32.xlu0 %v7529
    %v7531 = vpop.xlane.xlu0 %7530
    %v7532 = vcvt.f32.s32 %v7531
    %v7533 = vcvt.f32.s32 %v7527
    %v7534 = vshll.u32 %v7533, 16
    %v7535 = vadd.s32 %v7534, %v7532
    %v7536 = vand.u32 %v5939, 65535
    %v7537 = vshra.s32 %v5939, 16
    %v7538 = vcvt.s32.f32 %v7536
    %v7539 = vcvt.s32.f32 %v7537
    %7540 = vmin.xlane.f32.xlu0 %v7539
    %v7541 = vpop.xlane.xlu0 %7540
    %vm7542 = vcmp.eq.f32.partialorder %v7539, %v7541
    %v7543 = vsel %vm7542, %v7538, inf
    %7544 = vmin.xlane.f32.xlu0 %v7543
    %v7545 = vpop.xlane.xlu0 %7544
    %v7546 = vcvt.f32.s32 %v7545
    %v7547 = vcvt.f32.s32 %v7541
    %v7548 = vshll.u32 %v7547, 16
    %v7549 = vadd.s32 %v7548, %v7546
    %v7550 = vand.u32 %v5940, 65535
    %v7551 = vshra.s32 %v5940, 16
    %v7552 = vcvt.s32.f32 %v7550
    %v7553 = vcvt.s32.f32 %v7551
    %7554 = vmin.xlane.f32.xlu0 %v7553
    %v7555 = vpop.xlane.xlu0 %7554
    %vm7556 = vcmp.eq.f32.partialorder %v7553, %v7555
    %v7557 = vsel %vm7556, %v7552, inf
    %7558 = vmin.xlane.f32.xlu0 %v7557
    %v7559 = vpop.xlane.xlu0 %7558
    %v7560 = vcvt.f32.s32 %v7559
    %v7561 = vcvt.f32.s32 %v7555
    %v7562 = vshll.u32 %v7561, 16
    %v7563 = vadd.s32 %v7562, %v7560
    %v7564 = vand.u32 %v5941, 65535
    %v7565 = vshra.s32 %v5941, 16
    %v7566 = vcvt.s32.f32 %v7564
    %v7567 = vcvt.s32.f32 %v7565
    %7568 = vmin.xlane.f32.xlu0 %v7567
    %v7569 = vpop.xlane.xlu0 %7568
    %vm7570 = vcmp.eq.f32.partialorder %v7567, %v7569
    %v7571 = vsel %vm7570, %v7566, inf
    %7572 = vmin.xlane.f32.xlu0 %v7571
    %v7573 = vpop.xlane.xlu0 %7572
    %v7574 = vcvt.f32.s32 %v7573
    %v7575 = vcvt.f32.s32 %v7569
    %v7576 = vshll.u32 %v7575, 16
    %v7577 = vadd.s32 %v7576, %v7574
    %v7578 = vand.u32 %v5942, 65535
    %v7579 = vshra.s32 %v5942, 16
    %v7580 = vcvt.s32.f32 %v7578
    %v7581 = vcvt.s32.f32 %v7579
    %7582 = vmin.xlane.f32.xlu0 %v7581
    %v7583 = vpop.xlane.xlu0 %7582
    %vm7584 = vcmp.eq.f32.partialorder %v7581, %v7583
    %v7585 = vsel %vm7584, %v7580, inf
    %7586 = vmin.xlane.f32.xlu0 %v7585
    %v7587 = vpop.xlane.xlu0 %7586
    %v7588 = vcvt.f32.s32 %v7587
    %v7589 = vcvt.f32.s32 %v7583
    %v7590 = vshll.u32 %v7589, 16
    %v7591 = vadd.s32 %v7590, %v7588
    %v7592 = vand.u32 %v5943, 65535
    %v7593 = vshra.s32 %v5943, 16
    %v7594 = vcvt.s32.f32 %v7592
    %v7595 = vcvt.s32.f32 %v7593
    %7596 = vmin.xlane.f32.xlu0 %v7595
    %v7597 = vpop.xlane.xlu0 %7596
    %vm7598 = vcmp.eq.f32.partialorder %v7595, %v7597
    %v7599 = vsel %vm7598, %v7594, inf
    %7600 = vmin.xlane.f32.xlu0 %v7599
    %v7601 = vpop.xlane.xlu0 %7600
    %v7602 = vcvt.f32.s32 %v7601
    %v7603 = vcvt.f32.s32 %v7597
    %v7604 = vshll.u32 %v7603, 16
    %v7605 = vadd.s32 %v7604, %v7602
    %v7606 = vand.u32 %v5944, 65535
    %v7607 = vshra.s32 %v5944, 16
    %v7608 = vcvt.s32.f32 %v7606
    %v7609 = vcvt.s32.f32 %v7607
    %7610 = vmin.xlane.f32.xlu0 %v7609
    %v7611 = vpop.xlane.xlu0 %7610
    %vm7612 = vcmp.eq.f32.partialorder %v7609, %v7611
    %v7613 = vsel %vm7612, %v7608, inf
    %7614 = vmin.xlane.f32.xlu0 %v7613
    %v7615 = vpop.xlane.xlu0 %7614
    %v7616 = vcvt.f32.s32 %v7615
    %v7617 = vcvt.f32.s32 %v7611
    %v7618 = vshll.u32 %v7617, 16
    %v7619 = vadd.s32 %v7618, %v7616
    %v7620 = vand.u32 %v5945, 65535
    %v7621 = vshra.s32 %v5945, 16
    %v7622 = vcvt.s32.f32 %v7620
    %v7623 = vcvt.s32.f32 %v7621
    %7624 = vmin.xlane.f32.xlu0 %v7623
    %v7625 = vpop.xlane.xlu0 %7624
    %vm7626 = vcmp.eq.f32.partialorder %v7623, %v7625
    %v7627 = vsel %vm7626, %v7622, inf
    %7628 = vmin.xlane.f32.xlu0 %v7627
    %v7629 = vpop.xlane.xlu0 %7628
    %v7630 = vcvt.f32.s32 %v7629
    %v7631 = vcvt.f32.s32 %v7625
    %v7632 = vshll.u32 %v7631, 16
    %v7633 = vadd.s32 %v7632, %v7630
    %v7634 = vand.u32 %v5946, 65535
    %v7635 = vshra.s32 %v5946, 16
    %v7636 = vcvt.s32.f32 %v7634
    %v7637 = vcvt.s32.f32 %v7635
    %7638 = vmin.xlane.f32.xlu0 %v7637
    %v7639 = vpop.xlane.xlu0 %7638
    %vm7640 = vcmp.eq.f32.partialorder %v7637, %v7639
    %v7641 = vsel %vm7640, %v7636, inf
    %7642 = vmin.xlane.f32.xlu0 %v7641
    %v7643 = vpop.xlane.xlu0 %7642
    %v7644 = vcvt.f32.s32 %v7643
    %v7645 = vcvt.f32.s32 %v7639
    %v7646 = vshll.u32 %v7645, 16
    %v7647 = vadd.s32 %v7646, %v7644
    %v7648 = vand.u32 %v5947, 65535
    %v7649 = vshra.s32 %v5947, 16
    %v7650 = vcvt.s32.f32 %v7648
    %v7651 = vcvt.s32.f32 %v7649
    %7652 = vmin.xlane.f32.xlu0 %v7651
    %v7653 = vpop.xlane.xlu0 %7652
    %vm7654 = vcmp.eq.f32.partialorder %v7651, %v7653
    %v7655 = vsel %vm7654, %v7650, inf
    %7656 = vmin.xlane.f32.xlu0 %v7655
    %v7657 = vpop.xlane.xlu0 %7656
    %v7658 = vcvt.f32.s32 %v7657
    %v7659 = vcvt.f32.s32 %v7653
    %v7660 = vshll.u32 %v7659, 16
    %v7661 = vadd.s32 %v7660, %v7658
    %v7662 = vand.u32 %v5948, 65535
    %v7663 = vshra.s32 %v5948, 16
    %v7664 = vcvt.s32.f32 %v7662
    %v7665 = vcvt.s32.f32 %v7663
    %7666 = vmin.xlane.f32.xlu0 %v7665
    %v7667 = vpop.xlane.xlu0 %7666
    %vm7668 = vcmp.eq.f32.partialorder %v7665, %v7667
    %v7669 = vsel %vm7668, %v7664, inf
    %7670 = vmin.xlane.f32.xlu0 %v7669
    %v7671 = vpop.xlane.xlu0 %7670
    %v7672 = vcvt.f32.s32 %v7671
    %v7673 = vcvt.f32.s32 %v7667
    %v7674 = vshll.u32 %v7673, 16
    %v7675 = vadd.s32 %v7674, %v7672
    %v7676 = vand.u32 %v5949, 65535
    %v7677 = vshra.s32 %v5949, 16
    %v7678 = vcvt.s32.f32 %v7676
    %v7679 = vcvt.s32.f32 %v7677
    %7680 = vmin.xlane.f32.xlu0 %v7679
    %v7681 = vpop.xlane.xlu0 %7680
    %vm7682 = vcmp.eq.f32.partialorder %v7679, %v7681
    %v7683 = vsel %vm7682, %v7678, inf
    %7684 = vmin.xlane.f32.xlu0 %v7683
    %v7685 = vpop.xlane.xlu0 %7684
    %v7686 = vcvt.f32.s32 %v7685
    %v7687 = vcvt.f32.s32 %v7681
    %v7688 = vshll.u32 %v7687, 16
    %v7689 = vadd.s32 %v7688, %v7686
    %v7690 = vand.u32 %v5950, 65535
    %v7691 = vshra.s32 %v5950, 16
    %v7692 = vcvt.s32.f32 %v7690
    %v7693 = vcvt.s32.f32 %v7691
    %7694 = vmin.xlane.f32.xlu0 %v7693
    %v7695 = vpop.xlane.xlu0 %7694
    %vm7696 = vcmp.eq.f32.partialorder %v7693, %v7695
    %v7697 = vsel %vm7696, %v7692, inf
    %7698 = vmin.xlane.f32.xlu0 %v7697
    %v7699 = vpop.xlane.xlu0 %7698
    %v7700 = vcvt.f32.s32 %v7699
    %v7701 = vcvt.f32.s32 %v7695
    %v7702 = vshll.u32 %v7701, 16
    %v7703 = vadd.s32 %v7702, %v7700
    %v7704 = vand.u32 %v5951, 65535
    %v7705 = vshra.s32 %v5951, 16
    %v7706 = vcvt.s32.f32 %v7704
    %v7707 = vcvt.s32.f32 %v7705
    %7708 = vmin.xlane.f32.xlu0 %v7707
    %v7709 = vpop.xlane.xlu0 %7708
    %vm7710 = vcmp.eq.f32.partialorder %v7707, %v7709
    %v7711 = vsel %vm7710, %v7706, inf
    %7712 = vmin.xlane.f32.xlu0 %v7711
    %v7713 = vpop.xlane.xlu0 %7712
    %v7714 = vcvt.f32.s32 %v7713
    %v7715 = vcvt.f32.s32 %v7709
    %v7716 = vshll.u32 %v7715, 16
    %v7717 = vadd.s32 %v7716, %v7714
    %v7718 = vand.u32 %v5952, 65535
    %v7719 = vshra.s32 %v5952, 16
    %v7720 = vcvt.s32.f32 %v7718
    %v7721 = vcvt.s32.f32 %v7719
    %7722 = vmin.xlane.f32.xlu0 %v7721
    %v7723 = vpop.xlane.xlu0 %7722
    %vm7724 = vcmp.eq.f32.partialorder %v7721, %v7723
    %v7725 = vsel %vm7724, %v7720, inf
    %7726 = vmin.xlane.f32.xlu0 %v7725
    %v7727 = vpop.xlane.xlu0 %7726
    %v7728 = vcvt.f32.s32 %v7727
    %v7729 = vcvt.f32.s32 %v7723
    %v7730 = vshll.u32 %v7729, 16
    %v7731 = vadd.s32 %v7730, %v7728
    %v7732 = vand.u32 %v5953, 65535
    %v7733 = vshra.s32 %v5953, 16
    %v7734 = vcvt.s32.f32 %v7732
    %v7735 = vcvt.s32.f32 %v7733
    %7736 = vmin.xlane.f32.xlu0 %v7735
    %v7737 = vpop.xlane.xlu0 %7736
    %vm7738 = vcmp.eq.f32.partialorder %v7735, %v7737
    %v7739 = vsel %vm7738, %v7734, inf
    %7740 = vmin.xlane.f32.xlu0 %v7739
    %v7741 = vpop.xlane.xlu0 %7740
    %v7742 = vcvt.f32.s32 %v7741
    %v7743 = vcvt.f32.s32 %v7737
    %v7744 = vshll.u32 %v7743, 16
    %v7745 = vadd.s32 %v7744, %v7742
    %vm7746 = vcmp.eq.s32.totalorder %v2107, %v5967
    %vm7747 = vcmp.eq.s32.totalorder %v2107, %v5981
    %vm7748 = vcmp.eq.s32.totalorder %v2107, %v5995
    %vm7749 = vcmp.eq.s32.totalorder %v2107, %v6009
    %vm7750 = vcmp.eq.s32.totalorder %v2107, %v6023
    %vm7751 = vcmp.eq.s32.totalorder %v2107, %v6037
    %vm7752 = vcmp.eq.s32.totalorder %v2107, %v6051
    %vm7753 = vcmp.eq.s32.totalorder %v2107, %v6065
    %vm7754 = vcmp.eq.s32.totalorder %v2107, %v6079
    %vm7755 = vcmp.eq.s32.totalorder %v2107, %v6093
    %vm7756 = vcmp.eq.s32.totalorder %v2107, %v6107
    %vm7757 = vcmp.eq.s32.totalorder %v2107, %v6121
    %vm7758 = vcmp.eq.s32.totalorder %v2107, %v6135
    %vm7759 = vcmp.eq.s32.totalorder %v2107, %v6149
    %vm7760 = vcmp.eq.s32.totalorder %v2107, %v6163
    %vm7761 = vcmp.eq.s32.totalorder %v2107, %v6177
    %vm7762 = vcmp.eq.s32.totalorder %v2107, %v6191
    %vm7763 = vcmp.eq.s32.totalorder %v2107, %v6205
    %vm7764 = vcmp.eq.s32.totalorder %v2107, %v6219
    %vm7765 = vcmp.eq.s32.totalorder %v2107, %v6233
    %vm7766 = vcmp.eq.s32.totalorder %v2107, %v6247
    %vm7767 = vcmp.eq.s32.totalorder %v2107, %v6261
    %vm7768 = vcmp.eq.s32.totalorder %v2107, %v6275
    %vm7769 = vcmp.eq.s32.totalorder %v2107, %v6289
    %vm7770 = vcmp.eq.s32.totalorder %v2107, %v6303
    %vm7771 = vcmp.eq.s32.totalorder %v2107, %v6317
    %vm7772 = vcmp.eq.s32.totalorder %v2107, %v6331
    %vm7773 = vcmp.eq.s32.totalorder %v2107, %v6345
    %vm7774 = vcmp.eq.s32.totalorder %v2107, %v6359
    %vm7775 = vcmp.eq.s32.totalorder %v2107, %v6373
    %vm7776 = vcmp.eq.s32.totalorder %v2107, %v6387
    %vm7777 = vcmp.eq.s32.totalorder %v2107, %v6401
    %vm7778 = vcmp.eq.s32.totalorder %v2107, %v6415
    %vm7779 = vcmp.eq.s32.totalorder %v2107, %v6429
    %vm7780 = vcmp.eq.s32.totalorder %v2107, %v6443
    %vm7781 = vcmp.eq.s32.totalorder %v2107, %v6457
    %vm7782 = vcmp.eq.s32.totalorder %v2107, %v6471
    %vm7783 = vcmp.eq.s32.totalorder %v2107, %v6485
    %vm7784 = vcmp.eq.s32.totalorder %v2107, %v6499
    %vm7785 = vcmp.eq.s32.totalorder %v2107, %v6513
    %vm7786 = vcmp.eq.s32.totalorder %v2107, %v6527
    %vm7787 = vcmp.eq.s32.totalorder %v2107, %v6541
    %vm7788 = vcmp.eq.s32.totalorder %v2107, %v6555
    %vm7789 = vcmp.eq.s32.totalorder %v2107, %v6569
    %vm7790 = vcmp.eq.s32.totalorder %v2107, %v6583
    %vm7791 = vcmp.eq.s32.totalorder %v2107, %v6597
    %vm7792 = vcmp.eq.s32.totalorder %v2107, %v6611
    %vm7793 = vcmp.eq.s32.totalorder %v2107, %v6625
    %vm7794 = vcmp.eq.s32.totalorder %v2107, %v6639
    %vm7795 = vcmp.eq.s32.totalorder %v2107, %v6653
    %vm7796 = vcmp.eq.s32.totalorder %v2107, %v6667
    %vm7797 = vcmp.eq.s32.totalorder %v2107, %v6681
    %vm7798 = vcmp.eq.s32.totalorder %v2107, %v6695
    %vm7799 = vcmp.eq.s32.totalorder %v2107, %v6709
    %vm7800 = vcmp.eq.s32.totalorder %v2107, %v6723
    %vm7801 = vcmp.eq.s32.totalorder %v2107, %v6737
    %vm7802 = vcmp.eq.s32.totalorder %v2107, %v6751
    %vm7803 = vcmp.eq.s32.totalorder %v2107, %v6765
    %vm7804 = vcmp.eq.s32.totalorder %v2107, %v6779
    %vm7805 = vcmp.eq.s32.totalorder %v2107, %v6793
    %vm7806 = vcmp.eq.s32.totalorder %v2107, %v6807
    %vm7807 = vcmp.eq.s32.totalorder %v2107, %v6821
    %vm7808 = vcmp.eq.s32.totalorder %v2107, %v6835
    %vm7809 = vcmp.eq.s32.totalorder %v2107, %v6849
    %vm7810 = vcmp.eq.s32.totalorder %v2107, %v6863
    %vm7811 = vcmp.eq.s32.totalorder %v2107, %v6877
    %vm7812 = vcmp.eq.s32.totalorder %v2107, %v6891
    %vm7813 = vcmp.eq.s32.totalorder %v2107, %v6905
    %vm7814 = vcmp.eq.s32.totalorder %v2107, %v6919
    %vm7815 = vcmp.eq.s32.totalorder %v2107, %v6933
    %vm7816 = vcmp.eq.s32.totalorder %v2107, %v6947
    %vm7817 = vcmp.eq.s32.totalorder %v2107, %v6961
    %vm7818 = vcmp.eq.s32.totalorder %v2107, %v6975
    %vm7819 = vcmp.eq.s32.totalorder %v2107, %v6989
    %vm7820 = vcmp.eq.s32.totalorder %v2107, %v7003
    %vm7821 = vcmp.eq.s32.totalorder %v2107, %v7017
    %vm7822 = vcmp.eq.s32.totalorder %v2107, %v7031
    %vm7823 = vcmp.eq.s32.totalorder %v2107, %v7045
    %vm7824 = vcmp.eq.s32.totalorder %v2107, %v7059
    %vm7825 = vcmp.eq.s32.totalorder %v2107, %v7073
    %vm7826 = vcmp.eq.s32.totalorder %v2107, %v7087
    %vm7827 = vcmp.eq.s32.totalorder %v2107, %v7101
    %vm7828 = vcmp.eq.s32.totalorder %v2107, %v7115
    %vm7829 = vcmp.eq.s32.totalorder %v2107, %v7129
    %vm7830 = vcmp.eq.s32.totalorder %v2107, %v7143
    %vm7831 = vcmp.eq.s32.totalorder %v2107, %v7157
    %vm7832 = vcmp.eq.s32.totalorder %v2107, %v7171
    %vm7833 = vcmp.eq.s32.totalorder %v2107, %v7185
    %vm7834 = vcmp.eq.s32.totalorder %v2107, %v7199
    %vm7835 = vcmp.eq.s32.totalorder %v2107, %v7213
    %vm7836 = vcmp.eq.s32.totalorder %v2107, %v7227
    %vm7837 = vcmp.eq.s32.totalorder %v2107, %v7241
    %vm7838 = vcmp.eq.s32.totalorder %v2107, %v7255
    %vm7839 = vcmp.eq.s32.totalorder %v2107, %v7269
    %vm7840 = vcmp.eq.s32.totalorder %v2107, %v7283
    %vm7841 = vcmp.eq.s32.totalorder %v2107, %v7297
    %vm7842 = vcmp.eq.s32.totalorder %v2107, %v7311
    %vm7843 = vcmp.eq.s32.totalorder %v2107, %v7325
    %vm7844 = vcmp.eq.s32.totalorder %v2107, %v7339
    %vm7845 = vcmp.eq.s32.totalorder %v2107, %v7353
    %vm7846 = vcmp.eq.s32.totalorder %v2107, %v7367
    %vm7847 = vcmp.eq.s32.totalorder %v2107, %v7381
    %vm7848 = vcmp.eq.s32.totalorder %v2107, %v7395
    %vm7849 = vcmp.eq.s32.totalorder %v2107, %v7409
    %vm7850 = vcmp.eq.s32.totalorder %v2107, %v7423
    %vm7851 = vcmp.eq.s32.totalorder %v2107, %v7437
    %vm7852 = vcmp.eq.s32.totalorder %v2107, %v7451
    %vm7853 = vcmp.eq.s32.totalorder %v2107, %v7465
    %vm7854 = vcmp.eq.s32.totalorder %v2107, %v7479
    %vm7855 = vcmp.eq.s32.totalorder %v2107, %v7493
    %vm7856 = vcmp.eq.s32.totalorder %v2107, %v7507
    %vm7857 = vcmp.eq.s32.totalorder %v2107, %v7521
    %vm7858 = vcmp.eq.s32.totalorder %v2107, %v7535
    %vm7859 = vcmp.eq.s32.totalorder %v2107, %v7549
    %vm7860 = vcmp.eq.s32.totalorder %v2107, %v7563
    %vm7861 = vcmp.eq.s32.totalorder %v2107, %v7577
    %vm7862 = vcmp.eq.s32.totalorder %v2107, %v7591
    %vm7863 = vcmp.eq.s32.totalorder %v2107, %v7605
    %vm7864 = vcmp.eq.s32.totalorder %v2107, %v7619
    %vm7865 = vcmp.eq.s32.totalorder %v2107, %v7633
    %vm7866 = vcmp.eq.s32.totalorder %v2107, %v7647
    %vm7867 = vcmp.eq.s32.totalorder %v2107, %v7661
    %vm7868 = vcmp.eq.s32.totalorder %v2107, %v7675
    %vm7869 = vcmp.eq.s32.totalorder %v2107, %v7689
    %vm7870 = vcmp.eq.s32.totalorder %v2107, %v7703
    %vm7871 = vcmp.eq.s32.totalorder %v2107, %v7717
    %vm7872 = vcmp.eq.s32.totalorder %v2107, %v7731
    %vm7873 = vcmp.eq.s32.totalorder %v2107, %v7745
    %v7874 = vsel %vm7746, 1, 0
    %v7875 = vsel %vm7747, 1, 0
    %v7876 = vsel %vm7748, 1, 0
    %v7877 = vsel %vm7749, 1, 0
    %v7878 = vsel %vm7750, 1, 0
    %v7879 = vsel %vm7751, 1, 0
    %v7880 = vsel %vm7752, 1, 0
    %v7881 = vsel %vm7753, 1, 0
    %v7882 = vsel %vm7754, 1, 0
    %v7883 = vsel %vm7755, 1, 0
    %v7884 = vsel %vm7756, 1, 0
    %v7885 = vsel %vm7757, 1, 0
    %v7886 = vsel %vm7758, 1, 0
    %v7887 = vsel %vm7759, 1, 0
    %v7888 = vsel %vm7760, 1, 0
    %v7889 = vsel %vm7761, 1, 0
    %v7890 = vsel %vm7762, 1, 0
    %v7891 = vsel %vm7763, 1, 0
    %v7892 = vsel %vm7764, 1, 0
    %v7893 = vsel %vm7765, 1, 0
    %v7894 = vsel %vm7766, 1, 0
    %v7895 = vsel %vm7767, 1, 0
    %v7896 = vsel %vm7768, 1, 0
    %v7897 = vsel %vm7769, 1, 0
    %v7898 = vsel %vm7770, 1, 0
    %v7899 = vsel %vm7771, 1, 0
    %v7900 = vsel %vm7772, 1, 0
    %v7901 = vsel %vm7773, 1, 0
    %v7902 = vsel %vm7774, 1, 0
    %v7903 = vsel %vm7775, 1, 0
    %v7904 = vsel %vm7776, 1, 0
    %v7905 = vsel %vm7777, 1, 0
    %v7906 = vsel %vm7778, 1, 0
    %v7907 = vsel %vm7779, 1, 0
    %v7908 = vsel %vm7780, 1, 0
    %v7909 = vsel %vm7781, 1, 0
    %v7910 = vsel %vm7782, 1, 0
    %v7911 = vsel %vm7783, 1, 0
    %v7912 = vsel %vm7784, 1, 0
    %v7913 = vsel %vm7785, 1, 0
    %v7914 = vsel %vm7786, 1, 0
    %v7915 = vsel %vm7787, 1, 0
    %v7916 = vsel %vm7788, 1, 0
    %v7917 = vsel %vm7789, 1, 0
    %v7918 = vsel %vm7790, 1, 0
    %v7919 = vsel %vm7791, 1, 0
    %v7920 = vsel %vm7792, 1, 0
    %v7921 = vsel %vm7793, 1, 0
    %v7922 = vsel %vm7794, 1, 0
    %v7923 = vsel %vm7795, 1, 0
    %v7924 = vsel %vm7796, 1, 0
    %v7925 = vsel %vm7797, 1, 0
    %v7926 = vsel %vm7798, 1, 0
    %v7927 = vsel %vm7799, 1, 0
    %v7928 = vsel %vm7800, 1, 0
    %v7929 = vsel %vm7801, 1, 0
    %v7930 = vsel %vm7802, 1, 0
    %v7931 = vsel %vm7803, 1, 0
    %v7932 = vsel %vm7804, 1, 0
    %v7933 = vsel %vm7805, 1, 0
    %v7934 = vsel %vm7806, 1, 0
    %v7935 = vsel %vm7807, 1, 0
    %v7936 = vsel %vm7808, 1, 0
    %v7937 = vsel %vm7809, 1, 0
    %v7938 = vsel %vm7810, 1, 0
    %v7939 = vsel %vm7811, 1, 0
    %v7940 = vsel %vm7812, 1, 0
    %v7941 = vsel %vm7813, 1, 0
    %v7942 = vsel %vm7814, 1, 0
    %v7943 = vsel %vm7815, 1, 0
    %v7944 = vsel %vm7816, 1, 0
    %v7945 = vsel %vm7817, 1, 0
    %v7946 = vsel %vm7818, 1, 0
    %v7947 = vsel %vm7819, 1, 0
    %v7948 = vsel %vm7820, 1, 0
    %v7949 = vsel %vm7821, 1, 0
    %v7950 = vsel %vm7822, 1, 0
    %v7951 = vsel %vm7823, 1, 0
    %v7952 = vsel %vm7824, 1, 0
    %v7953 = vsel %vm7825, 1, 0
    %v7954 = vsel %vm7826, 1, 0
    %v7955 = vsel %vm7827, 1, 0
    %v7956 = vsel %vm7828, 1, 0
    %v7957 = vsel %vm7829, 1, 0
    %v7958 = vsel %vm7830, 1, 0
    %v7959 = vsel %vm7831, 1, 0
    %v7960 = vsel %vm7832, 1, 0
    %v7961 = vsel %vm7833, 1, 0
    %v7962 = vsel %vm7834, 1, 0
    %v7963 = vsel %vm7835, 1, 0
    %v7964 = vsel %vm7836, 1, 0
    %v7965 = vsel %vm7837, 1, 0
    %v7966 = vsel %vm7838, 1, 0
    %v7967 = vsel %vm7839, 1, 0
    %v7968 = vsel %vm7840, 1, 0
    %v7969 = vsel %vm7841, 1, 0
    %v7970 = vsel %vm7842, 1, 0
    %v7971 = vsel %vm7843, 1, 0
    %v7972 = vsel %vm7844, 1, 0
    %v7973 = vsel %vm7845, 1, 0
    %v7974 = vsel %vm7846, 1, 0
    %v7975 = vsel %vm7847, 1, 0
    %v7976 = vsel %vm7848, 1, 0
    %v7977 = vsel %vm7849, 1, 0
    %v7978 = vsel %vm7850, 1, 0
    %v7979 = vsel %vm7851, 1, 0
    %v7980 = vsel %vm7852, 1, 0
    %v7981 = vsel %vm7853, 1, 0
    %v7982 = vsel %vm7854, 1, 0
    %v7983 = vsel %vm7855, 1, 0
    %v7984 = vsel %vm7856, 1, 0
    %v7985 = vsel %vm7857, 1, 0
    %v7986 = vsel %vm7858, 1, 0
    %v7987 = vsel %vm7859, 1, 0
    %v7988 = vsel %vm7860, 1, 0
    %v7989 = vsel %vm7861, 1, 0
    %v7990 = vsel %vm7862, 1, 0
    %v7991 = vsel %vm7863, 1, 0
    %v7992 = vsel %vm7864, 1, 0
    %v7993 = vsel %vm7865, 1, 0
    %v7994 = vsel %vm7866, 1, 0
    %v7995 = vsel %vm7867, 1, 0
    %v7996 = vsel %vm7868, 1, 0
    %v7997 = vsel %vm7869, 1, 0
    %v7998 = vsel %vm7870, 1, 0
    %v7999 = vsel %vm7871, 1, 0
    %v8000 = vsel %vm7872, 1, 0
    %v8001 = vsel %vm7873, 1, 0
    %v8002 = vcvt.s32.f32 %v7874
    %v8003 = vcvt.s32.f32 %v7875
    %v8004 = vcvt.s32.f32 %v7876
    %v8005 = vcvt.s32.f32 %v7877
    %v8006 = vcvt.s32.f32 %v7878
    %v8007 = vcvt.s32.f32 %v7879
    %v8008 = vcvt.s32.f32 %v7880
    %v8009 = vcvt.s32.f32 %v7881
    %v8010 = vcvt.s32.f32 %v7882
    %v8011 = vcvt.s32.f32 %v7883
    %v8012 = vcvt.s32.f32 %v7884
    %v8013 = vcvt.s32.f32 %v7885
    %v8014 = vcvt.s32.f32 %v7886
    %v8015 = vcvt.s32.f32 %v7887
    %v8016 = vcvt.s32.f32 %v7888
    %v8017 = vcvt.s32.f32 %v7889
    %v8018 = vcvt.s32.f32 %v7890
    %v8019 = vcvt.s32.f32 %v7891
    %v8020 = vcvt.s32.f32 %v7892
    %v8021 = vcvt.s32.f32 %v7893
    %v8022 = vcvt.s32.f32 %v7894
    %v8023 = vcvt.s32.f32 %v7895
    %v8024 = vcvt.s32.f32 %v7896
    %v8025 = vcvt.s32.f32 %v7897
    %v8026 = vcvt.s32.f32 %v7898
    %v8027 = vcvt.s32.f32 %v7899
    %v8028 = vcvt.s32.f32 %v7900
    %v8029 = vcvt.s32.f32 %v7901
    %v8030 = vcvt.s32.f32 %v7902
    %v8031 = vcvt.s32.f32 %v7903
    %v8032 = vcvt.s32.f32 %v7904
    %v8033 = vcvt.s32.f32 %v7905
    %v8034 = vcvt.s32.f32 %v7906
    %v8035 = vcvt.s32.f32 %v7907
    %v8036 = vcvt.s32.f32 %v7908
    %v8037 = vcvt.s32.f32 %v7909
    %v8038 = vcvt.s32.f32 %v7910
    %v8039 = vcvt.s32.f32 %v7911
    %v8040 = vcvt.s32.f32 %v7912
    %v8041 = vcvt.s32.f32 %v7913
    %v8042 = vcvt.s32.f32 %v7914
    %v8043 = vcvt.s32.f32 %v7915
    %v8044 = vcvt.s32.f32 %v7916
    %v8045 = vcvt.s32.f32 %v7917
    %v8046 = vcvt.s32.f32 %v7918
    %v8047 = vcvt.s32.f32 %v7919
    %v8048 = vcvt.s32.f32 %v7920
    %v8049 = vcvt.s32.f32 %v7921
    %v8050 = vcvt.s32.f32 %v7922
    %v8051 = vcvt.s32.f32 %v7923
    %v8052 = vcvt.s32.f32 %v7924
    %v8053 = vcvt.s32.f32 %v7925
    %v8054 = vcvt.s32.f32 %v7926
    %v8055 = vcvt.s32.f32 %v7927
    %v8056 = vcvt.s32.f32 %v7928
    %v8057 = vcvt.s32.f32 %v7929
    %v8058 = vcvt.s32.f32 %v7930
    %v8059 = vcvt.s32.f32 %v7931
    %v8060 = vcvt.s32.f32 %v7932
    %v8061 = vcvt.s32.f32 %v7933
    %v8062 = vcvt.s32.f32 %v7934
    %v8063 = vcvt.s32.f32 %v7935
    %v8064 = vcvt.s32.f32 %v7936
    %v8065 = vcvt.s32.f32 %v7937
    %v8066 = vcvt.s32.f32 %v7938
    %v8067 = vcvt.s32.f32 %v7939
    %v8068 = vcvt.s32.f32 %v7940
    %v8069 = vcvt.s32.f32 %v7941
    %v8070 = vcvt.s32.f32 %v7942
    %v8071 = vcvt.s32.f32 %v7943
    %v8072 = vcvt.s32.f32 %v7944
    %v8073 = vcvt.s32.f32 %v7945
    %v8074 = vcvt.s32.f32 %v7946
    %v8075 = vcvt.s32.f32 %v7947
    %v8076 = vcvt.s32.f32 %v7948
    %v8077 = vcvt.s32.f32 %v7949
    %v8078 = vcvt.s32.f32 %v7950
    %v8079 = vcvt.s32.f32 %v7951
    %v8080 = vcvt.s32.f32 %v7952
    %v8081 = vcvt.s32.f32 %v7953
    %v8082 = vcvt.s32.f32 %v7954
    %v8083 = vcvt.s32.f32 %v7955
    %v8084 = vcvt.s32.f32 %v7956
    %v8085 = vcvt.s32.f32 %v7957
    %v8086 = vcvt.s32.f32 %v7958
    %v8087 = vcvt.s32.f32 %v7959
    %v8088 = vcvt.s32.f32 %v7960
    %v8089 = vcvt.s32.f32 %v7961
    %v8090 = vcvt.s32.f32 %v7962
    %v8091 = vcvt.s32.f32 %v7963
    %v8092 = vcvt.s32.f32 %v7964
    %v8093 = vcvt.s32.f32 %v7965
    %v8094 = vcvt.s32.f32 %v7966
    %v8095 = vcvt.s32.f32 %v7967
    %v8096 = vcvt.s32.f32 %v7968
    %v8097 = vcvt.s32.f32 %v7969
    %v8098 = vcvt.s32.f32 %v7970
    %v8099 = vcvt.s32.f32 %v7971
    %v8100 = vcvt.s32.f32 %v7972
    %v8101 = vcvt.s32.f32 %v7973
    %v8102 = vcvt.s32.f32 %v7974
    %v8103 = vcvt.s32.f32 %v7975
    %v8104 = vcvt.s32.f32 %v7976
    %v8105 = vcvt.s32.f32 %v7977
    %v8106 = vcvt.s32.f32 %v7978
    %v8107 = vcvt.s32.f32 %v7979
    %v8108 = vcvt.s32.f32 %v7980
    %v8109 = vcvt.s32.f32 %v7981
    %v8110 = vcvt.s32.f32 %v7982
    %v8111 = vcvt.s32.f32 %v7983
    %v8112 = vcvt.s32.f32 %v7984
    %v8113 = vcvt.s32.f32 %v7985
    %v8114 = vcvt.s32.f32 %v7986
    %v8115 = vcvt.s32.f32 %v7987
    %v8116 = vcvt.s32.f32 %v7988
    %v8117 = vcvt.s32.f32 %v7989
    %v8118 = vcvt.s32.f32 %v7990
    %v8119 = vcvt.s32.f32 %v7991
    %v8120 = vcvt.s32.f32 %v7992
    %v8121 = vcvt.s32.f32 %v7993
    %v8122 = vcvt.s32.f32 %v7994
    %v8123 = vcvt.s32.f32 %v7995
    %v8124 = vcvt.s32.f32 %v7996
    %v8125 = vcvt.s32.f32 %v7997
    %v8126 = vcvt.s32.f32 %v7998
    %v8127 = vcvt.s32.f32 %v7999
    %v8128 = vcvt.s32.f32 %v8000
    %v8129 = vcvt.s32.f32 %v8001
    %v8130 = vsel %vm5185, %v8002, %v5055
    %v8131 = vsel %vm5185, %v8003, %v5056
    %v8132 = vsel %vm5185, %v8004, %v5057
    %v8133 = vsel %vm5185, %v8005, %v5058
    %v8134 = vsel %vm5185, %v8006, %v5059
    %v8135 = vsel %vm5185, %v8007, %v5060
    %v8136 = vsel %vm5185, %v8008, %v5061
    %v8137 = vsel %vm5185, %v8009, %v5062
    %v8138 = vsel %vm5185, %v8010, %v5063
    %v8139 = vsel %vm5185, %v8011, %v5064
    %v8140 = vsel %vm5185, %v8012, %v5065
    %v8141 = vsel %vm5185, %v8013, %v5066
    %v8142 = vsel %vm5185, %v8014, %v5067
    %v8143 = vsel %vm5185, %v8015, %v5068
    %v8144 = vsel %vm5185, %v8016, %v5069
    %v8145 = vsel %vm5185, %v8017, %v5070
    %v8146 = vsel %vm5185, %v8018, %v5071
    %v8147 = vsel %vm5185, %v8019, %v5072
    %v8148 = vsel %vm5185, %v8020, %v5073
    %v8149 = vsel %vm5185, %v8021, %v5074
    %v8150 = vsel %vm5185, %v8022, %v5075
    %v8151 = vsel %vm5185, %v8023, %v5076
    %v8152 = vsel %vm5185, %v8024, %v5077
    %v8153 = vsel %vm5185, %v8025, %v5078
    %v8154 = vsel %vm5185, %v8026, %v5079
    %v8155 = vsel %vm5185, %v8027, %v5080
    %v8156 = vsel %vm5185, %v8028, %v5081
    %v8157 = vsel %vm5185, %v8029, %v5082
    %v8158 = vsel %vm5185, %v8030, %v5083
    %v8159 = vsel %vm5185, %v8031, %v5084
    %v8160 = vsel %vm5185, %v8032, %v5085
    %v8161 = vsel %vm5185, %v8033, %v5086
    %v8162 = vsel %vm5185, %v8034, %v5087
    %v8163 = vsel %vm5185, %v8035, %v5088
    %v8164 = vsel %vm5185, %v8036, %v5089
    %v8165 = vsel %vm5185, %v8037, %v5090
    %v8166 = vsel %vm5185, %v8038, %v5091
    %v8167 = vsel %vm5185, %v8039, %v5092
    %v8168 = vsel %vm5185, %v8040, %v5093
    %v8169 = vsel %vm5185, %v8041, %v5094
    %v8170 = vsel %vm5185, %v8042, %v5095
    %v8171 = vsel %vm5185, %v8043, %v5096
    %v8172 = vsel %vm5185, %v8044, %v5097
    %v8173 = vsel %vm5185, %v8045, %v5098
    %v8174 = vsel %vm5185, %v8046, %v5099
    %v8175 = vsel %vm5185, %v8047, %v5100
    %v8176 = vsel %vm5185, %v8048, %v5101
    %v8177 = vsel %vm5185, %v8049, %v5102
    %v8178 = vsel %vm5185, %v8050, %v5103
    %v8179 = vsel %vm5185, %v8051, %v5104
    %v8180 = vsel %vm5185, %v8052, %v5105
    %v8181 = vsel %vm5185, %v8053, %v5106
    %v8182 = vsel %vm5185, %v8054, %v5107
    %v8183 = vsel %vm5185, %v8055, %v5108
    %v8184 = vsel %vm5185, %v8056, %v5109
    %v8185 = vsel %vm5185, %v8057, %v5110
    %v8186 = vsel %vm5185, %v8058, %v5111
    %v8187 = vsel %vm5185, %v8059, %v5112
    %v8188 = vsel %vm5185, %v8060, %v5113
    %v8189 = vsel %vm5185, %v8061, %v5114
    %v8190 = vsel %vm5185, %v8062, %v5115
    %v8191 = vsel %vm5185, %v8063, %v5116
    %v8192 = vsel %vm5185, %v8064, %v5117
    %v8193 = vsel %vm5185, %v8065, %v5118
    %v8194 = vsel %vm5185, %v8066, %v5119
    %v8195 = vsel %vm5185, %v8067, %v5120
    %v8196 = vsel %vm5185, %v8068, %v5121
    %v8197 = vsel %vm5185, %v8069, %v5122
    %v8198 = vsel %vm5185, %v8070, %v5123
    %v8199 = vsel %vm5185, %v8071, %v5124
    %v8200 = vsel %vm5185, %v8072, %v5125
    %v8201 = vsel %vm5185, %v8073, %v5126
    %v8202 = vsel %vm5185, %v8074, %v5127
    %v8203 = vsel %vm5185, %v8075, %v5128
    %v8204 = vsel %vm5185, %v8076, %v5129
    %v8205 = vsel %vm5185, %v8077, %v5130
    %v8206 = vsel %vm5185, %v8078, %v5131
    %v8207 = vsel %vm5185, %v8079, %v5132
    %v8208 = vsel %vm5185, %v8080, %v5133
    %v8209 = vsel %vm5185, %v8081, %v5134
    %v8210 = vsel %vm5185, %v8082, %v5135
    %v8211 = vsel %vm5185, %v8083, %v5136
    %v8212 = vsel %vm5185, %v8084, %v5137
    %v8213 = vsel %vm5185, %v8085, %v5138
    %v8214 = vsel %vm5185, %v8086, %v5139
    %v8215 = vsel %vm5185, %v8087, %v5140
    %v8216 = vsel %vm5185, %v8088, %v5141
    %v8217 = vsel %vm5185, %v8089, %v5142
    %v8218 = vsel %vm5185, %v8090, %v5143
    %v8219 = vsel %vm5185, %v8091, %v5144
    %v8220 = vsel %vm5185, %v8092, %v5145
    %v8221 = vsel %vm5185, %v8093, %v5146
    %v8222 = vsel %vm5185, %v8094, %v5147
    %v8223 = vsel %vm5185, %v8095, %v5148
    %v8224 = vsel %vm5185, %v8096, %v5149
    %v8225 = vsel %vm5185, %v8097, %v5150
    %v8226 = vsel %vm5185, %v8098, %v5151
    %v8227 = vsel %vm5185, %v8099, %v5152
    %v8228 = vsel %vm5185, %v8100, %v5153
    %v8229 = vsel %vm5185, %v8101, %v5154
    %v8230 = vsel %vm5185, %v8102, %v5155
    %v8231 = vsel %vm5185, %v8103, %v5156
    %v8232 = vsel %vm5185, %v8104, %v5157
    %v8233 = vsel %vm5185, %v8105, %v5158
    %v8234 = vsel %vm5185, %v8106, %v5159
    %v8235 = vsel %vm5185, %v8107, %v5160
    %v8236 = vsel %vm5185, %v8108, %v5161
    %v8237 = vsel %vm5185, %v8109, %v5162
    %v8238 = vsel %vm5185, %v8110, %v5163
    %v8239 = vsel %vm5185, %v8111, %v5164
    %v8240 = vsel %vm5185, %v8112, %v5165
    %v8241 = vsel %vm5185, %v8113, %v5166
    %v8242 = vsel %vm5185, %v8114, %v5167
    %v8243 = vsel %vm5185, %v8115, %v5168
    %v8244 = vsel %vm5185, %v8116, %v5169
    %v8245 = vsel %vm5185, %v8117, %v5170
    %v8246 = vsel %vm5185, %v8118, %v5171
    %v8247 = vsel %vm5185, %v8119, %v5172
    %v8248 = vsel %vm5185, %v8120, %v5173
    %v8249 = vsel %vm5185, %v8121, %v5174
    %v8250 = vsel %vm5185, %v8122, %v5175
    %v8251 = vsel %vm5185, %v8123, %v5176
    %v8252 = vsel %vm5185, %v8124, %v5177
    %v8253 = vsel %vm5185, %v8125, %v5178
    %v8254 = vsel %vm5185, %v8126, %v5179
    %v8255 = vsel %vm5185, %v8127, %v5180
    %v8256 = vsel %vm5185, %v8128, %v5181
    %v8257 = vsel %vm5185, %v8129, %v5182
    %vm8258 = vcmp.ge.s32.totalorder %v2107, 64
    %vm8259 = vcmp.lt.s32.totalorder %v2107, 84
    %vm8260 = vmand %vm8258, %vm8259
    %v8261 = vsel %vm8260, %v1468, -inf
    %v8262 = vsel %vm8260, %v1473, -inf
    %v8263 = vsel %vm8260, %v1478, -inf
    %v8264 = vsel %vm8260, %v1483, -inf
    %v8265 = vsel %vm8260, %v1488, -inf
    %v8266 = vsel %vm8260, %v1493, -inf
    %v8267 = vsel %vm8260, %v1498, -inf
    %v8268 = vsel %vm8260, %v1503, -inf
    %v8269 = vsel %vm8260, %v1508, -inf
    %v8270 = vsel %vm8260, %v1513, -inf
    %v8271 = vsel %vm8260, %v1518, -inf
    %v8272 = vsel %vm8260, %v1523, -inf
    %v8273 = vsel %vm8260, %v1528, -inf
    %v8274 = vsel %vm8260, %v1533, -inf
    %v8275 = vsel %vm8260, %v1538, -inf
    %v8276 = vsel %vm8260, %v1543, -inf
    %v8277 = vsel %vm8260, %v1548, -inf
    %v8278 = vsel %vm8260, %v1553, -inf
    %v8279 = vsel %vm8260, %v1558, -inf
    %v8280 = vsel %vm8260, %v1563, -inf
    %v8281 = vsel %vm8260, %v1568, -inf
    %v8282 = vsel %vm8260, %v1573, -inf
    %v8283 = vsel %vm8260, %v1578, -inf
    %v8284 = vsel %vm8260, %v1583, -inf
    %v8285 = vsel %vm8260, %v1588, -inf
    %v8286 = vsel %vm8260, %v1593, -inf
    %v8287 = vsel %vm8260, %v1598, -inf
    %v8288 = vsel %vm8260, %v1603, -inf
    %v8289 = vsel %vm8260, %v1608, -inf
    %v8290 = vsel %vm8260, %v1613, -inf
    %v8291 = vsel %vm8260, %v1618, -inf
    %v8292 = vsel %vm8260, %v1623, -inf
    %v8293 = vsel %vm8260, %v1628, -inf
    %v8294 = vsel %vm8260, %v1633, -inf
    %v8295 = vsel %vm8260, %v1638, -inf
    %v8296 = vsel %vm8260, %v1643, -inf
    %v8297 = vsel %vm8260, %v1648, -inf
    %v8298 = vsel %vm8260, %v1653, -inf
    %v8299 = vsel %vm8260, %v1658, -inf
    %v8300 = vsel %vm8260, %v1663, -inf
    %v8301 = vsel %vm8260, %v1668, -inf
    %v8302 = vsel %vm8260, %v1673, -inf
    %v8303 = vsel %vm8260, %v1678, -inf
    %v8304 = vsel %vm8260, %v1683, -inf
    %v8305 = vsel %vm8260, %v1688, -inf
    %v8306 = vsel %vm8260, %v1693, -inf
    %v8307 = vsel %vm8260, %v1698, -inf
    %v8308 = vsel %vm8260, %v1703, -inf
    %v8309 = vsel %vm8260, %v1708, -inf
    %v8310 = vsel %vm8260, %v1713, -inf
    %v8311 = vsel %vm8260, %v1718, -inf
    %v8312 = vsel %vm8260, %v1723, -inf
    %v8313 = vsel %vm8260, %v1728, -inf
    %v8314 = vsel %vm8260, %v1733, -inf
    %v8315 = vsel %vm8260, %v1738, -inf
    %v8316 = vsel %vm8260, %v1743, -inf
    %v8317 = vsel %vm8260, %v1748, -inf
    %v8318 = vsel %vm8260, %v1753, -inf
    %v8319 = vsel %vm8260, %v1758, -inf
    %v8320 = vsel %vm8260, %v1763, -inf
    %v8321 = vsel %vm8260, %v1768, -inf
    %v8322 = vsel %vm8260, %v1773, -inf
    %v8323 = vsel %vm8260, %v1778, -inf
    %v8324 = vsel %vm8260, %v1783, -inf
    %v8325 = vsel %vm8260, %v1788, -inf
    %v8326 = vsel %vm8260, %v1793, -inf
    %v8327 = vsel %vm8260, %v1798, -inf
    %v8328 = vsel %vm8260, %v1803, -inf
    %v8329 = vsel %vm8260, %v1808, -inf
    %v8330 = vsel %vm8260, %v1813, -inf
    %v8331 = vsel %vm8260, %v1818, -inf
    %v8332 = vsel %vm8260, %v1823, -inf
    %v8333 = vsel %vm8260, %v1828, -inf
    %v8334 = vsel %vm8260, %v1833, -inf
    %v8335 = vsel %vm8260, %v1838, -inf
    %v8336 = vsel %vm8260, %v1843, -inf
    %v8337 = vsel %vm8260, %v1848, -inf
    %v8338 = vsel %vm8260, %v1853, -inf
    %v8339 = vsel %vm8260, %v1858, -inf
    %v8340 = vsel %vm8260, %v1863, -inf
    %v8341 = vsel %vm8260, %v1868, -inf
    %v8342 = vsel %vm8260, %v1873, -inf
    %v8343 = vsel %vm8260, %v1878, -inf
    %v8344 = vsel %vm8260, %v1883, -inf
    %v8345 = vsel %vm8260, %v1888, -inf
    %v8346 = vsel %vm8260, %v1893, -inf
    %v8347 = vsel %vm8260, %v1898, -inf
    %v8348 = vsel %vm8260, %v1903, -inf
    %v8349 = vsel %vm8260, %v1908, -inf
    %v8350 = vsel %vm8260, %v1913, -inf
    %v8351 = vsel %vm8260, %v1918, -inf
    %v8352 = vsel %vm8260, %v1923, -inf
    %v8353 = vsel %vm8260, %v1928, -inf
    %v8354 = vsel %vm8260, %v1933, -inf
    %v8355 = vsel %vm8260, %v1938, -inf
    %v8356 = vsel %vm8260, %v1943, -inf
    %v8357 = vsel %vm8260, %v1948, -inf
    %v8358 = vsel %vm8260, %v1953, -inf
    %v8359 = vsel %vm8260, %v1958, -inf
    %v8360 = vsel %vm8260, %v1963, -inf
    %v8361 = vsel %vm8260, %v1968, -inf
    %v8362 = vsel %vm8260, %v1973, -inf
    %v8363 = vsel %vm8260, %v1978, -inf
    %v8364 = vsel %vm8260, %v1983, -inf
    %v8365 = vsel %vm8260, %v1988, -inf
    %v8366 = vsel %vm8260, %v1993, -inf
    %v8367 = vsel %vm8260, %v1998, -inf
    %v8368 = vsel %vm8260, %v2003, -inf
    %v8369 = vsel %vm8260, %v2008, -inf
    %v8370 = vsel %vm8260, %v2013, -inf
    %v8371 = vsel %vm8260, %v2018, -inf
    %v8372 = vsel %vm8260, %v2023, -inf
    %v8373 = vsel %vm8260, %v2028, -inf
    %v8374 = vsel %vm8260, %v2033, -inf
    %v8375 = vsel %vm8260, %v2038, -inf
    %v8376 = vsel %vm8260, %v2043, -inf
    %v8377 = vsel %vm8260, %v2048, -inf
    %v8378 = vsel %vm8260, %v2053, -inf
    %v8379 = vsel %vm8260, %v2058, -inf
    %v8380 = vsel %vm8260, %v2063, -inf
    %v8381 = vsel %vm8260, %v2068, -inf
    %v8382 = vsel %vm8260, %v2073, -inf
    %v8383 = vsel %vm8260, %v2078, -inf
    %v8384 = vsel %vm8260, %v2083, -inf
    %v8385 = vsel %vm8260, %v2088, -inf
    %v8386 = vsel %vm8260, %v2093, -inf
    %v8387 = vsel %vm8260, %v2098, -inf
    %v8388 = vsel %vm8260, %v2103, -inf
    %8389 = vmax.xlane.f32.xlu0 %v8261
    %v8390 = vpop.xlane.xlu0 %8389
    %8391 = vmax.xlane.f32.xlu0 %v8262
    %v8392 = vpop.xlane.xlu0 %8391
    %8393 = vmax.xlane.f32.xlu0 %v8263
    %v8394 = vpop.xlane.xlu0 %8393
    %8395 = vmax.xlane.f32.xlu0 %v8264
    %v8396 = vpop.xlane.xlu0 %8395
    %8397 = vmax.xlane.f32.xlu0 %v8265
    %v8398 = vpop.xlane.xlu0 %8397
    %8399 = vmax.xlane.f32.xlu0 %v8266
    %v8400 = vpop.xlane.xlu0 %8399
    %8401 = vmax.xlane.f32.xlu0 %v8267
    %v8402 = vpop.xlane.xlu0 %8401
    %8403 = vmax.xlane.f32.xlu0 %v8268
    %v8404 = vpop.xlane.xlu0 %8403
    %8405 = vmax.xlane.f32.xlu0 %v8269
    %v8406 = vpop.xlane.xlu0 %8405
    %8407 = vmax.xlane.f32.xlu0 %v8270
    %v8408 = vpop.xlane.xlu0 %8407
    %8409 = vmax.xlane.f32.xlu0 %v8271
    %v8410 = vpop.xlane.xlu0 %8409
    %8411 = vmax.xlane.f32.xlu0 %v8272
    %v8412 = vpop.xlane.xlu0 %8411
    %8413 = vmax.xlane.f32.xlu0 %v8273
    %v8414 = vpop.xlane.xlu0 %8413
    %8415 = vmax.xlane.f32.xlu0 %v8274
    %v8416 = vpop.xlane.xlu0 %8415
    %8417 = vmax.xlane.f32.xlu0 %v8275
    %v8418 = vpop.xlane.xlu0 %8417
    %8419 = vmax.xlane.f32.xlu0 %v8276
    %v8420 = vpop.xlane.xlu0 %8419
    %8421 = vmax.xlane.f32.xlu0 %v8277
    %v8422 = vpop.xlane.xlu0 %8421
    %8423 = vmax.xlane.f32.xlu0 %v8278
    %v8424 = vpop.xlane.xlu0 %8423
    %8425 = vmax.xlane.f32.xlu0 %v8279
    %v8426 = vpop.xlane.xlu0 %8425
    %8427 = vmax.xlane.f32.xlu0 %v8280
    %v8428 = vpop.xlane.xlu0 %8427
    %8429 = vmax.xlane.f32.xlu0 %v8281
    %v8430 = vpop.xlane.xlu0 %8429
    %8431 = vmax.xlane.f32.xlu0 %v8282
    %v8432 = vpop.xlane.xlu0 %8431
    %8433 = vmax.xlane.f32.xlu0 %v8283
    %v8434 = vpop.xlane.xlu0 %8433
    %8435 = vmax.xlane.f32.xlu0 %v8284
    %v8436 = vpop.xlane.xlu0 %8435
    %8437 = vmax.xlane.f32.xlu0 %v8285
    %v8438 = vpop.xlane.xlu0 %8437
    %8439 = vmax.xlane.f32.xlu0 %v8286
    %v8440 = vpop.xlane.xlu0 %8439
    %8441 = vmax.xlane.f32.xlu0 %v8287
    %v8442 = vpop.xlane.xlu0 %8441
    %8443 = vmax.xlane.f32.xlu0 %v8288
    %v8444 = vpop.xlane.xlu0 %8443
    %8445 = vmax.xlane.f32.xlu0 %v8289
    %v8446 = vpop.xlane.xlu0 %8445
    %8447 = vmax.xlane.f32.xlu0 %v8290
    %v8448 = vpop.xlane.xlu0 %8447
    %8449 = vmax.xlane.f32.xlu0 %v8291
    %v8450 = vpop.xlane.xlu0 %8449
    %8451 = vmax.xlane.f32.xlu0 %v8292
    %v8452 = vpop.xlane.xlu0 %8451
    %8453 = vmax.xlane.f32.xlu0 %v8293
    %v8454 = vpop.xlane.xlu0 %8453
    %8455 = vmax.xlane.f32.xlu0 %v8294
    %v8456 = vpop.xlane.xlu0 %8455
    %8457 = vmax.xlane.f32.xlu0 %v8295
    %v8458 = vpop.xlane.xlu0 %8457
    %8459 = vmax.xlane.f32.xlu0 %v8296
    %v8460 = vpop.xlane.xlu0 %8459
    %8461 = vmax.xlane.f32.xlu0 %v8297
    %v8462 = vpop.xlane.xlu0 %8461
    %8463 = vmax.xlane.f32.xlu0 %v8298
    %v8464 = vpop.xlane.xlu0 %8463
    %8465 = vmax.xlane.f32.xlu0 %v8299
    %v8466 = vpop.xlane.xlu0 %8465
    %8467 = vmax.xlane.f32.xlu0 %v8300
    %v8468 = vpop.xlane.xlu0 %8467
    %8469 = vmax.xlane.f32.xlu0 %v8301
    %v8470 = vpop.xlane.xlu0 %8469
    %8471 = vmax.xlane.f32.xlu0 %v8302
    %v8472 = vpop.xlane.xlu0 %8471
    %8473 = vmax.xlane.f32.xlu0 %v8303
    %v8474 = vpop.xlane.xlu0 %8473
    %8475 = vmax.xlane.f32.xlu0 %v8304
    %v8476 = vpop.xlane.xlu0 %8475
    %8477 = vmax.xlane.f32.xlu0 %v8305
    %v8478 = vpop.xlane.xlu0 %8477
    %8479 = vmax.xlane.f32.xlu0 %v8306
    %v8480 = vpop.xlane.xlu0 %8479
    %8481 = vmax.xlane.f32.xlu0 %v8307
    %v8482 = vpop.xlane.xlu0 %8481
    %8483 = vmax.xlane.f32.xlu0 %v8308
    %v8484 = vpop.xlane.xlu0 %8483
    %8485 = vmax.xlane.f32.xlu0 %v8309
    %v8486 = vpop.xlane.xlu0 %8485
    %8487 = vmax.xlane.f32.xlu0 %v8310
    %v8488 = vpop.xlane.xlu0 %8487
    %8489 = vmax.xlane.f32.xlu0 %v8311
    %v8490 = vpop.xlane.xlu0 %8489
    %8491 = vmax.xlane.f32.xlu0 %v8312
    %v8492 = vpop.xlane.xlu0 %8491
    %8493 = vmax.xlane.f32.xlu0 %v8313
    %v8494 = vpop.xlane.xlu0 %8493
    %8495 = vmax.xlane.f32.xlu0 %v8314
    %v8496 = vpop.xlane.xlu0 %8495
    %8497 = vmax.xlane.f32.xlu0 %v8315
    %v8498 = vpop.xlane.xlu0 %8497
    %8499 = vmax.xlane.f32.xlu0 %v8316
    %v8500 = vpop.xlane.xlu0 %8499
    %8501 = vmax.xlane.f32.xlu0 %v8317
    %v8502 = vpop.xlane.xlu0 %8501
    %8503 = vmax.xlane.f32.xlu0 %v8318
    %v8504 = vpop.xlane.xlu0 %8503
    %8505 = vmax.xlane.f32.xlu0 %v8319
    %v8506 = vpop.xlane.xlu0 %8505
    %8507 = vmax.xlane.f32.xlu0 %v8320
    %v8508 = vpop.xlane.xlu0 %8507
    %8509 = vmax.xlane.f32.xlu0 %v8321
    %v8510 = vpop.xlane.xlu0 %8509
    %8511 = vmax.xlane.f32.xlu0 %v8322
    %v8512 = vpop.xlane.xlu0 %8511
    %8513 = vmax.xlane.f32.xlu0 %v8323
    %v8514 = vpop.xlane.xlu0 %8513
    %8515 = vmax.xlane.f32.xlu0 %v8324
    %v8516 = vpop.xlane.xlu0 %8515
    %8517 = vmax.xlane.f32.xlu0 %v8325
    %v8518 = vpop.xlane.xlu0 %8517
    %8519 = vmax.xlane.f32.xlu0 %v8326
    %v8520 = vpop.xlane.xlu0 %8519
    %8521 = vmax.xlane.f32.xlu0 %v8327
    %v8522 = vpop.xlane.xlu0 %8521
    %8523 = vmax.xlane.f32.xlu0 %v8328
    %v8524 = vpop.xlane.xlu0 %8523
    %8525 = vmax.xlane.f32.xlu0 %v8329
    %v8526 = vpop.xlane.xlu0 %8525
    %8527 = vmax.xlane.f32.xlu0 %v8330
    %v8528 = vpop.xlane.xlu0 %8527
    %8529 = vmax.xlane.f32.xlu0 %v8331
    %v8530 = vpop.xlane.xlu0 %8529
    %8531 = vmax.xlane.f32.xlu0 %v8332
    %v8532 = vpop.xlane.xlu0 %8531
    %8533 = vmax.xlane.f32.xlu0 %v8333
    %v8534 = vpop.xlane.xlu0 %8533
    %8535 = vmax.xlane.f32.xlu0 %v8334
    %v8536 = vpop.xlane.xlu0 %8535
    %8537 = vmax.xlane.f32.xlu0 %v8335
    %v8538 = vpop.xlane.xlu0 %8537
    %8539 = vmax.xlane.f32.xlu0 %v8336
    %v8540 = vpop.xlane.xlu0 %8539
    %8541 = vmax.xlane.f32.xlu0 %v8337
    %v8542 = vpop.xlane.xlu0 %8541
    %8543 = vmax.xlane.f32.xlu0 %v8338
    %v8544 = vpop.xlane.xlu0 %8543
    %8545 = vmax.xlane.f32.xlu0 %v8339
    %v8546 = vpop.xlane.xlu0 %8545
    %8547 = vmax.xlane.f32.xlu0 %v8340
    %v8548 = vpop.xlane.xlu0 %8547
    %8549 = vmax.xlane.f32.xlu0 %v8341
    %v8550 = vpop.xlane.xlu0 %8549
    %8551 = vmax.xlane.f32.xlu0 %v8342
    %v8552 = vpop.xlane.xlu0 %8551
    %8553 = vmax.xlane.f32.xlu0 %v8343
    %v8554 = vpop.xlane.xlu0 %8553
    %8555 = vmax.xlane.f32.xlu0 %v8344
    %v8556 = vpop.xlane.xlu0 %8555
    %8557 = vmax.xlane.f32.xlu0 %v8345
    %v8558 = vpop.xlane.xlu0 %8557
    %8559 = vmax.xlane.f32.xlu0 %v8346
    %v8560 = vpop.xlane.xlu0 %8559
    %8561 = vmax.xlane.f32.xlu0 %v8347
    %v8562 = vpop.xlane.xlu0 %8561
    %8563 = vmax.xlane.f32.xlu0 %v8348
    %v8564 = vpop.xlane.xlu0 %8563
    %8565 = vmax.xlane.f32.xlu0 %v8349
    %v8566 = vpop.xlane.xlu0 %8565
    %8567 = vmax.xlane.f32.xlu0 %v8350
    %v8568 = vpop.xlane.xlu0 %8567
    %8569 = vmax.xlane.f32.xlu0 %v8351
    %v8570 = vpop.xlane.xlu0 %8569
    %8571 = vmax.xlane.f32.xlu0 %v8352
    %v8572 = vpop.xlane.xlu0 %8571
    %8573 = vmax.xlane.f32.xlu0 %v8353
    %v8574 = vpop.xlane.xlu0 %8573
    %8575 = vmax.xlane.f32.xlu0 %v8354
    %v8576 = vpop.xlane.xlu0 %8575
    %8577 = vmax.xlane.f32.xlu0 %v8355
    %v8578 = vpop.xlane.xlu0 %8577
    %8579 = vmax.xlane.f32.xlu0 %v8356
    %v8580 = vpop.xlane.xlu0 %8579
    %8581 = vmax.xlane.f32.xlu0 %v8357
    %v8582 = vpop.xlane.xlu0 %8581
    %8583 = vmax.xlane.f32.xlu0 %v8358
    %v8584 = vpop.xlane.xlu0 %8583
    %8585 = vmax.xlane.f32.xlu0 %v8359
    %v8586 = vpop.xlane.xlu0 %8585
    %8587 = vmax.xlane.f32.xlu0 %v8360
    %v8588 = vpop.xlane.xlu0 %8587
    %8589 = vmax.xlane.f32.xlu0 %v8361
    %v8590 = vpop.xlane.xlu0 %8589
    %8591 = vmax.xlane.f32.xlu0 %v8362
    %v8592 = vpop.xlane.xlu0 %8591
    %8593 = vmax.xlane.f32.xlu0 %v8363
    %v8594 = vpop.xlane.xlu0 %8593
    %8595 = vmax.xlane.f32.xlu0 %v8364
    %v8596 = vpop.xlane.xlu0 %8595
    %8597 = vmax.xlane.f32.xlu0 %v8365
    %v8598 = vpop.xlane.xlu0 %8597
    %8599 = vmax.xlane.f32.xlu0 %v8366
    %v8600 = vpop.xlane.xlu0 %8599
    %8601 = vmax.xlane.f32.xlu0 %v8367
    %v8602 = vpop.xlane.xlu0 %8601
    %8603 = vmax.xlane.f32.xlu0 %v8368
    %v8604 = vpop.xlane.xlu0 %8603
    %8605 = vmax.xlane.f32.xlu0 %v8369
    %v8606 = vpop.xlane.xlu0 %8605
    %8607 = vmax.xlane.f32.xlu0 %v8370
    %v8608 = vpop.xlane.xlu0 %8607
    %8609 = vmax.xlane.f32.xlu0 %v8371
    %v8610 = vpop.xlane.xlu0 %8609
    %8611 = vmax.xlane.f32.xlu0 %v8372
    %v8612 = vpop.xlane.xlu0 %8611
    %8613 = vmax.xlane.f32.xlu0 %v8373
    %v8614 = vpop.xlane.xlu0 %8613
    %8615 = vmax.xlane.f32.xlu0 %v8374
    %v8616 = vpop.xlane.xlu0 %8615
    %8617 = vmax.xlane.f32.xlu0 %v8375
    %v8618 = vpop.xlane.xlu0 %8617
    %8619 = vmax.xlane.f32.xlu0 %v8376
    %v8620 = vpop.xlane.xlu0 %8619
    %8621 = vmax.xlane.f32.xlu0 %v8377
    %v8622 = vpop.xlane.xlu0 %8621
    %8623 = vmax.xlane.f32.xlu0 %v8378
    %v8624 = vpop.xlane.xlu0 %8623
    %8625 = vmax.xlane.f32.xlu0 %v8379
    %v8626 = vpop.xlane.xlu0 %8625
    %8627 = vmax.xlane.f32.xlu0 %v8380
    %v8628 = vpop.xlane.xlu0 %8627
    %8629 = vmax.xlane.f32.xlu0 %v8381
    %v8630 = vpop.xlane.xlu0 %8629
    %8631 = vmax.xlane.f32.xlu0 %v8382
    %v8632 = vpop.xlane.xlu0 %8631
    %8633 = vmax.xlane.f32.xlu0 %v8383
    %v8634 = vpop.xlane.xlu0 %8633
    %8635 = vmax.xlane.f32.xlu0 %v8384
    %v8636 = vpop.xlane.xlu0 %8635
    %8637 = vmax.xlane.f32.xlu0 %v8385
    %v8638 = vpop.xlane.xlu0 %8637
    %8639 = vmax.xlane.f32.xlu0 %v8386
    %v8640 = vpop.xlane.xlu0 %8639
    %8641 = vmax.xlane.f32.xlu0 %v8387
    %v8642 = vpop.xlane.xlu0 %8641
    %8643 = vmax.xlane.f32.xlu0 %v8388
    %v8644 = vpop.xlane.xlu0 %8643
    %vm8645 = vcmp.eq.f32.partialorder %v1468, %v8390
    %vm8646 = vcmp.eq.f32.partialorder %v1473, %v8392
    %vm8647 = vcmp.eq.f32.partialorder %v1478, %v8394
    %vm8648 = vcmp.eq.f32.partialorder %v1483, %v8396
    %vm8649 = vcmp.eq.f32.partialorder %v1488, %v8398
    %vm8650 = vcmp.eq.f32.partialorder %v1493, %v8400
    %vm8651 = vcmp.eq.f32.partialorder %v1498, %v8402
    %vm8652 = vcmp.eq.f32.partialorder %v1503, %v8404
    %vm8653 = vcmp.eq.f32.partialorder %v1508, %v8406
    %vm8654 = vcmp.eq.f32.partialorder %v1513, %v8408
    %vm8655 = vcmp.eq.f32.partialorder %v1518, %v8410
    %vm8656 = vcmp.eq.f32.partialorder %v1523, %v8412
    %vm8657 = vcmp.eq.f32.partialorder %v1528, %v8414
    %vm8658 = vcmp.eq.f32.partialorder %v1533, %v8416
    %vm8659 = vcmp.eq.f32.partialorder %v1538, %v8418
    %vm8660 = vcmp.eq.f32.partialorder %v1543, %v8420
    %vm8661 = vcmp.eq.f32.partialorder %v1548, %v8422
    %vm8662 = vcmp.eq.f32.partialorder %v1553, %v8424
    %vm8663 = vcmp.eq.f32.partialorder %v1558, %v8426
    %vm8664 = vcmp.eq.f32.partialorder %v1563, %v8428
    %vm8665 = vcmp.eq.f32.partialorder %v1568, %v8430
    %vm8666 = vcmp.eq.f32.partialorder %v1573, %v8432
    %vm8667 = vcmp.eq.f32.partialorder %v1578, %v8434
    %vm8668 = vcmp.eq.f32.partialorder %v1583, %v8436
    %vm8669 = vcmp.eq.f32.partialorder %v1588, %v8438
    %vm8670 = vcmp.eq.f32.partialorder %v1593, %v8440
    %vm8671 = vcmp.eq.f32.partialorder %v1598, %v8442
    %vm8672 = vcmp.eq.f32.partialorder %v1603, %v8444
    %vm8673 = vcmp.eq.f32.partialorder %v1608, %v8446
    %vm8674 = vcmp.eq.f32.partialorder %v1613, %v8448
    %vm8675 = vcmp.eq.f32.partialorder %v1618, %v8450
    %vm8676 = vcmp.eq.f32.partialorder %v1623, %v8452
    %vm8677 = vcmp.eq.f32.partialorder %v1628, %v8454
    %vm8678 = vcmp.eq.f32.partialorder %v1633, %v8456
    %vm8679 = vcmp.eq.f32.partialorder %v1638, %v8458
    %vm8680 = vcmp.eq.f32.partialorder %v1643, %v8460
    %vm8681 = vcmp.eq.f32.partialorder %v1648, %v8462
    %vm8682 = vcmp.eq.f32.partialorder %v1653, %v8464
    %vm8683 = vcmp.eq.f32.partialorder %v1658, %v8466
    %vm8684 = vcmp.eq.f32.partialorder %v1663, %v8468
    %vm8685 = vcmp.eq.f32.partialorder %v1668, %v8470
    %vm8686 = vcmp.eq.f32.partialorder %v1673, %v8472
    %vm8687 = vcmp.eq.f32.partialorder %v1678, %v8474
    %vm8688 = vcmp.eq.f32.partialorder %v1683, %v8476
    %vm8689 = vcmp.eq.f32.partialorder %v1688, %v8478
    %vm8690 = vcmp.eq.f32.partialorder %v1693, %v8480
    %vm8691 = vcmp.eq.f32.partialorder %v1698, %v8482
    %vm8692 = vcmp.eq.f32.partialorder %v1703, %v8484
    %vm8693 = vcmp.eq.f32.partialorder %v1708, %v8486
    %vm8694 = vcmp.eq.f32.partialorder %v1713, %v8488
    %vm8695 = vcmp.eq.f32.partialorder %v1718, %v8490
    %vm8696 = vcmp.eq.f32.partialorder %v1723, %v8492
    %vm8697 = vcmp.eq.f32.partialorder %v1728, %v8494
    %vm8698 = vcmp.eq.f32.partialorder %v1733, %v8496
    %vm8699 = vcmp.eq.f32.partialorder %v1738, %v8498
    %vm8700 = vcmp.eq.f32.partialorder %v1743, %v8500
    %vm8701 = vcmp.eq.f32.partialorder %v1748, %v8502
    %vm8702 = vcmp.eq.f32.partialorder %v1753, %v8504
    %vm8703 = vcmp.eq.f32.partialorder %v1758, %v8506
    %vm8704 = vcmp.eq.f32.partialorder %v1763, %v8508
    %vm8705 = vcmp.eq.f32.partialorder %v1768, %v8510
    %vm8706 = vcmp.eq.f32.partialorder %v1773, %v8512
    %vm8707 = vcmp.eq.f32.partialorder %v1778, %v8514
    %vm8708 = vcmp.eq.f32.partialorder %v1783, %v8516
    %vm8709 = vcmp.eq.f32.partialorder %v1788, %v8518
    %vm8710 = vcmp.eq.f32.partialorder %v1793, %v8520
    %vm8711 = vcmp.eq.f32.partialorder %v1798, %v8522
    %vm8712 = vcmp.eq.f32.partialorder %v1803, %v8524
    %vm8713 = vcmp.eq.f32.partialorder %v1808, %v8526
    %vm8714 = vcmp.eq.f32.partialorder %v1813, %v8528
    %vm8715 = vcmp.eq.f32.partialorder %v1818, %v8530
    %vm8716 = vcmp.eq.f32.partialorder %v1823, %v8532
    %vm8717 = vcmp.eq.f32.partialorder %v1828, %v8534
    %vm8718 = vcmp.eq.f32.partialorder %v1833, %v8536
    %vm8719 = vcmp.eq.f32.partialorder %v1838, %v8538
    %vm8720 = vcmp.eq.f32.partialorder %v1843, %v8540
    %vm8721 = vcmp.eq.f32.partialorder %v1848, %v8542
    %vm8722 = vcmp.eq.f32.partialorder %v1853, %v8544
    %vm8723 = vcmp.eq.f32.partialorder %v1858, %v8546
    %vm8724 = vcmp.eq.f32.partialorder %v1863, %v8548
    %vm8725 = vcmp.eq.f32.partialorder %v1868, %v8550
    %vm8726 = vcmp.eq.f32.partialorder %v1873, %v8552
    %vm8727 = vcmp.eq.f32.partialorder %v1878, %v8554
    %vm8728 = vcmp.eq.f32.partialorder %v1883, %v8556
    %vm8729 = vcmp.eq.f32.partialorder %v1888, %v8558
    %vm8730 = vcmp.eq.f32.partialorder %v1893, %v8560
    %vm8731 = vcmp.eq.f32.partialorder %v1898, %v8562
    %vm8732 = vcmp.eq.f32.partialorder %v1903, %v8564
    %vm8733 = vcmp.eq.f32.partialorder %v1908, %v8566
    %vm8734 = vcmp.eq.f32.partialorder %v1913, %v8568
    %vm8735 = vcmp.eq.f32.partialorder %v1918, %v8570
    %vm8736 = vcmp.eq.f32.partialorder %v1923, %v8572
    %vm8737 = vcmp.eq.f32.partialorder %v1928, %v8574
    %vm8738 = vcmp.eq.f32.partialorder %v1933, %v8576
    %vm8739 = vcmp.eq.f32.partialorder %v1938, %v8578
    %vm8740 = vcmp.eq.f32.partialorder %v1943, %v8580
    %vm8741 = vcmp.eq.f32.partialorder %v1948, %v8582
    %vm8742 = vcmp.eq.f32.partialorder %v1953, %v8584
    %vm8743 = vcmp.eq.f32.partialorder %v1958, %v8586
    %vm8744 = vcmp.eq.f32.partialorder %v1963, %v8588
    %vm8745 = vcmp.eq.f32.partialorder %v1968, %v8590
    %vm8746 = vcmp.eq.f32.partialorder %v1973, %v8592
    %vm8747 = vcmp.eq.f32.partialorder %v1978, %v8594
    %vm8748 = vcmp.eq.f32.partialorder %v1983, %v8596
    %vm8749 = vcmp.eq.f32.partialorder %v1988, %v8598
    %vm8750 = vcmp.eq.f32.partialorder %v1993, %v8600
    %vm8751 = vcmp.eq.f32.partialorder %v1998, %v8602
    %vm8752 = vcmp.eq.f32.partialorder %v2003, %v8604
    %vm8753 = vcmp.eq.f32.partialorder %v2008, %v8606
    %vm8754 = vcmp.eq.f32.partialorder %v2013, %v8608
    %vm8755 = vcmp.eq.f32.partialorder %v2018, %v8610
    %vm8756 = vcmp.eq.f32.partialorder %v2023, %v8612
    %vm8757 = vcmp.eq.f32.partialorder %v2028, %v8614
    %vm8758 = vcmp.eq.f32.partialorder %v2033, %v8616
    %vm8759 = vcmp.eq.f32.partialorder %v2038, %v8618
    %vm8760 = vcmp.eq.f32.partialorder %v2043, %v8620
    %vm8761 = vcmp.eq.f32.partialorder %v2048, %v8622
    %vm8762 = vcmp.eq.f32.partialorder %v2053, %v8624
    %vm8763 = vcmp.eq.f32.partialorder %v2058, %v8626
    %vm8764 = vcmp.eq.f32.partialorder %v2063, %v8628
    %vm8765 = vcmp.eq.f32.partialorder %v2068, %v8630
    %vm8766 = vcmp.eq.f32.partialorder %v2073, %v8632
    %vm8767 = vcmp.eq.f32.partialorder %v2078, %v8634
    %vm8768 = vcmp.eq.f32.partialorder %v2083, %v8636
    %vm8769 = vcmp.eq.f32.partialorder %v2088, %v8638
    %vm8770 = vcmp.eq.f32.partialorder %v2093, %v8640
    %vm8771 = vcmp.eq.f32.partialorder %v2098, %v8642
    %vm8772 = vcmp.eq.f32.partialorder %v2103, %v8644
    %vm8773 = vmand %vm8260, %vm8645
    %vm8774 = vmand %vm8260, %vm8646
    %vm8775 = vmand %vm8260, %vm8647
    %vm8776 = vmand %vm8260, %vm8648
    %vm8777 = vmand %vm8260, %vm8649
    %vm8778 = vmand %vm8260, %vm8650
    %vm8779 = vmand %vm8260, %vm8651
    %vm8780 = vmand %vm8260, %vm8652
    %vm8781 = vmand %vm8260, %vm8653
    %vm8782 = vmand %vm8260, %vm8654
    %vm8783 = vmand %vm8260, %vm8655
    %vm8784 = vmand %vm8260, %vm8656
    %vm8785 = vmand %vm8260, %vm8657
    %vm8786 = vmand %vm8260, %vm8658
    %vm8787 = vmand %vm8260, %vm8659
    %vm8788 = vmand %vm8260, %vm8660
    %vm8789 = vmand %vm8260, %vm8661
    %vm8790 = vmand %vm8260, %vm8662
    %vm8791 = vmand %vm8260, %vm8663
    %vm8792 = vmand %vm8260, %vm8664
    %vm8793 = vmand %vm8260, %vm8665
    %vm8794 = vmand %vm8260, %vm8666
    %vm8795 = vmand %vm8260, %vm8667
    %vm8796 = vmand %vm8260, %vm8668
    %vm8797 = vmand %vm8260, %vm8669
    %vm8798 = vmand %vm8260, %vm8670
    %vm8799 = vmand %vm8260, %vm8671
    %vm8800 = vmand %vm8260, %vm8672
    %vm8801 = vmand %vm8260, %vm8673
    %vm8802 = vmand %vm8260, %vm8674
    %vm8803 = vmand %vm8260, %vm8675
    %vm8804 = vmand %vm8260, %vm8676
    %vm8805 = vmand %vm8260, %vm8677
    %vm8806 = vmand %vm8260, %vm8678
    %vm8807 = vmand %vm8260, %vm8679
    %vm8808 = vmand %vm8260, %vm8680
    %vm8809 = vmand %vm8260, %vm8681
    %vm8810 = vmand %vm8260, %vm8682
    %vm8811 = vmand %vm8260, %vm8683
    %vm8812 = vmand %vm8260, %vm8684
    %vm8813 = vmand %vm8260, %vm8685
    %vm8814 = vmand %vm8260, %vm8686
    %vm8815 = vmand %vm8260, %vm8687
    %vm8816 = vmand %vm8260, %vm8688
    %vm8817 = vmand %vm8260, %vm8689
    %vm8818 = vmand %vm8260, %vm8690
    %vm8819 = vmand %vm8260, %vm8691
    %vm8820 = vmand %vm8260, %vm8692
    %vm8821 = vmand %vm8260, %vm8693
    %vm8822 = vmand %vm8260, %vm8694
    %vm8823 = vmand %vm8260, %vm8695
    %vm8824 = vmand %vm8260, %vm8696
    %vm8825 = vmand %vm8260, %vm8697
    %vm8826 = vmand %vm8260, %vm8698
    %vm8827 = vmand %vm8260, %vm8699
    %vm8828 = vmand %vm8260, %vm8700
    %vm8829 = vmand %vm8260, %vm8701
    %vm8830 = vmand %vm8260, %vm8702
    %vm8831 = vmand %vm8260, %vm8703
    %vm8832 = vmand %vm8260, %vm8704
    %vm8833 = vmand %vm8260, %vm8705
    %vm8834 = vmand %vm8260, %vm8706
    %vm8835 = vmand %vm8260, %vm8707
    %vm8836 = vmand %vm8260, %vm8708
    %vm8837 = vmand %vm8260, %vm8709
    %vm8838 = vmand %vm8260, %vm8710
    %vm8839 = vmand %vm8260, %vm8711
    %vm8840 = vmand %vm8260, %vm8712
    %vm8841 = vmand %vm8260, %vm8713
    %vm8842 = vmand %vm8260, %vm8714
    %vm8843 = vmand %vm8260, %vm8715
    %vm8844 = vmand %vm8260, %vm8716
    %vm8845 = vmand %vm8260, %vm8717
    %vm8846 = vmand %vm8260, %vm8718
    %vm8847 = vmand %vm8260, %vm8719
    %vm8848 = vmand %vm8260, %vm8720
    %vm8849 = vmand %vm8260, %vm8721
    %vm8850 = vmand %vm8260, %vm8722
    %vm8851 = vmand %vm8260, %vm8723
    %vm8852 = vmand %vm8260, %vm8724
    %vm8853 = vmand %vm8260, %vm8725
    %vm8854 = vmand %vm8260, %vm8726
    %vm8855 = vmand %vm8260, %vm8727
    %vm8856 = vmand %vm8260, %vm8728
    %vm8857 = vmand %vm8260, %vm8729
    %vm8858 = vmand %vm8260, %vm8730
    %vm8859 = vmand %vm8260, %vm8731
    %vm8860 = vmand %vm8260, %vm8732
    %vm8861 = vmand %vm8260, %vm8733
    %vm8862 = vmand %vm8260, %vm8734
    %vm8863 = vmand %vm8260, %vm8735
    %vm8864 = vmand %vm8260, %vm8736
    %vm8865 = vmand %vm8260, %vm8737
    %vm8866 = vmand %vm8260, %vm8738
    %vm8867 = vmand %vm8260, %vm8739
    %vm8868 = vmand %vm8260, %vm8740
    %vm8869 = vmand %vm8260, %vm8741
    %vm8870 = vmand %vm8260, %vm8742
    %vm8871 = vmand %vm8260, %vm8743
    %vm8872 = vmand %vm8260, %vm8744
    %vm8873 = vmand %vm8260, %vm8745
    %vm8874 = vmand %vm8260, %vm8746
    %vm8875 = vmand %vm8260, %vm8747
    %vm8876 = vmand %vm8260, %vm8748
    %vm8877 = vmand %vm8260, %vm8749
    %vm8878 = vmand %vm8260, %vm8750
    %vm8879 = vmand %vm8260, %vm8751
    %vm8880 = vmand %vm8260, %vm8752
    %vm8881 = vmand %vm8260, %vm8753
    %vm8882 = vmand %vm8260, %vm8754
    %vm8883 = vmand %vm8260, %vm8755
    %vm8884 = vmand %vm8260, %vm8756
    %vm8885 = vmand %vm8260, %vm8757
    %vm8886 = vmand %vm8260, %vm8758
    %vm8887 = vmand %vm8260, %vm8759
    %vm8888 = vmand %vm8260, %vm8760
    %vm8889 = vmand %vm8260, %vm8761
    %vm8890 = vmand %vm8260, %vm8762
    %vm8891 = vmand %vm8260, %vm8763
    %vm8892 = vmand %vm8260, %vm8764
    %vm8893 = vmand %vm8260, %vm8765
    %vm8894 = vmand %vm8260, %vm8766
    %vm8895 = vmand %vm8260, %vm8767
    %vm8896 = vmand %vm8260, %vm8768
    %vm8897 = vmand %vm8260, %vm8769
    %vm8898 = vmand %vm8260, %vm8770
    %vm8899 = vmand %vm8260, %vm8771
    %vm8900 = vmand %vm8260, %vm8772
    %v8901 = vsel %vm8773, %v2107, 128
    %v8902 = vsel %vm8774, %v2107, 128
    %v8903 = vsel %vm8775, %v2107, 128
    %v8904 = vsel %vm8776, %v2107, 128
    %v8905 = vsel %vm8777, %v2107, 128
    %v8906 = vsel %vm8778, %v2107, 128
    %v8907 = vsel %vm8779, %v2107, 128
    %v8908 = vsel %vm8780, %v2107, 128
    %v8909 = vsel %vm8781, %v2107, 128
    %v8910 = vsel %vm8782, %v2107, 128
    %v8911 = vsel %vm8783, %v2107, 128
    %v8912 = vsel %vm8784, %v2107, 128
    %v8913 = vsel %vm8785, %v2107, 128
    %v8914 = vsel %vm8786, %v2107, 128
    %v8915 = vsel %vm8787, %v2107, 128
    %v8916 = vsel %vm8788, %v2107, 128
    %v8917 = vsel %vm8789, %v2107, 128
    %v8918 = vsel %vm8790, %v2107, 128
    %v8919 = vsel %vm8791, %v2107, 128
    %v8920 = vsel %vm8792, %v2107, 128
    %v8921 = vsel %vm8793, %v2107, 128
    %v8922 = vsel %vm8794, %v2107, 128
    %v8923 = vsel %vm8795, %v2107, 128
    %v8924 = vsel %vm8796, %v2107, 128
    %v8925 = vsel %vm8797, %v2107, 128
    %v8926 = vsel %vm8798, %v2107, 128
    %v8927 = vsel %vm8799, %v2107, 128
    %v8928 = vsel %vm8800, %v2107, 128
    %v8929 = vsel %vm8801, %v2107, 128
    %v8930 = vsel %vm8802, %v2107, 128
    %v8931 = vsel %vm8803, %v2107, 128
    %v8932 = vsel %vm8804, %v2107, 128
    %v8933 = vsel %vm8805, %v2107, 128
    %v8934 = vsel %vm8806, %v2107, 128
    %v8935 = vsel %vm8807, %v2107, 128
    %v8936 = vsel %vm8808, %v2107, 128
    %v8937 = vsel %vm8809, %v2107, 128
    %v8938 = vsel %vm8810, %v2107, 128
    %v8939 = vsel %vm8811, %v2107, 128
    %v8940 = vsel %vm8812, %v2107, 128
    %v8941 = vsel %vm8813, %v2107, 128
    %v8942 = vsel %vm8814, %v2107, 128
    %v8943 = vsel %vm8815, %v2107, 128
    %v8944 = vsel %vm8816, %v2107, 128
    %v8945 = vsel %vm8817, %v2107, 128
    %v8946 = vsel %vm8818, %v2107, 128
    %v8947 = vsel %vm8819, %v2107, 128
    %v8948 = vsel %vm8820, %v2107, 128
    %v8949 = vsel %vm8821, %v2107, 128
    %v8950 = vsel %vm8822, %v2107, 128
    %v8951 = vsel %vm8823, %v2107, 128
    %v8952 = vsel %vm8824, %v2107, 128
    %v8953 = vsel %vm8825, %v2107, 128
    %v8954 = vsel %vm8826, %v2107, 128
    %v8955 = vsel %vm8827, %v2107, 128
    %v8956 = vsel %vm8828, %v2107, 128
    %v8957 = vsel %vm8829, %v2107, 128
    %v8958 = vsel %vm8830, %v2107, 128
    %v8959 = vsel %vm8831, %v2107, 128
    %v8960 = vsel %vm8832, %v2107, 128
    %v8961 = vsel %vm8833, %v2107, 128
    %v8962 = vsel %vm8834, %v2107, 128
    %v8963 = vsel %vm8835, %v2107, 128
    %v8964 = vsel %vm8836, %v2107, 128
    %v8965 = vsel %vm8837, %v2107, 128
    %v8966 = vsel %vm8838, %v2107, 128
    %v8967 = vsel %vm8839, %v2107, 128
    %v8968 = vsel %vm8840, %v2107, 128
    %v8969 = vsel %vm8841, %v2107, 128
    %v8970 = vsel %vm8842, %v2107, 128
    %v8971 = vsel %vm8843, %v2107, 128
    %v8972 = vsel %vm8844, %v2107, 128
    %v8973 = vsel %vm8845, %v2107, 128
    %v8974 = vsel %vm8846, %v2107, 128
    %v8975 = vsel %vm8847, %v2107, 128
    %v8976 = vsel %vm8848, %v2107, 128
    %v8977 = vsel %vm8849, %v2107, 128
    %v8978 = vsel %vm8850, %v2107, 128
    %v8979 = vsel %vm8851, %v2107, 128
    %v8980 = vsel %vm8852, %v2107, 128
    %v8981 = vsel %vm8853, %v2107, 128
    %v8982 = vsel %vm8854, %v2107, 128
    %v8983 = vsel %vm8855, %v2107, 128
    %v8984 = vsel %vm8856, %v2107, 128
    %v8985 = vsel %vm8857, %v2107, 128
    %v8986 = vsel %vm8858, %v2107, 128
    %v8987 = vsel %vm8859, %v2107, 128
    %v8988 = vsel %vm8860, %v2107, 128
    %v8989 = vsel %vm8861, %v2107, 128
    %v8990 = vsel %vm8862, %v2107, 128
    %v8991 = vsel %vm8863, %v2107, 128
    %v8992 = vsel %vm8864, %v2107, 128
    %v8993 = vsel %vm8865, %v2107, 128
    %v8994 = vsel %vm8866, %v2107, 128
    %v8995 = vsel %vm8867, %v2107, 128
    %v8996 = vsel %vm8868, %v2107, 128
    %v8997 = vsel %vm8869, %v2107, 128
    %v8998 = vsel %vm8870, %v2107, 128
    %v8999 = vsel %vm8871, %v2107, 128
    %v9000 = vsel %vm8872, %v2107, 128
    %v9001 = vsel %vm8873, %v2107, 128
    %v9002 = vsel %vm8874, %v2107, 128
    %v9003 = vsel %vm8875, %v2107, 128
    %v9004 = vsel %vm8876, %v2107, 128
    %v9005 = vsel %vm8877, %v2107, 128
    %v9006 = vsel %vm8878, %v2107, 128
    %v9007 = vsel %vm8879, %v2107, 128
    %v9008 = vsel %vm8880, %v2107, 128
    %v9009 = vsel %vm8881, %v2107, 128
    %v9010 = vsel %vm8882, %v2107, 128
    %v9011 = vsel %vm8883, %v2107, 128
    %v9012 = vsel %vm8884, %v2107, 128
    %v9013 = vsel %vm8885, %v2107, 128
    %v9014 = vsel %vm8886, %v2107, 128
    %v9015 = vsel %vm8887, %v2107, 128
    %v9016 = vsel %vm8888, %v2107, 128
    %v9017 = vsel %vm8889, %v2107, 128
    %v9018 = vsel %vm8890, %v2107, 128
    %v9019 = vsel %vm8891, %v2107, 128
    %v9020 = vsel %vm8892, %v2107, 128
    %v9021 = vsel %vm8893, %v2107, 128
    %v9022 = vsel %vm8894, %v2107, 128
    %v9023 = vsel %vm8895, %v2107, 128
    %v9024 = vsel %vm8896, %v2107, 128
    %v9025 = vsel %vm8897, %v2107, 128
    %v9026 = vsel %vm8898, %v2107, 128
    %v9027 = vsel %vm8899, %v2107, 128
    %v9028 = vsel %vm8900, %v2107, 128
    %v9029 = vand.u32 %v8901, 65535
    %v9030 = vshra.s32 %v8901, 16
    %v9031 = vcvt.s32.f32 %v9029
    %v9032 = vcvt.s32.f32 %v9030
    %9033 = vmin.xlane.f32.xlu0 %v9032
    %v9034 = vpop.xlane.xlu0 %9033
    %vm9035 = vcmp.eq.f32.partialorder %v9032, %v9034
    %v9036 = vsel %vm9035, %v9031, inf
    %9037 = vmin.xlane.f32.xlu0 %v9036
    %v9038 = vpop.xlane.xlu0 %9037
    %v9039 = vcvt.f32.s32 %v9038
    %v9040 = vcvt.f32.s32 %v9034
    %v9041 = vshll.u32 %v9040, 16
    %v9042 = vadd.s32 %v9041, %v9039
    %v9043 = vand.u32 %v8902, 65535
    %v9044 = vshra.s32 %v8902, 16
    %v9045 = vcvt.s32.f32 %v9043
    %v9046 = vcvt.s32.f32 %v9044
    %9047 = vmin.xlane.f32.xlu0 %v9046
    %v9048 = vpop.xlane.xlu0 %9047
    %vm9049 = vcmp.eq.f32.partialorder %v9046, %v9048
    %v9050 = vsel %vm9049, %v9045, inf
    %9051 = vmin.xlane.f32.xlu0 %v9050
    %v9052 = vpop.xlane.xlu0 %9051
    %v9053 = vcvt.f32.s32 %v9052
    %v9054 = vcvt.f32.s32 %v9048
    %v9055 = vshll.u32 %v9054, 16
    %v9056 = vadd.s32 %v9055, %v9053
    %v9057 = vand.u32 %v8903, 65535
    %v9058 = vshra.s32 %v8903, 16
    %v9059 = vcvt.s32.f32 %v9057
    %v9060 = vcvt.s32.f32 %v9058
    %9061 = vmin.xlane.f32.xlu0 %v9060
    %v9062 = vpop.xlane.xlu0 %9061
    %vm9063 = vcmp.eq.f32.partialorder %v9060, %v9062
    %v9064 = vsel %vm9063, %v9059, inf
    %9065 = vmin.xlane.f32.xlu0 %v9064
    %v9066 = vpop.xlane.xlu0 %9065
    %v9067 = vcvt.f32.s32 %v9066
    %v9068 = vcvt.f32.s32 %v9062
    %v9069 = vshll.u32 %v9068, 16
    %v9070 = vadd.s32 %v9069, %v9067
    %v9071 = vand.u32 %v8904, 65535
    %v9072 = vshra.s32 %v8904, 16
    %v9073 = vcvt.s32.f32 %v9071
    %v9074 = vcvt.s32.f32 %v9072
    %9075 = vmin.xlane.f32.xlu0 %v9074
    %v9076 = vpop.xlane.xlu0 %9075
    %vm9077 = vcmp.eq.f32.partialorder %v9074, %v9076
    %v9078 = vsel %vm9077, %v9073, inf
    %9079 = vmin.xlane.f32.xlu0 %v9078
    %v9080 = vpop.xlane.xlu0 %9079
    %v9081 = vcvt.f32.s32 %v9080
    %v9082 = vcvt.f32.s32 %v9076
    %v9083 = vshll.u32 %v9082, 16
    %v9084 = vadd.s32 %v9083, %v9081
    %v9085 = vand.u32 %v8905, 65535
    %v9086 = vshra.s32 %v8905, 16
    %v9087 = vcvt.s32.f32 %v9085
    %v9088 = vcvt.s32.f32 %v9086
    %9089 = vmin.xlane.f32.xlu0 %v9088
    %v9090 = vpop.xlane.xlu0 %9089
    %vm9091 = vcmp.eq.f32.partialorder %v9088, %v9090
    %v9092 = vsel %vm9091, %v9087, inf
    %9093 = vmin.xlane.f32.xlu0 %v9092
    %v9094 = vpop.xlane.xlu0 %9093
    %v9095 = vcvt.f32.s32 %v9094
    %v9096 = vcvt.f32.s32 %v9090
    %v9097 = vshll.u32 %v9096, 16
    %v9098 = vadd.s32 %v9097, %v9095
    %v9099 = vand.u32 %v8906, 65535
    %v9100 = vshra.s32 %v8906, 16
    %v9101 = vcvt.s32.f32 %v9099
    %v9102 = vcvt.s32.f32 %v9100
    %9103 = vmin.xlane.f32.xlu0 %v9102
    %v9104 = vpop.xlane.xlu0 %9103
    %vm9105 = vcmp.eq.f32.partialorder %v9102, %v9104
    %v9106 = vsel %vm9105, %v9101, inf
    %9107 = vmin.xlane.f32.xlu0 %v9106
    %v9108 = vpop.xlane.xlu0 %9107
    %v9109 = vcvt.f32.s32 %v9108
    %v9110 = vcvt.f32.s32 %v9104
    %v9111 = vshll.u32 %v9110, 16
    %v9112 = vadd.s32 %v9111, %v9109
    %v9113 = vand.u32 %v8907, 65535
    %v9114 = vshra.s32 %v8907, 16
    %v9115 = vcvt.s32.f32 %v9113
    %v9116 = vcvt.s32.f32 %v9114
    %9117 = vmin.xlane.f32.xlu0 %v9116
    %v9118 = vpop.xlane.xlu0 %9117
    %vm9119 = vcmp.eq.f32.partialorder %v9116, %v9118
    %v9120 = vsel %vm9119, %v9115, inf
    %9121 = vmin.xlane.f32.xlu0 %v9120
    %v9122 = vpop.xlane.xlu0 %9121
    %v9123 = vcvt.f32.s32 %v9122
    %v9124 = vcvt.f32.s32 %v9118
    %v9125 = vshll.u32 %v9124, 16
    %v9126 = vadd.s32 %v9125, %v9123
    %v9127 = vand.u32 %v8908, 65535
    %v9128 = vshra.s32 %v8908, 16
    %v9129 = vcvt.s32.f32 %v9127
    %v9130 = vcvt.s32.f32 %v9128
    %9131 = vmin.xlane.f32.xlu0 %v9130
    %v9132 = vpop.xlane.xlu0 %9131
    %vm9133 = vcmp.eq.f32.partialorder %v9130, %v9132
    %v9134 = vsel %vm9133, %v9129, inf
    %9135 = vmin.xlane.f32.xlu0 %v9134
    %v9136 = vpop.xlane.xlu0 %9135
    %v9137 = vcvt.f32.s32 %v9136
    %v9138 = vcvt.f32.s32 %v9132
    %v9139 = vshll.u32 %v9138, 16
    %v9140 = vadd.s32 %v9139, %v9137
    %v9141 = vand.u32 %v8909, 65535
    %v9142 = vshra.s32 %v8909, 16
    %v9143 = vcvt.s32.f32 %v9141
    %v9144 = vcvt.s32.f32 %v9142
    %9145 = vmin.xlane.f32.xlu0 %v9144
    %v9146 = vpop.xlane.xlu0 %9145
    %vm9147 = vcmp.eq.f32.partialorder %v9144, %v9146
    %v9148 = vsel %vm9147, %v9143, inf
    %9149 = vmin.xlane.f32.xlu0 %v9148
    %v9150 = vpop.xlane.xlu0 %9149
    %v9151 = vcvt.f32.s32 %v9150
    %v9152 = vcvt.f32.s32 %v9146
    %v9153 = vshll.u32 %v9152, 16
    %v9154 = vadd.s32 %v9153, %v9151
    %v9155 = vand.u32 %v8910, 65535
    %v9156 = vshra.s32 %v8910, 16
    %v9157 = vcvt.s32.f32 %v9155
    %v9158 = vcvt.s32.f32 %v9156
    %9159 = vmin.xlane.f32.xlu0 %v9158
    %v9160 = vpop.xlane.xlu0 %9159
    %vm9161 = vcmp.eq.f32.partialorder %v9158, %v9160
    %v9162 = vsel %vm9161, %v9157, inf
    %9163 = vmin.xlane.f32.xlu0 %v9162
    %v9164 = vpop.xlane.xlu0 %9163
    %v9165 = vcvt.f32.s32 %v9164
    %v9166 = vcvt.f32.s32 %v9160
    %v9167 = vshll.u32 %v9166, 16
    %v9168 = vadd.s32 %v9167, %v9165
    %v9169 = vand.u32 %v8911, 65535
    %v9170 = vshra.s32 %v8911, 16
    %v9171 = vcvt.s32.f32 %v9169
    %v9172 = vcvt.s32.f32 %v9170
    %9173 = vmin.xlane.f32.xlu0 %v9172
    %v9174 = vpop.xlane.xlu0 %9173
    %vm9175 = vcmp.eq.f32.partialorder %v9172, %v9174
    %v9176 = vsel %vm9175, %v9171, inf
    %9177 = vmin.xlane.f32.xlu0 %v9176
    %v9178 = vpop.xlane.xlu0 %9177
    %v9179 = vcvt.f32.s32 %v9178
    %v9180 = vcvt.f32.s32 %v9174
    %v9181 = vshll.u32 %v9180, 16
    %v9182 = vadd.s32 %v9181, %v9179
    %v9183 = vand.u32 %v8912, 65535
    %v9184 = vshra.s32 %v8912, 16
    %v9185 = vcvt.s32.f32 %v9183
    %v9186 = vcvt.s32.f32 %v9184
    %9187 = vmin.xlane.f32.xlu0 %v9186
    %v9188 = vpop.xlane.xlu0 %9187
    %vm9189 = vcmp.eq.f32.partialorder %v9186, %v9188
    %v9190 = vsel %vm9189, %v9185, inf
    %9191 = vmin.xlane.f32.xlu0 %v9190
    %v9192 = vpop.xlane.xlu0 %9191
    %v9193 = vcvt.f32.s32 %v9192
    %v9194 = vcvt.f32.s32 %v9188
    %v9195 = vshll.u32 %v9194, 16
    %v9196 = vadd.s32 %v9195, %v9193
    %v9197 = vand.u32 %v8913, 65535
    %v9198 = vshra.s32 %v8913, 16
    %v9199 = vcvt.s32.f32 %v9197
    %v9200 = vcvt.s32.f32 %v9198
    %9201 = vmin.xlane.f32.xlu0 %v9200
    %v9202 = vpop.xlane.xlu0 %9201
    %vm9203 = vcmp.eq.f32.partialorder %v9200, %v9202
    %v9204 = vsel %vm9203, %v9199, inf
    %9205 = vmin.xlane.f32.xlu0 %v9204
    %v9206 = vpop.xlane.xlu0 %9205
    %v9207 = vcvt.f32.s32 %v9206
    %v9208 = vcvt.f32.s32 %v9202
    %v9209 = vshll.u32 %v9208, 16
    %v9210 = vadd.s32 %v9209, %v9207
    %v9211 = vand.u32 %v8914, 65535
    %v9212 = vshra.s32 %v8914, 16
    %v9213 = vcvt.s32.f32 %v9211
    %v9214 = vcvt.s32.f32 %v9212
    %9215 = vmin.xlane.f32.xlu0 %v9214
    %v9216 = vpop.xlane.xlu0 %9215
    %vm9217 = vcmp.eq.f32.partialorder %v9214, %v9216
    %v9218 = vsel %vm9217, %v9213, inf
    %9219 = vmin.xlane.f32.xlu0 %v9218
    %v9220 = vpop.xlane.xlu0 %9219
    %v9221 = vcvt.f32.s32 %v9220
    %v9222 = vcvt.f32.s32 %v9216
    %v9223 = vshll.u32 %v9222, 16
    %v9224 = vadd.s32 %v9223, %v9221
    %v9225 = vand.u32 %v8915, 65535
    %v9226 = vshra.s32 %v8915, 16
    %v9227 = vcvt.s32.f32 %v9225
    %v9228 = vcvt.s32.f32 %v9226
    %9229 = vmin.xlane.f32.xlu0 %v9228
    %v9230 = vpop.xlane.xlu0 %9229
    %vm9231 = vcmp.eq.f32.partialorder %v9228, %v9230
    %v9232 = vsel %vm9231, %v9227, inf
    %9233 = vmin.xlane.f32.xlu0 %v9232
    %v9234 = vpop.xlane.xlu0 %9233
    %v9235 = vcvt.f32.s32 %v9234
    %v9236 = vcvt.f32.s32 %v9230
    %v9237 = vshll.u32 %v9236, 16
    %v9238 = vadd.s32 %v9237, %v9235
    %v9239 = vand.u32 %v8916, 65535
    %v9240 = vshra.s32 %v8916, 16
    %v9241 = vcvt.s32.f32 %v9239
    %v9242 = vcvt.s32.f32 %v9240
    %9243 = vmin.xlane.f32.xlu0 %v9242
    %v9244 = vpop.xlane.xlu0 %9243
    %vm9245 = vcmp.eq.f32.partialorder %v9242, %v9244
    %v9246 = vsel %vm9245, %v9241, inf
    %9247 = vmin.xlane.f32.xlu0 %v9246
    %v9248 = vpop.xlane.xlu0 %9247
    %v9249 = vcvt.f32.s32 %v9248
    %v9250 = vcvt.f32.s32 %v9244
    %v9251 = vshll.u32 %v9250, 16
    %v9252 = vadd.s32 %v9251, %v9249
    %v9253 = vand.u32 %v8917, 65535
    %v9254 = vshra.s32 %v8917, 16
    %v9255 = vcvt.s32.f32 %v9253
    %v9256 = vcvt.s32.f32 %v9254
    %9257 = vmin.xlane.f32.xlu0 %v9256
    %v9258 = vpop.xlane.xlu0 %9257
    %vm9259 = vcmp.eq.f32.partialorder %v9256, %v9258
    %v9260 = vsel %vm9259, %v9255, inf
    %9261 = vmin.xlane.f32.xlu0 %v9260
    %v9262 = vpop.xlane.xlu0 %9261
    %v9263 = vcvt.f32.s32 %v9262
    %v9264 = vcvt.f32.s32 %v9258
    %v9265 = vshll.u32 %v9264, 16
    %v9266 = vadd.s32 %v9265, %v9263
    %v9267 = vand.u32 %v8918, 65535
    %v9268 = vshra.s32 %v8918, 16
    %v9269 = vcvt.s32.f32 %v9267
    %v9270 = vcvt.s32.f32 %v9268
    %9271 = vmin.xlane.f32.xlu0 %v9270
    %v9272 = vpop.xlane.xlu0 %9271
    %vm9273 = vcmp.eq.f32.partialorder %v9270, %v9272
    %v9274 = vsel %vm9273, %v9269, inf
    %9275 = vmin.xlane.f32.xlu0 %v9274
    %v9276 = vpop.xlane.xlu0 %9275
    %v9277 = vcvt.f32.s32 %v9276
    %v9278 = vcvt.f32.s32 %v9272
    %v9279 = vshll.u32 %v9278, 16
    %v9280 = vadd.s32 %v9279, %v9277
    %v9281 = vand.u32 %v8919, 65535
    %v9282 = vshra.s32 %v8919, 16
    %v9283 = vcvt.s32.f32 %v9281
    %v9284 = vcvt.s32.f32 %v9282
    %9285 = vmin.xlane.f32.xlu0 %v9284
    %v9286 = vpop.xlane.xlu0 %9285
    %vm9287 = vcmp.eq.f32.partialorder %v9284, %v9286
    %v9288 = vsel %vm9287, %v9283, inf
    %9289 = vmin.xlane.f32.xlu0 %v9288
    %v9290 = vpop.xlane.xlu0 %9289
    %v9291 = vcvt.f32.s32 %v9290
    %v9292 = vcvt.f32.s32 %v9286
    %v9293 = vshll.u32 %v9292, 16
    %v9294 = vadd.s32 %v9293, %v9291
    %v9295 = vand.u32 %v8920, 65535
    %v9296 = vshra.s32 %v8920, 16
    %v9297 = vcvt.s32.f32 %v9295
    %v9298 = vcvt.s32.f32 %v9296
    %9299 = vmin.xlane.f32.xlu0 %v9298
    %v9300 = vpop.xlane.xlu0 %9299
    %vm9301 = vcmp.eq.f32.partialorder %v9298, %v9300
    %v9302 = vsel %vm9301, %v9297, inf
    %9303 = vmin.xlane.f32.xlu0 %v9302
    %v9304 = vpop.xlane.xlu0 %9303
    %v9305 = vcvt.f32.s32 %v9304
    %v9306 = vcvt.f32.s32 %v9300
    %v9307 = vshll.u32 %v9306, 16
    %v9308 = vadd.s32 %v9307, %v9305
    %v9309 = vand.u32 %v8921, 65535
    %v9310 = vshra.s32 %v8921, 16
    %v9311 = vcvt.s32.f32 %v9309
    %v9312 = vcvt.s32.f32 %v9310
    %9313 = vmin.xlane.f32.xlu0 %v9312
    %v9314 = vpop.xlane.xlu0 %9313
    %vm9315 = vcmp.eq.f32.partialorder %v9312, %v9314
    %v9316 = vsel %vm9315, %v9311, inf
    %9317 = vmin.xlane.f32.xlu0 %v9316
    %v9318 = vpop.xlane.xlu0 %9317
    %v9319 = vcvt.f32.s32 %v9318
    %v9320 = vcvt.f32.s32 %v9314
    %v9321 = vshll.u32 %v9320, 16
    %v9322 = vadd.s32 %v9321, %v9319
    %v9323 = vand.u32 %v8922, 65535
    %v9324 = vshra.s32 %v8922, 16
    %v9325 = vcvt.s32.f32 %v9323
    %v9326 = vcvt.s32.f32 %v9324
    %9327 = vmin.xlane.f32.xlu0 %v9326
    %v9328 = vpop.xlane.xlu0 %9327
    %vm9329 = vcmp.eq.f32.partialorder %v9326, %v9328
    %v9330 = vsel %vm9329, %v9325, inf
    %9331 = vmin.xlane.f32.xlu0 %v9330
    %v9332 = vpop.xlane.xlu0 %9331
    %v9333 = vcvt.f32.s32 %v9332
    %v9334 = vcvt.f32.s32 %v9328
    %v9335 = vshll.u32 %v9334, 16
    %v9336 = vadd.s32 %v9335, %v9333
    %v9337 = vand.u32 %v8923, 65535
    %v9338 = vshra.s32 %v8923, 16
    %v9339 = vcvt.s32.f32 %v9337
    %v9340 = vcvt.s32.f32 %v9338
    %9341 = vmin.xlane.f32.xlu0 %v9340
    %v9342 = vpop.xlane.xlu0 %9341
    %vm9343 = vcmp.eq.f32.partialorder %v9340, %v9342
    %v9344 = vsel %vm9343, %v9339, inf
    %9345 = vmin.xlane.f32.xlu0 %v9344
    %v9346 = vpop.xlane.xlu0 %9345
    %v9347 = vcvt.f32.s32 %v9346
    %v9348 = vcvt.f32.s32 %v9342
    %v9349 = vshll.u32 %v9348, 16
    %v9350 = vadd.s32 %v9349, %v9347
    %v9351 = vand.u32 %v8924, 65535
    %v9352 = vshra.s32 %v8924, 16
    %v9353 = vcvt.s32.f32 %v9351
    %v9354 = vcvt.s32.f32 %v9352
    %9355 = vmin.xlane.f32.xlu0 %v9354
    %v9356 = vpop.xlane.xlu0 %9355
    %vm9357 = vcmp.eq.f32.partialorder %v9354, %v9356
    %v9358 = vsel %vm9357, %v9353, inf
    %9359 = vmin.xlane.f32.xlu0 %v9358
    %v9360 = vpop.xlane.xlu0 %9359
    %v9361 = vcvt.f32.s32 %v9360
    %v9362 = vcvt.f32.s32 %v9356
    %v9363 = vshll.u32 %v9362, 16
    %v9364 = vadd.s32 %v9363, %v9361
    %v9365 = vand.u32 %v8925, 65535
    %v9366 = vshra.s32 %v8925, 16
    %v9367 = vcvt.s32.f32 %v9365
    %v9368 = vcvt.s32.f32 %v9366
    %9369 = vmin.xlane.f32.xlu0 %v9368
    %v9370 = vpop.xlane.xlu0 %9369
    %vm9371 = vcmp.eq.f32.partialorder %v9368, %v9370
    %v9372 = vsel %vm9371, %v9367, inf
    %9373 = vmin.xlane.f32.xlu0 %v9372
    %v9374 = vpop.xlane.xlu0 %9373
    %v9375 = vcvt.f32.s32 %v9374
    %v9376 = vcvt.f32.s32 %v9370
    %v9377 = vshll.u32 %v9376, 16
    %v9378 = vadd.s32 %v9377, %v9375
    %v9379 = vand.u32 %v8926, 65535
    %v9380 = vshra.s32 %v8926, 16
    %v9381 = vcvt.s32.f32 %v9379
    %v9382 = vcvt.s32.f32 %v9380
    %9383 = vmin.xlane.f32.xlu0 %v9382
    %v9384 = vpop.xlane.xlu0 %9383
    %vm9385 = vcmp.eq.f32.partialorder %v9382, %v9384
    %v9386 = vsel %vm9385, %v9381, inf
    %9387 = vmin.xlane.f32.xlu0 %v9386
    %v9388 = vpop.xlane.xlu0 %9387
    %v9389 = vcvt.f32.s32 %v9388
    %v9390 = vcvt.f32.s32 %v9384
    %v9391 = vshll.u32 %v9390, 16
    %v9392 = vadd.s32 %v9391, %v9389
    %v9393 = vand.u32 %v8927, 65535
    %v9394 = vshra.s32 %v8927, 16
    %v9395 = vcvt.s32.f32 %v9393
    %v9396 = vcvt.s32.f32 %v9394
    %9397 = vmin.xlane.f32.xlu0 %v9396
    %v9398 = vpop.xlane.xlu0 %9397
    %vm9399 = vcmp.eq.f32.partialorder %v9396, %v9398
    %v9400 = vsel %vm9399, %v9395, inf
    %9401 = vmin.xlane.f32.xlu0 %v9400
    %v9402 = vpop.xlane.xlu0 %9401
    %v9403 = vcvt.f32.s32 %v9402
    %v9404 = vcvt.f32.s32 %v9398
    %v9405 = vshll.u32 %v9404, 16
    %v9406 = vadd.s32 %v9405, %v9403
    %v9407 = vand.u32 %v8928, 65535
    %v9408 = vshra.s32 %v8928, 16
    %v9409 = vcvt.s32.f32 %v9407
    %v9410 = vcvt.s32.f32 %v9408
    %9411 = vmin.xlane.f32.xlu0 %v9410
    %v9412 = vpop.xlane.xlu0 %9411
    %vm9413 = vcmp.eq.f32.partialorder %v9410, %v9412
    %v9414 = vsel %vm9413, %v9409, inf
    %9415 = vmin.xlane.f32.xlu0 %v9414
    %v9416 = vpop.xlane.xlu0 %9415
    %v9417 = vcvt.f32.s32 %v9416
    %v9418 = vcvt.f32.s32 %v9412
    %v9419 = vshll.u32 %v9418, 16
    %v9420 = vadd.s32 %v9419, %v9417
    %v9421 = vand.u32 %v8929, 65535
    %v9422 = vshra.s32 %v8929, 16
    %v9423 = vcvt.s32.f32 %v9421
    %v9424 = vcvt.s32.f32 %v9422
    %9425 = vmin.xlane.f32.xlu0 %v9424
    %v9426 = vpop.xlane.xlu0 %9425
    %vm9427 = vcmp.eq.f32.partialorder %v9424, %v9426
    %v9428 = vsel %vm9427, %v9423, inf
    %9429 = vmin.xlane.f32.xlu0 %v9428
    %v9430 = vpop.xlane.xlu0 %9429
    %v9431 = vcvt.f32.s32 %v9430
    %v9432 = vcvt.f32.s32 %v9426
    %v9433 = vshll.u32 %v9432, 16
    %v9434 = vadd.s32 %v9433, %v9431
    %v9435 = vand.u32 %v8930, 65535
    %v9436 = vshra.s32 %v8930, 16
    %v9437 = vcvt.s32.f32 %v9435
    %v9438 = vcvt.s32.f32 %v9436
    %9439 = vmin.xlane.f32.xlu0 %v9438
    %v9440 = vpop.xlane.xlu0 %9439
    %vm9441 = vcmp.eq.f32.partialorder %v9438, %v9440
    %v9442 = vsel %vm9441, %v9437, inf
    %9443 = vmin.xlane.f32.xlu0 %v9442
    %v9444 = vpop.xlane.xlu0 %9443
    %v9445 = vcvt.f32.s32 %v9444
    %v9446 = vcvt.f32.s32 %v9440
    %v9447 = vshll.u32 %v9446, 16
    %v9448 = vadd.s32 %v9447, %v9445
    %v9449 = vand.u32 %v8931, 65535
    %v9450 = vshra.s32 %v8931, 16
    %v9451 = vcvt.s32.f32 %v9449
    %v9452 = vcvt.s32.f32 %v9450
    %9453 = vmin.xlane.f32.xlu0 %v9452
    %v9454 = vpop.xlane.xlu0 %9453
    %vm9455 = vcmp.eq.f32.partialorder %v9452, %v9454
    %v9456 = vsel %vm9455, %v9451, inf
    %9457 = vmin.xlane.f32.xlu0 %v9456
    %v9458 = vpop.xlane.xlu0 %9457
    %v9459 = vcvt.f32.s32 %v9458
    %v9460 = vcvt.f32.s32 %v9454
    %v9461 = vshll.u32 %v9460, 16
    %v9462 = vadd.s32 %v9461, %v9459
    %v9463 = vand.u32 %v8932, 65535
    %v9464 = vshra.s32 %v8932, 16
    %v9465 = vcvt.s32.f32 %v9463
    %v9466 = vcvt.s32.f32 %v9464
    %9467 = vmin.xlane.f32.xlu0 %v9466
    %v9468 = vpop.xlane.xlu0 %9467
    %vm9469 = vcmp.eq.f32.partialorder %v9466, %v9468
    %v9470 = vsel %vm9469, %v9465, inf
    %9471 = vmin.xlane.f32.xlu0 %v9470
    %v9472 = vpop.xlane.xlu0 %9471
    %v9473 = vcvt.f32.s32 %v9472
    %v9474 = vcvt.f32.s32 %v9468
    %v9475 = vshll.u32 %v9474, 16
    %v9476 = vadd.s32 %v9475, %v9473
    %v9477 = vand.u32 %v8933, 65535
    %v9478 = vshra.s32 %v8933, 16
    %v9479 = vcvt.s32.f32 %v9477
    %v9480 = vcvt.s32.f32 %v9478
    %9481 = vmin.xlane.f32.xlu0 %v9480
    %v9482 = vpop.xlane.xlu0 %9481
    %vm9483 = vcmp.eq.f32.partialorder %v9480, %v9482
    %v9484 = vsel %vm9483, %v9479, inf
    %9485 = vmin.xlane.f32.xlu0 %v9484
    %v9486 = vpop.xlane.xlu0 %9485
    %v9487 = vcvt.f32.s32 %v9486
    %v9488 = vcvt.f32.s32 %v9482
    %v9489 = vshll.u32 %v9488, 16
    %v9490 = vadd.s32 %v9489, %v9487
    %v9491 = vand.u32 %v8934, 65535
    %v9492 = vshra.s32 %v8934, 16
    %v9493 = vcvt.s32.f32 %v9491
    %v9494 = vcvt.s32.f32 %v9492
    %9495 = vmin.xlane.f32.xlu0 %v9494
    %v9496 = vpop.xlane.xlu0 %9495
    %vm9497 = vcmp.eq.f32.partialorder %v9494, %v9496
    %v9498 = vsel %vm9497, %v9493, inf
    %9499 = vmin.xlane.f32.xlu0 %v9498
    %v9500 = vpop.xlane.xlu0 %9499
    %v9501 = vcvt.f32.s32 %v9500
    %v9502 = vcvt.f32.s32 %v9496
    %v9503 = vshll.u32 %v9502, 16
    %v9504 = vadd.s32 %v9503, %v9501
    %v9505 = vand.u32 %v8935, 65535
    %v9506 = vshra.s32 %v8935, 16
    %v9507 = vcvt.s32.f32 %v9505
    %v9508 = vcvt.s32.f32 %v9506
    %9509 = vmin.xlane.f32.xlu0 %v9508
    %v9510 = vpop.xlane.xlu0 %9509
    %vm9511 = vcmp.eq.f32.partialorder %v9508, %v9510
    %v9512 = vsel %vm9511, %v9507, inf
    %9513 = vmin.xlane.f32.xlu0 %v9512
    %v9514 = vpop.xlane.xlu0 %9513
    %v9515 = vcvt.f32.s32 %v9514
    %v9516 = vcvt.f32.s32 %v9510
    %v9517 = vshll.u32 %v9516, 16
    %v9518 = vadd.s32 %v9517, %v9515
    %v9519 = vand.u32 %v8936, 65535
    %v9520 = vshra.s32 %v8936, 16
    %v9521 = vcvt.s32.f32 %v9519
    %v9522 = vcvt.s32.f32 %v9520
    %9523 = vmin.xlane.f32.xlu0 %v9522
    %v9524 = vpop.xlane.xlu0 %9523
    %vm9525 = vcmp.eq.f32.partialorder %v9522, %v9524
    %v9526 = vsel %vm9525, %v9521, inf
    %9527 = vmin.xlane.f32.xlu0 %v9526
    %v9528 = vpop.xlane.xlu0 %9527
    %v9529 = vcvt.f32.s32 %v9528
    %v9530 = vcvt.f32.s32 %v9524
    %v9531 = vshll.u32 %v9530, 16
    %v9532 = vadd.s32 %v9531, %v9529
    %v9533 = vand.u32 %v8937, 65535
    %v9534 = vshra.s32 %v8937, 16
    %v9535 = vcvt.s32.f32 %v9533
    %v9536 = vcvt.s32.f32 %v9534
    %9537 = vmin.xlane.f32.xlu0 %v9536
    %v9538 = vpop.xlane.xlu0 %9537
    %vm9539 = vcmp.eq.f32.partialorder %v9536, %v9538
    %v9540 = vsel %vm9539, %v9535, inf
    %9541 = vmin.xlane.f32.xlu0 %v9540
    %v9542 = vpop.xlane.xlu0 %9541
    %v9543 = vcvt.f32.s32 %v9542
    %v9544 = vcvt.f32.s32 %v9538
    %v9545 = vshll.u32 %v9544, 16
    %v9546 = vadd.s32 %v9545, %v9543
    %v9547 = vand.u32 %v8938, 65535
    %v9548 = vshra.s32 %v8938, 16
    %v9549 = vcvt.s32.f32 %v9547
    %v9550 = vcvt.s32.f32 %v9548
    %9551 = vmin.xlane.f32.xlu0 %v9550
    %v9552 = vpop.xlane.xlu0 %9551
    %vm9553 = vcmp.eq.f32.partialorder %v9550, %v9552
    %v9554 = vsel %vm9553, %v9549, inf
    %9555 = vmin.xlane.f32.xlu0 %v9554
    %v9556 = vpop.xlane.xlu0 %9555
    %v9557 = vcvt.f32.s32 %v9556
    %v9558 = vcvt.f32.s32 %v9552
    %v9559 = vshll.u32 %v9558, 16
    %v9560 = vadd.s32 %v9559, %v9557
    %v9561 = vand.u32 %v8939, 65535
    %v9562 = vshra.s32 %v8939, 16
    %v9563 = vcvt.s32.f32 %v9561
    %v9564 = vcvt.s32.f32 %v9562
    %9565 = vmin.xlane.f32.xlu0 %v9564
    %v9566 = vpop.xlane.xlu0 %9565
    %vm9567 = vcmp.eq.f32.partialorder %v9564, %v9566
    %v9568 = vsel %vm9567, %v9563, inf
    %9569 = vmin.xlane.f32.xlu0 %v9568
    %v9570 = vpop.xlane.xlu0 %9569
    %v9571 = vcvt.f32.s32 %v9570
    %v9572 = vcvt.f32.s32 %v9566
    %v9573 = vshll.u32 %v9572, 16
    %v9574 = vadd.s32 %v9573, %v9571
    %v9575 = vand.u32 %v8940, 65535
    %v9576 = vshra.s32 %v8940, 16
    %v9577 = vcvt.s32.f32 %v9575
    %v9578 = vcvt.s32.f32 %v9576
    %9579 = vmin.xlane.f32.xlu0 %v9578
    %v9580 = vpop.xlane.xlu0 %9579
    %vm9581 = vcmp.eq.f32.partialorder %v9578, %v9580
    %v9582 = vsel %vm9581, %v9577, inf
    %9583 = vmin.xlane.f32.xlu0 %v9582
    %v9584 = vpop.xlane.xlu0 %9583
    %v9585 = vcvt.f32.s32 %v9584
    %v9586 = vcvt.f32.s32 %v9580
    %v9587 = vshll.u32 %v9586, 16
    %v9588 = vadd.s32 %v9587, %v9585
    %v9589 = vand.u32 %v8941, 65535
    %v9590 = vshra.s32 %v8941, 16
    %v9591 = vcvt.s32.f32 %v9589
    %v9592 = vcvt.s32.f32 %v9590
    %9593 = vmin.xlane.f32.xlu0 %v9592
    %v9594 = vpop.xlane.xlu0 %9593
    %vm9595 = vcmp.eq.f32.partialorder %v9592, %v9594
    %v9596 = vsel %vm9595, %v9591, inf
    %9597 = vmin.xlane.f32.xlu0 %v9596
    %v9598 = vpop.xlane.xlu0 %9597
    %v9599 = vcvt.f32.s32 %v9598
    %v9600 = vcvt.f32.s32 %v9594
    %v9601 = vshll.u32 %v9600, 16
    %v9602 = vadd.s32 %v9601, %v9599
    %v9603 = vand.u32 %v8942, 65535
    %v9604 = vshra.s32 %v8942, 16
    %v9605 = vcvt.s32.f32 %v9603
    %v9606 = vcvt.s32.f32 %v9604
    %9607 = vmin.xlane.f32.xlu0 %v9606
    %v9608 = vpop.xlane.xlu0 %9607
    %vm9609 = vcmp.eq.f32.partialorder %v9606, %v9608
    %v9610 = vsel %vm9609, %v9605, inf
    %9611 = vmin.xlane.f32.xlu0 %v9610
    %v9612 = vpop.xlane.xlu0 %9611
    %v9613 = vcvt.f32.s32 %v9612
    %v9614 = vcvt.f32.s32 %v9608
    %v9615 = vshll.u32 %v9614, 16
    %v9616 = vadd.s32 %v9615, %v9613
    %v9617 = vand.u32 %v8943, 65535
    %v9618 = vshra.s32 %v8943, 16
    %v9619 = vcvt.s32.f32 %v9617
    %v9620 = vcvt.s32.f32 %v9618
    %9621 = vmin.xlane.f32.xlu0 %v9620
    %v9622 = vpop.xlane.xlu0 %9621
    %vm9623 = vcmp.eq.f32.partialorder %v9620, %v9622
    %v9624 = vsel %vm9623, %v9619, inf
    %9625 = vmin.xlane.f32.xlu0 %v9624
    %v9626 = vpop.xlane.xlu0 %9625
    %v9627 = vcvt.f32.s32 %v9626
    %v9628 = vcvt.f32.s32 %v9622
    %v9629 = vshll.u32 %v9628, 16
    %v9630 = vadd.s32 %v9629, %v9627
    %v9631 = vand.u32 %v8944, 65535
    %v9632 = vshra.s32 %v8944, 16
    %v9633 = vcvt.s32.f32 %v9631
    %v9634 = vcvt.s32.f32 %v9632
    %9635 = vmin.xlane.f32.xlu0 %v9634
    %v9636 = vpop.xlane.xlu0 %9635
    %vm9637 = vcmp.eq.f32.partialorder %v9634, %v9636
    %v9638 = vsel %vm9637, %v9633, inf
    %9639 = vmin.xlane.f32.xlu0 %v9638
    %v9640 = vpop.xlane.xlu0 %9639
    %v9641 = vcvt.f32.s32 %v9640
    %v9642 = vcvt.f32.s32 %v9636
    %v9643 = vshll.u32 %v9642, 16
    %v9644 = vadd.s32 %v9643, %v9641
    %v9645 = vand.u32 %v8945, 65535
    %v9646 = vshra.s32 %v8945, 16
    %v9647 = vcvt.s32.f32 %v9645
    %v9648 = vcvt.s32.f32 %v9646
    %9649 = vmin.xlane.f32.xlu0 %v9648
    %v9650 = vpop.xlane.xlu0 %9649
    %vm9651 = vcmp.eq.f32.partialorder %v9648, %v9650
    %v9652 = vsel %vm9651, %v9647, inf
    %9653 = vmin.xlane.f32.xlu0 %v9652
    %v9654 = vpop.xlane.xlu0 %9653
    %v9655 = vcvt.f32.s32 %v9654
    %v9656 = vcvt.f32.s32 %v9650
    %v9657 = vshll.u32 %v9656, 16
    %v9658 = vadd.s32 %v9657, %v9655
    %v9659 = vand.u32 %v8946, 65535
    %v9660 = vshra.s32 %v8946, 16
    %v9661 = vcvt.s32.f32 %v9659
    %v9662 = vcvt.s32.f32 %v9660
    %9663 = vmin.xlane.f32.xlu0 %v9662
    %v9664 = vpop.xlane.xlu0 %9663
    %vm9665 = vcmp.eq.f32.partialorder %v9662, %v9664
    %v9666 = vsel %vm9665, %v9661, inf
    %9667 = vmin.xlane.f32.xlu0 %v9666
    %v9668 = vpop.xlane.xlu0 %9667
    %v9669 = vcvt.f32.s32 %v9668
    %v9670 = vcvt.f32.s32 %v9664
    %v9671 = vshll.u32 %v9670, 16
    %v9672 = vadd.s32 %v9671, %v9669
    %v9673 = vand.u32 %v8947, 65535
    %v9674 = vshra.s32 %v8947, 16
    %v9675 = vcvt.s32.f32 %v9673
    %v9676 = vcvt.s32.f32 %v9674
    %9677 = vmin.xlane.f32.xlu0 %v9676
    %v9678 = vpop.xlane.xlu0 %9677
    %vm9679 = vcmp.eq.f32.partialorder %v9676, %v9678
    %v9680 = vsel %vm9679, %v9675, inf
    %9681 = vmin.xlane.f32.xlu0 %v9680
    %v9682 = vpop.xlane.xlu0 %9681
    %v9683 = vcvt.f32.s32 %v9682
    %v9684 = vcvt.f32.s32 %v9678
    %v9685 = vshll.u32 %v9684, 16
    %v9686 = vadd.s32 %v9685, %v9683
    %v9687 = vand.u32 %v8948, 65535
    %v9688 = vshra.s32 %v8948, 16
    %v9689 = vcvt.s32.f32 %v9687
    %v9690 = vcvt.s32.f32 %v9688
    %9691 = vmin.xlane.f32.xlu0 %v9690
    %v9692 = vpop.xlane.xlu0 %9691
    %vm9693 = vcmp.eq.f32.partialorder %v9690, %v9692
    %v9694 = vsel %vm9693, %v9689, inf
    %9695 = vmin.xlane.f32.xlu0 %v9694
    %v9696 = vpop.xlane.xlu0 %9695
    %v9697 = vcvt.f32.s32 %v9696
    %v9698 = vcvt.f32.s32 %v9692
    %v9699 = vshll.u32 %v9698, 16
    %v9700 = vadd.s32 %v9699, %v9697
    %v9701 = vand.u32 %v8949, 65535
    %v9702 = vshra.s32 %v8949, 16
    %v9703 = vcvt.s32.f32 %v9701
    %v9704 = vcvt.s32.f32 %v9702
    %9705 = vmin.xlane.f32.xlu0 %v9704
    %v9706 = vpop.xlane.xlu0 %9705
    %vm9707 = vcmp.eq.f32.partialorder %v9704, %v9706
    %v9708 = vsel %vm9707, %v9703, inf
    %9709 = vmin.xlane.f32.xlu0 %v9708
    %v9710 = vpop.xlane.xlu0 %9709
    %v9711 = vcvt.f32.s32 %v9710
    %v9712 = vcvt.f32.s32 %v9706
    %v9713 = vshll.u32 %v9712, 16
    %v9714 = vadd.s32 %v9713, %v9711
    %v9715 = vand.u32 %v8950, 65535
    %v9716 = vshra.s32 %v8950, 16
    %v9717 = vcvt.s32.f32 %v9715
    %v9718 = vcvt.s32.f32 %v9716
    %9719 = vmin.xlane.f32.xlu0 %v9718
    %v9720 = vpop.xlane.xlu0 %9719
    %vm9721 = vcmp.eq.f32.partialorder %v9718, %v9720
    %v9722 = vsel %vm9721, %v9717, inf
    %9723 = vmin.xlane.f32.xlu0 %v9722
    %v9724 = vpop.xlane.xlu0 %9723
    %v9725 = vcvt.f32.s32 %v9724
    %v9726 = vcvt.f32.s32 %v9720
    %v9727 = vshll.u32 %v9726, 16
    %v9728 = vadd.s32 %v9727, %v9725
    %v9729 = vand.u32 %v8951, 65535
    %v9730 = vshra.s32 %v8951, 16
    %v9731 = vcvt.s32.f32 %v9729
    %v9732 = vcvt.s32.f32 %v9730
    %9733 = vmin.xlane.f32.xlu0 %v9732
    %v9734 = vpop.xlane.xlu0 %9733
    %vm9735 = vcmp.eq.f32.partialorder %v9732, %v9734
    %v9736 = vsel %vm9735, %v9731, inf
    %9737 = vmin.xlane.f32.xlu0 %v9736
    %v9738 = vpop.xlane.xlu0 %9737
    %v9739 = vcvt.f32.s32 %v9738
    %v9740 = vcvt.f32.s32 %v9734
    %v9741 = vshll.u32 %v9740, 16
    %v9742 = vadd.s32 %v9741, %v9739
    %v9743 = vand.u32 %v8952, 65535
    %v9744 = vshra.s32 %v8952, 16
    %v9745 = vcvt.s32.f32 %v9743
    %v9746 = vcvt.s32.f32 %v9744
    %9747 = vmin.xlane.f32.xlu0 %v9746
    %v9748 = vpop.xlane.xlu0 %9747
    %vm9749 = vcmp.eq.f32.partialorder %v9746, %v9748
    %v9750 = vsel %vm9749, %v9745, inf
    %9751 = vmin.xlane.f32.xlu0 %v9750
    %v9752 = vpop.xlane.xlu0 %9751
    %v9753 = vcvt.f32.s32 %v9752
    %v9754 = vcvt.f32.s32 %v9748
    %v9755 = vshll.u32 %v9754, 16
    %v9756 = vadd.s32 %v9755, %v9753
    %v9757 = vand.u32 %v8953, 65535
    %v9758 = vshra.s32 %v8953, 16
    %v9759 = vcvt.s32.f32 %v9757
    %v9760 = vcvt.s32.f32 %v9758
    %9761 = vmin.xlane.f32.xlu0 %v9760
    %v9762 = vpop.xlane.xlu0 %9761
    %vm9763 = vcmp.eq.f32.partialorder %v9760, %v9762
    %v9764 = vsel %vm9763, %v9759, inf
    %9765 = vmin.xlane.f32.xlu0 %v9764
    %v9766 = vpop.xlane.xlu0 %9765
    %v9767 = vcvt.f32.s32 %v9766
    %v9768 = vcvt.f32.s32 %v9762
    %v9769 = vshll.u32 %v9768, 16
    %v9770 = vadd.s32 %v9769, %v9767
    %v9771 = vand.u32 %v8954, 65535
    %v9772 = vshra.s32 %v8954, 16
    %v9773 = vcvt.s32.f32 %v9771
    %v9774 = vcvt.s32.f32 %v9772
    %9775 = vmin.xlane.f32.xlu0 %v9774
    %v9776 = vpop.xlane.xlu0 %9775
    %vm9777 = vcmp.eq.f32.partialorder %v9774, %v9776
    %v9778 = vsel %vm9777, %v9773, inf
    %9779 = vmin.xlane.f32.xlu0 %v9778
    %v9780 = vpop.xlane.xlu0 %9779
    %v9781 = vcvt.f32.s32 %v9780
    %v9782 = vcvt.f32.s32 %v9776
    %v9783 = vshll.u32 %v9782, 16
    %v9784 = vadd.s32 %v9783, %v9781
    %v9785 = vand.u32 %v8955, 65535
    %v9786 = vshra.s32 %v8955, 16
    %v9787 = vcvt.s32.f32 %v9785
    %v9788 = vcvt.s32.f32 %v9786
    %9789 = vmin.xlane.f32.xlu0 %v9788
    %v9790 = vpop.xlane.xlu0 %9789
    %vm9791 = vcmp.eq.f32.partialorder %v9788, %v9790
    %v9792 = vsel %vm9791, %v9787, inf
    %9793 = vmin.xlane.f32.xlu0 %v9792
    %v9794 = vpop.xlane.xlu0 %9793
    %v9795 = vcvt.f32.s32 %v9794
    %v9796 = vcvt.f32.s32 %v9790
    %v9797 = vshll.u32 %v9796, 16
    %v9798 = vadd.s32 %v9797, %v9795
    %v9799 = vand.u32 %v8956, 65535
    %v9800 = vshra.s32 %v8956, 16
    %v9801 = vcvt.s32.f32 %v9799
    %v9802 = vcvt.s32.f32 %v9800
    %9803 = vmin.xlane.f32.xlu0 %v9802
    %v9804 = vpop.xlane.xlu0 %9803
    %vm9805 = vcmp.eq.f32.partialorder %v9802, %v9804
    %v9806 = vsel %vm9805, %v9801, inf
    %9807 = vmin.xlane.f32.xlu0 %v9806
    %v9808 = vpop.xlane.xlu0 %9807
    %v9809 = vcvt.f32.s32 %v9808
    %v9810 = vcvt.f32.s32 %v9804
    %v9811 = vshll.u32 %v9810, 16
    %v9812 = vadd.s32 %v9811, %v9809
    %v9813 = vand.u32 %v8957, 65535
    %v9814 = vshra.s32 %v8957, 16
    %v9815 = vcvt.s32.f32 %v9813
    %v9816 = vcvt.s32.f32 %v9814
    %9817 = vmin.xlane.f32.xlu0 %v9816
    %v9818 = vpop.xlane.xlu0 %9817
    %vm9819 = vcmp.eq.f32.partialorder %v9816, %v9818
    %v9820 = vsel %vm9819, %v9815, inf
    %9821 = vmin.xlane.f32.xlu0 %v9820
    %v9822 = vpop.xlane.xlu0 %9821
    %v9823 = vcvt.f32.s32 %v9822
    %v9824 = vcvt.f32.s32 %v9818
    %v9825 = vshll.u32 %v9824, 16
    %v9826 = vadd.s32 %v9825, %v9823
    %v9827 = vand.u32 %v8958, 65535
    %v9828 = vshra.s32 %v8958, 16
    %v9829 = vcvt.s32.f32 %v9827
    %v9830 = vcvt.s32.f32 %v9828
    %9831 = vmin.xlane.f32.xlu0 %v9830
    %v9832 = vpop.xlane.xlu0 %9831
    %vm9833 = vcmp.eq.f32.partialorder %v9830, %v9832
    %v9834 = vsel %vm9833, %v9829, inf
    %9835 = vmin.xlane.f32.xlu0 %v9834
    %v9836 = vpop.xlane.xlu0 %9835
    %v9837 = vcvt.f32.s32 %v9836
    %v9838 = vcvt.f32.s32 %v9832
    %v9839 = vshll.u32 %v9838, 16
    %v9840 = vadd.s32 %v9839, %v9837
    %v9841 = vand.u32 %v8959, 65535
    %v9842 = vshra.s32 %v8959, 16
    %v9843 = vcvt.s32.f32 %v9841
    %v9844 = vcvt.s32.f32 %v9842
    %9845 = vmin.xlane.f32.xlu0 %v9844
    %v9846 = vpop.xlane.xlu0 %9845
    %vm9847 = vcmp.eq.f32.partialorder %v9844, %v9846
    %v9848 = vsel %vm9847, %v9843, inf
    %9849 = vmin.xlane.f32.xlu0 %v9848
    %v9850 = vpop.xlane.xlu0 %9849
    %v9851 = vcvt.f32.s32 %v9850
    %v9852 = vcvt.f32.s32 %v9846
    %v9853 = vshll.u32 %v9852, 16
    %v9854 = vadd.s32 %v9853, %v9851
    %v9855 = vand.u32 %v8960, 65535
    %v9856 = vshra.s32 %v8960, 16
    %v9857 = vcvt.s32.f32 %v9855
    %v9858 = vcvt.s32.f32 %v9856
    %9859 = vmin.xlane.f32.xlu0 %v9858
    %v9860 = vpop.xlane.xlu0 %9859
    %vm9861 = vcmp.eq.f32.partialorder %v9858, %v9860
    %v9862 = vsel %vm9861, %v9857, inf
    %9863 = vmin.xlane.f32.xlu0 %v9862
    %v9864 = vpop.xlane.xlu0 %9863
    %v9865 = vcvt.f32.s32 %v9864
    %v9866 = vcvt.f32.s32 %v9860
    %v9867 = vshll.u32 %v9866, 16
    %v9868 = vadd.s32 %v9867, %v9865
    %v9869 = vand.u32 %v8961, 65535
    %v9870 = vshra.s32 %v8961, 16
    %v9871 = vcvt.s32.f32 %v9869
    %v9872 = vcvt.s32.f32 %v9870
    %9873 = vmin.xlane.f32.xlu0 %v9872
    %v9874 = vpop.xlane.xlu0 %9873
    %vm9875 = vcmp.eq.f32.partialorder %v9872, %v9874
    %v9876 = vsel %vm9875, %v9871, inf
    %9877 = vmin.xlane.f32.xlu0 %v9876
    %v9878 = vpop.xlane.xlu0 %9877
    %v9879 = vcvt.f32.s32 %v9878
    %v9880 = vcvt.f32.s32 %v9874
    %v9881 = vshll.u32 %v9880, 16
    %v9882 = vadd.s32 %v9881, %v9879
    %v9883 = vand.u32 %v8962, 65535
    %v9884 = vshra.s32 %v8962, 16
    %v9885 = vcvt.s32.f32 %v9883
    %v9886 = vcvt.s32.f32 %v9884
    %9887 = vmin.xlane.f32.xlu0 %v9886
    %v9888 = vpop.xlane.xlu0 %9887
    %vm9889 = vcmp.eq.f32.partialorder %v9886, %v9888
    %v9890 = vsel %vm9889, %v9885, inf
    %9891 = vmin.xlane.f32.xlu0 %v9890
    %v9892 = vpop.xlane.xlu0 %9891
    %v9893 = vcvt.f32.s32 %v9892
    %v9894 = vcvt.f32.s32 %v9888
    %v9895 = vshll.u32 %v9894, 16
    %v9896 = vadd.s32 %v9895, %v9893
    %v9897 = vand.u32 %v8963, 65535
    %v9898 = vshra.s32 %v8963, 16
    %v9899 = vcvt.s32.f32 %v9897
    %v9900 = vcvt.s32.f32 %v9898
    %9901 = vmin.xlane.f32.xlu0 %v9900
    %v9902 = vpop.xlane.xlu0 %9901
    %vm9903 = vcmp.eq.f32.partialorder %v9900, %v9902
    %v9904 = vsel %vm9903, %v9899, inf
    %9905 = vmin.xlane.f32.xlu0 %v9904
    %v9906 = vpop.xlane.xlu0 %9905
    %v9907 = vcvt.f32.s32 %v9906
    %v9908 = vcvt.f32.s32 %v9902
    %v9909 = vshll.u32 %v9908, 16
    %v9910 = vadd.s32 %v9909, %v9907
    %v9911 = vand.u32 %v8964, 65535
    %v9912 = vshra.s32 %v8964, 16
    %v9913 = vcvt.s32.f32 %v9911
    %v9914 = vcvt.s32.f32 %v9912
    %9915 = vmin.xlane.f32.xlu0 %v9914
    %v9916 = vpop.xlane.xlu0 %9915
    %vm9917 = vcmp.eq.f32.partialorder %v9914, %v9916
    %v9918 = vsel %vm9917, %v9913, inf
    %9919 = vmin.xlane.f32.xlu0 %v9918
    %v9920 = vpop.xlane.xlu0 %9919
    %v9921 = vcvt.f32.s32 %v9920
    %v9922 = vcvt.f32.s32 %v9916
    %v9923 = vshll.u32 %v9922, 16
    %v9924 = vadd.s32 %v9923, %v9921
    %v9925 = vand.u32 %v8965, 65535
    %v9926 = vshra.s32 %v8965, 16
    %v9927 = vcvt.s32.f32 %v9925
    %v9928 = vcvt.s32.f32 %v9926
    %9929 = vmin.xlane.f32.xlu0 %v9928
    %v9930 = vpop.xlane.xlu0 %9929
    %vm9931 = vcmp.eq.f32.partialorder %v9928, %v9930
    %v9932 = vsel %vm9931, %v9927, inf
    %9933 = vmin.xlane.f32.xlu0 %v9932
    %v9934 = vpop.xlane.xlu0 %9933
    %v9935 = vcvt.f32.s32 %v9934
    %v9936 = vcvt.f32.s32 %v9930
    %v9937 = vshll.u32 %v9936, 16
    %v9938 = vadd.s32 %v9937, %v9935
    %v9939 = vand.u32 %v8966, 65535
    %v9940 = vshra.s32 %v8966, 16
    %v9941 = vcvt.s32.f32 %v9939
    %v9942 = vcvt.s32.f32 %v9940
    %9943 = vmin.xlane.f32.xlu0 %v9942
    %v9944 = vpop.xlane.xlu0 %9943
    %vm9945 = vcmp.eq.f32.partialorder %v9942, %v9944
    %v9946 = vsel %vm9945, %v9941, inf
    %9947 = vmin.xlane.f32.xlu0 %v9946
    %v9948 = vpop.xlane.xlu0 %9947
    %v9949 = vcvt.f32.s32 %v9948
    %v9950 = vcvt.f32.s32 %v9944
    %v9951 = vshll.u32 %v9950, 16
    %v9952 = vadd.s32 %v9951, %v9949
    %v9953 = vand.u32 %v8967, 65535
    %v9954 = vshra.s32 %v8967, 16
    %v9955 = vcvt.s32.f32 %v9953
    %v9956 = vcvt.s32.f32 %v9954
    %9957 = vmin.xlane.f32.xlu0 %v9956
    %v9958 = vpop.xlane.xlu0 %9957
    %vm9959 = vcmp.eq.f32.partialorder %v9956, %v9958
    %v9960 = vsel %vm9959, %v9955, inf
    %9961 = vmin.xlane.f32.xlu0 %v9960
    %v9962 = vpop.xlane.xlu0 %9961
    %v9963 = vcvt.f32.s32 %v9962
    %v9964 = vcvt.f32.s32 %v9958
    %v9965 = vshll.u32 %v9964, 16
    %v9966 = vadd.s32 %v9965, %v9963
    %v9967 = vand.u32 %v8968, 65535
    %v9968 = vshra.s32 %v8968, 16
    %v9969 = vcvt.s32.f32 %v9967
    %v9970 = vcvt.s32.f32 %v9968
    %9971 = vmin.xlane.f32.xlu0 %v9970
    %v9972 = vpop.xlane.xlu0 %9971
    %vm9973 = vcmp.eq.f32.partialorder %v9970, %v9972
    %v9974 = vsel %vm9973, %v9969, inf
    %9975 = vmin.xlane.f32.xlu0 %v9974
    %v9976 = vpop.xlane.xlu0 %9975
    %v9977 = vcvt.f32.s32 %v9976
    %v9978 = vcvt.f32.s32 %v9972
    %v9979 = vshll.u32 %v9978, 16
    %v9980 = vadd.s32 %v9979, %v9977
    %v9981 = vand.u32 %v8969, 65535
    %v9982 = vshra.s32 %v8969, 16
    %v9983 = vcvt.s32.f32 %v9981
    %v9984 = vcvt.s32.f32 %v9982
    %9985 = vmin.xlane.f32.xlu0 %v9984
    %v9986 = vpop.xlane.xlu0 %9985
    %vm9987 = vcmp.eq.f32.partialorder %v9984, %v9986
    %v9988 = vsel %vm9987, %v9983, inf
    %9989 = vmin.xlane.f32.xlu0 %v9988
    %v9990 = vpop.xlane.xlu0 %9989
    %v9991 = vcvt.f32.s32 %v9990
    %v9992 = vcvt.f32.s32 %v9986
    %v9993 = vshll.u32 %v9992, 16
    %v9994 = vadd.s32 %v9993, %v9991
    %v9995 = vand.u32 %v8970, 65535
    %v9996 = vshra.s32 %v8970, 16
    %v9997 = vcvt.s32.f32 %v9995
    %v9998 = vcvt.s32.f32 %v9996
    %9999 = vmin.xlane.f32.xlu0 %v9998
    %v10000 = vpop.xlane.xlu0 %9999
    %vm10001 = vcmp.eq.f32.partialorder %v9998, %v10000
    %v10002 = vsel %vm10001, %v9997, inf
    %10003 = vmin.xlane.f32.xlu0 %v10002
    %v10004 = vpop.xlane.xlu0 %10003
    %v10005 = vcvt.f32.s32 %v10004
    %v10006 = vcvt.f32.s32 %v10000
    %v10007 = vshll.u32 %v10006, 16
    %v10008 = vadd.s32 %v10007, %v10005
    %v10009 = vand.u32 %v8971, 65535
    %v10010 = vshra.s32 %v8971, 16
    %v10011 = vcvt.s32.f32 %v10009
    %v10012 = vcvt.s32.f32 %v10010
    %10013 = vmin.xlane.f32.xlu0 %v10012
    %v10014 = vpop.xlane.xlu0 %10013
    %vm10015 = vcmp.eq.f32.partialorder %v10012, %v10014
    %v10016 = vsel %vm10015, %v10011, inf
    %10017 = vmin.xlane.f32.xlu0 %v10016
    %v10018 = vpop.xlane.xlu0 %10017
    %v10019 = vcvt.f32.s32 %v10018
    %v10020 = vcvt.f32.s32 %v10014
    %v10021 = vshll.u32 %v10020, 16
    %v10022 = vadd.s32 %v10021, %v10019
    %v10023 = vand.u32 %v8972, 65535
    %v10024 = vshra.s32 %v8972, 16
    %v10025 = vcvt.s32.f32 %v10023
    %v10026 = vcvt.s32.f32 %v10024
    %10027 = vmin.xlane.f32.xlu0 %v10026
    %v10028 = vpop.xlane.xlu0 %10027
    %vm10029 = vcmp.eq.f32.partialorder %v10026, %v10028
    %v10030 = vsel %vm10029, %v10025, inf
    %10031 = vmin.xlane.f32.xlu0 %v10030
    %v10032 = vpop.xlane.xlu0 %10031
    %v10033 = vcvt.f32.s32 %v10032
    %v10034 = vcvt.f32.s32 %v10028
    %v10035 = vshll.u32 %v10034, 16
    %v10036 = vadd.s32 %v10035, %v10033
    %v10037 = vand.u32 %v8973, 65535
    %v10038 = vshra.s32 %v8973, 16
    %v10039 = vcvt.s32.f32 %v10037
    %v10040 = vcvt.s32.f32 %v10038
    %10041 = vmin.xlane.f32.xlu0 %v10040
    %v10042 = vpop.xlane.xlu0 %10041
    %vm10043 = vcmp.eq.f32.partialorder %v10040, %v10042
    %v10044 = vsel %vm10043, %v10039, inf
    %10045 = vmin.xlane.f32.xlu0 %v10044
    %v10046 = vpop.xlane.xlu0 %10045
    %v10047 = vcvt.f32.s32 %v10046
    %v10048 = vcvt.f32.s32 %v10042
    %v10049 = vshll.u32 %v10048, 16
    %v10050 = vadd.s32 %v10049, %v10047
    %v10051 = vand.u32 %v8974, 65535
    %v10052 = vshra.s32 %v8974, 16
    %v10053 = vcvt.s32.f32 %v10051
    %v10054 = vcvt.s32.f32 %v10052
    %10055 = vmin.xlane.f32.xlu0 %v10054
    %v10056 = vpop.xlane.xlu0 %10055
    %vm10057 = vcmp.eq.f32.partialorder %v10054, %v10056
    %v10058 = vsel %vm10057, %v10053, inf
    %10059 = vmin.xlane.f32.xlu0 %v10058
    %v10060 = vpop.xlane.xlu0 %10059
    %v10061 = vcvt.f32.s32 %v10060
    %v10062 = vcvt.f32.s32 %v10056
    %v10063 = vshll.u32 %v10062, 16
    %v10064 = vadd.s32 %v10063, %v10061
    %v10065 = vand.u32 %v8975, 65535
    %v10066 = vshra.s32 %v8975, 16
    %v10067 = vcvt.s32.f32 %v10065
    %v10068 = vcvt.s32.f32 %v10066
    %10069 = vmin.xlane.f32.xlu0 %v10068
    %v10070 = vpop.xlane.xlu0 %10069
    %vm10071 = vcmp.eq.f32.partialorder %v10068, %v10070
    %v10072 = vsel %vm10071, %v10067, inf
    %10073 = vmin.xlane.f32.xlu0 %v10072
    %v10074 = vpop.xlane.xlu0 %10073
    %v10075 = vcvt.f32.s32 %v10074
    %v10076 = vcvt.f32.s32 %v10070
    %v10077 = vshll.u32 %v10076, 16
    %v10078 = vadd.s32 %v10077, %v10075
    %v10079 = vand.u32 %v8976, 65535
    %v10080 = vshra.s32 %v8976, 16
    %v10081 = vcvt.s32.f32 %v10079
    %v10082 = vcvt.s32.f32 %v10080
    %10083 = vmin.xlane.f32.xlu0 %v10082
    %v10084 = vpop.xlane.xlu0 %10083
    %vm10085 = vcmp.eq.f32.partialorder %v10082, %v10084
    %v10086 = vsel %vm10085, %v10081, inf
    %10087 = vmin.xlane.f32.xlu0 %v10086
    %v10088 = vpop.xlane.xlu0 %10087
    %v10089 = vcvt.f32.s32 %v10088
    %v10090 = vcvt.f32.s32 %v10084
    %v10091 = vshll.u32 %v10090, 16
    %v10092 = vadd.s32 %v10091, %v10089
    %v10093 = vand.u32 %v8977, 65535
    %v10094 = vshra.s32 %v8977, 16
    %v10095 = vcvt.s32.f32 %v10093
    %v10096 = vcvt.s32.f32 %v10094
    %10097 = vmin.xlane.f32.xlu0 %v10096
    %v10098 = vpop.xlane.xlu0 %10097
    %vm10099 = vcmp.eq.f32.partialorder %v10096, %v10098
    %v10100 = vsel %vm10099, %v10095, inf
    %10101 = vmin.xlane.f32.xlu0 %v10100
    %v10102 = vpop.xlane.xlu0 %10101
    %v10103 = vcvt.f32.s32 %v10102
    %v10104 = vcvt.f32.s32 %v10098
    %v10105 = vshll.u32 %v10104, 16
    %v10106 = vadd.s32 %v10105, %v10103
    %v10107 = vand.u32 %v8978, 65535
    %v10108 = vshra.s32 %v8978, 16
    %v10109 = vcvt.s32.f32 %v10107
    %v10110 = vcvt.s32.f32 %v10108
    %10111 = vmin.xlane.f32.xlu0 %v10110
    %v10112 = vpop.xlane.xlu0 %10111
    %vm10113 = vcmp.eq.f32.partialorder %v10110, %v10112
    %v10114 = vsel %vm10113, %v10109, inf
    %10115 = vmin.xlane.f32.xlu0 %v10114
    %v10116 = vpop.xlane.xlu0 %10115
    %v10117 = vcvt.f32.s32 %v10116
    %v10118 = vcvt.f32.s32 %v10112
    %v10119 = vshll.u32 %v10118, 16
    %v10120 = vadd.s32 %v10119, %v10117
    %v10121 = vand.u32 %v8979, 65535
    %v10122 = vshra.s32 %v8979, 16
    %v10123 = vcvt.s32.f32 %v10121
    %v10124 = vcvt.s32.f32 %v10122
    %10125 = vmin.xlane.f32.xlu0 %v10124
    %v10126 = vpop.xlane.xlu0 %10125
    %vm10127 = vcmp.eq.f32.partialorder %v10124, %v10126
    %v10128 = vsel %vm10127, %v10123, inf
    %10129 = vmin.xlane.f32.xlu0 %v10128
    %v10130 = vpop.xlane.xlu0 %10129
    %v10131 = vcvt.f32.s32 %v10130
    %v10132 = vcvt.f32.s32 %v10126
    %v10133 = vshll.u32 %v10132, 16
    %v10134 = vadd.s32 %v10133, %v10131
    %v10135 = vand.u32 %v8980, 65535
    %v10136 = vshra.s32 %v8980, 16
    %v10137 = vcvt.s32.f32 %v10135
    %v10138 = vcvt.s32.f32 %v10136
    %10139 = vmin.xlane.f32.xlu0 %v10138
    %v10140 = vpop.xlane.xlu0 %10139
    %vm10141 = vcmp.eq.f32.partialorder %v10138, %v10140
    %v10142 = vsel %vm10141, %v10137, inf
    %10143 = vmin.xlane.f32.xlu0 %v10142
    %v10144 = vpop.xlane.xlu0 %10143
    %v10145 = vcvt.f32.s32 %v10144
    %v10146 = vcvt.f32.s32 %v10140
    %v10147 = vshll.u32 %v10146, 16
    %v10148 = vadd.s32 %v10147, %v10145
    %v10149 = vand.u32 %v8981, 65535
    %v10150 = vshra.s32 %v8981, 16
    %v10151 = vcvt.s32.f32 %v10149
    %v10152 = vcvt.s32.f32 %v10150
    %10153 = vmin.xlane.f32.xlu0 %v10152
    %v10154 = vpop.xlane.xlu0 %10153
    %vm10155 = vcmp.eq.f32.partialorder %v10152, %v10154
    %v10156 = vsel %vm10155, %v10151, inf
    %10157 = vmin.xlane.f32.xlu0 %v10156
    %v10158 = vpop.xlane.xlu0 %10157
    %v10159 = vcvt.f32.s32 %v10158
    %v10160 = vcvt.f32.s32 %v10154
    %v10161 = vshll.u32 %v10160, 16
    %v10162 = vadd.s32 %v10161, %v10159
    %v10163 = vand.u32 %v8982, 65535
    %v10164 = vshra.s32 %v8982, 16
    %v10165 = vcvt.s32.f32 %v10163
    %v10166 = vcvt.s32.f32 %v10164
    %10167 = vmin.xlane.f32.xlu0 %v10166
    %v10168 = vpop.xlane.xlu0 %10167
    %vm10169 = vcmp.eq.f32.partialorder %v10166, %v10168
    %v10170 = vsel %vm10169, %v10165, inf
    %10171 = vmin.xlane.f32.xlu0 %v10170
    %v10172 = vpop.xlane.xlu0 %10171
    %v10173 = vcvt.f32.s32 %v10172
    %v10174 = vcvt.f32.s32 %v10168
    %v10175 = vshll.u32 %v10174, 16
    %v10176 = vadd.s32 %v10175, %v10173
    %v10177 = vand.u32 %v8983, 65535
    %v10178 = vshra.s32 %v8983, 16
    %v10179 = vcvt.s32.f32 %v10177
    %v10180 = vcvt.s32.f32 %v10178
    %10181 = vmin.xlane.f32.xlu0 %v10180
    %v10182 = vpop.xlane.xlu0 %10181
    %vm10183 = vcmp.eq.f32.partialorder %v10180, %v10182
    %v10184 = vsel %vm10183, %v10179, inf
    %10185 = vmin.xlane.f32.xlu0 %v10184
    %v10186 = vpop.xlane.xlu0 %10185
    %v10187 = vcvt.f32.s32 %v10186
    %v10188 = vcvt.f32.s32 %v10182
    %v10189 = vshll.u32 %v10188, 16
    %v10190 = vadd.s32 %v10189, %v10187
    %v10191 = vand.u32 %v8984, 65535
    %v10192 = vshra.s32 %v8984, 16
    %v10193 = vcvt.s32.f32 %v10191
    %v10194 = vcvt.s32.f32 %v10192
    %10195 = vmin.xlane.f32.xlu0 %v10194
    %v10196 = vpop.xlane.xlu0 %10195
    %vm10197 = vcmp.eq.f32.partialorder %v10194, %v10196
    %v10198 = vsel %vm10197, %v10193, inf
    %10199 = vmin.xlane.f32.xlu0 %v10198
    %v10200 = vpop.xlane.xlu0 %10199
    %v10201 = vcvt.f32.s32 %v10200
    %v10202 = vcvt.f32.s32 %v10196
    %v10203 = vshll.u32 %v10202, 16
    %v10204 = vadd.s32 %v10203, %v10201
    %v10205 = vand.u32 %v8985, 65535
    %v10206 = vshra.s32 %v8985, 16
    %v10207 = vcvt.s32.f32 %v10205
    %v10208 = vcvt.s32.f32 %v10206
    %10209 = vmin.xlane.f32.xlu0 %v10208
    %v10210 = vpop.xlane.xlu0 %10209
    %vm10211 = vcmp.eq.f32.partialorder %v10208, %v10210
    %v10212 = vsel %vm10211, %v10207, inf
    %10213 = vmin.xlane.f32.xlu0 %v10212
    %v10214 = vpop.xlane.xlu0 %10213
    %v10215 = vcvt.f32.s32 %v10214
    %v10216 = vcvt.f32.s32 %v10210
    %v10217 = vshll.u32 %v10216, 16
    %v10218 = vadd.s32 %v10217, %v10215
    %v10219 = vand.u32 %v8986, 65535
    %v10220 = vshra.s32 %v8986, 16
    %v10221 = vcvt.s32.f32 %v10219
    %v10222 = vcvt.s32.f32 %v10220
    %10223 = vmin.xlane.f32.xlu0 %v10222
    %v10224 = vpop.xlane.xlu0 %10223
    %vm10225 = vcmp.eq.f32.partialorder %v10222, %v10224
    %v10226 = vsel %vm10225, %v10221, inf
    %10227 = vmin.xlane.f32.xlu0 %v10226
    %v10228 = vpop.xlane.xlu0 %10227
    %v10229 = vcvt.f32.s32 %v10228
    %v10230 = vcvt.f32.s32 %v10224
    %v10231 = vshll.u32 %v10230, 16
    %v10232 = vadd.s32 %v10231, %v10229
    %v10233 = vand.u32 %v8987, 65535
    %v10234 = vshra.s32 %v8987, 16
    %v10235 = vcvt.s32.f32 %v10233
    %v10236 = vcvt.s32.f32 %v10234
    %10237 = vmin.xlane.f32.xlu0 %v10236
    %v10238 = vpop.xlane.xlu0 %10237
    %vm10239 = vcmp.eq.f32.partialorder %v10236, %v10238
    %v10240 = vsel %vm10239, %v10235, inf
    %10241 = vmin.xlane.f32.xlu0 %v10240
    %v10242 = vpop.xlane.xlu0 %10241
    %v10243 = vcvt.f32.s32 %v10242
    %v10244 = vcvt.f32.s32 %v10238
    %v10245 = vshll.u32 %v10244, 16
    %v10246 = vadd.s32 %v10245, %v10243
    %v10247 = vand.u32 %v8988, 65535
    %v10248 = vshra.s32 %v8988, 16
    %v10249 = vcvt.s32.f32 %v10247
    %v10250 = vcvt.s32.f32 %v10248
    %10251 = vmin.xlane.f32.xlu0 %v10250
    %v10252 = vpop.xlane.xlu0 %10251
    %vm10253 = vcmp.eq.f32.partialorder %v10250, %v10252
    %v10254 = vsel %vm10253, %v10249, inf
    %10255 = vmin.xlane.f32.xlu0 %v10254
    %v10256 = vpop.xlane.xlu0 %10255
    %v10257 = vcvt.f32.s32 %v10256
    %v10258 = vcvt.f32.s32 %v10252
    %v10259 = vshll.u32 %v10258, 16
    %v10260 = vadd.s32 %v10259, %v10257
    %v10261 = vand.u32 %v8989, 65535
    %v10262 = vshra.s32 %v8989, 16
    %v10263 = vcvt.s32.f32 %v10261
    %v10264 = vcvt.s32.f32 %v10262
    %10265 = vmin.xlane.f32.xlu0 %v10264
    %v10266 = vpop.xlane.xlu0 %10265
    %vm10267 = vcmp.eq.f32.partialorder %v10264, %v10266
    %v10268 = vsel %vm10267, %v10263, inf
    %10269 = vmin.xlane.f32.xlu0 %v10268
    %v10270 = vpop.xlane.xlu0 %10269
    %v10271 = vcvt.f32.s32 %v10270
    %v10272 = vcvt.f32.s32 %v10266
    %v10273 = vshll.u32 %v10272, 16
    %v10274 = vadd.s32 %v10273, %v10271
    %v10275 = vand.u32 %v8990, 65535
    %v10276 = vshra.s32 %v8990, 16
    %v10277 = vcvt.s32.f32 %v10275
    %v10278 = vcvt.s32.f32 %v10276
    %10279 = vmin.xlane.f32.xlu0 %v10278
    %v10280 = vpop.xlane.xlu0 %10279
    %vm10281 = vcmp.eq.f32.partialorder %v10278, %v10280
    %v10282 = vsel %vm10281, %v10277, inf
    %10283 = vmin.xlane.f32.xlu0 %v10282
    %v10284 = vpop.xlane.xlu0 %10283
    %v10285 = vcvt.f32.s32 %v10284
    %v10286 = vcvt.f32.s32 %v10280
    %v10287 = vshll.u32 %v10286, 16
    %v10288 = vadd.s32 %v10287, %v10285
    %v10289 = vand.u32 %v8991, 65535
    %v10290 = vshra.s32 %v8991, 16
    %v10291 = vcvt.s32.f32 %v10289
    %v10292 = vcvt.s32.f32 %v10290
    %10293 = vmin.xlane.f32.xlu0 %v10292
    %v10294 = vpop.xlane.xlu0 %10293
    %vm10295 = vcmp.eq.f32.partialorder %v10292, %v10294
    %v10296 = vsel %vm10295, %v10291, inf
    %10297 = vmin.xlane.f32.xlu0 %v10296
    %v10298 = vpop.xlane.xlu0 %10297
    %v10299 = vcvt.f32.s32 %v10298
    %v10300 = vcvt.f32.s32 %v10294
    %v10301 = vshll.u32 %v10300, 16
    %v10302 = vadd.s32 %v10301, %v10299
    %v10303 = vand.u32 %v8992, 65535
    %v10304 = vshra.s32 %v8992, 16
    %v10305 = vcvt.s32.f32 %v10303
    %v10306 = vcvt.s32.f32 %v10304
    %10307 = vmin.xlane.f32.xlu0 %v10306
    %v10308 = vpop.xlane.xlu0 %10307
    %vm10309 = vcmp.eq.f32.partialorder %v10306, %v10308
    %v10310 = vsel %vm10309, %v10305, inf
    %10311 = vmin.xlane.f32.xlu0 %v10310
    %v10312 = vpop.xlane.xlu0 %10311
    %v10313 = vcvt.f32.s32 %v10312
    %v10314 = vcvt.f32.s32 %v10308
    %v10315 = vshll.u32 %v10314, 16
    %v10316 = vadd.s32 %v10315, %v10313
    %v10317 = vand.u32 %v8993, 65535
    %v10318 = vshra.s32 %v8993, 16
    %v10319 = vcvt.s32.f32 %v10317
    %v10320 = vcvt.s32.f32 %v10318
    %10321 = vmin.xlane.f32.xlu0 %v10320
    %v10322 = vpop.xlane.xlu0 %10321
    %vm10323 = vcmp.eq.f32.partialorder %v10320, %v10322
    %v10324 = vsel %vm10323, %v10319, inf
    %10325 = vmin.xlane.f32.xlu0 %v10324
    %v10326 = vpop.xlane.xlu0 %10325
    %v10327 = vcvt.f32.s32 %v10326
    %v10328 = vcvt.f32.s32 %v10322
    %v10329 = vshll.u32 %v10328, 16
    %v10330 = vadd.s32 %v10329, %v10327
    %v10331 = vand.u32 %v8994, 65535
    %v10332 = vshra.s32 %v8994, 16
    %v10333 = vcvt.s32.f32 %v10331
    %v10334 = vcvt.s32.f32 %v10332
    %10335 = vmin.xlane.f32.xlu0 %v10334
    %v10336 = vpop.xlane.xlu0 %10335
    %vm10337 = vcmp.eq.f32.partialorder %v10334, %v10336
    %v10338 = vsel %vm10337, %v10333, inf
    %10339 = vmin.xlane.f32.xlu0 %v10338
    %v10340 = vpop.xlane.xlu0 %10339
    %v10341 = vcvt.f32.s32 %v10340
    %v10342 = vcvt.f32.s32 %v10336
    %v10343 = vshll.u32 %v10342, 16
    %v10344 = vadd.s32 %v10343, %v10341
    %v10345 = vand.u32 %v8995, 65535
    %v10346 = vshra.s32 %v8995, 16
    %v10347 = vcvt.s32.f32 %v10345
    %v10348 = vcvt.s32.f32 %v10346
    %10349 = vmin.xlane.f32.xlu0 %v10348
    %v10350 = vpop.xlane.xlu0 %10349
    %vm10351 = vcmp.eq.f32.partialorder %v10348, %v10350
    %v10352 = vsel %vm10351, %v10347, inf
    %10353 = vmin.xlane.f32.xlu0 %v10352
    %v10354 = vpop.xlane.xlu0 %10353
    %v10355 = vcvt.f32.s32 %v10354
    %v10356 = vcvt.f32.s32 %v10350
    %v10357 = vshll.u32 %v10356, 16
    %v10358 = vadd.s32 %v10357, %v10355
    %v10359 = vand.u32 %v8996, 65535
    %v10360 = vshra.s32 %v8996, 16
    %v10361 = vcvt.s32.f32 %v10359
    %v10362 = vcvt.s32.f32 %v10360
    %10363 = vmin.xlane.f32.xlu0 %v10362
    %v10364 = vpop.xlane.xlu0 %10363
    %vm10365 = vcmp.eq.f32.partialorder %v10362, %v10364
    %v10366 = vsel %vm10365, %v10361, inf
    %10367 = vmin.xlane.f32.xlu0 %v10366
    %v10368 = vpop.xlane.xlu0 %10367
    %v10369 = vcvt.f32.s32 %v10368
    %v10370 = vcvt.f32.s32 %v10364
    %v10371 = vshll.u32 %v10370, 16
    %v10372 = vadd.s32 %v10371, %v10369
    %v10373 = vand.u32 %v8997, 65535
    %v10374 = vshra.s32 %v8997, 16
    %v10375 = vcvt.s32.f32 %v10373
    %v10376 = vcvt.s32.f32 %v10374
    %10377 = vmin.xlane.f32.xlu0 %v10376
    %v10378 = vpop.xlane.xlu0 %10377
    %vm10379 = vcmp.eq.f32.partialorder %v10376, %v10378
    %v10380 = vsel %vm10379, %v10375, inf
    %10381 = vmin.xlane.f32.xlu0 %v10380
    %v10382 = vpop.xlane.xlu0 %10381
    %v10383 = vcvt.f32.s32 %v10382
    %v10384 = vcvt.f32.s32 %v10378
    %v10385 = vshll.u32 %v10384, 16
    %v10386 = vadd.s32 %v10385, %v10383
    %v10387 = vand.u32 %v8998, 65535
    %v10388 = vshra.s32 %v8998, 16
    %v10389 = vcvt.s32.f32 %v10387
    %v10390 = vcvt.s32.f32 %v10388
    %10391 = vmin.xlane.f32.xlu0 %v10390
    %v10392 = vpop.xlane.xlu0 %10391
    %vm10393 = vcmp.eq.f32.partialorder %v10390, %v10392
    %v10394 = vsel %vm10393, %v10389, inf
    %10395 = vmin.xlane.f32.xlu0 %v10394
    %v10396 = vpop.xlane.xlu0 %10395
    %v10397 = vcvt.f32.s32 %v10396
    %v10398 = vcvt.f32.s32 %v10392
    %v10399 = vshll.u32 %v10398, 16
    %v10400 = vadd.s32 %v10399, %v10397
    %v10401 = vand.u32 %v8999, 65535
    %v10402 = vshra.s32 %v8999, 16
    %v10403 = vcvt.s32.f32 %v10401
    %v10404 = vcvt.s32.f32 %v10402
    %10405 = vmin.xlane.f32.xlu0 %v10404
    %v10406 = vpop.xlane.xlu0 %10405
    %vm10407 = vcmp.eq.f32.partialorder %v10404, %v10406
    %v10408 = vsel %vm10407, %v10403, inf
    %10409 = vmin.xlane.f32.xlu0 %v10408
    %v10410 = vpop.xlane.xlu0 %10409
    %v10411 = vcvt.f32.s32 %v10410
    %v10412 = vcvt.f32.s32 %v10406
    %v10413 = vshll.u32 %v10412, 16
    %v10414 = vadd.s32 %v10413, %v10411
    %v10415 = vand.u32 %v9000, 65535
    %v10416 = vshra.s32 %v9000, 16
    %v10417 = vcvt.s32.f32 %v10415
    %v10418 = vcvt.s32.f32 %v10416
    %10419 = vmin.xlane.f32.xlu0 %v10418
    %v10420 = vpop.xlane.xlu0 %10419
    %vm10421 = vcmp.eq.f32.partialorder %v10418, %v10420
    %v10422 = vsel %vm10421, %v10417, inf
    %10423 = vmin.xlane.f32.xlu0 %v10422
    %v10424 = vpop.xlane.xlu0 %10423
    %v10425 = vcvt.f32.s32 %v10424
    %v10426 = vcvt.f32.s32 %v10420
    %v10427 = vshll.u32 %v10426, 16
    %v10428 = vadd.s32 %v10427, %v10425
    %v10429 = vand.u32 %v9001, 65535
    %v10430 = vshra.s32 %v9001, 16
    %v10431 = vcvt.s32.f32 %v10429
    %v10432 = vcvt.s32.f32 %v10430
    %10433 = vmin.xlane.f32.xlu0 %v10432
    %v10434 = vpop.xlane.xlu0 %10433
    %vm10435 = vcmp.eq.f32.partialorder %v10432, %v10434
    %v10436 = vsel %vm10435, %v10431, inf
    %10437 = vmin.xlane.f32.xlu0 %v10436
    %v10438 = vpop.xlane.xlu0 %10437
    %v10439 = vcvt.f32.s32 %v10438
    %v10440 = vcvt.f32.s32 %v10434
    %v10441 = vshll.u32 %v10440, 16
    %v10442 = vadd.s32 %v10441, %v10439
    %v10443 = vand.u32 %v9002, 65535
    %v10444 = vshra.s32 %v9002, 16
    %v10445 = vcvt.s32.f32 %v10443
    %v10446 = vcvt.s32.f32 %v10444
    %10447 = vmin.xlane.f32.xlu0 %v10446
    %v10448 = vpop.xlane.xlu0 %10447
    %vm10449 = vcmp.eq.f32.partialorder %v10446, %v10448
    %v10450 = vsel %vm10449, %v10445, inf
    %10451 = vmin.xlane.f32.xlu0 %v10450
    %v10452 = vpop.xlane.xlu0 %10451
    %v10453 = vcvt.f32.s32 %v10452
    %v10454 = vcvt.f32.s32 %v10448
    %v10455 = vshll.u32 %v10454, 16
    %v10456 = vadd.s32 %v10455, %v10453
    %v10457 = vand.u32 %v9003, 65535
    %v10458 = vshra.s32 %v9003, 16
    %v10459 = vcvt.s32.f32 %v10457
    %v10460 = vcvt.s32.f32 %v10458
    %10461 = vmin.xlane.f32.xlu0 %v10460
    %v10462 = vpop.xlane.xlu0 %10461
    %vm10463 = vcmp.eq.f32.partialorder %v10460, %v10462
    %v10464 = vsel %vm10463, %v10459, inf
    %10465 = vmin.xlane.f32.xlu0 %v10464
    %v10466 = vpop.xlane.xlu0 %10465
    %v10467 = vcvt.f32.s32 %v10466
    %v10468 = vcvt.f32.s32 %v10462
    %v10469 = vshll.u32 %v10468, 16
    %v10470 = vadd.s32 %v10469, %v10467
    %v10471 = vand.u32 %v9004, 65535
    %v10472 = vshra.s32 %v9004, 16
    %v10473 = vcvt.s32.f32 %v10471
    %v10474 = vcvt.s32.f32 %v10472
    %10475 = vmin.xlane.f32.xlu0 %v10474
    %v10476 = vpop.xlane.xlu0 %10475
    %vm10477 = vcmp.eq.f32.partialorder %v10474, %v10476
    %v10478 = vsel %vm10477, %v10473, inf
    %10479 = vmin.xlane.f32.xlu0 %v10478
    %v10480 = vpop.xlane.xlu0 %10479
    %v10481 = vcvt.f32.s32 %v10480
    %v10482 = vcvt.f32.s32 %v10476
    %v10483 = vshll.u32 %v10482, 16
    %v10484 = vadd.s32 %v10483, %v10481
    %v10485 = vand.u32 %v9005, 65535
    %v10486 = vshra.s32 %v9005, 16
    %v10487 = vcvt.s32.f32 %v10485
    %v10488 = vcvt.s32.f32 %v10486
    %10489 = vmin.xlane.f32.xlu0 %v10488
    %v10490 = vpop.xlane.xlu0 %10489
    %vm10491 = vcmp.eq.f32.partialorder %v10488, %v10490
    %v10492 = vsel %vm10491, %v10487, inf
    %10493 = vmin.xlane.f32.xlu0 %v10492
    %v10494 = vpop.xlane.xlu0 %10493
    %v10495 = vcvt.f32.s32 %v10494
    %v10496 = vcvt.f32.s32 %v10490
    %v10497 = vshll.u32 %v10496, 16
    %v10498 = vadd.s32 %v10497, %v10495
    %v10499 = vand.u32 %v9006, 65535
    %v10500 = vshra.s32 %v9006, 16
    %v10501 = vcvt.s32.f32 %v10499
    %v10502 = vcvt.s32.f32 %v10500
    %10503 = vmin.xlane.f32.xlu0 %v10502
    %v10504 = vpop.xlane.xlu0 %10503
    %vm10505 = vcmp.eq.f32.partialorder %v10502, %v10504
    %v10506 = vsel %vm10505, %v10501, inf
    %10507 = vmin.xlane.f32.xlu0 %v10506
    %v10508 = vpop.xlane.xlu0 %10507
    %v10509 = vcvt.f32.s32 %v10508
    %v10510 = vcvt.f32.s32 %v10504
    %v10511 = vshll.u32 %v10510, 16
    %v10512 = vadd.s32 %v10511, %v10509
    %v10513 = vand.u32 %v9007, 65535
    %v10514 = vshra.s32 %v9007, 16
    %v10515 = vcvt.s32.f32 %v10513
    %v10516 = vcvt.s32.f32 %v10514
    %10517 = vmin.xlane.f32.xlu0 %v10516
    %v10518 = vpop.xlane.xlu0 %10517
    %vm10519 = vcmp.eq.f32.partialorder %v10516, %v10518
    %v10520 = vsel %vm10519, %v10515, inf
    %10521 = vmin.xlane.f32.xlu0 %v10520
    %v10522 = vpop.xlane.xlu0 %10521
    %v10523 = vcvt.f32.s32 %v10522
    %v10524 = vcvt.f32.s32 %v10518
    %v10525 = vshll.u32 %v10524, 16
    %v10526 = vadd.s32 %v10525, %v10523
    %v10527 = vand.u32 %v9008, 65535
    %v10528 = vshra.s32 %v9008, 16
    %v10529 = vcvt.s32.f32 %v10527
    %v10530 = vcvt.s32.f32 %v10528
    %10531 = vmin.xlane.f32.xlu0 %v10530
    %v10532 = vpop.xlane.xlu0 %10531
    %vm10533 = vcmp.eq.f32.partialorder %v10530, %v10532
    %v10534 = vsel %vm10533, %v10529, inf
    %10535 = vmin.xlane.f32.xlu0 %v10534
    %v10536 = vpop.xlane.xlu0 %10535
    %v10537 = vcvt.f32.s32 %v10536
    %v10538 = vcvt.f32.s32 %v10532
    %v10539 = vshll.u32 %v10538, 16
    %v10540 = vadd.s32 %v10539, %v10537
    %v10541 = vand.u32 %v9009, 65535
    %v10542 = vshra.s32 %v9009, 16
    %v10543 = vcvt.s32.f32 %v10541
    %v10544 = vcvt.s32.f32 %v10542
    %10545 = vmin.xlane.f32.xlu0 %v10544
    %v10546 = vpop.xlane.xlu0 %10545
    %vm10547 = vcmp.eq.f32.partialorder %v10544, %v10546
    %v10548 = vsel %vm10547, %v10543, inf
    %10549 = vmin.xlane.f32.xlu0 %v10548
    %v10550 = vpop.xlane.xlu0 %10549
    %v10551 = vcvt.f32.s32 %v10550
    %v10552 = vcvt.f32.s32 %v10546
    %v10553 = vshll.u32 %v10552, 16
    %v10554 = vadd.s32 %v10553, %v10551
    %v10555 = vand.u32 %v9010, 65535
    %v10556 = vshra.s32 %v9010, 16
    %v10557 = vcvt.s32.f32 %v10555
    %v10558 = vcvt.s32.f32 %v10556
    %10559 = vmin.xlane.f32.xlu0 %v10558
    %v10560 = vpop.xlane.xlu0 %10559
    %vm10561 = vcmp.eq.f32.partialorder %v10558, %v10560
    %v10562 = vsel %vm10561, %v10557, inf
    %10563 = vmin.xlane.f32.xlu0 %v10562
    %v10564 = vpop.xlane.xlu0 %10563
    %v10565 = vcvt.f32.s32 %v10564
    %v10566 = vcvt.f32.s32 %v10560
    %v10567 = vshll.u32 %v10566, 16
    %v10568 = vadd.s32 %v10567, %v10565
    %v10569 = vand.u32 %v9011, 65535
    %v10570 = vshra.s32 %v9011, 16
    %v10571 = vcvt.s32.f32 %v10569
    %v10572 = vcvt.s32.f32 %v10570
    %10573 = vmin.xlane.f32.xlu0 %v10572
    %v10574 = vpop.xlane.xlu0 %10573
    %vm10575 = vcmp.eq.f32.partialorder %v10572, %v10574
    %v10576 = vsel %vm10575, %v10571, inf
    %10577 = vmin.xlane.f32.xlu0 %v10576
    %v10578 = vpop.xlane.xlu0 %10577
    %v10579 = vcvt.f32.s32 %v10578
    %v10580 = vcvt.f32.s32 %v10574
    %v10581 = vshll.u32 %v10580, 16
    %v10582 = vadd.s32 %v10581, %v10579
    %v10583 = vand.u32 %v9012, 65535
    %v10584 = vshra.s32 %v9012, 16
    %v10585 = vcvt.s32.f32 %v10583
    %v10586 = vcvt.s32.f32 %v10584
    %10587 = vmin.xlane.f32.xlu0 %v10586
    %v10588 = vpop.xlane.xlu0 %10587
    %vm10589 = vcmp.eq.f32.partialorder %v10586, %v10588
    %v10590 = vsel %vm10589, %v10585, inf
    %10591 = vmin.xlane.f32.xlu0 %v10590
    %v10592 = vpop.xlane.xlu0 %10591
    %v10593 = vcvt.f32.s32 %v10592
    %v10594 = vcvt.f32.s32 %v10588
    %v10595 = vshll.u32 %v10594, 16
    %v10596 = vadd.s32 %v10595, %v10593
    %v10597 = vand.u32 %v9013, 65535
    %v10598 = vshra.s32 %v9013, 16
    %v10599 = vcvt.s32.f32 %v10597
    %v10600 = vcvt.s32.f32 %v10598
    %10601 = vmin.xlane.f32.xlu0 %v10600
    %v10602 = vpop.xlane.xlu0 %10601
    %vm10603 = vcmp.eq.f32.partialorder %v10600, %v10602
    %v10604 = vsel %vm10603, %v10599, inf
    %10605 = vmin.xlane.f32.xlu0 %v10604
    %v10606 = vpop.xlane.xlu0 %10605
    %v10607 = vcvt.f32.s32 %v10606
    %v10608 = vcvt.f32.s32 %v10602
    %v10609 = vshll.u32 %v10608, 16
    %v10610 = vadd.s32 %v10609, %v10607
    %v10611 = vand.u32 %v9014, 65535
    %v10612 = vshra.s32 %v9014, 16
    %v10613 = vcvt.s32.f32 %v10611
    %v10614 = vcvt.s32.f32 %v10612
    %10615 = vmin.xlane.f32.xlu0 %v10614
    %v10616 = vpop.xlane.xlu0 %10615
    %vm10617 = vcmp.eq.f32.partialorder %v10614, %v10616
    %v10618 = vsel %vm10617, %v10613, inf
    %10619 = vmin.xlane.f32.xlu0 %v10618
    %v10620 = vpop.xlane.xlu0 %10619
    %v10621 = vcvt.f32.s32 %v10620
    %v10622 = vcvt.f32.s32 %v10616
    %v10623 = vshll.u32 %v10622, 16
    %v10624 = vadd.s32 %v10623, %v10621
    %v10625 = vand.u32 %v9015, 65535
    %v10626 = vshra.s32 %v9015, 16
    %v10627 = vcvt.s32.f32 %v10625
    %v10628 = vcvt.s32.f32 %v10626
    %10629 = vmin.xlane.f32.xlu0 %v10628
    %v10630 = vpop.xlane.xlu0 %10629
    %vm10631 = vcmp.eq.f32.partialorder %v10628, %v10630
    %v10632 = vsel %vm10631, %v10627, inf
    %10633 = vmin.xlane.f32.xlu0 %v10632
    %v10634 = vpop.xlane.xlu0 %10633
    %v10635 = vcvt.f32.s32 %v10634
    %v10636 = vcvt.f32.s32 %v10630
    %v10637 = vshll.u32 %v10636, 16
    %v10638 = vadd.s32 %v10637, %v10635
    %v10639 = vand.u32 %v9016, 65535
    %v10640 = vshra.s32 %v9016, 16
    %v10641 = vcvt.s32.f32 %v10639
    %v10642 = vcvt.s32.f32 %v10640
    %10643 = vmin.xlane.f32.xlu0 %v10642
    %v10644 = vpop.xlane.xlu0 %10643
    %vm10645 = vcmp.eq.f32.partialorder %v10642, %v10644
    %v10646 = vsel %vm10645, %v10641, inf
    %10647 = vmin.xlane.f32.xlu0 %v10646
    %v10648 = vpop.xlane.xlu0 %10647
    %v10649 = vcvt.f32.s32 %v10648
    %v10650 = vcvt.f32.s32 %v10644
    %v10651 = vshll.u32 %v10650, 16
    %v10652 = vadd.s32 %v10651, %v10649
    %v10653 = vand.u32 %v9017, 65535
    %v10654 = vshra.s32 %v9017, 16
    %v10655 = vcvt.s32.f32 %v10653
    %v10656 = vcvt.s32.f32 %v10654
    %10657 = vmin.xlane.f32.xlu0 %v10656
    %v10658 = vpop.xlane.xlu0 %10657
    %vm10659 = vcmp.eq.f32.partialorder %v10656, %v10658
    %v10660 = vsel %vm10659, %v10655, inf
    %10661 = vmin.xlane.f32.xlu0 %v10660
    %v10662 = vpop.xlane.xlu0 %10661
    %v10663 = vcvt.f32.s32 %v10662
    %v10664 = vcvt.f32.s32 %v10658
    %v10665 = vshll.u32 %v10664, 16
    %v10666 = vadd.s32 %v10665, %v10663
    %v10667 = vand.u32 %v9018, 65535
    %v10668 = vshra.s32 %v9018, 16
    %v10669 = vcvt.s32.f32 %v10667
    %v10670 = vcvt.s32.f32 %v10668
    %10671 = vmin.xlane.f32.xlu0 %v10670
    %v10672 = vpop.xlane.xlu0 %10671
    %vm10673 = vcmp.eq.f32.partialorder %v10670, %v10672
    %v10674 = vsel %vm10673, %v10669, inf
    %10675 = vmin.xlane.f32.xlu0 %v10674
    %v10676 = vpop.xlane.xlu0 %10675
    %v10677 = vcvt.f32.s32 %v10676
    %v10678 = vcvt.f32.s32 %v10672
    %v10679 = vshll.u32 %v10678, 16
    %v10680 = vadd.s32 %v10679, %v10677
    %v10681 = vand.u32 %v9019, 65535
    %v10682 = vshra.s32 %v9019, 16
    %v10683 = vcvt.s32.f32 %v10681
    %v10684 = vcvt.s32.f32 %v10682
    %10685 = vmin.xlane.f32.xlu0 %v10684
    %v10686 = vpop.xlane.xlu0 %10685
    %vm10687 = vcmp.eq.f32.partialorder %v10684, %v10686
    %v10688 = vsel %vm10687, %v10683, inf
    %10689 = vmin.xlane.f32.xlu0 %v10688
    %v10690 = vpop.xlane.xlu0 %10689
    %v10691 = vcvt.f32.s32 %v10690
    %v10692 = vcvt.f32.s32 %v10686
    %v10693 = vshll.u32 %v10692, 16
    %v10694 = vadd.s32 %v10693, %v10691
    %v10695 = vand.u32 %v9020, 65535
    %v10696 = vshra.s32 %v9020, 16
    %v10697 = vcvt.s32.f32 %v10695
    %v10698 = vcvt.s32.f32 %v10696
    %10699 = vmin.xlane.f32.xlu0 %v10698
    %v10700 = vpop.xlane.xlu0 %10699
    %vm10701 = vcmp.eq.f32.partialorder %v10698, %v10700
    %v10702 = vsel %vm10701, %v10697, inf
    %10703 = vmin.xlane.f32.xlu0 %v10702
    %v10704 = vpop.xlane.xlu0 %10703
    %v10705 = vcvt.f32.s32 %v10704
    %v10706 = vcvt.f32.s32 %v10700
    %v10707 = vshll.u32 %v10706, 16
    %v10708 = vadd.s32 %v10707, %v10705
    %v10709 = vand.u32 %v9021, 65535
    %v10710 = vshra.s32 %v9021, 16
    %v10711 = vcvt.s32.f32 %v10709
    %v10712 = vcvt.s32.f32 %v10710
    %10713 = vmin.xlane.f32.xlu0 %v10712
    %v10714 = vpop.xlane.xlu0 %10713
    %vm10715 = vcmp.eq.f32.partialorder %v10712, %v10714
    %v10716 = vsel %vm10715, %v10711, inf
    %10717 = vmin.xlane.f32.xlu0 %v10716
    %v10718 = vpop.xlane.xlu0 %10717
    %v10719 = vcvt.f32.s32 %v10718
    %v10720 = vcvt.f32.s32 %v10714
    %v10721 = vshll.u32 %v10720, 16
    %v10722 = vadd.s32 %v10721, %v10719
    %v10723 = vand.u32 %v9022, 65535
    %v10724 = vshra.s32 %v9022, 16
    %v10725 = vcvt.s32.f32 %v10723
    %v10726 = vcvt.s32.f32 %v10724
    %10727 = vmin.xlane.f32.xlu0 %v10726
    %v10728 = vpop.xlane.xlu0 %10727
    %vm10729 = vcmp.eq.f32.partialorder %v10726, %v10728
    %v10730 = vsel %vm10729, %v10725, inf
    %10731 = vmin.xlane.f32.xlu0 %v10730
    %v10732 = vpop.xlane.xlu0 %10731
    %v10733 = vcvt.f32.s32 %v10732
    %v10734 = vcvt.f32.s32 %v10728
    %v10735 = vshll.u32 %v10734, 16
    %v10736 = vadd.s32 %v10735, %v10733
    %v10737 = vand.u32 %v9023, 65535
    %v10738 = vshra.s32 %v9023, 16
    %v10739 = vcvt.s32.f32 %v10737
    %v10740 = vcvt.s32.f32 %v10738
    %10741 = vmin.xlane.f32.xlu0 %v10740
    %v10742 = vpop.xlane.xlu0 %10741
    %vm10743 = vcmp.eq.f32.partialorder %v10740, %v10742
    %v10744 = vsel %vm10743, %v10739, inf
    %10745 = vmin.xlane.f32.xlu0 %v10744
    %v10746 = vpop.xlane.xlu0 %10745
    %v10747 = vcvt.f32.s32 %v10746
    %v10748 = vcvt.f32.s32 %v10742
    %v10749 = vshll.u32 %v10748, 16
    %v10750 = vadd.s32 %v10749, %v10747
    %v10751 = vand.u32 %v9024, 65535
    %v10752 = vshra.s32 %v9024, 16
    %v10753 = vcvt.s32.f32 %v10751
    %v10754 = vcvt.s32.f32 %v10752
    %10755 = vmin.xlane.f32.xlu0 %v10754
    %v10756 = vpop.xlane.xlu0 %10755
    %vm10757 = vcmp.eq.f32.partialorder %v10754, %v10756
    %v10758 = vsel %vm10757, %v10753, inf
    %10759 = vmin.xlane.f32.xlu0 %v10758
    %v10760 = vpop.xlane.xlu0 %10759
    %v10761 = vcvt.f32.s32 %v10760
    %v10762 = vcvt.f32.s32 %v10756
    %v10763 = vshll.u32 %v10762, 16
    %v10764 = vadd.s32 %v10763, %v10761
    %v10765 = vand.u32 %v9025, 65535
    %v10766 = vshra.s32 %v9025, 16
    %v10767 = vcvt.s32.f32 %v10765
    %v10768 = vcvt.s32.f32 %v10766
    %10769 = vmin.xlane.f32.xlu0 %v10768
    %v10770 = vpop.xlane.xlu0 %10769
    %vm10771 = vcmp.eq.f32.partialorder %v10768, %v10770
    %v10772 = vsel %vm10771, %v10767, inf
    %10773 = vmin.xlane.f32.xlu0 %v10772
    %v10774 = vpop.xlane.xlu0 %10773
    %v10775 = vcvt.f32.s32 %v10774
    %v10776 = vcvt.f32.s32 %v10770
    %v10777 = vshll.u32 %v10776, 16
    %v10778 = vadd.s32 %v10777, %v10775
    %v10779 = vand.u32 %v9026, 65535
    %v10780 = vshra.s32 %v9026, 16
    %v10781 = vcvt.s32.f32 %v10779
    %v10782 = vcvt.s32.f32 %v10780
    %10783 = vmin.xlane.f32.xlu0 %v10782
    %v10784 = vpop.xlane.xlu0 %10783
    %vm10785 = vcmp.eq.f32.partialorder %v10782, %v10784
    %v10786 = vsel %vm10785, %v10781, inf
    %10787 = vmin.xlane.f32.xlu0 %v10786
    %v10788 = vpop.xlane.xlu0 %10787
    %v10789 = vcvt.f32.s32 %v10788
    %v10790 = vcvt.f32.s32 %v10784
    %v10791 = vshll.u32 %v10790, 16
    %v10792 = vadd.s32 %v10791, %v10789
    %v10793 = vand.u32 %v9027, 65535
    %v10794 = vshra.s32 %v9027, 16
    %v10795 = vcvt.s32.f32 %v10793
    %v10796 = vcvt.s32.f32 %v10794
    %10797 = vmin.xlane.f32.xlu0 %v10796
    %v10798 = vpop.xlane.xlu0 %10797
    %vm10799 = vcmp.eq.f32.partialorder %v10796, %v10798
    %v10800 = vsel %vm10799, %v10795, inf
    %10801 = vmin.xlane.f32.xlu0 %v10800
    %v10802 = vpop.xlane.xlu0 %10801
    %v10803 = vcvt.f32.s32 %v10802
    %v10804 = vcvt.f32.s32 %v10798
    %v10805 = vshll.u32 %v10804, 16
    %v10806 = vadd.s32 %v10805, %v10803
    %v10807 = vand.u32 %v9028, 65535
    %v10808 = vshra.s32 %v9028, 16
    %v10809 = vcvt.s32.f32 %v10807
    %v10810 = vcvt.s32.f32 %v10808
    %10811 = vmin.xlane.f32.xlu0 %v10810
    %v10812 = vpop.xlane.xlu0 %10811
    %vm10813 = vcmp.eq.f32.partialorder %v10810, %v10812
    %v10814 = vsel %vm10813, %v10809, inf
    %10815 = vmin.xlane.f32.xlu0 %v10814
    %v10816 = vpop.xlane.xlu0 %10815
    %v10817 = vcvt.f32.s32 %v10816
    %v10818 = vcvt.f32.s32 %v10812
    %v10819 = vshll.u32 %v10818, 16
    %v10820 = vadd.s32 %v10819, %v10817
    %vm10821 = vcmp.eq.s32.totalorder %v2107, %v9042
    %vm10822 = vcmp.eq.s32.totalorder %v2107, %v9056
    %vm10823 = vcmp.eq.s32.totalorder %v2107, %v9070
    %vm10824 = vcmp.eq.s32.totalorder %v2107, %v9084
    %vm10825 = vcmp.eq.s32.totalorder %v2107, %v9098
    %vm10826 = vcmp.eq.s32.totalorder %v2107, %v9112
    %vm10827 = vcmp.eq.s32.totalorder %v2107, %v9126
    %vm10828 = vcmp.eq.s32.totalorder %v2107, %v9140
    %vm10829 = vcmp.eq.s32.totalorder %v2107, %v9154
    %vm10830 = vcmp.eq.s32.totalorder %v2107, %v9168
    %vm10831 = vcmp.eq.s32.totalorder %v2107, %v9182
    %vm10832 = vcmp.eq.s32.totalorder %v2107, %v9196
    %vm10833 = vcmp.eq.s32.totalorder %v2107, %v9210
    %vm10834 = vcmp.eq.s32.totalorder %v2107, %v9224
    %vm10835 = vcmp.eq.s32.totalorder %v2107, %v9238
    %vm10836 = vcmp.eq.s32.totalorder %v2107, %v9252
    %vm10837 = vcmp.eq.s32.totalorder %v2107, %v9266
    %vm10838 = vcmp.eq.s32.totalorder %v2107, %v9280
    %vm10839 = vcmp.eq.s32.totalorder %v2107, %v9294
    %vm10840 = vcmp.eq.s32.totalorder %v2107, %v9308
    %vm10841 = vcmp.eq.s32.totalorder %v2107, %v9322
    %vm10842 = vcmp.eq.s32.totalorder %v2107, %v9336
    %vm10843 = vcmp.eq.s32.totalorder %v2107, %v9350
    %vm10844 = vcmp.eq.s32.totalorder %v2107, %v9364
    %vm10845 = vcmp.eq.s32.totalorder %v2107, %v9378
    %vm10846 = vcmp.eq.s32.totalorder %v2107, %v9392
    %vm10847 = vcmp.eq.s32.totalorder %v2107, %v9406
    %vm10848 = vcmp.eq.s32.totalorder %v2107, %v9420
    %vm10849 = vcmp.eq.s32.totalorder %v2107, %v9434
    %vm10850 = vcmp.eq.s32.totalorder %v2107, %v9448
    %vm10851 = vcmp.eq.s32.totalorder %v2107, %v9462
    %vm10852 = vcmp.eq.s32.totalorder %v2107, %v9476
    %vm10853 = vcmp.eq.s32.totalorder %v2107, %v9490
    %vm10854 = vcmp.eq.s32.totalorder %v2107, %v9504
    %vm10855 = vcmp.eq.s32.totalorder %v2107, %v9518
    %vm10856 = vcmp.eq.s32.totalorder %v2107, %v9532
    %vm10857 = vcmp.eq.s32.totalorder %v2107, %v9546
    %vm10858 = vcmp.eq.s32.totalorder %v2107, %v9560
    %vm10859 = vcmp.eq.s32.totalorder %v2107, %v9574
    %vm10860 = vcmp.eq.s32.totalorder %v2107, %v9588
    %vm10861 = vcmp.eq.s32.totalorder %v2107, %v9602
    %vm10862 = vcmp.eq.s32.totalorder %v2107, %v9616
    %vm10863 = vcmp.eq.s32.totalorder %v2107, %v9630
    %vm10864 = vcmp.eq.s32.totalorder %v2107, %v9644
    %vm10865 = vcmp.eq.s32.totalorder %v2107, %v9658
    %vm10866 = vcmp.eq.s32.totalorder %v2107, %v9672
    %vm10867 = vcmp.eq.s32.totalorder %v2107, %v9686
    %vm10868 = vcmp.eq.s32.totalorder %v2107, %v9700
    %vm10869 = vcmp.eq.s32.totalorder %v2107, %v9714
    %vm10870 = vcmp.eq.s32.totalorder %v2107, %v9728
    %vm10871 = vcmp.eq.s32.totalorder %v2107, %v9742
    %vm10872 = vcmp.eq.s32.totalorder %v2107, %v9756
    %vm10873 = vcmp.eq.s32.totalorder %v2107, %v9770
    %vm10874 = vcmp.eq.s32.totalorder %v2107, %v9784
    %vm10875 = vcmp.eq.s32.totalorder %v2107, %v9798
    %vm10876 = vcmp.eq.s32.totalorder %v2107, %v9812
    %vm10877 = vcmp.eq.s32.totalorder %v2107, %v9826
    %vm10878 = vcmp.eq.s32.totalorder %v2107, %v9840
    %vm10879 = vcmp.eq.s32.totalorder %v2107, %v9854
    %vm10880 = vcmp.eq.s32.totalorder %v2107, %v9868
    %vm10881 = vcmp.eq.s32.totalorder %v2107, %v9882
    %vm10882 = vcmp.eq.s32.totalorder %v2107, %v9896
    %vm10883 = vcmp.eq.s32.totalorder %v2107, %v9910
    %vm10884 = vcmp.eq.s32.totalorder %v2107, %v9924
    %vm10885 = vcmp.eq.s32.totalorder %v2107, %v9938
    %vm10886 = vcmp.eq.s32.totalorder %v2107, %v9952
    %vm10887 = vcmp.eq.s32.totalorder %v2107, %v9966
    %vm10888 = vcmp.eq.s32.totalorder %v2107, %v9980
    %vm10889 = vcmp.eq.s32.totalorder %v2107, %v9994
    %vm10890 = vcmp.eq.s32.totalorder %v2107, %v10008
    %vm10891 = vcmp.eq.s32.totalorder %v2107, %v10022
    %vm10892 = vcmp.eq.s32.totalorder %v2107, %v10036
    %vm10893 = vcmp.eq.s32.totalorder %v2107, %v10050
    %vm10894 = vcmp.eq.s32.totalorder %v2107, %v10064
    %vm10895 = vcmp.eq.s32.totalorder %v2107, %v10078
    %vm10896 = vcmp.eq.s32.totalorder %v2107, %v10092
    %vm10897 = vcmp.eq.s32.totalorder %v2107, %v10106
    %vm10898 = vcmp.eq.s32.totalorder %v2107, %v10120
    %vm10899 = vcmp.eq.s32.totalorder %v2107, %v10134
    %vm10900 = vcmp.eq.s32.totalorder %v2107, %v10148
    %vm10901 = vcmp.eq.s32.totalorder %v2107, %v10162
    %vm10902 = vcmp.eq.s32.totalorder %v2107, %v10176
    %vm10903 = vcmp.eq.s32.totalorder %v2107, %v10190
    %vm10904 = vcmp.eq.s32.totalorder %v2107, %v10204
    %vm10905 = vcmp.eq.s32.totalorder %v2107, %v10218
    %vm10906 = vcmp.eq.s32.totalorder %v2107, %v10232
    %vm10907 = vcmp.eq.s32.totalorder %v2107, %v10246
    %vm10908 = vcmp.eq.s32.totalorder %v2107, %v10260
    %vm10909 = vcmp.eq.s32.totalorder %v2107, %v10274
    %vm10910 = vcmp.eq.s32.totalorder %v2107, %v10288
    %vm10911 = vcmp.eq.s32.totalorder %v2107, %v10302
    %vm10912 = vcmp.eq.s32.totalorder %v2107, %v10316
    %vm10913 = vcmp.eq.s32.totalorder %v2107, %v10330
    %vm10914 = vcmp.eq.s32.totalorder %v2107, %v10344
    %vm10915 = vcmp.eq.s32.totalorder %v2107, %v10358
    %vm10916 = vcmp.eq.s32.totalorder %v2107, %v10372
    %vm10917 = vcmp.eq.s32.totalorder %v2107, %v10386
    %vm10918 = vcmp.eq.s32.totalorder %v2107, %v10400
    %vm10919 = vcmp.eq.s32.totalorder %v2107, %v10414
    %vm10920 = vcmp.eq.s32.totalorder %v2107, %v10428
    %vm10921 = vcmp.eq.s32.totalorder %v2107, %v10442
    %vm10922 = vcmp.eq.s32.totalorder %v2107, %v10456
    %vm10923 = vcmp.eq.s32.totalorder %v2107, %v10470
    %vm10924 = vcmp.eq.s32.totalorder %v2107, %v10484
    %vm10925 = vcmp.eq.s32.totalorder %v2107, %v10498
    %vm10926 = vcmp.eq.s32.totalorder %v2107, %v10512
    %vm10927 = vcmp.eq.s32.totalorder %v2107, %v10526
    %vm10928 = vcmp.eq.s32.totalorder %v2107, %v10540
    %vm10929 = vcmp.eq.s32.totalorder %v2107, %v10554
    %vm10930 = vcmp.eq.s32.totalorder %v2107, %v10568
    %vm10931 = vcmp.eq.s32.totalorder %v2107, %v10582
    %vm10932 = vcmp.eq.s32.totalorder %v2107, %v10596
    %vm10933 = vcmp.eq.s32.totalorder %v2107, %v10610
    %vm10934 = vcmp.eq.s32.totalorder %v2107, %v10624
    %vm10935 = vcmp.eq.s32.totalorder %v2107, %v10638
    %vm10936 = vcmp.eq.s32.totalorder %v2107, %v10652
    %vm10937 = vcmp.eq.s32.totalorder %v2107, %v10666
    %vm10938 = vcmp.eq.s32.totalorder %v2107, %v10680
    %vm10939 = vcmp.eq.s32.totalorder %v2107, %v10694
    %vm10940 = vcmp.eq.s32.totalorder %v2107, %v10708
    %vm10941 = vcmp.eq.s32.totalorder %v2107, %v10722
    %vm10942 = vcmp.eq.s32.totalorder %v2107, %v10736
    %vm10943 = vcmp.eq.s32.totalorder %v2107, %v10750
    %vm10944 = vcmp.eq.s32.totalorder %v2107, %v10764
    %vm10945 = vcmp.eq.s32.totalorder %v2107, %v10778
    %vm10946 = vcmp.eq.s32.totalorder %v2107, %v10792
    %vm10947 = vcmp.eq.s32.totalorder %v2107, %v10806
    %vm10948 = vcmp.eq.s32.totalorder %v2107, %v10820
    %v10949 = vsel %vm10821, 1, 0
    %v10950 = vsel %vm10822, 1, 0
    %v10951 = vsel %vm10823, 1, 0
    %v10952 = vsel %vm10824, 1, 0
    %v10953 = vsel %vm10825, 1, 0
    %v10954 = vsel %vm10826, 1, 0
    %v10955 = vsel %vm10827, 1, 0
    %v10956 = vsel %vm10828, 1, 0
    %v10957 = vsel %vm10829, 1, 0
    %v10958 = vsel %vm10830, 1, 0
    %v10959 = vsel %vm10831, 1, 0
    %v10960 = vsel %vm10832, 1, 0
    %v10961 = vsel %vm10833, 1, 0
    %v10962 = vsel %vm10834, 1, 0
    %v10963 = vsel %vm10835, 1, 0
    %v10964 = vsel %vm10836, 1, 0
    %v10965 = vsel %vm10837, 1, 0
    %v10966 = vsel %vm10838, 1, 0
    %v10967 = vsel %vm10839, 1, 0
    %v10968 = vsel %vm10840, 1, 0
    %v10969 = vsel %vm10841, 1, 0
    %v10970 = vsel %vm10842, 1, 0
    %v10971 = vsel %vm10843, 1, 0
    %v10972 = vsel %vm10844, 1, 0
    %v10973 = vsel %vm10845, 1, 0
    %v10974 = vsel %vm10846, 1, 0
    %v10975 = vsel %vm10847, 1, 0
    %v10976 = vsel %vm10848, 1, 0
    %v10977 = vsel %vm10849, 1, 0
    %v10978 = vsel %vm10850, 1, 0
    %v10979 = vsel %vm10851, 1, 0
    %v10980 = vsel %vm10852, 1, 0
    %v10981 = vsel %vm10853, 1, 0
    %v10982 = vsel %vm10854, 1, 0
    %v10983 = vsel %vm10855, 1, 0
    %v10984 = vsel %vm10856, 1, 0
    %v10985 = vsel %vm10857, 1, 0
    %v10986 = vsel %vm10858, 1, 0
    %v10987 = vsel %vm10859, 1, 0
    %v10988 = vsel %vm10860, 1, 0
    %v10989 = vsel %vm10861, 1, 0
    %v10990 = vsel %vm10862, 1, 0
    %v10991 = vsel %vm10863, 1, 0
    %v10992 = vsel %vm10864, 1, 0
    %v10993 = vsel %vm10865, 1, 0
    %v10994 = vsel %vm10866, 1, 0
    %v10995 = vsel %vm10867, 1, 0
    %v10996 = vsel %vm10868, 1, 0
    %v10997 = vsel %vm10869, 1, 0
    %v10998 = vsel %vm10870, 1, 0
    %v10999 = vsel %vm10871, 1, 0
    %v11000 = vsel %vm10872, 1, 0
    %v11001 = vsel %vm10873, 1, 0
    %v11002 = vsel %vm10874, 1, 0
    %v11003 = vsel %vm10875, 1, 0
    %v11004 = vsel %vm10876, 1, 0
    %v11005 = vsel %vm10877, 1, 0
    %v11006 = vsel %vm10878, 1, 0
    %v11007 = vsel %vm10879, 1, 0
    %v11008 = vsel %vm10880, 1, 0
    %v11009 = vsel %vm10881, 1, 0
    %v11010 = vsel %vm10882, 1, 0
    %v11011 = vsel %vm10883, 1, 0
    %v11012 = vsel %vm10884, 1, 0
    %v11013 = vsel %vm10885, 1, 0
    %v11014 = vsel %vm10886, 1, 0
    %v11015 = vsel %vm10887, 1, 0
    %v11016 = vsel %vm10888, 1, 0
    %v11017 = vsel %vm10889, 1, 0
    %v11018 = vsel %vm10890, 1, 0
    %v11019 = vsel %vm10891, 1, 0
    %v11020 = vsel %vm10892, 1, 0
    %v11021 = vsel %vm10893, 1, 0
    %v11022 = vsel %vm10894, 1, 0
    %v11023 = vsel %vm10895, 1, 0
    %v11024 = vsel %vm10896, 1, 0
    %v11025 = vsel %vm10897, 1, 0
    %v11026 = vsel %vm10898, 1, 0
    %v11027 = vsel %vm10899, 1, 0
    %v11028 = vsel %vm10900, 1, 0
    %v11029 = vsel %vm10901, 1, 0
    %v11030 = vsel %vm10902, 1, 0
    %v11031 = vsel %vm10903, 1, 0
    %v11032 = vsel %vm10904, 1, 0
    %v11033 = vsel %vm10905, 1, 0
    %v11034 = vsel %vm10906, 1, 0
    %v11035 = vsel %vm10907, 1, 0
    %v11036 = vsel %vm10908, 1, 0
    %v11037 = vsel %vm10909, 1, 0
    %v11038 = vsel %vm10910, 1, 0
    %v11039 = vsel %vm10911, 1, 0
    %v11040 = vsel %vm10912, 1, 0
    %v11041 = vsel %vm10913, 1, 0
    %v11042 = vsel %vm10914, 1, 0
    %v11043 = vsel %vm10915, 1, 0
    %v11044 = vsel %vm10916, 1, 0
    %v11045 = vsel %vm10917, 1, 0
    %v11046 = vsel %vm10918, 1, 0
    %v11047 = vsel %vm10919, 1, 0
    %v11048 = vsel %vm10920, 1, 0
    %v11049 = vsel %vm10921, 1, 0
    %v11050 = vsel %vm10922, 1, 0
    %v11051 = vsel %vm10923, 1, 0
    %v11052 = vsel %vm10924, 1, 0
    %v11053 = vsel %vm10925, 1, 0
    %v11054 = vsel %vm10926, 1, 0
    %v11055 = vsel %vm10927, 1, 0
    %v11056 = vsel %vm10928, 1, 0
    %v11057 = vsel %vm10929, 1, 0
    %v11058 = vsel %vm10930, 1, 0
    %v11059 = vsel %vm10931, 1, 0
    %v11060 = vsel %vm10932, 1, 0
    %v11061 = vsel %vm10933, 1, 0
    %v11062 = vsel %vm10934, 1, 0
    %v11063 = vsel %vm10935, 1, 0
    %v11064 = vsel %vm10936, 1, 0
    %v11065 = vsel %vm10937, 1, 0
    %v11066 = vsel %vm10938, 1, 0
    %v11067 = vsel %vm10939, 1, 0
    %v11068 = vsel %vm10940, 1, 0
    %v11069 = vsel %vm10941, 1, 0
    %v11070 = vsel %vm10942, 1, 0
    %v11071 = vsel %vm10943, 1, 0
    %v11072 = vsel %vm10944, 1, 0
    %v11073 = vsel %vm10945, 1, 0
    %v11074 = vsel %vm10946, 1, 0
    %v11075 = vsel %vm10947, 1, 0
    %v11076 = vsel %vm10948, 1, 0
    %v11077 = vcvt.s32.f32 %v10949
    %v11078 = vcvt.s32.f32 %v10950
    %v11079 = vcvt.s32.f32 %v10951
    %v11080 = vcvt.s32.f32 %v10952
    %v11081 = vcvt.s32.f32 %v10953
    %v11082 = vcvt.s32.f32 %v10954
    %v11083 = vcvt.s32.f32 %v10955
    %v11084 = vcvt.s32.f32 %v10956
    %v11085 = vcvt.s32.f32 %v10957
    %v11086 = vcvt.s32.f32 %v10958
    %v11087 = vcvt.s32.f32 %v10959
    %v11088 = vcvt.s32.f32 %v10960
    %v11089 = vcvt.s32.f32 %v10961
    %v11090 = vcvt.s32.f32 %v10962
    %v11091 = vcvt.s32.f32 %v10963
    %v11092 = vcvt.s32.f32 %v10964
    %v11093 = vcvt.s32.f32 %v10965
    %v11094 = vcvt.s32.f32 %v10966
    %v11095 = vcvt.s32.f32 %v10967
    %v11096 = vcvt.s32.f32 %v10968
    %v11097 = vcvt.s32.f32 %v10969
    %v11098 = vcvt.s32.f32 %v10970
    %v11099 = vcvt.s32.f32 %v10971
    %v11100 = vcvt.s32.f32 %v10972
    %v11101 = vcvt.s32.f32 %v10973
    %v11102 = vcvt.s32.f32 %v10974
    %v11103 = vcvt.s32.f32 %v10975
    %v11104 = vcvt.s32.f32 %v10976
    %v11105 = vcvt.s32.f32 %v10977
    %v11106 = vcvt.s32.f32 %v10978
    %v11107 = vcvt.s32.f32 %v10979
    %v11108 = vcvt.s32.f32 %v10980
    %v11109 = vcvt.s32.f32 %v10981
    %v11110 = vcvt.s32.f32 %v10982
    %v11111 = vcvt.s32.f32 %v10983
    %v11112 = vcvt.s32.f32 %v10984
    %v11113 = vcvt.s32.f32 %v10985
    %v11114 = vcvt.s32.f32 %v10986
    %v11115 = vcvt.s32.f32 %v10987
    %v11116 = vcvt.s32.f32 %v10988
    %v11117 = vcvt.s32.f32 %v10989
    %v11118 = vcvt.s32.f32 %v10990
    %v11119 = vcvt.s32.f32 %v10991
    %v11120 = vcvt.s32.f32 %v10992
    %v11121 = vcvt.s32.f32 %v10993
    %v11122 = vcvt.s32.f32 %v10994
    %v11123 = vcvt.s32.f32 %v10995
    %v11124 = vcvt.s32.f32 %v10996
    %v11125 = vcvt.s32.f32 %v10997
    %v11126 = vcvt.s32.f32 %v10998
    %v11127 = vcvt.s32.f32 %v10999
    %v11128 = vcvt.s32.f32 %v11000
    %v11129 = vcvt.s32.f32 %v11001
    %v11130 = vcvt.s32.f32 %v11002
    %v11131 = vcvt.s32.f32 %v11003
    %v11132 = vcvt.s32.f32 %v11004
    %v11133 = vcvt.s32.f32 %v11005
    %v11134 = vcvt.s32.f32 %v11006
    %v11135 = vcvt.s32.f32 %v11007
    %v11136 = vcvt.s32.f32 %v11008
    %v11137 = vcvt.s32.f32 %v11009
    %v11138 = vcvt.s32.f32 %v11010
    %v11139 = vcvt.s32.f32 %v11011
    %v11140 = vcvt.s32.f32 %v11012
    %v11141 = vcvt.s32.f32 %v11013
    %v11142 = vcvt.s32.f32 %v11014
    %v11143 = vcvt.s32.f32 %v11015
    %v11144 = vcvt.s32.f32 %v11016
    %v11145 = vcvt.s32.f32 %v11017
    %v11146 = vcvt.s32.f32 %v11018
    %v11147 = vcvt.s32.f32 %v11019
    %v11148 = vcvt.s32.f32 %v11020
    %v11149 = vcvt.s32.f32 %v11021
    %v11150 = vcvt.s32.f32 %v11022
    %v11151 = vcvt.s32.f32 %v11023
    %v11152 = vcvt.s32.f32 %v11024
    %v11153 = vcvt.s32.f32 %v11025
    %v11154 = vcvt.s32.f32 %v11026
    %v11155 = vcvt.s32.f32 %v11027
    %v11156 = vcvt.s32.f32 %v11028
    %v11157 = vcvt.s32.f32 %v11029
    %v11158 = vcvt.s32.f32 %v11030
    %v11159 = vcvt.s32.f32 %v11031
    %v11160 = vcvt.s32.f32 %v11032
    %v11161 = vcvt.s32.f32 %v11033
    %v11162 = vcvt.s32.f32 %v11034
    %v11163 = vcvt.s32.f32 %v11035
    %v11164 = vcvt.s32.f32 %v11036
    %v11165 = vcvt.s32.f32 %v11037
    %v11166 = vcvt.s32.f32 %v11038
    %v11167 = vcvt.s32.f32 %v11039
    %v11168 = vcvt.s32.f32 %v11040
    %v11169 = vcvt.s32.f32 %v11041
    %v11170 = vcvt.s32.f32 %v11042
    %v11171 = vcvt.s32.f32 %v11043
    %v11172 = vcvt.s32.f32 %v11044
    %v11173 = vcvt.s32.f32 %v11045
    %v11174 = vcvt.s32.f32 %v11046
    %v11175 = vcvt.s32.f32 %v11047
    %v11176 = vcvt.s32.f32 %v11048
    %v11177 = vcvt.s32.f32 %v11049
    %v11178 = vcvt.s32.f32 %v11050
    %v11179 = vcvt.s32.f32 %v11051
    %v11180 = vcvt.s32.f32 %v11052
    %v11181 = vcvt.s32.f32 %v11053
    %v11182 = vcvt.s32.f32 %v11054
    %v11183 = vcvt.s32.f32 %v11055
    %v11184 = vcvt.s32.f32 %v11056
    %v11185 = vcvt.s32.f32 %v11057
    %v11186 = vcvt.s32.f32 %v11058
    %v11187 = vcvt.s32.f32 %v11059
    %v11188 = vcvt.s32.f32 %v11060
    %v11189 = vcvt.s32.f32 %v11061
    %v11190 = vcvt.s32.f32 %v11062
    %v11191 = vcvt.s32.f32 %v11063
    %v11192 = vcvt.s32.f32 %v11064
    %v11193 = vcvt.s32.f32 %v11065
    %v11194 = vcvt.s32.f32 %v11066
    %v11195 = vcvt.s32.f32 %v11067
    %v11196 = vcvt.s32.f32 %v11068
    %v11197 = vcvt.s32.f32 %v11069
    %v11198 = vcvt.s32.f32 %v11070
    %v11199 = vcvt.s32.f32 %v11071
    %v11200 = vcvt.s32.f32 %v11072
    %v11201 = vcvt.s32.f32 %v11073
    %v11202 = vcvt.s32.f32 %v11074
    %v11203 = vcvt.s32.f32 %v11075
    %v11204 = vcvt.s32.f32 %v11076
    %v11205 = vsel %vm8260, %v11077, %v8130
    %v11206 = vsel %vm8260, %v11078, %v8131
    %v11207 = vsel %vm8260, %v11079, %v8132
    %v11208 = vsel %vm8260, %v11080, %v8133
    %v11209 = vsel %vm8260, %v11081, %v8134
    %v11210 = vsel %vm8260, %v11082, %v8135
    %v11211 = vsel %vm8260, %v11083, %v8136
    %v11212 = vsel %vm8260, %v11084, %v8137
    %v11213 = vsel %vm8260, %v11085, %v8138
    %v11214 = vsel %vm8260, %v11086, %v8139
    %v11215 = vsel %vm8260, %v11087, %v8140
    %v11216 = vsel %vm8260, %v11088, %v8141
    %v11217 = vsel %vm8260, %v11089, %v8142
    %v11218 = vsel %vm8260, %v11090, %v8143
    %v11219 = vsel %vm8260, %v11091, %v8144
    %v11220 = vsel %vm8260, %v11092, %v8145
    %v11221 = vsel %vm8260, %v11093, %v8146
    %v11222 = vsel %vm8260, %v11094, %v8147
    %v11223 = vsel %vm8260, %v11095, %v8148
    %v11224 = vsel %vm8260, %v11096, %v8149
    %v11225 = vsel %vm8260, %v11097, %v8150
    %v11226 = vsel %vm8260, %v11098, %v8151
    %v11227 = vsel %vm8260, %v11099, %v8152
    %v11228 = vsel %vm8260, %v11100, %v8153
    %v11229 = vsel %vm8260, %v11101, %v8154
    %v11230 = vsel %vm8260, %v11102, %v8155
    %v11231 = vsel %vm8260, %v11103, %v8156
    %v11232 = vsel %vm8260, %v11104, %v8157
    %v11233 = vsel %vm8260, %v11105, %v8158
    %v11234 = vsel %vm8260, %v11106, %v8159
    %v11235 = vsel %vm8260, %v11107, %v8160
    %v11236 = vsel %vm8260, %v11108, %v8161
    %v11237 = vsel %vm8260, %v11109, %v8162
    %v11238 = vsel %vm8260, %v11110, %v8163
    %v11239 = vsel %vm8260, %v11111, %v8164
    %v11240 = vsel %vm8260, %v11112, %v8165
    %v11241 = vsel %vm8260, %v11113, %v8166
    %v11242 = vsel %vm8260, %v11114, %v8167
    %v11243 = vsel %vm8260, %v11115, %v8168
    %v11244 = vsel %vm8260, %v11116, %v8169
    %v11245 = vsel %vm8260, %v11117, %v8170
    %v11246 = vsel %vm8260, %v11118, %v8171
    %v11247 = vsel %vm8260, %v11119, %v8172
    %v11248 = vsel %vm8260, %v11120, %v8173
    %v11249 = vsel %vm8260, %v11121, %v8174
    %v11250 = vsel %vm8260, %v11122, %v8175
    %v11251 = vsel %vm8260, %v11123, %v8176
    %v11252 = vsel %vm8260, %v11124, %v8177
    %v11253 = vsel %vm8260, %v11125, %v8178
    %v11254 = vsel %vm8260, %v11126, %v8179
    %v11255 = vsel %vm8260, %v11127, %v8180
    %v11256 = vsel %vm8260, %v11128, %v8181
    %v11257 = vsel %vm8260, %v11129, %v8182
    %v11258 = vsel %vm8260, %v11130, %v8183
    %v11259 = vsel %vm8260, %v11131, %v8184
    %v11260 = vsel %vm8260, %v11132, %v8185
    %v11261 = vsel %vm8260, %v11133, %v8186
    %v11262 = vsel %vm8260, %v11134, %v8187
    %v11263 = vsel %vm8260, %v11135, %v8188
    %v11264 = vsel %vm8260, %v11136, %v8189
    %v11265 = vsel %vm8260, %v11137, %v8190
    %v11266 = vsel %vm8260, %v11138, %v8191
    %v11267 = vsel %vm8260, %v11139, %v8192
    %v11268 = vsel %vm8260, %v11140, %v8193
    %v11269 = vsel %vm8260, %v11141, %v8194
    %v11270 = vsel %vm8260, %v11142, %v8195
    %v11271 = vsel %vm8260, %v11143, %v8196
    %v11272 = vsel %vm8260, %v11144, %v8197
    %v11273 = vsel %vm8260, %v11145, %v8198
    %v11274 = vsel %vm8260, %v11146, %v8199
    %v11275 = vsel %vm8260, %v11147, %v8200
    %v11276 = vsel %vm8260, %v11148, %v8201
    %v11277 = vsel %vm8260, %v11149, %v8202
    %v11278 = vsel %vm8260, %v11150, %v8203
    %v11279 = vsel %vm8260, %v11151, %v8204
    %v11280 = vsel %vm8260, %v11152, %v8205
    %v11281 = vsel %vm8260, %v11153, %v8206
    %v11282 = vsel %vm8260, %v11154, %v8207
    %v11283 = vsel %vm8260, %v11155, %v8208
    %v11284 = vsel %vm8260, %v11156, %v8209
    %v11285 = vsel %vm8260, %v11157, %v8210
    %v11286 = vsel %vm8260, %v11158, %v8211
    %v11287 = vsel %vm8260, %v11159, %v8212
    %v11288 = vsel %vm8260, %v11160, %v8213
    %v11289 = vsel %vm8260, %v11161, %v8214
    %v11290 = vsel %vm8260, %v11162, %v8215
    %v11291 = vsel %vm8260, %v11163, %v8216
    %v11292 = vsel %vm8260, %v11164, %v8217
    %v11293 = vsel %vm8260, %v11165, %v8218
    %v11294 = vsel %vm8260, %v11166, %v8219
    %v11295 = vsel %vm8260, %v11167, %v8220
    %v11296 = vsel %vm8260, %v11168, %v8221
    %v11297 = vsel %vm8260, %v11169, %v8222
    %v11298 = vsel %vm8260, %v11170, %v8223
    %v11299 = vsel %vm8260, %v11171, %v8224
    %v11300 = vsel %vm8260, %v11172, %v8225
    %v11301 = vsel %vm8260, %v11173, %v8226
    %v11302 = vsel %vm8260, %v11174, %v8227
    %v11303 = vsel %vm8260, %v11175, %v8228
    %v11304 = vsel %vm8260, %v11176, %v8229
    %v11305 = vsel %vm8260, %v11177, %v8230
    %v11306 = vsel %vm8260, %v11178, %v8231
    %v11307 = vsel %vm8260, %v11179, %v8232
    %v11308 = vsel %vm8260, %v11180, %v8233
    %v11309 = vsel %vm8260, %v11181, %v8234
    %v11310 = vsel %vm8260, %v11182, %v8235
    %v11311 = vsel %vm8260, %v11183, %v8236
    %v11312 = vsel %vm8260, %v11184, %v8237
    %v11313 = vsel %vm8260, %v11185, %v8238
    %v11314 = vsel %vm8260, %v11186, %v8239
    %v11315 = vsel %vm8260, %v11187, %v8240
    %v11316 = vsel %vm8260, %v11188, %v8241
    %v11317 = vsel %vm8260, %v11189, %v8242
    %v11318 = vsel %vm8260, %v11190, %v8243
    %v11319 = vsel %vm8260, %v11191, %v8244
    %v11320 = vsel %vm8260, %v11192, %v8245
    %v11321 = vsel %vm8260, %v11193, %v8246
    %v11322 = vsel %vm8260, %v11194, %v8247
    %v11323 = vsel %vm8260, %v11195, %v8248
    %v11324 = vsel %vm8260, %v11196, %v8249
    %v11325 = vsel %vm8260, %v11197, %v8250
    %v11326 = vsel %vm8260, %v11198, %v8251
    %v11327 = vsel %vm8260, %v11199, %v8252
    %v11328 = vsel %vm8260, %v11200, %v8253
    %v11329 = vsel %vm8260, %v11201, %v8254
    %v11330 = vsel %vm8260, %v11202, %v8255
    %v11331 = vsel %vm8260, %v11203, %v8256
    %v11332 = vsel %vm8260, %v11204, %v8257
    %11333 = vst [vmem:[#allocation2] sm:$0xff] %v11205
    %11334 = vst [vmem:[#allocation2 + $0x8] sm:$0xff] %v11206
    %11335 = vst [vmem:[#allocation2 + $0x10] sm:$0xff] %v11207
    %11336 = vst [vmem:[#allocation2 + $0x18] sm:$0xff] %v11208
    %11337 = vst [vmem:[#allocation2 + $0x20] sm:$0xff] %v11209
    %11338 = vst [vmem:[#allocation2 + $0x28] sm:$0xff] %v11210
    %11339 = vst [vmem:[#allocation2 + $0x30] sm:$0xff] %v11211
    %11340 = vst [vmem:[#allocation2 + $0x38] sm:$0xff] %v11212
    %11341 = vst [vmem:[#allocation2 + $0x40] sm:$0xff] %v11213
    %11342 = vst [vmem:[#allocation2 + $0x48] sm:$0xff] %v11214
    %11343 = vst [vmem:[#allocation2 + $0x50] sm:$0xff] %v11215
    %11344 = vst [vmem:[#allocation2 + $0x58] sm:$0xff] %v11216
    %11345 = vst [vmem:[#allocation2 + $0x60] sm:$0xff] %v11217
    %11346 = vst [vmem:[#allocation2 + $0x68] sm:$0xff] %v11218
    %11347 = vst [vmem:[#allocation2 + $0x70] sm:$0xff] %v11219
    %11348 = vst [vmem:[#allocation2 + $0x78] sm:$0xff] %v11220
    %11349 = vst [vmem:[#allocation2 + $0x80] sm:$0xff] %v11221
    %11350 = vst [vmem:[#allocation2 + $0x88] sm:$0xff] %v11222
    %11351 = vst [vmem:[#allocation2 + $0x90] sm:$0xff] %v11223
    %11352 = vst [vmem:[#allocation2 + $0x98] sm:$0xff] %v11224
    %11353 = vst [vmem:[#allocation2 + $0xa0] sm:$0xff] %v11225
    %11354 = vst [vmem:[#allocation2 + $0xa8] sm:$0xff] %v11226
    %11355 = vst [vmem:[#allocation2 + $0xb0] sm:$0xff] %v11227
    %11356 = vst [vmem:[#allocation2 + $0xb8] sm:$0xff] %v11228
    %11357 = vst [vmem:[#allocation2 + $0xc0] sm:$0xff] %v11229
    %11358 = vst [vmem:[#allocation2 + $0xc8] sm:$0xff] %v11230
    %11359 = vst [vmem:[#allocation2 + $0xd0] sm:$0xff] %v11231
    %11360 = vst [vmem:[#allocation2 + $0xd8] sm:$0xff] %v11232
    %11361 = vst [vmem:[#allocation2 + $0xe0] sm:$0xff] %v11233
    %11362 = vst [vmem:[#allocation2 + $0xe8] sm:$0xff] %v11234
    %11363 = vst [vmem:[#allocation2 + $0xf0] sm:$0xff] %v11235
    %11364 = vst [vmem:[#allocation2 + $0xf8] sm:$0xff] %v11236
    %11365 = vst [vmem:[#allocation2 + $0x100] sm:$0xff] %v11237
    %11366 = vst [vmem:[#allocation2 + $0x108] sm:$0xff] %v11238
    %11367 = vst [vmem:[#allocation2 + $0x110] sm:$0xff] %v11239
    %11368 = vst [vmem:[#allocation2 + $0x118] sm:$0xff] %v11240
    %11369 = vst [vmem:[#allocation2 + $0x120] sm:$0xff] %v11241
    %11370 = vst [vmem:[#allocation2 + $0x128] sm:$0xff] %v11242
    %11371 = vst [vmem:[#allocation2 + $0x130] sm:$0xff] %v11243
    %11372 = vst [vmem:[#allocation2 + $0x138] sm:$0xff] %v11244
    %11373 = vst [vmem:[#allocation2 + $0x140] sm:$0xff] %v11245
    %11374 = vst [vmem:[#allocation2 + $0x148] sm:$0xff] %v11246
    %11375 = vst [vmem:[#allocation2 + $0x150] sm:$0xff] %v11247
    %11376 = vst [vmem:[#allocation2 + $0x158] sm:$0xff] %v11248
    %11377 = vst [vmem:[#allocation2 + $0x160] sm:$0xff] %v11249
    %11378 = vst [vmem:[#allocation2 + $0x168] sm:$0xff] %v11250
    %11379 = vst [vmem:[#allocation2 + $0x170] sm:$0xff] %v11251
    %11380 = vst [vmem:[#allocation2 + $0x178] sm:$0xff] %v11252
    %11381 = vst [vmem:[#allocation2 + $0x180] sm:$0xff] %v11253
    %11382 = vst [vmem:[#allocation2 + $0x188] sm:$0xff] %v11254
    %11383 = vst [vmem:[#allocation2 + $0x190] sm:$0xff] %v11255
    %11384 = vst [vmem:[#allocation2 + $0x198] sm:$0xff] %v11256
    %11385 = vst [vmem:[#allocation2 + $0x1a0] sm:$0xff] %v11257
    %11386 = vst [vmem:[#allocation2 + $0x1a8] sm:$0xff] %v11258
    %11387 = vst [vmem:[#allocation2 + $0x1b0] sm:$0xff] %v11259
    %11388 = vst [vmem:[#allocation2 + $0x1b8] sm:$0xff] %v11260
    %11389 = vst [vmem:[#allocation2 + $0x1c0] sm:$0xff] %v11261
    %11390 = vst [vmem:[#allocation2 + $0x1c8] sm:$0xff] %v11262
    %11391 = vst [vmem:[#allocation2 + $0x1d0] sm:$0xff] %v11263
    %11392 = vst [vmem:[#allocation2 + $0x1d8] sm:$0xff] %v11264
    %11393 = vst [vmem:[#allocation2 + $0x1e0] sm:$0xff] %v11265
    %11394 = vst [vmem:[#allocation2 + $0x1e8] sm:$0xff] %v11266
    %11395 = vst [vmem:[#allocation2 + $0x1f0] sm:$0xff] %v11267
    %11396 = vst [vmem:[#allocation2 + $0x1f8] sm:$0xff] %v11268
    %11397 = vst [vmem:[#allocation2 + $0x200] sm:$0xff] %v11269
    %11398 = vst [vmem:[#allocation2 + $0x208] sm:$0xff] %v11270
    %11399 = vst [vmem:[#allocation2 + $0x210] sm:$0xff] %v11271
    %11400 = vst [vmem:[#allocation2 + $0x218] sm:$0xff] %v11272
    %11401 = vst [vmem:[#allocation2 + $0x220] sm:$0xff] %v11273
    %11402 = vst [vmem:[#allocation2 + $0x228] sm:$0xff] %v11274
    %11403 = vst [vmem:[#allocation2 + $0x230] sm:$0xff] %v11275
    %11404 = vst [vmem:[#allocation2 + $0x238] sm:$0xff] %v11276
    %11405 = vst [vmem:[#allocation2 + $0x240] sm:$0xff] %v11277
    %11406 = vst [vmem:[#allocation2 + $0x248] sm:$0xff] %v11278
    %11407 = vst [vmem:[#allocation2 + $0x250] sm:$0xff] %v11279
    %11408 = vst [vmem:[#allocation2 + $0x258] sm:$0xff] %v11280
    %11409 = vst [vmem:[#allocation2 + $0x260] sm:$0xff] %v11281
    %11410 = vst [vmem:[#allocation2 + $0x268] sm:$0xff] %v11282
    %11411 = vst [vmem:[#allocation2 + $0x270] sm:$0xff] %v11283
    %11412 = vst [vmem:[#allocation2 + $0x278] sm:$0xff] %v11284
    %11413 = vst [vmem:[#allocation2 + $0x280] sm:$0xff] %v11285
    %11414 = vst [vmem:[#allocation2 + $0x288] sm:$0xff] %v11286
    %11415 = vst [vmem:[#allocation2 + $0x290] sm:$0xff] %v11287
    %11416 = vst [vmem:[#allocation2 + $0x298] sm:$0xff] %v11288
    %11417 = vst [vmem:[#allocation2 + $0x2a0] sm:$0xff] %v11289
    %11418 = vst [vmem:[#allocation2 + $0x2a8] sm:$0xff] %v11290
    %11419 = vst [vmem:[#allocation2 + $0x2b0] sm:$0xff] %v11291
    %11420 = vst [vmem:[#allocation2 + $0x2b8] sm:$0xff] %v11292
    %11421 = vst [vmem:[#allocation2 + $0x2c0] sm:$0xff] %v11293
    %11422 = vst [vmem:[#allocation2 + $0x2c8] sm:$0xff] %v11294
    %11423 = vst [vmem:[#allocation2 + $0x2d0] sm:$0xff] %v11295
    %11424 = vst [vmem:[#allocation2 + $0x2d8] sm:$0xff] %v11296
    %11425 = vst [vmem:[#allocation2 + $0x2e0] sm:$0xff] %v11297
    %11426 = vst [vmem:[#allocation2 + $0x2e8] sm:$0xff] %v11298
    %11427 = vst [vmem:[#allocation2 + $0x2f0] sm:$0xff] %v11299
    %11428 = vst [vmem:[#allocation2 + $0x2f8] sm:$0xff] %v11300
    %11429 = vst [vmem:[#allocation2 + $0x300] sm:$0xff] %v11301
    %11430 = vst [vmem:[#allocation2 + $0x308] sm:$0xff] %v11302
    %11431 = vst [vmem:[#allocation2 + $0x310] sm:$0xff] %v11303
    %11432 = vst [vmem:[#allocation2 + $0x318] sm:$0xff] %v11304
    %11433 = vst [vmem:[#allocation2 + $0x320] sm:$0xff] %v11305
    %11434 = vst [vmem:[#allocation2 + $0x328] sm:$0xff] %v11306
    %11435 = vst [vmem:[#allocation2 + $0x330] sm:$0xff] %v11307
    %11436 = vst [vmem:[#allocation2 + $0x338] sm:$0xff] %v11308
    %11437 = vst [vmem:[#allocation2 + $0x340] sm:$0xff] %v11309
    %11438 = vst [vmem:[#allocation2 + $0x348] sm:$0xff] %v11310
    %11439 = vst [vmem:[#allocation2 + $0x350] sm:$0xff] %v11311
    %11440 = vst [vmem:[#allocation2 + $0x358] sm:$0xff] %v11312
    %11441 = vst [vmem:[#allocation2 + $0x360] sm:$0xff] %v11313
    %11442 = vst [vmem:[#allocation2 + $0x368] sm:$0xff] %v11314
    %11443 = vst [vmem:[#allocation2 + $0x370] sm:$0xff] %v11315
    %11444 = vst [vmem:[#allocation2 + $0x378] sm:$0xff] %v11316
    %11445 = vst [vmem:[#allocation2 + $0x380] sm:$0xff] %v11317
    %11446 = vst [vmem:[#allocation2 + $0x388] sm:$0xff] %v11318
    %11447 = vst [vmem:[#allocation2 + $0x390] sm:$0xff] %v11319
    %11448 = vst [vmem:[#allocation2 + $0x398] sm:$0xff] %v11320
    %11449 = vst [vmem:[#allocation2 + $0x3a0] sm:$0xff] %v11321
    %11450 = vst [vmem:[#allocation2 + $0x3a8] sm:$0xff] %v11322
    %11451 = vst [vmem:[#allocation2 + $0x3b0] sm:$0xff] %v11323
    %11452 = vst [vmem:[#allocation2 + $0x3b8] sm:$0xff] %v11324
    %11453 = vst [vmem:[#allocation2 + $0x3c0] sm:$0xff] %v11325
    %11454 = vst [vmem:[#allocation2 + $0x3c8] sm:$0xff] %v11326
    %11455 = vst [vmem:[#allocation2 + $0x3d0] sm:$0xff] %v11327
    %11456 = vst [vmem:[#allocation2 + $0x3d8] sm:$0xff] %v11328
    %11457 = vst [vmem:[#allocation2 + $0x3e0] sm:$0xff] %v11329
    %11458 = vst [vmem:[#allocation2 + $0x3e8] sm:$0xff] %v11330
    %11459 = vst [vmem:[#allocation2 + $0x3f0] sm:$0xff] %v11331
    %11460 = vst [vmem:[#allocation2 + $0x3f8] sm:$0xff] %v11332
    // Predicated region
    $region22: #{ae_encode_and_binarize.1} parent=1 // pred_check
      _
    $region23: #{ae_encode_and_binarize.1} parent=1 // pred_check_branch
      %11462 = sbr.rel (0) target = $region25
    $region24: #{ae_encode_and_binarize.1} parent=1 // pred_region
      %s11464 = ssub.s32 16384, 16384
      %11465 = vsyncadd [#allocation3], %s11464
      %s11466 = sshll.u32 [#allocation2], 4
      %s11467 = int_to_ptr.vmem [resolvable:$true] %s11466
      %11472 = dma.vmem_to_hbm [thread:$0]  %s11467, 16384, %s5, [#allocation3], 128, 128, 8
    $region25: #{ae_encode_and_binarize.1} parent=1 // pred_fallthru
      _
    // Predicated region
    $region26: #{ae_encode_and_binarize.1} parent=1 // pred_check
      _
    $region27: #{ae_encode_and_binarize.1} parent=1 // pred_check_branch
      %11474 = sbr.rel (0) target = $region29
    $region28: #{ae_encode_and_binarize.1} parent=1 // pred_region
      %11475 = dma.done [#allocation3], 16384
    $region29: #{ae_encode_and_binarize.1} parent=1 // pred_fallthru
      _
    %11476 = vsyncpa [#allocation3], 1

</llo_original>
